<compile_context>
chip_gen: v7x
topology: tpu7x:2x2x1
jax: 0.10.0
libtpu: 0.0.40
codegen_flags: <defaults>
</compile_context>

<pallas_src>
import numpy as np
import jax
import jax.numpy as jnp
from jax.experimental import pallas as pl
from jax.experimental.pallas import tpu as pltpu

EPS = 1e-5
RRELU_SLOPE = 0.15  # (0.1 + 0.2) / 2, eval-mode RReLU


# ----------------------------------------------------------------------------
# Fused whole-network Pallas kernel
# ----------------------------------------------------------------------------
def _disc_kernel(a1_ref, w1_ref, s2_ref, w2_ref, s3_ref, w3_ref,
                 s4_ref, w4_ref, w5e_ref, o_ref):
    f32, bf16 = jnp.float32, jnp.bfloat16

    def conv_taps(x_bf16, s_ref, w_ref, act):
        """sum_t (S_t @ X) @ W_t with f32 accumulation, then activation."""
        acc = None
        for t in range(s_ref.shape[0]):          # static unroll over 9 taps
            sel = jnp.dot(s_ref[t], x_bf16, preferred_element_type=f32)
            part = jnp.dot(sel.astype(bf16), w_ref[t], preferred_element_type=f32)
            acc = part if acc is None else acc + part
        if act == "relu":
            acc = jnp.maximum(acc, 0.0)
        else:  # eval-mode RReLU
            acc = jnp.where(acc >= 0.0, acc, RRELU_SLOPE * acc)
        return acc

    # --- net1 -----------------------------------------------------------------
    # Conv(1->32,k3,s1,p1)+BN+ReLU (im2col patches for Cin=1 come from the host)
    y1 = jnp.dot(a1_ref[0], w1_ref[...], preferred_element_type=f32)   # [H*W, 32]
    act1 = jnp.maximum(y1, 0.0).astype(bf16)
    # Conv(32->64,k3,s2,p1)+BN+RReLU  (Dropout = identity in eval)
    act2 = conv_taps(act1, s2_ref, w2_ref, "leaky").astype(bf16)       # [H2*W2, 64]

    # --- net2 -----------------------------------------------------------------
    act3 = conv_taps(act2, s3_ref, w3_ref, "leaky").astype(bf16)       # [H3*W3, 128]
    act4 = conv_taps(act3, s4_ref, w4_ref, "relu")                     # [H4*W4, 256] f32

    # --- net3: ReflectionPad2d(2) + Conv(256->1, k5, stride=(4,3)) --------------
    # Cout == 1: keep it off the MXU -- VPU multiply with precomputed f32
    # effective weights, then reduce over (pixels, channels).
    prod = w5e_ref[...] * act4[None, :, :]            # [M5, H4*W4, 256]
    red = jnp.sum(prod, axis=2)                       # [M5, H4*W4]
    o_ref[0] = jnp.sum(red, axis=1, keepdims=True)    # [M5, 1]


# ----------------------------------------------------------------------------
# Host-side constant construction (selection matrices, folded weights)
# ----------------------------------------------------------------------------
def _conv_out(n, k, s, p):
    return (n + 2 * p - k) // s + 1


def _reflect(i, n):
    if i < 0:
        return -i
    if i >= n:
        return 2 * (n - 1) - i
    return i


def _build_selection(hi, wi, kh, kw, sh, sw, pad):
    """Per-tap 0/1 gather matrices: (S[t] @ x_flat)[m] = x[iy, ix] (or 0 if padded)."""
    ho = _conv_out(hi, kh, sh, pad)
    wo = _conv_out(wi, kw, sw, pad)
    s = np.zeros((kh * kw, ho * wo, hi * wi), np.float32)
    for dy in range(kh):
        for dx in range(kw):
            t = dy * kw + dx
            for oy in range(ho):
                for ox in range(wo):
                    iy = oy * sh + dy - pad
                    ix = ox * sw + dx - pad
                    if 0 <= iy < hi and 0 <= ix < wi:
                        s[t, oy * wo + ox, iy * wi + ix] = 1.0
    return s


def _fold_taps(w_torch, gamma):
    """[Cout,Cin,kh,kw] torch weight -> [kh*kw, Cin, Cout] with BN scale folded in."""
    w = np.asarray(w_torch)
    g = np.asarray(gamma)
    cout, cin, kh, kw = w.shape
    scale = g / np.sqrt(1.0 + EPS)            # running stats: mean=0, var=1, beta=0
    taps = np.transpose(w, (2, 3, 1, 0)).reshape(kh * kw, cin, cout)
    return (taps * scale[None, None, :]).astype(np.float32)


def init_raw_params(key):
    """PyTorch-layout params matching __init__ + init_weight_ (N(0, 0.02))."""
    ks = jax.random.split(key, 9)
    std = 0.02

    def conv_w(k, cout, cin, kh, kw):
        return std * jax.random.normal(k, (cout, cin, kh, kw), jnp.float32)

    def bn_gamma(k, c):
        return std * jax.random.normal(k, (c,), jnp.float32)

    return {
        "w1": conv_w(ks[0], 32, 1, 3, 3),    "g1": bn_gamma(ks[1], 32),
        "w2": conv_w(ks[2], 64, 32, 3, 3),   "g2": bn_gamma(ks[3], 64),
        "w3": conv_w(ks[4], 128, 64, 3, 3),  "g3": bn_gamma(ks[5], 128),
        "w4": conv_w(ks[6], 256, 128, 3, 3), "g4": bn_gamma(ks[7], 256),
        "w5": conv_w(ks[8], 1, 256, 5, 5),
    }


def prepare_operands(raw, h, w):
    """Precompute the VMEM-resident constants consumed by the fused kernel."""
    h2, w2 = _conv_out(h, 3, 2, 1), _conv_out(w, 3, 2, 1)      # after layer 2
    h4, w4 = _conv_out(h2, 3, 2, 1), _conv_out(w2, 3, 2, 1)    # after layer 4
    ho5, wo5 = _conv_out(h4, 5, 4, 2), _conv_out(w4, 5, 3, 2)  # after layer 5

    # Layer 1: folded weight [K, 32]; pad K 9 -> 16 for clean bf16 MXU tiles.
    w1_taps = _fold_taps(raw["w1"], raw["g1"]).reshape(9, 32)
    w1p = np.zeros((16, 32), np.float32)
    w1p[:9] = w1_taps

    s2 = _build_selection(h, w, 3, 3, 2, 2, 1)     # [9, H2*W2, H*W]
    s3 = _build_selection(h2, w2, 3, 3, 1, 1, 1)   # [9, H2*W2, H2*W2]
    s4 = _build_selection(h2, w2, 3, 3, 2, 2, 1)   # [9, H4*W4, H2*W2]

    # Layer 5: f32 effective weights folding reflection pad + 5x5 taps.
    w5 = np.asarray(raw["w5"])                     # [1, 256, 5, 5]
    w5eff = np.zeros((ho5 * wo5, h4 * w4, 256), np.float32)
    for oy in range(ho5):
        for ox in range(wo5):
            m = oy * wo5 + ox
            for dy in range(5):
                for dx in range(5):
                    iy = _reflect(oy * 4 + dy - 2, h4)
                    ix = _reflect(ox * 3 + dx - 2, w4)
                    w5eff[m, iy * w4 + ix, :] += w5[0, :, dy, dx]

    bf = jnp.bfloat16
    return {
        "w1": jnp.asarray(w1p, bf),
        "s2": jnp.asarray(s2, bf), "w2": jnp.asarray(_fold_taps(raw["w2"], raw["g2"]), bf),
        "s3": jnp.asarray(s3, bf), "w3": jnp.asarray(_fold_taps(raw["w3"], raw["g3"]), bf),
        "s4": jnp.asarray(s4, bf), "w4": jnp.asarray(_fold_taps(raw["w4"], raw["g4"]), bf),
        "w5eff": jnp.asarray(w5eff, jnp.float32),
    }


# ----------------------------------------------------------------------------
# Forward pass: one fused pallas_call for the whole network
# ----------------------------------------------------------------------------
def discriminator_forward(tensor_in, ops):
    """tensor_in: NCHW [B, 1, H, W] -> NCHW [B, 1, Ho, Wo]."""
    b, _, h, w = tensor_in.shape
    h2, w2 = _conv_out(h, 3, 2, 1), _conv_out(w, 3, 2, 1)
    h4, w4 = _conv_out(h2, 3, 2, 1), _conv_out(w2, 3, 2, 1)
    ho5, wo5 = _conv_out(h4, 5, 4, 2), _conv_out(w4, 5, 3, 2)
    m5 = ho5 * wo5

    # Host-side im2col only for the tiny Cin=1 first layer (K padded 9 -> 16).
    x = tensor_in[:, 0]                                              # [B, H, W]
    xp = jnp.pad(x, ((0, 0), (1, 1), (1, 1)))
    cols = [xp[:, dy:dy + h, dx:dx + w] for dy in range(3) for dx in range(3)]
    a1 = jnp.stack(cols, axis=-1).reshape(b, h * w, 9)
    a1 = jnp.pad(a1, ((0, 0), (0, 0), (0, 7))).astype(jnp.bfloat16)  # [B, H*W, 16]

    def full(arr):
        return pl.BlockSpec(arr.shape, lambda i: (0,) * arr.ndim)

    out = pl.pallas_call(
        _disc_kernel,
        out_shape=jax.ShapeDtypeStruct((b, m5, 1), jnp.float32),
        grid=(b,),
        in_specs=[
            pl.BlockSpec((1, h * w, 16), lambda i: (i, 0, 0)),
            full(ops["w1"]),
            full(ops["s2"]), full(ops["w2"]),
            full(ops["s3"]), full(ops["w3"]),
            full(ops["s4"]), full(ops["w4"]),
            full(ops["w5eff"]),
        ],
        out_specs=pl.BlockSpec((1, m5, 1), lambda i: (i, 0, 0)),
        compiler_params=pltpu.CompilerParams(
            dimension_semantics=("parallel",),
            vmem_limit_bytes=32 * 1024 * 1024,
        ),
    )(a1, ops["w1"], ops["s2"], ops["w2"], ops["s3"], ops["w3"],
      ops["s4"], ops["w4"], ops["w5eff"])

    return out.reshape(b, 1, ho5, wo5)


# ----------------------------------------------------------------------------
# Pure-JAX reference (f32) for correctness checking
# ----------------------------------------------------------------------------
def _reference_forward(x, raw):
    def conv(x, w, stride, pad, reflect=False):
        if reflect:
            x = jnp.pad(x, ((0, 0), (0, 0), (pad, pad), (pad, pad)), mode="reflect")
            pad = 0
        return jax.lax.conv_general_dilated(
            x, w, window_strides=stride, padding=[(pad, pad), (pad, pad)],
            dimension_numbers=("NCHW", "OIHW", "NCHW"),
            precision=jax.lax.Precision.HIGHEST)

    def bn(x, gamma):
        return x * (gamma / jnp.sqrt(1.0 + EPS)).reshape(1, -1, 1, 1)

    x = jnp.maximum(bn(conv(x, raw["w1"], (1, 1), 1), raw["g1"]), 0.0)
    y = bn(conv(x, raw["w2"], (2, 2), 1), raw["g2"])
    x = jnp.where(y >= 0.0, y, RRELU_SLOPE * y)
    y = bn(conv(x, raw["w3"], (1, 1), 1), raw["g3"])
    x = jnp.where(y >= 0.0, y, RRELU_SLOPE * y)
    x = jnp.maximum(bn(conv(x, raw["w4"], (2, 2), 1), raw["g4"]), 0.0)
    return conv(x, raw["w5"], (4, 3), 2, reflect=True)


if __name__ == "__main__":
    key = jax.random.PRNGKey(0)
    k_param, k_in = jax.random.split(key)
    raw = init_raw_params(k_param)

    B, H, W = 2, 16, 16
    tensor_in = jax.random.normal(k_in, (B, 1, H, W), jnp.float32)

    ops = prepare_operands(raw, H, W)

    fwd = jax.jit(discriminator_forward)
    out = jax.block_until_ready(fwd(tensor_in, ops))

    # 16x16 -> s2 -> 8x8 -> s2 -> 4x4 -> reflpad(2) -> 8x8 -> k5,s(4,3) -> 1x2
    assert out.shape == (B, 1, 1, 2), out.shape
    assert bool(jnp.all(jnp.isfinite(out)))

    # Compare against the f32 XLA reference (kernel uses bf16 MXU operands).
    ref = _reference_forward(tensor_in, raw)
    denom = float(jnp.max(jnp.abs(ref))) + 1e-30
    rel = float(jnp.max(jnp.abs(out - ref))) / denom
    assert rel < 0.25, f"mismatch vs reference: {rel}"

    print("KERNEL_OK")
</pallas_src>

<mosaic_0001>
module attributes {stable_mosaic.version = 11 : i64} {
  func.func @_disc_kernel(%arg0: i32, %arg1: memref<1x256x16xbf16, #tpu.memory_space<vmem>>, %arg2: memref<16x32xbf16, #tpu.memory_space<vmem>>, %arg3: memref<9x64x256xbf16, #tpu.memory_space<vmem>>, %arg4: memref<9x32x64xbf16, #tpu.memory_space<vmem>>, %arg5: memref<9x64x64xbf16, #tpu.memory_space<vmem>>, %arg6: memref<9x64x128xbf16, #tpu.memory_space<vmem>>, %arg7: memref<9x16x64xbf16, #tpu.memory_space<vmem>>, %arg8: memref<9x128x256xbf16, #tpu.memory_space<vmem>>, %arg9: memref<2x16x256xf32, #tpu.memory_space<vmem>>, %arg10: memref<1x2x1xf32, #tpu.memory_space<vmem>>) attributes {dimension_semantics = [#tpu.dimension_semantics<parallel>], iteration_bounds = array<i64: 2>, scalar_prefetch = 0 : i64, scratch_operands = 0 : i64, tpu.core_type = #tpu.core_type<tc>, window_params = [{transform_indices = @transform_0, window_bounds = array<i64: 1, 256, 16>}, {pipeline_mode = #tpu.pipeline_mode<synchronous>, transform_indices = @transform_1, window_bounds = array<i64: 16, 32>}, {pipeline_mode = #tpu.pipeline_mode<synchronous>, transform_indices = @transform_2, window_bounds = array<i64: 9, 64, 256>}, {pipeline_mode = #tpu.pipeline_mode<synchronous>, transform_indices = @transform_3, window_bounds = array<i64: 9, 32, 64>}, {pipeline_mode = #tpu.pipeline_mode<synchronous>, transform_indices = @transform_4, window_bounds = array<i64: 9, 64, 64>}, {pipeline_mode = #tpu.pipeline_mode<synchronous>, transform_indices = @transform_5, window_bounds = array<i64: 9, 64, 128>}, {pipeline_mode = #tpu.pipeline_mode<synchronous>, transform_indices = @transform_6, window_bounds = array<i64: 9, 16, 64>}, {pipeline_mode = #tpu.pipeline_mode<synchronous>, transform_indices = @transform_7, window_bounds = array<i64: 9, 128, 256>}, {pipeline_mode = #tpu.pipeline_mode<synchronous>, transform_indices = @transform_8, window_bounds = array<i64: 2, 16, 256>}, {transform_indices = @transform_9, window_bounds = array<i64: 1, 2, 1>}]} {
    %c0 = arith.constant 0 : index
    %c0_0 = arith.constant 0 : index
    %c0_1 = arith.constant 0 : index
    %0 = vector.load %arg1[%c0, %c0_0, %c0_1] : memref<1x256x16xbf16, #tpu.memory_space<vmem>>, vector<1x256x16xbf16>
    %1 = vector.shape_cast %0 : vector<1x256x16xbf16> to vector<256x16xbf16>
    %c0_2 = arith.constant 0 : index
    %c0_3 = arith.constant 0 : index
    %2 = vector.load %arg2[%c0_2, %c0_3] : memref<16x32xbf16, #tpu.memory_space<vmem>>, vector<16x32xbf16>
    %cst = arith.constant dense<0.000000e+00> : vector<256x32xf32>
    %3 = tpu.matmul %1, %2, %cst {dimension_numbers = #tpu.dot_dimension_numbers<[1], [0], [0], [1], [0, 0, 1, 1], [], []>} : vector<256x16xbf16>, vector<16x32xbf16>, vector<256x32xf32> -> vector<256x32xf32>
    %cst_4 = arith.constant 0.000000e+00 : f32
    %4 = vector.broadcast %cst_4 : f32 to vector<256x32xf32>
    %5 = arith.maximumf %3, %4 : vector<256x32xf32>
    %6 = arith.truncf %5 : vector<256x32xf32> to vector<256x32xbf16>
    %c0_5 = arith.constant 0 : index
    %c0_6 = arith.constant 0 : index
    %c0_7 = arith.constant 0 : index
    %7 = vector.load %arg3[%c0_5, %c0_6, %c0_7] : memref<9x64x256xbf16, #tpu.memory_space<vmem>>, vector<1x64x256xbf16>
    %8 = vector.shape_cast %7 : vector<1x64x256xbf16> to vector<64x256xbf16>
    %cst_8 = arith.constant dense<0.000000e+00> : vector<64x32xf32>
    %9 = tpu.matmul %8, %6, %cst_8 {dimension_numbers = #tpu.dot_dimension_numbers<[1], [0], [0], [1], [0, 0, 1, 1], [], []>} : vector<64x256xbf16>, vector<256x32xbf16>, vector<64x32xf32> -> vector<64x32xf32>
    %10 = arith.truncf %9 : vector<64x32xf32> to vector<64x32xbf16>
    %c0_9 = arith.constant 0 : index
    %c0_10 = arith.constant 0 : index
    %c0_11 = arith.constant 0 : index
    %11 = vector.load %arg4[%c0_9, %c0_10, %c0_11] : memref<9x32x64xbf16, #tpu.memory_space<vmem>>, vector<1x32x64xbf16>
    %12 = vector.shape_cast %11 : vector<1x32x64xbf16> to vector<32x64xbf16>
    %cst_12 = arith.constant dense<0.000000e+00> : vector<64x64xf32>
    %13 = tpu.matmul %10, %12, %cst_12 {dimension_numbers = #tpu.dot_dimension_numbers<[1], [0], [0], [1], [0, 0, 1, 1], [], []>} : vector<64x32xbf16>, vector<32x64xbf16>, vector<64x64xf32> -> vector<64x64xf32>
    %c1 = arith.constant 1 : index
    %c0_13 = arith.constant 0 : index
    %c0_14 = arith.constant 0 : index
    %14 = vector.load %arg3[%c1, %c0_13, %c0_14] : memref<9x64x256xbf16, #tpu.memory_space<vmem>>, vector<1x64x256xbf16>
    %15 = vector.shape_cast %14 : vector<1x64x256xbf16> to vector<64x256xbf16>
    %cst_15 = arith.constant dense<0.000000e+00> : vector<64x32xf32>
    %16 = tpu.matmul %15, %6, %cst_15 {dimension_numbers = #tpu.dot_dimension_numbers<[1], [0], [0], [1], [0, 0, 1, 1], [], []>} : vector<64x256xbf16>, vector<256x32xbf16>, vector<64x32xf32> -> vector<64x32xf32>
    %17 = arith.truncf %16 : vector<64x32xf32> to vector<64x32xbf16>
    %c1_16 = arith.constant 1 : index
    %c0_17 = arith.constant 0 : index
    %c0_18 = arith.constant 0 : index
    %18 = vector.load %arg4[%c1_16, %c0_17, %c0_18] : memref<9x32x64xbf16, #tpu.memory_space<vmem>>, vector<1x32x64xbf16>
    %19 = vector.shape_cast %18 : vector<1x32x64xbf16> to vector<32x64xbf16>
    %cst_19 = arith.constant dense<0.000000e+00> : vector<64x64xf32>
    %20 = tpu.matmul %17, %19, %cst_19 {dimension_numbers = #tpu.dot_dimension_numbers<[1], [0], [0], [1], [0, 0, 1, 1], [], []>} : vector<64x32xbf16>, vector<32x64xbf16>, vector<64x64xf32> -> vector<64x64xf32>
    %21 = arith.addf %13, %20 : vector<64x64xf32>
    %c2 = arith.constant 2 : index
    %c0_20 = arith.constant 0 : index
    %c0_21 = arith.constant 0 : index
    %22 = vector.load %arg3[%c2, %c0_20, %c0_21] : memref<9x64x256xbf16, #tpu.memory_space<vmem>>, vector<1x64x256xbf16>
    %23 = vector.shape_cast %22 : vector<1x64x256xbf16> to vector<64x256xbf16>
    %cst_22 = arith.constant dense<0.000000e+00> : vector<64x32xf32>
    %24 = tpu.matmul %23, %6, %cst_22 {dimension_numbers = #tpu.dot_dimension_numbers<[1], [0], [0], [1], [0, 0, 1, 1], [], []>} : vector<64x256xbf16>, vector<256x32xbf16>, vector<64x32xf32> -> vector<64x32xf32>
    %25 = arith.truncf %24 : vector<64x32xf32> to vector<64x32xbf16>
    %c2_23 = arith.constant 2 : index
    %c0_24 = arith.constant 0 : index
    %c0_25 = arith.constant 0 : index
    %26 = vector.load %arg4[%c2_23, %c0_24, %c0_25] : memref<9x32x64xbf16, #tpu.memory_space<vmem>>, vector<1x32x64xbf16>
    %27 = vector.shape_cast %26 : vector<1x32x64xbf16> to vector<32x64xbf16>
    %cst_26 = arith.constant dense<0.000000e+00> : vector<64x64xf32>
    %28 = tpu.matmul %25, %27, %cst_26 {dimension_numbers = #tpu.dot_dimension_numbers<[1], [0], [0], [1], [0, 0, 1, 1], [], []>} : vector<64x32xbf16>, vector<32x64xbf16>, vector<64x64xf32> -> vector<64x64xf32>
    %29 = arith.addf %21, %28 : vector<64x64xf32>
    %c3 = arith.constant 3 : index
    %c0_27 = arith.constant 0 : index
    %c0_28 = arith.constant 0 : index
    %30 = vector.load %arg3[%c3, %c0_27, %c0_28] : memref<9x64x256xbf16, #tpu.memory_space<vmem>>, vector<1x64x256xbf16>
    %31 = vector.shape_cast %30 : vector<1x64x256xbf16> to vector<64x256xbf16>
    %cst_29 = arith.constant dense<0.000000e+00> : vector<64x32xf32>
    %32 = tpu.matmul %31, %6, %cst_29 {dimension_numbers = #tpu.dot_dimension_numbers<[1], [0], [0], [1], [0, 0, 1, 1], [], []>} : vector<64x256xbf16>, vector<256x32xbf16>, vector<64x32xf32> -> vector<64x32xf32>
    %33 = arith.truncf %32 : vector<64x32xf32> to vector<64x32xbf16>
    %c3_30 = arith.constant 3 : index
    %c0_31 = arith.constant 0 : index
    %c0_32 = arith.constant 0 : index
    %34 = vector.load %arg4[%c3_30, %c0_31, %c0_32] : memref<9x32x64xbf16, #tpu.memory_space<vmem>>, vector<1x32x64xbf16>
    %35 = vector.shape_cast %34 : vector<1x32x64xbf16> to vector<32x64xbf16>
    %cst_33 = arith.constant dense<0.000000e+00> : vector<64x64xf32>
    %36 = tpu.matmul %33, %35, %cst_33 {dimension_numbers = #tpu.dot_dimension_numbers<[1], [0], [0], [1], [0, 0, 1, 1], [], []>} : vector<64x32xbf16>, vector<32x64xbf16>, vector<64x64xf32> -> vector<64x64xf32>
    %37 = arith.addf %29, %36 : vector<64x64xf32>
    %c4 = arith.constant 4 : index
    %c0_34 = arith.constant 0 : index
    %c0_35 = arith.constant 0 : index
    %38 = vector.load %arg3[%c4, %c0_34, %c0_35] : memref<9x64x256xbf16, #tpu.memory_space<vmem>>, vector<1x64x256xbf16>
    %39 = vector.shape_cast %38 : vector<1x64x256xbf16> to vector<64x256xbf16>
    %cst_36 = arith.constant dense<0.000000e+00> : vector<64x32xf32>
    %40 = tpu.matmul %39, %6, %cst_36 {dimension_numbers = #tpu.dot_dimension_numbers<[1], [0], [0], [1], [0, 0, 1, 1], [], []>} : vector<64x256xbf16>, vector<256x32xbf16>, vector<64x32xf32> -> vector<64x32xf32>
    %41 = arith.truncf %40 : vector<64x32xf32> to vector<64x32xbf16>
    %c4_37 = arith.constant 4 : index
    %c0_38 = arith.constant 0 : index
    %c0_39 = arith.constant 0 : index
    %42 = vector.load %arg4[%c4_37, %c0_38, %c0_39] : memref<9x32x64xbf16, #tpu.memory_space<vmem>>, vector<1x32x64xbf16>
    %43 = vector.shape_cast %42 : vector<1x32x64xbf16> to vector<32x64xbf16>
    %cst_40 = arith.constant dense<0.000000e+00> : vector<64x64xf32>
    %44 = tpu.matmul %41, %43, %cst_40 {dimension_numbers = #tpu.dot_dimension_numbers<[1], [0], [0], [1], [0, 0, 1, 1], [], []>} : vector<64x32xbf16>, vector<32x64xbf16>, vector<64x64xf32> -> vector<64x64xf32>
    %45 = arith.addf %37, %44 : vector<64x64xf32>
    %c5 = arith.constant 5 : index
    %c0_41 = arith.constant 0 : index
    %c0_42 = arith.constant 0 : index
    %46 = vector.load %arg3[%c5, %c0_41, %c0_42] : memref<9x64x256xbf16, #tpu.memory_space<vmem>>, vector<1x64x256xbf16>
    %47 = vector.shape_cast %46 : vector<1x64x256xbf16> to vector<64x256xbf16>
    %cst_43 = arith.constant dense<0.000000e+00> : vector<64x32xf32>
    %48 = tpu.matmul %47, %6, %cst_43 {dimension_numbers = #tpu.dot_dimension_numbers<[1], [0], [0], [1], [0, 0, 1, 1], [], []>} : vector<64x256xbf16>, vector<256x32xbf16>, vector<64x32xf32> -> vector<64x32xf32>
    %49 = arith.truncf %48 : vector<64x32xf32> to vector<64x32xbf16>
    %c5_44 = arith.constant 5 : index
    %c0_45 = arith.constant 0 : index
    %c0_46 = arith.constant 0 : index
    %50 = vector.load %arg4[%c5_44, %c0_45, %c0_46] : memref<9x32x64xbf16, #tpu.memory_space<vmem>>, vector<1x32x64xbf16>
    %51 = vector.shape_cast %50 : vector<1x32x64xbf16> to vector<32x64xbf16>
    %cst_47 = arith.constant dense<0.000000e+00> : vector<64x64xf32>
    %52 = tpu.matmul %49, %51, %cst_47 {dimension_numbers = #tpu.dot_dimension_numbers<[1], [0], [0], [1], [0, 0, 1, 1], [], []>} : vector<64x32xbf16>, vector<32x64xbf16>, vector<64x64xf32> -> vector<64x64xf32>
    %53 = arith.addf %45, %52 : vector<64x64xf32>
    %c6 = arith.constant 6 : index
    %c0_48 = arith.constant 0 : index
    %c0_49 = arith.constant 0 : index
    %54 = vector.load %arg3[%c6, %c0_48, %c0_49] : memref<9x64x256xbf16, #tpu.memory_space<vmem>>, vector<1x64x256xbf16>
    %55 = vector.shape_cast %54 : vector<1x64x256xbf16> to vector<64x256xbf16>
    %cst_50 = arith.constant dense<0.000000e+00> : vector<64x32xf32>
    %56 = tpu.matmul %55, %6, %cst_50 {dimension_numbers = #tpu.dot_dimension_numbers<[1], [0], [0], [1], [0, 0, 1, 1], [], []>} : vector<64x256xbf16>, vector<256x32xbf16>, vector<64x32xf32> -> vector<64x32xf32>
    %57 = arith.truncf %56 : vector<64x32xf32> to vector<64x32xbf16>
    %c6_51 = arith.constant 6 : index
    %c0_52 = arith.constant 0 : index
    %c0_53 = arith.constant 0 : index
    %58 = vector.load %arg4[%c6_51, %c0_52, %c0_53] : memref<9x32x64xbf16, #tpu.memory_space<vmem>>, vector<1x32x64xbf16>
    %59 = vector.shape_cast %58 : vector<1x32x64xbf16> to vector<32x64xbf16>
    %cst_54 = arith.constant dense<0.000000e+00> : vector<64x64xf32>
    %60 = tpu.matmul %57, %59, %cst_54 {dimension_numbers = #tpu.dot_dimension_numbers<[1], [0], [0], [1], [0, 0, 1, 1], [], []>} : vector<64x32xbf16>, vector<32x64xbf16>, vector<64x64xf32> -> vector<64x64xf32>
    %61 = arith.addf %53, %60 : vector<64x64xf32>
    %c7 = arith.constant 7 : index
    %c0_55 = arith.constant 0 : index
    %c0_56 = arith.constant 0 : index
    %62 = vector.load %arg3[%c7, %c0_55, %c0_56] : memref<9x64x256xbf16, #tpu.memory_space<vmem>>, vector<1x64x256xbf16>
    %63 = vector.shape_cast %62 : vector<1x64x256xbf16> to vector<64x256xbf16>
    %cst_57 = arith.constant dense<0.000000e+00> : vector<64x32xf32>
    %64 = tpu.matmul %63, %6, %cst_57 {dimension_numbers = #tpu.dot_dimension_numbers<[1], [0], [0], [1], [0, 0, 1, 1], [], []>} : vector<64x256xbf16>, vector<256x32xbf16>, vector<64x32xf32> -> vector<64x32xf32>
    %65 = arith.truncf %64 : vector<64x32xf32> to vector<64x32xbf16>
    %c7_58 = arith.constant 7 : index
    %c0_59 = arith.constant 0 : index
    %c0_60 = arith.constant 0 : index
    %66 = vector.load %arg4[%c7_58, %c0_59, %c0_60] : memref<9x32x64xbf16, #tpu.memory_space<vmem>>, vector<1x32x64xbf16>
    %67 = vector.shape_cast %66 : vector<1x32x64xbf16> to vector<32x64xbf16>
    %cst_61 = arith.constant dense<0.000000e+00> : vector<64x64xf32>
    %68 = tpu.matmul %65, %67, %cst_61 {dimension_numbers = #tpu.dot_dimension_numbers<[1], [0], [0], [1], [0, 0, 1, 1], [], []>} : vector<64x32xbf16>, vector<32x64xbf16>, vector<64x64xf32> -> vector<64x64xf32>
    %69 = arith.addf %61, %68 : vector<64x64xf32>
    %c8 = arith.constant 8 : index
    %c0_62 = arith.constant 0 : index
    %c0_63 = arith.constant 0 : index
    %70 = vector.load %arg3[%c8, %c0_62, %c0_63] : memref<9x64x256xbf16, #tpu.memory_space<vmem>>, vector<1x64x256xbf16>
    %71 = vector.shape_cast %70 : vector<1x64x256xbf16> to vector<64x256xbf16>
    %cst_64 = arith.constant dense<0.000000e+00> : vector<64x32xf32>
    %72 = tpu.matmul %71, %6, %cst_64 {dimension_numbers = #tpu.dot_dimension_numbers<[1], [0], [0], [1], [0, 0, 1, 1], [], []>} : vector<64x256xbf16>, vector<256x32xbf16>, vector<64x32xf32> -> vector<64x32xf32>
    %73 = arith.truncf %72 : vector<64x32xf32> to vector<64x32xbf16>
    %c8_65 = arith.constant 8 : index
    %c0_66 = arith.constant 0 : index
    %c0_67 = arith.constant 0 : index
    %74 = vector.load %arg4[%c8_65, %c0_66, %c0_67] : memref<9x32x64xbf16, #tpu.memory_space<vmem>>, vector<1x32x64xbf16>
    %75 = vector.shape_cast %74 : vector<1x32x64xbf16> to vector<32x64xbf16>
    %cst_68 = arith.constant dense<0.000000e+00> : vector<64x64xf32>
    %76 = tpu.matmul %73, %75, %cst_68 {dimension_numbers = #tpu.dot_dimension_numbers<[1], [0], [0], [1], [0, 0, 1, 1], [], []>} : vector<64x32xbf16>, vector<32x64xbf16>, vector<64x64xf32> -> vector<64x64xf32>
    %77 = arith.addf %69, %76 : vector<64x64xf32>
    %cst_69 = arith.constant 0.000000e+00 : f32
    %78 = vector.broadcast %cst_69 : f32 to vector<64x64xf32>
    %79 = arith.cmpf oge, %77, %78 : vector<64x64xf32>
    %cst_70 = arith.constant 1.500000e-01 : f32
    %80 = vector.broadcast %cst_70 : f32 to vector<64x64xf32>
    %81 = arith.mulf %80, %77 : vector<64x64xf32>
    %82 = arith.select %79, %77, %81 : vector<64x64xi1>, vector<64x64xf32>
    %83 = arith.truncf %82 : vector<64x64xf32> to vector<64x64xbf16>
    %c0_71 = arith.constant 0 : index
    %c0_72 = arith.constant 0 : index
    %c0_73 = arith.constant 0 : index
    %84 = vector.load %arg5[%c0_71, %c0_72, %c0_73] : memref<9x64x64xbf16, #tpu.memory_space<vmem>>, vector<1x64x64xbf16>
    %85 = vector.shape_cast %84 : vector<1x64x64xbf16> to vector<64x64xbf16>
    %cst_74 = arith.constant dense<0.000000e+00> : vector<64x64xf32>
    %86 = tpu.matmul %85, %83, %cst_74 {dimension_numbers = #tpu.dot_dimension_numbers<[1], [0], [0], [1], [0, 0, 1, 1], [], []>} : vector<64x64xbf16>, vector<64x64xbf16>, vector<64x64xf32> -> vector<64x64xf32>
    %87 = arith.truncf %86 : vector<64x64xf32> to vector<64x64xbf16>
    %c0_75 = arith.constant 0 : index
    %c0_76 = arith.constant 0 : index
    %c0_77 = arith.constant 0 : index
    %88 = vector.load %arg6[%c0_75, %c0_76, %c0_77] : memref<9x64x128xbf16, #tpu.memory_space<vmem>>, vector<1x64x128xbf16>
    %89 = vector.shape_cast %88 : vector<1x64x128xbf16> to vector<64x128xbf16>
    %cst_78 = arith.constant dense<0.000000e+00> : vector<64x128xf32>
    %90 = tpu.matmul %87, %89, %cst_78 {dimension_numbers = #tpu.dot_dimension_numbers<[1], [0], [0], [1], [0, 0, 1, 1], [], []>} : vector<64x64xbf16>, vector<64x128xbf16>, vector<64x128xf32> -> vector<64x128xf32>
    %c1_79 = arith.constant 1 : index
    %c0_80 = arith.constant 0 : index
    %c0_81 = arith.constant 0 : index
    %91 = vector.load %arg5[%c1_79, %c0_80, %c0_81] : memref<9x64x64xbf16, #tpu.memory_space<vmem>>, vector<1x64x64xbf16>
    %92 = vector.shape_cast %91 : vector<1x64x64xbf16> to vector<64x64xbf16>
    %cst_82 = arith.constant dense<0.000000e+00> : vector<64x64xf32>
    %93 = tpu.matmul %92, %83, %cst_82 {dimension_numbers = #tpu.dot_dimension_numbers<[1], [0], [0], [1], [0, 0, 1, 1], [], []>} : vector<64x64xbf16>, vector<64x64xbf16>, vector<64x64xf32> -> vector<64x64xf32>
    %94 = arith.truncf %93 : vector<64x64xf32> to vector<64x64xbf16>
    %c1_83 = arith.constant 1 : index
    %c0_84 = arith.constant 0 : index
    %c0_85 = arith.constant 0 : index
    %95 = vector.load %arg6[%c1_83, %c0_84, %c0_85] : memref<9x64x128xbf16, #tpu.memory_space<vmem>>, vector<1x64x128xbf16>
    %96 = vector.shape_cast %95 : vector<1x64x128xbf16> to vector<64x128xbf16>
    %cst_86 = arith.constant dense<0.000000e+00> : vector<64x128xf32>
    %97 = tpu.matmul %94, %96, %cst_86 {dimension_numbers = #tpu.dot_dimension_numbers<[1], [0], [0], [1], [0, 0, 1, 1], [], []>} : vector<64x64xbf16>, vector<64x128xbf16>, vector<64x128xf32> -> vector<64x128xf32>
    %98 = arith.addf %90, %97 : vector<64x128xf32>
    %c2_87 = arith.constant 2 : index
    %c0_88 = arith.constant 0 : index
    %c0_89 = arith.constant 0 : index
    %99 = vector.load %arg5[%c2_87, %c0_88, %c0_89] : memref<9x64x64xbf16, #tpu.memory_space<vmem>>, vector<1x64x64xbf16>
    %100 = vector.shape_cast %99 : vector<1x64x64xbf16> to vector<64x64xbf16>
    %cst_90 = arith.constant dense<0.000000e+00> : vector<64x64xf32>
    %101 = tpu.matmul %100, %83, %cst_90 {dimension_numbers = #tpu.dot_dimension_numbers<[1], [0], [0], [1], [0, 0, 1, 1], [], []>} : vector<64x64xbf16>, vector<64x64xbf16>, vector<64x64xf32> -> vector<64x64xf32>
    %102 = arith.truncf %101 : vector<64x64xf32> to vector<64x64xbf16>
    %c2_91 = arith.constant 2 : index
    %c0_92 = arith.constant 0 : index
    %c0_93 = arith.constant 0 : index
    %103 = vector.load %arg6[%c2_91, %c0_92, %c0_93] : memref<9x64x128xbf16, #tpu.memory_space<vmem>>, vector<1x64x128xbf16>
    %104 = vector.shape_cast %103 : vector<1x64x128xbf16> to vector<64x128xbf16>
    %cst_94 = arith.constant dense<0.000000e+00> : vector<64x128xf32>
    %105 = tpu.matmul %102, %104, %cst_94 {dimension_numbers = #tpu.dot_dimension_numbers<[1], [0], [0], [1], [0, 0, 1, 1], [], []>} : vector<64x64xbf16>, vector<64x128xbf16>, vector<64x128xf32> -> vector<64x128xf32>
    %106 = arith.addf %98, %105 : vector<64x128xf32>
    %c3_95 = arith.constant 3 : index
    %c0_96 = arith.constant 0 : index
    %c0_97 = arith.constant 0 : index
    %107 = vector.load %arg5[%c3_95, %c0_96, %c0_97] : memref<9x64x64xbf16, #tpu.memory_space<vmem>>, vector<1x64x64xbf16>
    %108 = vector.shape_cast %107 : vector<1x64x64xbf16> to vector<64x64xbf16>
    %cst_98 = arith.constant dense<0.000000e+00> : vector<64x64xf32>
    %109 = tpu.matmul %108, %83, %cst_98 {dimension_numbers = #tpu.dot_dimension_numbers<[1], [0], [0], [1], [0, 0, 1, 1], [], []>} : vector<64x64xbf16>, vector<64x64xbf16>, vector<64x64xf32> -> vector<64x64xf32>
    %110 = arith.truncf %109 : vector<64x64xf32> to vector<64x64xbf16>
    %c3_99 = arith.constant 3 : index
    %c0_100 = arith.constant 0 : index
    %c0_101 = arith.constant 0 : index
    %111 = vector.load %arg6[%c3_99, %c0_100, %c0_101] : memref<9x64x128xbf16, #tpu.memory_space<vmem>>, vector<1x64x128xbf16>
    %112 = vector.shape_cast %111 : vector<1x64x128xbf16> to vector<64x128xbf16>
    %cst_102 = arith.constant dense<0.000000e+00> : vector<64x128xf32>
    %113 = tpu.matmul %110, %112, %cst_102 {dimension_numbers = #tpu.dot_dimension_numbers<[1], [0], [0], [1], [0, 0, 1, 1], [], []>} : vector<64x64xbf16>, vector<64x128xbf16>, vector<64x128xf32> -> vector<64x128xf32>
    %114 = arith.addf %106, %113 : vector<64x128xf32>
    %c4_103 = arith.constant 4 : index
    %c0_104 = arith.constant 0 : index
    %c0_105 = arith.constant 0 : index
    %115 = vector.load %arg5[%c4_103, %c0_104, %c0_105] : memref<9x64x64xbf16, #tpu.memory_space<vmem>>, vector<1x64x64xbf16>
    %116 = vector.shape_cast %115 : vector<1x64x64xbf16> to vector<64x64xbf16>
    %cst_106 = arith.constant dense<0.000000e+00> : vector<64x64xf32>
    %117 = tpu.matmul %116, %83, %cst_106 {dimension_numbers = #tpu.dot_dimension_numbers<[1], [0], [0], [1], [0, 0, 1, 1], [], []>} : vector<64x64xbf16>, vector<64x64xbf16>, vector<64x64xf32> -> vector<64x64xf32>
    %118 = arith.truncf %117 : vector<64x64xf32> to vector<64x64xbf16>
    %c4_107 = arith.constant 4 : index
    %c0_108 = arith.constant 0 : index
    %c0_109 = arith.constant 0 : index
    %119 = vector.load %arg6[%c4_107, %c0_108, %c0_109] : memref<9x64x128xbf16, #tpu.memory_space<vmem>>, vector<1x64x128xbf16>
    %120 = vector.shape_cast %119 : vector<1x64x128xbf16> to vector<64x128xbf16>
    %cst_110 = arith.constant dense<0.000000e+00> : vector<64x128xf32>
    %121 = tpu.matmul %118, %120, %cst_110 {dimension_numbers = #tpu.dot_dimension_numbers<[1], [0], [0], [1], [0, 0, 1, 1], [], []>} : vector<64x64xbf16>, vector<64x128xbf16>, vector<64x128xf32> -> vector<64x128xf32>
    %122 = arith.addf %114, %121 : vector<64x128xf32>
    %c5_111 = arith.constant 5 : index
    %c0_112 = arith.constant 0 : index
    %c0_113 = arith.constant 0 : index
    %123 = vector.load %arg5[%c5_111, %c0_112, %c0_113] : memref<9x64x64xbf16, #tpu.memory_space<vmem>>, vector<1x64x64xbf16>
    %124 = vector.shape_cast %123 : vector<1x64x64xbf16> to vector<64x64xbf16>
    %cst_114 = arith.constant dense<0.000000e+00> : vector<64x64xf32>
    %125 = tpu.matmul %124, %83, %cst_114 {dimension_numbers = #tpu.dot_dimension_numbers<[1], [0], [0], [1], [0, 0, 1, 1], [], []>} : vector<64x64xbf16>, vector<64x64xbf16>, vector<64x64xf32> -> vector<64x64xf32>
    %126 = arith.truncf %125 : vector<64x64xf32> to vector<64x64xbf16>
    %c5_115 = arith.constant 5 : index
    %c0_116 = arith.constant 0 : index
    %c0_117 = arith.constant 0 : index
    %127 = vector.load %arg6[%c5_115, %c0_116, %c0_117] : memref<9x64x128xbf16, #tpu.memory_space<vmem>>, vector<1x64x128xbf16>
    %128 = vector.shape_cast %127 : vector<1x64x128xbf16> to vector<64x128xbf16>
    %cst_118 = arith.constant dense<0.000000e+00> : vector<64x128xf32>
    %129 = tpu.matmul %126, %128, %cst_118 {dimension_numbers = #tpu.dot_dimension_numbers<[1], [0], [0], [1], [0, 0, 1, 1], [], []>} : vector<64x64xbf16>, vector<64x128xbf16>, vector<64x128xf32> -> vector<64x128xf32>
    %130 = arith.addf %122, %129 : vector<64x128xf32>
    %c6_119 = arith.constant 6 : index
    %c0_120 = arith.constant 0 : index
    %c0_121 = arith.constant 0 : index
    %131 = vector.load %arg5[%c6_119, %c0_120, %c0_121] : memref<9x64x64xbf16, #tpu.memory_space<vmem>>, vector<1x64x64xbf16>
    %132 = vector.shape_cast %131 : vector<1x64x64xbf16> to vector<64x64xbf16>
    %cst_122 = arith.constant dense<0.000000e+00> : vector<64x64xf32>
    %133 = tpu.matmul %132, %83, %cst_122 {dimension_numbers = #tpu.dot_dimension_numbers<[1], [0], [0], [1], [0, 0, 1, 1], [], []>} : vector<64x64xbf16>, vector<64x64xbf16>, vector<64x64xf32> -> vector<64x64xf32>
    %134 = arith.truncf %133 : vector<64x64xf32> to vector<64x64xbf16>
    %c6_123 = arith.constant 6 : index
    %c0_124 = arith.constant 0 : index
    %c0_125 = arith.constant 0 : index
    %135 = vector.load %arg6[%c6_123, %c0_124, %c0_125] : memref<9x64x128xbf16, #tpu.memory_space<vmem>>, vector<1x64x128xbf16>
    %136 = vector.shape_cast %135 : vector<1x64x128xbf16> to vector<64x128xbf16>
    %cst_126 = arith.constant dense<0.000000e+00> : vector<64x128xf32>
    %137 = tpu.matmul %134, %136, %cst_126 {dimension_numbers = #tpu.dot_dimension_numbers<[1], [0], [0], [1], [0, 0, 1, 1], [], []>} : vector<64x64xbf16>, vector<64x128xbf16>, vector<64x128xf32> -> vector<64x128xf32>
    %138 = arith.addf %130, %137 : vector<64x128xf32>
    %c7_127 = arith.constant 7 : index
    %c0_128 = arith.constant 0 : index
    %c0_129 = arith.constant 0 : index
    %139 = vector.load %arg5[%c7_127, %c0_128, %c0_129] : memref<9x64x64xbf16, #tpu.memory_space<vmem>>, vector<1x64x64xbf16>
    %140 = vector.shape_cast %139 : vector<1x64x64xbf16> to vector<64x64xbf16>
    %cst_130 = arith.constant dense<0.000000e+00> : vector<64x64xf32>
    %141 = tpu.matmul %140, %83, %cst_130 {dimension_numbers = #tpu.dot_dimension_numbers<[1], [0], [0], [1], [0, 0, 1, 1], [], []>} : vector<64x64xbf16>, vector<64x64xbf16>, vector<64x64xf32> -> vector<64x64xf32>
    %142 = arith.truncf %141 : vector<64x64xf32> to vector<64x64xbf16>
    %c7_131 = arith.constant 7 : index
    %c0_132 = arith.constant 0 : index
    %c0_133 = arith.constant 0 : index
    %143 = vector.load %arg6[%c7_131, %c0_132, %c0_133] : memref<9x64x128xbf16, #tpu.memory_space<vmem>>, vector<1x64x128xbf16>
    %144 = vector.shape_cast %143 : vector<1x64x128xbf16> to vector<64x128xbf16>
    %cst_134 = arith.constant dense<0.000000e+00> : vector<64x128xf32>
    %145 = tpu.matmul %142, %144, %cst_134 {dimension_numbers = #tpu.dot_dimension_numbers<[1], [0], [0], [1], [0, 0, 1, 1], [], []>} : vector<64x64xbf16>, vector<64x128xbf16>, vector<64x128xf32> -> vector<64x128xf32>
    %146 = arith.addf %138, %145 : vector<64x128xf32>
    %c8_135 = arith.constant 8 : index
    %c0_136 = arith.constant 0 : index
    %c0_137 = arith.constant 0 : index
    %147 = vector.load %arg5[%c8_135, %c0_136, %c0_137] : memref<9x64x64xbf16, #tpu.memory_space<vmem>>, vector<1x64x64xbf16>
    %148 = vector.shape_cast %147 : vector<1x64x64xbf16> to vector<64x64xbf16>
    %cst_138 = arith.constant dense<0.000000e+00> : vector<64x64xf32>
    %149 = tpu.matmul %148, %83, %cst_138 {dimension_numbers = #tpu.dot_dimension_numbers<[1], [0], [0], [1], [0, 0, 1, 1], [], []>} : vector<64x64xbf16>, vector<64x64xbf16>, vector<64x64xf32> -> vector<64x64xf32>
    %150 = arith.truncf %149 : vector<64x64xf32> to vector<64x64xbf16>
    %c8_139 = arith.constant 8 : index
    %c0_140 = arith.constant 0 : index
    %c0_141 = arith.constant 0 : index
    %151 = vector.load %arg6[%c8_139, %c0_140, %c0_141] : memref<9x64x128xbf16, #tpu.memory_space<vmem>>, vector<1x64x128xbf16>
    %152 = vector.shape_cast %151 : vector<1x64x128xbf16> to vector<64x128xbf16>
    %cst_142 = arith.constant dense<0.000000e+00> : vector<64x128xf32>
    %153 = tpu.matmul %150, %152, %cst_142 {dimension_numbers = #tpu.dot_dimension_numbers<[1], [0], [0], [1], [0, 0, 1, 1], [], []>} : vector<64x64xbf16>, vector<64x128xbf16>, vector<64x128xf32> -> vector<64x128xf32>
    %154 = arith.addf %146, %153 : vector<64x128xf32>
    %cst_143 = arith.constant 0.000000e+00 : f32
    %155 = vector.broadcast %cst_143 : f32 to vector<64x128xf32>
    %156 = arith.cmpf oge, %154, %155 : vector<64x128xf32>
    %cst_144 = arith.constant 1.500000e-01 : f32
    %157 = vector.broadcast %cst_144 : f32 to vector<64x128xf32>
    %158 = arith.mulf %157, %154 : vector<64x128xf32>
    %159 = arith.select %156, %154, %158 : vector<64x128xi1>, vector<64x128xf32>
    %160 = arith.truncf %159 : vector<64x128xf32> to vector<64x128xbf16>
    %c0_145 = arith.constant 0 : index
    %c0_146 = arith.constant 0 : index
    %c0_147 = arith.constant 0 : index
    %161 = vector.load %arg7[%c0_145, %c0_146, %c0_147] : memref<9x16x64xbf16, #tpu.memory_space<vmem>>, vector<1x16x64xbf16>
    %162 = vector.shape_cast %161 : vector<1x16x64xbf16> to vector<16x64xbf16>
    %cst_148 = arith.constant dense<0.000000e+00> : vector<16x128xf32>
    %163 = tpu.matmul %162, %160, %cst_148 {dimension_numbers = #tpu.dot_dimension_numbers<[1], [0], [0], [1], [0, 0, 1, 1], [], []>} : vector<16x64xbf16>, vector<64x128xbf16>, vector<16x128xf32> -> vector<16x128xf32>
    %164 = arith.truncf %163 : vector<16x128xf32> to vector<16x128xbf16>
    %c0_149 = arith.constant 0 : index
    %c0_150 = arith.constant 0 : index
    %c0_151 = arith.constant 0 : index
    %165 = vector.load %arg8[%c0_149, %c0_150, %c0_151] : memref<9x128x256xbf16, #tpu.memory_space<vmem>>, vector<1x128x256xbf16>
    %166 = vector.shape_cast %165 : vector<1x128x256xbf16> to vector<128x256xbf16>
    %cst_152 = arith.constant dense<0.000000e+00> : vector<16x256xf32>
    %167 = tpu.matmul %164, %166, %cst_152 {dimension_numbers = #tpu.dot_dimension_numbers<[1], [0], [0], [1], [0, 0, 1, 1], [], []>} : vector<16x128xbf16>, vector<128x256xbf16>, vector<16x256xf32> -> vector<16x256xf32>
    %c1_153 = arith.constant 1 : index
    %c0_154 = arith.constant 0 : index
    %c0_155 = arith.constant 0 : index
    %168 = vector.load %arg7[%c1_153, %c0_154, %c0_155] : memref<9x16x64xbf16, #tpu.memory_space<vmem>>, vector<1x16x64xbf16>
    %169 = vector.shape_cast %168 : vector<1x16x64xbf16> to vector<16x64xbf16>
    %cst_156 = arith.constant dense<0.000000e+00> : vector<16x128xf32>
    %170 = tpu.matmul %169, %160, %cst_156 {dimension_numbers = #tpu.dot_dimension_numbers<[1], [0], [0], [1], [0, 0, 1, 1], [], []>} : vector<16x64xbf16>, vector<64x128xbf16>, vector<16x128xf32> -> vector<16x128xf32>
    %171 = arith.truncf %170 : vector<16x128xf32> to vector<16x128xbf16>
    %c1_157 = arith.constant 1 : index
    %c0_158 = arith.constant 0 : index
    %c0_159 = arith.constant 0 : index
    %172 = vector.load %arg8[%c1_157, %c0_158, %c0_159] : memref<9x128x256xbf16, #tpu.memory_space<vmem>>, vector<1x128x256xbf16>
    %173 = vector.shape_cast %172 : vector<1x128x256xbf16> to vector<128x256xbf16>
    %cst_160 = arith.constant dense<0.000000e+00> : vector<16x256xf32>
    %174 = tpu.matmul %171, %173, %cst_160 {dimension_numbers = #tpu.dot_dimension_numbers<[1], [0], [0], [1], [0, 0, 1, 1], [], []>} : vector<16x128xbf16>, vector<128x256xbf16>, vector<16x256xf32> -> vector<16x256xf32>
    %175 = arith.addf %167, %174 : vector<16x256xf32>
    %c2_161 = arith.constant 2 : index
    %c0_162 = arith.constant 0 : index
    %c0_163 = arith.constant 0 : index
    %176 = vector.load %arg7[%c2_161, %c0_162, %c0_163] : memref<9x16x64xbf16, #tpu.memory_space<vmem>>, vector<1x16x64xbf16>
    %177 = vector.shape_cast %176 : vector<1x16x64xbf16> to vector<16x64xbf16>
    %cst_164 = arith.constant dense<0.000000e+00> : vector<16x128xf32>
    %178 = tpu.matmul %177, %160, %cst_164 {dimension_numbers = #tpu.dot_dimension_numbers<[1], [0], [0], [1], [0, 0, 1, 1], [], []>} : vector<16x64xbf16>, vector<64x128xbf16>, vector<16x128xf32> -> vector<16x128xf32>
    %179 = arith.truncf %178 : vector<16x128xf32> to vector<16x128xbf16>
    %c2_165 = arith.constant 2 : index
    %c0_166 = arith.constant 0 : index
    %c0_167 = arith.constant 0 : index
    %180 = vector.load %arg8[%c2_165, %c0_166, %c0_167] : memref<9x128x256xbf16, #tpu.memory_space<vmem>>, vector<1x128x256xbf16>
    %181 = vector.shape_cast %180 : vector<1x128x256xbf16> to vector<128x256xbf16>
    %cst_168 = arith.constant dense<0.000000e+00> : vector<16x256xf32>
    %182 = tpu.matmul %179, %181, %cst_168 {dimension_numbers = #tpu.dot_dimension_numbers<[1], [0], [0], [1], [0, 0, 1, 1], [], []>} : vector<16x128xbf16>, vector<128x256xbf16>, vector<16x256xf32> -> vector<16x256xf32>
    %183 = arith.addf %175, %182 : vector<16x256xf32>
    %c3_169 = arith.constant 3 : index
    %c0_170 = arith.constant 0 : index
    %c0_171 = arith.constant 0 : index
    %184 = vector.load %arg7[%c3_169, %c0_170, %c0_171] : memref<9x16x64xbf16, #tpu.memory_space<vmem>>, vector<1x16x64xbf16>
    %185 = vector.shape_cast %184 : vector<1x16x64xbf16> to vector<16x64xbf16>
    %cst_172 = arith.constant dense<0.000000e+00> : vector<16x128xf32>
    %186 = tpu.matmul %185, %160, %cst_172 {dimension_numbers = #tpu.dot_dimension_numbers<[1], [0], [0], [1], [0, 0, 1, 1], [], []>} : vector<16x64xbf16>, vector<64x128xbf16>, vector<16x128xf32> -> vector<16x128xf32>
    %187 = arith.truncf %186 : vector<16x128xf32> to vector<16x128xbf16>
    %c3_173 = arith.constant 3 : index
    %c0_174 = arith.constant 0 : index
    %c0_175 = arith.constant 0 : index
    %188 = vector.load %arg8[%c3_173, %c0_174, %c0_175] : memref<9x128x256xbf16, #tpu.memory_space<vmem>>, vector<1x128x256xbf16>
    %189 = vector.shape_cast %188 : vector<1x128x256xbf16> to vector<128x256xbf16>
    %cst_176 = arith.constant dense<0.000000e+00> : vector<16x256xf32>
    %190 = tpu.matmul %187, %189, %cst_176 {dimension_numbers = #tpu.dot_dimension_numbers<[1], [0], [0], [1], [0, 0, 1, 1], [], []>} : vector<16x128xbf16>, vector<128x256xbf16>, vector<16x256xf32> -> vector<16x256xf32>
    %191 = arith.addf %183, %190 : vector<16x256xf32>
    %c4_177 = arith.constant 4 : index
    %c0_178 = arith.constant 0 : index
    %c0_179 = arith.constant 0 : index
    %192 = vector.load %arg7[%c4_177, %c0_178, %c0_179] : memref<9x16x64xbf16, #tpu.memory_space<vmem>>, vector<1x16x64xbf16>
    %193 = vector.shape_cast %192 : vector<1x16x64xbf16> to vector<16x64xbf16>
    %cst_180 = arith.constant dense<0.000000e+00> : vector<16x128xf32>
    %194 = tpu.matmul %193, %160, %cst_180 {dimension_numbers = #tpu.dot_dimension_numbers<[1], [0], [0], [1], [0, 0, 1, 1], [], []>} : vector<16x64xbf16>, vector<64x128xbf16>, vector<16x128xf32> -> vector<16x128xf32>
    %195 = arith.truncf %194 : vector<16x128xf32> to vector<16x128xbf16>
    %c4_181 = arith.constant 4 : index
    %c0_182 = arith.constant 0 : index
    %c0_183 = arith.constant 0 : index
    %196 = vector.load %arg8[%c4_181, %c0_182, %c0_183] : memref<9x128x256xbf16, #tpu.memory_space<vmem>>, vector<1x128x256xbf16>
    %197 = vector.shape_cast %196 : vector<1x128x256xbf16> to vector<128x256xbf16>
    %cst_184 = arith.constant dense<0.000000e+00> : vector<16x256xf32>
    %198 = tpu.matmul %195, %197, %cst_184 {dimension_numbers = #tpu.dot_dimension_numbers<[1], [0], [0], [1], [0, 0, 1, 1], [], []>} : vector<16x128xbf16>, vector<128x256xbf16>, vector<16x256xf32> -> vector<16x256xf32>
    %199 = arith.addf %191, %198 : vector<16x256xf32>
    %c5_185 = arith.constant 5 : index
    %c0_186 = arith.constant 0 : index
    %c0_187 = arith.constant 0 : index
    %200 = vector.load %arg7[%c5_185, %c0_186, %c0_187] : memref<9x16x64xbf16, #tpu.memory_space<vmem>>, vector<1x16x64xbf16>
    %201 = vector.shape_cast %200 : vector<1x16x64xbf16> to vector<16x64xbf16>
    %cst_188 = arith.constant dense<0.000000e+00> : vector<16x128xf32>
    %202 = tpu.matmul %201, %160, %cst_188 {dimension_numbers = #tpu.dot_dimension_numbers<[1], [0], [0], [1], [0, 0, 1, 1], [], []>} : vector<16x64xbf16>, vector<64x128xbf16>, vector<16x128xf32> -> vector<16x128xf32>
    %203 = arith.truncf %202 : vector<16x128xf32> to vector<16x128xbf16>
    %c5_189 = arith.constant 5 : index
    %c0_190 = arith.constant 0 : index
    %c0_191 = arith.constant 0 : index
    %204 = vector.load %arg8[%c5_189, %c0_190, %c0_191] : memref<9x128x256xbf16, #tpu.memory_space<vmem>>, vector<1x128x256xbf16>
    %205 = vector.shape_cast %204 : vector<1x128x256xbf16> to vector<128x256xbf16>
    %cst_192 = arith.constant dense<0.000000e+00> : vector<16x256xf32>
    %206 = tpu.matmul %203, %205, %cst_192 {dimension_numbers = #tpu.dot_dimension_numbers<[1], [0], [0], [1], [0, 0, 1, 1], [], []>} : vector<16x128xbf16>, vector<128x256xbf16>, vector<16x256xf32> -> vector<16x256xf32>
    %207 = arith.addf %199, %206 : vector<16x256xf32>
    %c6_193 = arith.constant 6 : index
    %c0_194 = arith.constant 0 : index
    %c0_195 = arith.constant 0 : index
    %208 = vector.load %arg7[%c6_193, %c0_194, %c0_195] : memref<9x16x64xbf16, #tpu.memory_space<vmem>>, vector<1x16x64xbf16>
    %209 = vector.shape_cast %208 : vector<1x16x64xbf16> to vector<16x64xbf16>
    %cst_196 = arith.constant dense<0.000000e+00> : vector<16x128xf32>
    %210 = tpu.matmul %209, %160, %cst_196 {dimension_numbers = #tpu.dot_dimension_numbers<[1], [0], [0], [1], [0, 0, 1, 1], [], []>} : vector<16x64xbf16>, vector<64x128xbf16>, vector<16x128xf32> -> vector<16x128xf32>
    %211 = arith.truncf %210 : vector<16x128xf32> to vector<16x128xbf16>
    %c6_197 = arith.constant 6 : index
    %c0_198 = arith.constant 0 : index
    %c0_199 = arith.constant 0 : index
    %212 = vector.load %arg8[%c6_197, %c0_198, %c0_199] : memref<9x128x256xbf16, #tpu.memory_space<vmem>>, vector<1x128x256xbf16>
    %213 = vector.shape_cast %212 : vector<1x128x256xbf16> to vector<128x256xbf16>
    %cst_200 = arith.constant dense<0.000000e+00> : vector<16x256xf32>
    %214 = tpu.matmul %211, %213, %cst_200 {dimension_numbers = #tpu.dot_dimension_numbers<[1], [0], [0], [1], [0, 0, 1, 1], [], []>} : vector<16x128xbf16>, vector<128x256xbf16>, vector<16x256xf32> -> vector<16x256xf32>
    %215 = arith.addf %207, %214 : vector<16x256xf32>
    %c7_201 = arith.constant 7 : index
    %c0_202 = arith.constant 0 : index
    %c0_203 = arith.constant 0 : index
    %216 = vector.load %arg7[%c7_201, %c0_202, %c0_203] : memref<9x16x64xbf16, #tpu.memory_space<vmem>>, vector<1x16x64xbf16>
    %217 = vector.shape_cast %216 : vector<1x16x64xbf16> to vector<16x64xbf16>
    %cst_204 = arith.constant dense<0.000000e+00> : vector<16x128xf32>
    %218 = tpu.matmul %217, %160, %cst_204 {dimension_numbers = #tpu.dot_dimension_numbers<[1], [0], [0], [1], [0, 0, 1, 1], [], []>} : vector<16x64xbf16>, vector<64x128xbf16>, vector<16x128xf32> -> vector<16x128xf32>
    %219 = arith.truncf %218 : vector<16x128xf32> to vector<16x128xbf16>
    %c7_205 = arith.constant 7 : index
    %c0_206 = arith.constant 0 : index
    %c0_207 = arith.constant 0 : index
    %220 = vector.load %arg8[%c7_205, %c0_206, %c0_207] : memref<9x128x256xbf16, #tpu.memory_space<vmem>>, vector<1x128x256xbf16>
    %221 = vector.shape_cast %220 : vector<1x128x256xbf16> to vector<128x256xbf16>
    %cst_208 = arith.constant dense<0.000000e+00> : vector<16x256xf32>
    %222 = tpu.matmul %219, %221, %cst_208 {dimension_numbers = #tpu.dot_dimension_numbers<[1], [0], [0], [1], [0, 0, 1, 1], [], []>} : vector<16x128xbf16>, vector<128x256xbf16>, vector<16x256xf32> -> vector<16x256xf32>
    %223 = arith.addf %215, %222 : vector<16x256xf32>
    %c8_209 = arith.constant 8 : index
    %c0_210 = arith.constant 0 : index
    %c0_211 = arith.constant 0 : index
    %224 = vector.load %arg7[%c8_209, %c0_210, %c0_211] : memref<9x16x64xbf16, #tpu.memory_space<vmem>>, vector<1x16x64xbf16>
    %225 = vector.shape_cast %224 : vector<1x16x64xbf16> to vector<16x64xbf16>
    %cst_212 = arith.constant dense<0.000000e+00> : vector<16x128xf32>
    %226 = tpu.matmul %225, %160, %cst_212 {dimension_numbers = #tpu.dot_dimension_numbers<[1], [0], [0], [1], [0, 0, 1, 1], [], []>} : vector<16x64xbf16>, vector<64x128xbf16>, vector<16x128xf32> -> vector<16x128xf32>
    %227 = arith.truncf %226 : vector<16x128xf32> to vector<16x128xbf16>
    %c8_213 = arith.constant 8 : index
    %c0_214 = arith.constant 0 : index
    %c0_215 = arith.constant 0 : index
    %228 = vector.load %arg8[%c8_213, %c0_214, %c0_215] : memref<9x128x256xbf16, #tpu.memory_space<vmem>>, vector<1x128x256xbf16>
    %229 = vector.shape_cast %228 : vector<1x128x256xbf16> to vector<128x256xbf16>
    %cst_216 = arith.constant dense<0.000000e+00> : vector<16x256xf32>
    %230 = tpu.matmul %227, %229, %cst_216 {dimension_numbers = #tpu.dot_dimension_numbers<[1], [0], [0], [1], [0, 0, 1, 1], [], []>} : vector<16x128xbf16>, vector<128x256xbf16>, vector<16x256xf32> -> vector<16x256xf32>
    %231 = arith.addf %223, %230 : vector<16x256xf32>
    %cst_217 = arith.constant 0.000000e+00 : f32
    %232 = vector.broadcast %cst_217 : f32 to vector<16x256xf32>
    %233 = arith.maximumf %231, %232 : vector<16x256xf32>
    %c0_218 = arith.constant 0 : index
    %c0_219 = arith.constant 0 : index
    %c0_220 = arith.constant 0 : index
    %234 = vector.load %arg9[%c0_218, %c0_219, %c0_220] : memref<2x16x256xf32, #tpu.memory_space<vmem>>, vector<2x16x256xf32>
    %235 = vector.shape_cast %233 : vector<16x256xf32> to vector<1x16x256xf32>
    %236 = vector.broadcast %235 : vector<1x16x256xf32> to vector<2x16x256xf32>
    %237 = arith.mulf %234, %236 : vector<2x16x256xf32>
    %cst_221 = arith.constant dense<0.000000e+00> : vector<2x16xf32>
    %238 = vector.multi_reduction <add>, %237, %cst_221 [2] : vector<2x16x256xf32> to vector<2x16xf32>
    %cst_222 = arith.constant dense<0.000000e+00> : vector<2xf32>
    %239 = vector.multi_reduction <add>, %238, %cst_222 [1] : vector<2x16xf32> to vector<2xf32>
    %240 = vector.shape_cast %239 : vector<2xf32> to vector<2x1xf32>
    %c0_223 = arith.constant 0 : index
    %c0_224 = arith.constant 0 : index
    %c0_225 = arith.constant 0 : index
    %241 = vector.load %arg10[%c0_223, %c0_224, %c0_225] : memref<1x2x1xf32, #tpu.memory_space<vmem>>, vector<1x2x1xf32>
    %242 = vector.shape_cast %241 : vector<1x2x1xf32> to vector<2x1xf32>
    %243 = vector.shape_cast %240 : vector<2x1xf32> to vector<1x2x1xf32>
    tpu.vector_store %arg10[%c0_223, %c0_224, %c0_225], %243 {strides = array<i32>} : memref<1x2x1xf32, #tpu.memory_space<vmem>>, vector<1x2x1xf32>,
    return
  }
  func.func @transform_0(%arg0: i32) -> (i32, i32, i32) {
    %c0_i32 = arith.constant 0 : i32
    %c0_i32_0 = arith.constant 0 : i32
    %c0_i32_1 = arith.constant 0 : i32
    return %arg0, %c0_i32, %c0_i32_0 : i32, i32, i32
  }
  func.func @transform_1(%arg0: i32) -> (i32, i32) {
    %c0_i32 = arith.constant 0 : i32
    %c0_i32_0 = arith.constant 0 : i32
    %c0_i32_1 = arith.constant 0 : i32
    return %c0_i32, %c0_i32_0 : i32, i32
  }
  func.func @transform_2(%arg0: i32) -> (i32, i32, i32) {
    %c0_i32 = arith.constant 0 : i32
    %c0_i32_0 = arith.constant 0 : i32
    %c0_i32_1 = arith.constant 0 : i32
    %c0_i32_2 = arith.constant 0 : i32
    return %c0_i32, %c0_i32_0, %c0_i32_1 : i32, i32, i32
  }
  func.func @transform_3(%arg0: i32) -> (i32, i32, i32) {
    %c0_i32 = arith.constant 0 : i32
    %c0_i32_0 = arith.constant 0 : i32
    %c0_i32_1 = arith.constant 0 : i32
    %c0_i32_2 = arith.constant 0 : i32
    return %c0_i32, %c0_i32_0, %c0_i32_1 : i32, i32, i32
  }
  func.func @transform_4(%arg0: i32) -> (i32, i32, i32) {
    %c0_i32 = arith.constant 0 : i32
    %c0_i32_0 = arith.constant 0 : i32
    %c0_i32_1 = arith.constant 0 : i32
    %c0_i32_2 = arith.constant 0 : i32
    return %c0_i32, %c0_i32_0, %c0_i32_1 : i32, i32, i32
  }
  func.func @transform_5(%arg0: i32) -> (i32, i32, i32) {
    %c0_i32 = arith.constant 0 : i32
    %c0_i32_0 = arith.constant 0 : i32
    %c0_i32_1 = arith.constant 0 : i32
    %c0_i32_2 = arith.constant 0 : i32
    return %c0_i32, %c0_i32_0, %c0_i32_1 : i32, i32, i32
  }
  func.func @transform_6(%arg0: i32) -> (i32, i32, i32) {
    %c0_i32 = arith.constant 0 : i32
    %c0_i32_0 = arith.constant 0 : i32
    %c0_i32_1 = arith.constant 0 : i32
    %c0_i32_2 = arith.constant 0 : i32
    return %c0_i32, %c0_i32_0, %c0_i32_1 : i32, i32, i32
  }
  func.func @transform_7(%arg0: i32) -> (i32, i32, i32) {
    %c0_i32 = arith.constant 0 : i32
    %c0_i32_0 = arith.constant 0 : i32
    %c0_i32_1 = arith.constant 0 : i32
    %c0_i32_2 = arith.constant 0 : i32
    return %c0_i32, %c0_i32_0, %c0_i32_1 : i32, i32, i32
  }
  func.func @transform_8(%arg0: i32) -> (i32, i32, i32) {
    %c0_i32 = arith.constant 0 : i32
    %c0_i32_0 = arith.constant 0 : i32
    %c0_i32_1 = arith.constant 0 : i32
    %c0_i32_2 = arith.constant 0 : i32
    return %c0_i32, %c0_i32_0, %c0_i32_1 : i32, i32, i32
  }
  func.func @transform_9(%arg0: i32) -> (i32, i32, i32) {
    %c0_i32 = arith.constant 0 : i32
    %c0_i32_0 = arith.constant 0 : i32
    %c0_i32_1 = arith.constant 0 : i32
    return %arg0, %c0_i32, %c0_i32_0 : i32, i32, i32
  }
}

</mosaic_0001>

<llo_original>
// kernel: discriminator_forward.1
$region0: #{discriminator_forward.1}
  #allocation0 [shape = 'u32[]', space=smem, size = 0x4, offset = 0x4, fixed_abs, tag = 'smem constant byte address 0x4 - core index']
  #allocation1 [shape = 'u32[144,128]{1,0:T(1,128)}', space=vmem, size = 0x12000, scoped, tag = 'internal scratch']
  %s0 = inlined_call_operand.vmem [shape: bf16[2,256,16], index: 0, kind: input, shape index: {}]
  %s1 = inlined_call_operand.vmem [shape: bf16[16,32], index: 1, kind: input, shape index: {}]
  %s2 = inlined_call_operand.hbm [shape: bf16[9,64,256], index: 2, kind: input, shape index: {}]
  %s3 = inlined_call_operand.vmem [shape: bf16[9,32,64], index: 3, kind: input, shape index: {}]
  %s4 = inlined_call_operand.hbm [shape: bf16[9,64,64], index: 4, kind: input, shape index: {}]
  %s5 = inlined_call_operand.hbm [shape: bf16[9,64,128], index: 5, kind: input, shape index: {}]
  %s6 = inlined_call_operand.vmem [shape: bf16[9,16,64], index: 6, kind: input, shape index: {}]
  %s7 = inlined_call_operand.vmem [shape: bf16[9,128,256], index: 7, kind: input, shape index: {}]
  %s8 = inlined_call_operand.hbm [shape: f32[2,16,256], index: 8, kind: input, shape index: {}]
  %s9 = inlined_call_operand.vmem [shape: f32[2,2,1], index: 9, kind: output, shape index: {}]
  %s10 = sld [smem:[#allocation0]]
  $region85: #{discriminator_forward.1} parent=0
    _
  %s12 = ssub.s32 1, %s10
  %s13 = scalar_select 0, %s12, %s10
  $region1: #{discriminator_forward.1} parent=0
    #allocation2 [shape = 'u8[294912]{0}', space=vmem, size = 0x48000, scoped, tag = 'input window, operand 2, single buffered']
    #allocation3 [shape = 's32[2]{0}', space=sflag, size = 0x8, scoped, tag = 'scoped memory for discriminator_forward.1']
    #allocation4 [shape = 'u8[147456]{0}', space=vmem, size = 0x24000, scoped, tag = 'input window, operand 4, single buffered']
    #allocation5 [shape = 's32[1]{0}', space=sflag, size = 0x4, scoped, tag = 'scoped memory for discriminator_forward.1']
    #allocation6 [shape = 'u8[147456]{0}', space=vmem, size = 0x24000, scoped, tag = 'input window, operand 5, single buffered']
    #allocation7 [shape = 'u8[32768]{0}', space=vmem, size = 0x8000, scoped, tag = 'input window, operand 8, single buffered']
    #allocation8 [shape = 's32[1]{0}', space=sflag, size = 0x4, scoped, tag = 'scoped memory for discriminator_forward.1']
    %14 = vsyncpa [#allocation3], 0
    %15 = vsyncpa [#allocation5], 0
    %16 = vsyncpa [#allocation8], 0
    loop: start=0, step=1, limit=4
    $region2: #{discriminator_forward.1} parent=1 // loop_pre_header
      _
    $region3: #{discriminator_forward.1} parent=1 // loop_header
      %s18 = sphi 0, %s22
      %p19 = scmp.ge.s32.totalorder %s18, 4
      %s28 = sphi 0, %s30
      %s31 = sphi 0, %s28
      %s32 = sphi 0, %s31
      %s48 = sphi 0, %s32
      %s52 = sphi 0, %s52
      %s54 = sphi 0, %s52
      %s55 = sphi 0, %s54
      %s69 = sphi 0, %s55
      %s73 = sphi 0, %s73
      %s75 = sphi 0, %s73
      %s76 = sphi 0, %s75
      %s90 = sphi 0, %s76
      %s94 = sphi 0, %s94
      %s96 = sphi 0, %s94
      %s97 = sphi 0, %s96
      %s111 = sphi 0, %s97
      %s115 = sphi 0, %s115
      %s117 = sphi 0, %s115
      %s118 = sphi 0, %s117
      %s132 = sphi 0, %s118
      %s136 = sphi 0, %s136
      %s138 = sphi 0, %s136
      %s139 = sphi 0, %s138
      %s153 = sphi 0, %s139
      %s157 = sphi 0, %s157
      %s159 = sphi 0, %s157
      %s160 = sphi 0, %s159
      %s174 = sphi 0, %s160
      %s178 = sphi 0, %s178
      %s180 = sphi 0, %s178
      %s181 = sphi 0, %s180
      %s195 = sphi 0, %s181
      %s199 = sphi 0, %s199
      %s201 = sphi 0, %s199
      %s202 = sphi 0, %s201
      %s216 = sphi 0, %s202
      %s222 = sphi 0, %s224
      %s225 = sphi 0, %s222
      %s226 = sphi 0, %s225
      %s242 = sphi 0, %s226
    $region4: #{discriminator_forward.1} parent=1 // loop_header_branch
      %21 = sbr.rel (%p19) target = $region8
    $region5: #{discriminator_forward.1} parent=1 // loop_body
      %s23 = ssub.s32 %s18, 1
      %s24 = ssub.s32 %s18, 2
      %s25 = sadd.s32 %s18, 1
      %s26 = ssub.s32 %s18, %s25
      %p27 = scmp.eq.s32.totalorder %s26, 0
      %s29 = sadd.s32 %s28, 1
      %s30 = scalar_select %p27, %s28, %s29
      %p33 = pneg %p27
      %p34 = scmp.eq.s32.totalorder %s18, 1
      %p35 = por %p33, %p34
      %p36 = scmp.ne.s32.totalorder %s28, %s31
      %p37 = scmp.eq.s32.totalorder %s18, 0
      %p38 = por %p36, %p37
      %p39 = scmp.ne.s32.totalorder %s28, %s31
      %p40 = scmp.eq.s32.totalorder %s23, 1
      %p41 = por %p39, %p40
      %p42 = scmp.ne.s32.totalorder %s31, %s32
      %p43 = scmp.eq.s32.totalorder %s23, 0
      %p44 = por %p42, %p43
      %p45 = scmp.ne.s32.totalorder %s31, %s32
      %p46 = scmp.eq.s32.totalorder %s24, 1
      %p47 = por %p45, %p46
      %p49 = scmp.ne.s32.totalorder %s32, %s48
      %p50 = scmp.eq.s32.totalorder %s24, 0
      %p51 = por %p49, %p50
      %s53 = sadd.s32 %s52, 1
      %p56 = scmp.eq.s32.totalorder %s18, 1
      %p57 = scmp.ne.s32.totalorder %s52, %s54
      %p58 = scmp.eq.s32.totalorder %s18, 0
      %p59 = por %p57, %p58
      %p60 = scmp.ne.s32.totalorder %s52, %s54
      %p61 = scmp.eq.s32.totalorder %s23, 1
      %p62 = por %p60, %p61
      %p63 = scmp.ne.s32.totalorder %s54, %s55
      %p64 = scmp.eq.s32.totalorder %s23, 0
      %p65 = por %p63, %p64
      %p66 = scmp.ne.s32.totalorder %s54, %s55
      %p67 = scmp.eq.s32.totalorder %s24, 1
      %p68 = por %p66, %p67
      %p70 = scmp.ne.s32.totalorder %s55, %s69
      %p71 = scmp.eq.s32.totalorder %s24, 0
      %p72 = por %p70, %p71
      %s74 = sadd.s32 %s73, 1
      %p77 = scmp.eq.s32.totalorder %s18, 1
      %p78 = scmp.ne.s32.totalorder %s73, %s75
      %p79 = scmp.eq.s32.totalorder %s18, 0
      %p80 = por %p78, %p79
      %p81 = scmp.ne.s32.totalorder %s73, %s75
      %p82 = scmp.eq.s32.totalorder %s23, 1
      %p83 = por %p81, %p82
      %p84 = scmp.ne.s32.totalorder %s75, %s76
      %p85 = scmp.eq.s32.totalorder %s23, 0
      %p86 = por %p84, %p85
      %p87 = scmp.ne.s32.totalorder %s75, %s76
      %p88 = scmp.eq.s32.totalorder %s24, 1
      %p89 = por %p87, %p88
      %p91 = scmp.ne.s32.totalorder %s76, %s90
      %p92 = scmp.eq.s32.totalorder %s24, 0
      %p93 = por %p91, %p92
      %s95 = sadd.s32 %s94, 1
      %p98 = scmp.eq.s32.totalorder %s18, 1
      %p99 = scmp.ne.s32.totalorder %s94, %s96
      %p100 = scmp.eq.s32.totalorder %s18, 0
      %p101 = por %p99, %p100
      %p102 = scmp.ne.s32.totalorder %s94, %s96
      %p103 = scmp.eq.s32.totalorder %s23, 1
      %p104 = por %p102, %p103
      %p105 = scmp.ne.s32.totalorder %s96, %s97
      %p106 = scmp.eq.s32.totalorder %s23, 0
      %p107 = por %p105, %p106
      %p108 = scmp.ne.s32.totalorder %s96, %s97
      %p109 = scmp.eq.s32.totalorder %s24, 1
      %p110 = por %p108, %p109
      %p112 = scmp.ne.s32.totalorder %s97, %s111
      %p113 = scmp.eq.s32.totalorder %s24, 0
      %p114 = por %p112, %p113
      %s116 = sadd.s32 %s115, 1
      %p119 = scmp.eq.s32.totalorder %s18, 1
      %p120 = scmp.ne.s32.totalorder %s115, %s117
      %p121 = scmp.eq.s32.totalorder %s18, 0
      %p122 = por %p120, %p121
      %p123 = scmp.ne.s32.totalorder %s115, %s117
      %p124 = scmp.eq.s32.totalorder %s23, 1
      %p125 = por %p123, %p124
      %p126 = scmp.ne.s32.totalorder %s117, %s118
      %p127 = scmp.eq.s32.totalorder %s23, 0
      %p128 = por %p126, %p127
      %p129 = scmp.ne.s32.totalorder %s117, %s118
      %p130 = scmp.eq.s32.totalorder %s24, 1
      %p131 = por %p129, %p130
      %p133 = scmp.ne.s32.totalorder %s118, %s132
      %p134 = scmp.eq.s32.totalorder %s24, 0
      %p135 = por %p133, %p134
      %s137 = sadd.s32 %s136, 1
      %p140 = scmp.eq.s32.totalorder %s18, 1
      %p141 = scmp.ne.s32.totalorder %s136, %s138
      %p142 = scmp.eq.s32.totalorder %s18, 0
      %p143 = por %p141, %p142
      %p144 = scmp.ne.s32.totalorder %s136, %s138
      %p145 = scmp.eq.s32.totalorder %s23, 1
      %p146 = por %p144, %p145
      %p147 = scmp.ne.s32.totalorder %s138, %s139
      %p148 = scmp.eq.s32.totalorder %s23, 0
      %p149 = por %p147, %p148
      %p150 = scmp.ne.s32.totalorder %s138, %s139
      %p151 = scmp.eq.s32.totalorder %s24, 1
      %p152 = por %p150, %p151
      %p154 = scmp.ne.s32.totalorder %s139, %s153
      %p155 = scmp.eq.s32.totalorder %s24, 0
      %p156 = por %p154, %p155
      %s158 = sadd.s32 %s157, 1
      %p161 = scmp.eq.s32.totalorder %s18, 1
      %p162 = scmp.ne.s32.totalorder %s157, %s159
      %p163 = scmp.eq.s32.totalorder %s18, 0
      %p164 = por %p162, %p163
      %p165 = scmp.ne.s32.totalorder %s157, %s159
      %p166 = scmp.eq.s32.totalorder %s23, 1
      %p167 = por %p165, %p166
      %p168 = scmp.ne.s32.totalorder %s159, %s160
      %p169 = scmp.eq.s32.totalorder %s23, 0
      %p170 = por %p168, %p169
      %p171 = scmp.ne.s32.totalorder %s159, %s160
      %p172 = scmp.eq.s32.totalorder %s24, 1
      %p173 = por %p171, %p172
      %p175 = scmp.ne.s32.totalorder %s160, %s174
      %p176 = scmp.eq.s32.totalorder %s24, 0
      %p177 = por %p175, %p176
      %s179 = sadd.s32 %s178, 1
      %p182 = scmp.eq.s32.totalorder %s18, 1
      %p183 = scmp.ne.s32.totalorder %s178, %s180
      %p184 = scmp.eq.s32.totalorder %s18, 0
      %p185 = por %p183, %p184
      %p186 = scmp.ne.s32.totalorder %s178, %s180
      %p187 = scmp.eq.s32.totalorder %s23, 1
      %p188 = por %p186, %p187
      %p189 = scmp.ne.s32.totalorder %s180, %s181
      %p190 = scmp.eq.s32.totalorder %s23, 0
      %p191 = por %p189, %p190
      %p192 = scmp.ne.s32.totalorder %s180, %s181
      %p193 = scmp.eq.s32.totalorder %s24, 1
      %p194 = por %p192, %p193
      %p196 = scmp.ne.s32.totalorder %s181, %s195
      %p197 = scmp.eq.s32.totalorder %s24, 0
      %p198 = por %p196, %p197
      %s200 = sadd.s32 %s199, 1
      %p203 = scmp.eq.s32.totalorder %s18, 1
      %p204 = scmp.ne.s32.totalorder %s199, %s201
      %p205 = scmp.eq.s32.totalorder %s18, 0
      %p206 = por %p204, %p205
      %p207 = scmp.ne.s32.totalorder %s199, %s201
      %p208 = scmp.eq.s32.totalorder %s23, 1
      %p209 = por %p207, %p208
      %p210 = scmp.ne.s32.totalorder %s201, %s202
      %p211 = scmp.eq.s32.totalorder %s23, 0
      %p212 = por %p210, %p211
      %p213 = scmp.ne.s32.totalorder %s201, %s202
      %p214 = scmp.eq.s32.totalorder %s24, 1
      %p215 = por %p213, %p214
      %p217 = scmp.ne.s32.totalorder %s202, %s216
      %p218 = scmp.eq.s32.totalorder %s24, 0
      %p219 = por %p217, %p218
      %s220 = ssub.s32 %s18, %s25
      %p221 = scmp.eq.s32.totalorder %s220, 0
      %s223 = sadd.s32 %s222, 1
      %s224 = scalar_select %p221, %s222, %s223
      %p227 = pneg %p221
      %p228 = scmp.eq.s32.totalorder %s18, 1
      %p229 = por %p227, %p228
      %p230 = scmp.ne.s32.totalorder %s222, %s225
      %p231 = scmp.eq.s32.totalorder %s18, 0
      %p232 = por %p230, %p231
      %p233 = scmp.ne.s32.totalorder %s222, %s225
      %p234 = scmp.eq.s32.totalorder %s23, 1
      %p235 = por %p233, %p234
      %p236 = scmp.ne.s32.totalorder %s225, %s226
      %p237 = scmp.eq.s32.totalorder %s23, 0
      %p238 = por %p236, %p237
      %p239 = scmp.ne.s32.totalorder %s225, %s226
      %p240 = scmp.eq.s32.totalorder %s24, 1
      %p241 = por %p239, %p240
      %p243 = scmp.ne.s32.totalorder %s226, %s242
      %p244 = scmp.eq.s32.totalorder %s24, 0
      %p245 = por %p243, %p244
      %p246 = scmp.le.s32.totalorder 1, %s18
      %p247 = scmp.lt.s32.totalorder %s18, 3
      %p248 = pnand %p246, %p247
      %p249 = pneg %p248
      // Predicated region
      $region9: #{discriminator_forward.1} parent=5 // pred_check
        _
      $region10: #{discriminator_forward.1} parent=5 // pred_check_branch
        %251 = sbr.rel (%p248) target = $region12
      $region11: #{discriminator_forward.1} parent=5 // pred_region
        %s252 = ssub.s32 %s18, 1
        // Predicated region
        $region13: #{discriminator_forward.1} parent=11 // pred_check
          %p253 = pneg %p65
        $region14: #{discriminator_forward.1} parent=11 // pred_check_branch
          %255 = sbr.rel (%p253) target = $region16
        $region15: #{discriminator_forward.1} parent=11 // pred_region
          _
        $region16: #{discriminator_forward.1} parent=11 // pred_fallthru
          _
        // Predicated region
        $region17: #{discriminator_forward.1} parent=11 // pred_check
          %p256 = pneg %p86
        $region18: #{discriminator_forward.1} parent=11 // pred_check_branch
          %258 = sbr.rel (%p256) target = $region20
        $region19: #{discriminator_forward.1} parent=11 // pred_region
          %s260 = ssub.s32 9216, 9216
          %261 = vsyncadd [#allocation3], %s260
          %s262 = sshll.u32 [#allocation2], 4
          %s263 = int_to_ptr.vmem [resolvable:$true] %s262
          %268 = dma.hbm_to_vmem [thread:$0]  %s2, 9216, %s263, [#allocation3], 128, 128, 8
        $region20: #{discriminator_forward.1} parent=11 // pred_fallthru
          _
        // Predicated region
        $region21: #{discriminator_forward.1} parent=11 // pred_check
          %p269 = pneg %p107
        $region22: #{discriminator_forward.1} parent=11 // pred_check_branch
          %271 = sbr.rel (%p269) target = $region24
        $region23: #{discriminator_forward.1} parent=11 // pred_region
          _
        $region24: #{discriminator_forward.1} parent=11 // pred_fallthru
          _
        // Predicated region
        $region25: #{discriminator_forward.1} parent=11 // pred_check
          %p272 = pneg %p128
        $region26: #{discriminator_forward.1} parent=11 // pred_check_branch
          %274 = sbr.rel (%p272) target = $region28
        $region27: #{discriminator_forward.1} parent=11 // pred_region
          %s276 = ssub.s32 4608, 4608
          %277 = vsyncadd [#allocation5], %s276
          %s278 = sshll.u32 [#allocation4], 4
          %s279 = int_to_ptr.vmem [resolvable:$true] %s278
          %284 = dma.hbm_to_vmem [thread:$0]  %s4, 4608, %s279, [#allocation5], 64, 64, 4
        $region28: #{discriminator_forward.1} parent=11 // pred_fallthru
          _
        // Predicated region
        $region29: #{discriminator_forward.1} parent=11 // pred_check
          %p285 = pneg %p149
        $region30: #{discriminator_forward.1} parent=11 // pred_check_branch
          %287 = sbr.rel (%p285) target = $region32
        $region31: #{discriminator_forward.1} parent=11 // pred_region
          %s289 = ssub.s32 4608, 4608
          %290 = vsyncadd [#allocation5], %s289
          %s291 = sshll.u32 [#allocation6], 4
          %s292 = int_to_ptr.vmem [resolvable:$true] %s291
          %297 = dma.hbm_to_vmem [thread:$0]  %s5, 4608, %s292, [#allocation5], 64, 64, 4
        $region32: #{discriminator_forward.1} parent=11 // pred_fallthru
          _
        // Predicated region
        $region33: #{discriminator_forward.1} parent=11 // pred_check
          %p298 = pneg %p170
        $region34: #{discriminator_forward.1} parent=11 // pred_check_branch
          %300 = sbr.rel (%p298) target = $region36
        $region35: #{discriminator_forward.1} parent=11 // pred_region
          _
        $region36: #{discriminator_forward.1} parent=11 // pred_fallthru
          _
        // Predicated region
        $region37: #{discriminator_forward.1} parent=11 // pred_check
          %p301 = pneg %p191
        $region38: #{discriminator_forward.1} parent=11 // pred_check_branch
          %303 = sbr.rel (%p301) target = $region40
        $region39: #{discriminator_forward.1} parent=11 // pred_region
          _
        $region40: #{discriminator_forward.1} parent=11 // pred_fallthru
          _
        // Predicated region
        $region41: #{discriminator_forward.1} parent=11 // pred_check
          %p304 = pneg %p212
        $region42: #{discriminator_forward.1} parent=11 // pred_check_branch
          %306 = sbr.rel (%p304) target = $region44
        $region43: #{discriminator_forward.1} parent=11 // pred_region
          %s308 = ssub.s32 1024, 1024
          %309 = vsyncadd [#allocation8], %s308
          %s310 = sshll.u32 [#allocation7], 4
          %s311 = int_to_ptr.vmem [resolvable:$true] %s310
          %316 = dma.hbm_to_vmem [thread:$0]  %s8, 1024, %s311, [#allocation8], 256, 256, 16
        $region44: #{discriminator_forward.1} parent=11 // pred_fallthru
          _
      $region12: #{discriminator_forward.1} parent=5 // pred_fallthru
        _
      %p317 = scmp.lt.s32.totalorder %s18, 2
      // Predicated region
      $region45: #{discriminator_forward.1} parent=5 // pred_check
        %p318 = pneg %p317
      $region46: #{discriminator_forward.1} parent=5 // pred_check_branch
        %320 = sbr.rel (%p318) target = $region48
      $region47: #{discriminator_forward.1} parent=5 // pred_region
        // Predicated region
        $region49: #{discriminator_forward.1} parent=47 // pred_check
          %p321 = pneg %p38
        $region50: #{discriminator_forward.1} parent=47 // pred_check_branch
          %323 = sbr.rel (%p321) target = $region52
        $region51: #{discriminator_forward.1} parent=47 // pred_region
          %p324 = scmp.lt.s32.totalorder %s18, 1
          %s325 = scalar_select %p324, %s18, 1
          %s326 = smul.addr %s325, 32
          %s327 = smul.addr %s326, 4
          %s328 = scalar_lea.vmem %s0, %s327
        $region52: #{discriminator_forward.1} parent=47 // pred_fallthru
          _
      $region48: #{discriminator_forward.1} parent=5 // pred_fallthru
        _
      %p329 = scmp.le.s32.totalorder 1, %s18
      %p330 = scmp.lt.s32.totalorder %s18, 3
      %p331 = pnand %p329, %p330
      %p332 = pneg %p331
      // Predicated region
      $region53: #{discriminator_forward.1} parent=5 // pred_check
        _
      $region54: #{discriminator_forward.1} parent=5 // pred_check_branch
        %334 = sbr.rel (%p331) target = $region56
      $region55: #{discriminator_forward.1} parent=5 // pred_region
        %s335 = ssub.s32 %s18, 1
        // Predicated region
        $region57: #{discriminator_forward.1} parent=55 // pred_check
          %p336 = pneg %p86
        $region58: #{discriminator_forward.1} parent=55 // pred_check_branch
          %338 = sbr.rel (%p336) target = $region60
        $region59: #{discriminator_forward.1} parent=55 // pred_region
          %339 = dma.done [#allocation3], 9216
        $region60: #{discriminator_forward.1} parent=55 // pred_fallthru
          _
        // Predicated region
        $region61: #{discriminator_forward.1} parent=55 // pred_check
          %p340 = pneg %p128
        $region62: #{discriminator_forward.1} parent=55 // pred_check_branch
          %342 = sbr.rel (%p340) target = $region64
        $region63: #{discriminator_forward.1} parent=55 // pred_region
          %343 = dma.done [#allocation5], 4608
        $region64: #{discriminator_forward.1} parent=55 // pred_fallthru
          _
        // Predicated region
        $region65: #{discriminator_forward.1} parent=55 // pred_check
          %p344 = pneg %p149
        $region66: #{discriminator_forward.1} parent=55 // pred_check_branch
          %346 = sbr.rel (%p344) target = $region68
        $region67: #{discriminator_forward.1} parent=55 // pred_region
          %347 = dma.done [#allocation5], 4608
        $region68: #{discriminator_forward.1} parent=55 // pred_fallthru
          _
        // Predicated region
        $region69: #{discriminator_forward.1} parent=55 // pred_check
          %p348 = pneg %p212
        $region70: #{discriminator_forward.1} parent=55 // pred_check_branch
          %350 = sbr.rel (%p348) target = $region72
        $region71: #{discriminator_forward.1} parent=55 // pred_region
          %351 = dma.done [#allocation8], 1024
        $region72: #{discriminator_forward.1} parent=55 // pred_fallthru
          _
        %p352 = scmp.lt.s32.totalorder %s23, 1
        %s353 = scalar_select %p352, %s23, 1
        %s354 = smul.addr %s353, 32
        %s355 = smul.addr %s354, 4
        %s356 = scalar_lea.vmem %s0, %s355
        %p357 = pneg %p44
        %p358 = pneg %p41
        %p359 = pneg %p65
        %p360 = pneg %p62
        %p361 = pneg %p86
        %p362 = pneg %p83
        %p363 = pneg %p107
        %p364 = pneg %p104
        %p365 = pneg %p128
        %p366 = pneg %p125
        %p367 = pneg %p149
        %p368 = pneg %p146
        %p369 = pneg %p170
        %p370 = pneg %p167
        %p371 = pneg %p191
        %p372 = pneg %p188
        %p373 = pneg %p212
        %p374 = pneg %p209
        %p375 = pneg %p238
        %p376 = pneg %p235
        %p377 = scmp.lt.s32.totalorder %s23, 1
        %s378 = scalar_select %p377, %s23, 1
        %s379 = smul.addr %s378, 2
        %s380 = scalar_lea.vmem %s9, %s379
        %p381 = scmp.lt.s32.totalorder %s23, 1
        %s382 = scalar_select %p381, %s23, 1
        %s383 = smul.addr %s382, 32
        %s384 = smul.addr %s383, 4
        %s385 = scalar_lea.vmem %s0, %s384
        %p386 = scmp.lt.s32.totalorder %s23, 1
        %s387 = scalar_select %p386, %s23, 1
        %s388 = smul.addr %s387, 2
        %s389 = scalar_lea.vmem %s9, %s388
        %v391 = vld [vmem:[%s385] sm:$0xf]
        %v392 = vld [vmem:[%s385 + $0x4] sm:$0xf]
        %v393 = vld [vmem:[%s385 + $0x8] sm:$0xf]
        %v394 = vld [vmem:[%s385 + $0xc] sm:$0xf]
        %v395 = vld [vmem:[%s385 + $0x10] sm:$0xf]
        %v396 = vld [vmem:[%s385 + $0x14] sm:$0xf]
        %v397 = vld [vmem:[%s385 + $0x18] sm:$0xf]
        %v398 = vld [vmem:[%s385 + $0x1c] sm:$0xf]
        %v399 = vld [vmem:[%s385 + $0x20] sm:$0xf]
        %v400 = vld [vmem:[%s385 + $0x24] sm:$0xf]
        %v401 = vld [vmem:[%s385 + $0x28] sm:$0xf]
        %v402 = vld [vmem:[%s385 + $0x2c] sm:$0xf]
        %v403 = vld [vmem:[%s385 + $0x30] sm:$0xf]
        %v404 = vld [vmem:[%s385 + $0x34] sm:$0xf]
        %v405 = vld [vmem:[%s385 + $0x38] sm:$0xf]
        %v406 = vld [vmem:[%s385 + $0x3c] sm:$0xf]
        %v407 = vld [vmem:[%s385 + $0x40] sm:$0xf]
        %v408 = vld [vmem:[%s385 + $0x44] sm:$0xf]
        %v409 = vld [vmem:[%s385 + $0x48] sm:$0xf]
        %v410 = vld [vmem:[%s385 + $0x4c] sm:$0xf]
        %v411 = vld [vmem:[%s385 + $0x50] sm:$0xf]
        %v412 = vld [vmem:[%s385 + $0x54] sm:$0xf]
        %v413 = vld [vmem:[%s385 + $0x58] sm:$0xf]
        %v414 = vld [vmem:[%s385 + $0x5c] sm:$0xf]
        %v415 = vld [vmem:[%s385 + $0x60] sm:$0xf]
        %v416 = vld [vmem:[%s385 + $0x64] sm:$0xf]
        %v417 = vld [vmem:[%s385 + $0x68] sm:$0xf]
        %v418 = vld [vmem:[%s385 + $0x6c] sm:$0xf]
        %v419 = vld [vmem:[%s385 + $0x70] sm:$0xf]
        %v420 = vld [vmem:[%s385 + $0x74] sm:$0xf]
        %v421 = vld [vmem:[%s385 + $0x78] sm:$0xf]
        %v422 = vld [vmem:[%s385 + $0x7c] sm:$0xf]
        %v423 = vld [vmem:[%s1] sm:$0xf]
        %v424 = vld [vmem:[%s1 + $0x4] sm:$0xf]
        %v457 = vunpack.c.l.b16 %v391
        %v458 = vunpack.c.l.b16 %v392
        %v459 = vunpack.c.l.b16 %v393
        %v460 = vunpack.c.l.b16 %v394
        %v461 = vunpack.c.l.b16 %v395
        %v462 = vunpack.c.l.b16 %v396
        %v463 = vunpack.c.l.b16 %v397
        %v464 = vunpack.c.l.b16 %v398
        %v465 = vunpack.c.l.b16 %v399
        %v466 = vunpack.c.l.b16 %v400
        %v467 = vunpack.c.l.b16 %v401
        %v468 = vunpack.c.l.b16 %v402
        %v469 = vunpack.c.l.b16 %v403
        %v470 = vunpack.c.l.b16 %v404
        %v471 = vunpack.c.l.b16 %v405
        %v472 = vunpack.c.l.b16 %v406
        %v473 = vunpack.c.l.b16 %v407
        %v474 = vunpack.c.l.b16 %v408
        %v475 = vunpack.c.l.b16 %v409
        %v476 = vunpack.c.l.b16 %v410
        %v477 = vunpack.c.l.b16 %v411
        %v478 = vunpack.c.l.b16 %v412
        %v479 = vunpack.c.l.b16 %v413
        %v480 = vunpack.c.l.b16 %v414
        %v481 = vunpack.c.l.b16 %v415
        %v482 = vunpack.c.l.b16 %v416
        %v483 = vunpack.c.l.b16 %v417
        %v484 = vunpack.c.l.b16 %v418
        %v485 = vunpack.c.l.b16 %v419
        %v486 = vunpack.c.l.b16 %v420
        %v487 = vunpack.c.l.b16 %v421
        %v488 = vunpack.c.l.b16 %v422
        %v489 = vpack.c.b16 %v458, %v457
        %v490 = vpack.c.b16 %v460, %v459
        %v491 = vpack.c.b16 %v462, %v461
        %v492 = vpack.c.b16 %v464, %v463
        %v493 = vpack.c.b16 %v466, %v465
        %v494 = vpack.c.b16 %v468, %v467
        %v495 = vpack.c.b16 %v470, %v469
        %v496 = vpack.c.b16 %v472, %v471
        %v497 = vpack.c.b16 %v474, %v473
        %v498 = vpack.c.b16 %v476, %v475
        %v499 = vpack.c.b16 %v478, %v477
        %v500 = vpack.c.b16 %v480, %v479
        %v501 = vpack.c.b16 %v482, %v481
        %v502 = vpack.c.b16 %v484, %v483
        %v503 = vpack.c.b16 %v486, %v485
        %v504 = vpack.c.b16 %v488, %v487
        %v507 = vunpack.c.l.b16 %v423
        %v508 = vunpack.c.l.b16 %v424
        %v509 = vpack.c.b16 %v508, %v507
        %vm511 = vcmask 130048
        %v513 = vsel %vm511, %v489, 0
        %v516 = vsel %vm511, %v490, 0
        %v519 = vsel %vm511, %v491, 0
        %v522 = vsel %vm511, %v492, 0
        %v525 = vsel %vm511, %v493, 0
        %v528 = vsel %vm511, %v494, 0
        %v531 = vsel %vm511, %v495, 0
        %v534 = vsel %vm511, %v496, 0
        %v537 = vsel %vm511, %v497, 0
        %v540 = vsel %vm511, %v498, 0
        %v543 = vsel %vm511, %v499, 0
        %v546 = vsel %vm511, %v500, 0
        %v549 = vsel %vm511, %v501, 0
        %v552 = vsel %vm511, %v502, 0
        %v555 = vsel %vm511, %v503, 0
        %v558 = vsel %vm511, %v504, 0
        %560 = vmatprep.subr.bf16.mxu0 0
        %561 = vmatpush1.bf16.msra.mxu0 %v509
        %562 = vmatprep.subr.bf16.mxu0 0
        %563 = vmatpush1.bf16.msra.mxu0 0
        %564 = vmatprep.subr.bf16.mxu0 0
        %565 = vmatpush1.bf16.msra.mxu0 0
        %566 = vmatprep.subr.bf16.mxu0 0
        %567 = vmatpush1.bf16.msra.mxu0 0
        %568 = vmatprep.subr.bf16.mxu0 0
        %569 = vmatpush1.bf16.msra.mxu0 0
        %570 = vmatprep.subr.bf16.mxu0 0
        %571 = vmatpush1.bf16.msra.mxu0 0
        %572 = vmatprep.subr.bf16.mxu0 0
        %573 = vmatpush1.bf16.msra.mxu0 0
        %574 = vmatprep.subr.bf16.mxu0 0
        %575 = vmatpush1.bf16.msra.mxu0 0
        %576 = vmatprep.subr.bf16.mxu0 0
        %577 = vmatpush1.bf16.msra.mxu0 0
        %578 = vmatprep.subr.bf16.mxu0 0
        %579 = vmatpush1.bf16.msra.mxu0 0
        %580 = vmatprep.subr.bf16.mxu0 0
        %581 = vmatpush1.bf16.msra.mxu0 0
        %582 = vmatprep.subr.bf16.mxu0 0
        %583 = vmatpush1.bf16.msra.mxu0 0
        %584 = vmatprep.subr.bf16.mxu0 0
        %585 = vmatpush1.bf16.msra.mxu0 0
        %586 = vmatprep.subr.bf16.mxu0 0
        %587 = vmatpush1.bf16.msra.mxu0 0
        %588 = vmatprep.subr.bf16.mxu0 0
        %589 = vmatpush1.bf16.msra.mxu0 0
        %590 = vmatprep.subr.bf16.mxu0 0
        %591 = vmatpush1.bf16.msra.mxu0 0
        %592 = vmatprep.mubr.bf16.mxu0 0
        %593 = vmatmul.mubr.bf16.gmra.mrb[0].mxu0 %v513
        %v594 = vpop.f32.mrb[0].mxu0
        %v595 = vadd.f32 0.0, %v594
        %v596 = vpop.f32.mrb[0].mxu0
        %v597 = vpop.f32.mrb[0].mxu0
        %v598 = vadd.f32 0.0, %v597
        %v599 = vpop.f32.mrb[0].mxu0
        %600 = vmatprep.mubr.bf16.mxu0 0
        %601 = vmatmul.mubr.bf16.gmra.mrb[0].mxu0 %v516
        %v602 = vpop.f32.mrb[0].mxu0
        %v603 = vadd.f32 0.0, %v602
        %v604 = vpop.f32.mrb[0].mxu0
        %v605 = vpop.f32.mrb[0].mxu0
        %v606 = vadd.f32 0.0, %v605
        %v607 = vpop.f32.mrb[0].mxu0
        %608 = vmatprep.mubr.bf16.mxu0 0
        %609 = vmatmul.mubr.bf16.gmra.mrb[0].mxu0 %v519
        %v610 = vpop.f32.mrb[0].mxu0
        %v611 = vadd.f32 0.0, %v610
        %v612 = vpop.f32.mrb[0].mxu0
        %v613 = vpop.f32.mrb[0].mxu0
        %v614 = vadd.f32 0.0, %v613
        %v615 = vpop.f32.mrb[0].mxu0
        %616 = vmatprep.mubr.bf16.mxu0 0
        %617 = vmatmul.mubr.bf16.gmra.mrb[0].mxu0 %v522
        %v618 = vpop.f32.mrb[0].mxu0
        %v619 = vadd.f32 0.0, %v618
        %v620 = vpop.f32.mrb[0].mxu0
        %v621 = vpop.f32.mrb[0].mxu0
        %v622 = vadd.f32 0.0, %v621
        %v623 = vpop.f32.mrb[0].mxu0
        %624 = vmatprep.mubr.bf16.mxu0 0
        %625 = vmatmul.mubr.bf16.gmra.mrb[0].mxu0 %v525
        %v626 = vpop.f32.mrb[0].mxu0
        %v627 = vadd.f32 0.0, %v626
        %v628 = vpop.f32.mrb[0].mxu0
        %v629 = vpop.f32.mrb[0].mxu0
        %v630 = vadd.f32 0.0, %v629
        %v631 = vpop.f32.mrb[0].mxu0
        %632 = vmatprep.mubr.bf16.mxu0 0
        %633 = vmatmul.mubr.bf16.gmra.mrb[0].mxu0 %v528
        %v634 = vpop.f32.mrb[0].mxu0
        %v635 = vadd.f32 0.0, %v634
        %v636 = vpop.f32.mrb[0].mxu0
        %v637 = vpop.f32.mrb[0].mxu0
        %v638 = vadd.f32 0.0, %v637
        %v639 = vpop.f32.mrb[0].mxu0
        %640 = vmatprep.mubr.bf16.mxu0 0
        %641 = vmatmul.mubr.bf16.gmra.mrb[0].mxu0 %v531
        %v642 = vpop.f32.mrb[0].mxu0
        %v643 = vadd.f32 0.0, %v642
        %v644 = vpop.f32.mrb[0].mxu0
        %v645 = vpop.f32.mrb[0].mxu0
        %v646 = vadd.f32 0.0, %v645
        %v647 = vpop.f32.mrb[0].mxu0
        %648 = vmatprep.mubr.bf16.mxu0 0
        %649 = vmatmul.mubr.bf16.gmra.mrb[0].mxu0 %v534
        %v650 = vpop.f32.mrb[0].mxu0
        %v651 = vadd.f32 0.0, %v650
        %v652 = vpop.f32.mrb[0].mxu0
        %v653 = vpop.f32.mrb[0].mxu0
        %v654 = vadd.f32 0.0, %v653
        %v655 = vpop.f32.mrb[0].mxu0
        %656 = vmatprep.mubr.bf16.mxu0 0
        %657 = vmatmul.mubr.bf16.gmra.mrb[0].mxu0 %v537
        %v658 = vpop.f32.mrb[0].mxu0
        %v659 = vadd.f32 0.0, %v658
        %v660 = vpop.f32.mrb[0].mxu0
        %v661 = vpop.f32.mrb[0].mxu0
        %v662 = vadd.f32 0.0, %v661
        %v663 = vpop.f32.mrb[0].mxu0
        %664 = vmatprep.mubr.bf16.mxu0 0
        %665 = vmatmul.mubr.bf16.gmra.mrb[0].mxu0 %v540
        %v666 = vpop.f32.mrb[0].mxu0
        %v667 = vadd.f32 0.0, %v666
        %v668 = vpop.f32.mrb[0].mxu0
        %v669 = vpop.f32.mrb[0].mxu0
        %v670 = vadd.f32 0.0, %v669
        %v671 = vpop.f32.mrb[0].mxu0
        %672 = vmatprep.mubr.bf16.mxu0 0
        %673 = vmatmul.mubr.bf16.gmra.mrb[0].mxu0 %v543
        %v674 = vpop.f32.mrb[0].mxu0
        %v675 = vadd.f32 0.0, %v674
        %v676 = vpop.f32.mrb[0].mxu0
        %v677 = vpop.f32.mrb[0].mxu0
        %v678 = vadd.f32 0.0, %v677
        %v679 = vpop.f32.mrb[0].mxu0
        %680 = vmatprep.mubr.bf16.mxu0 0
        %681 = vmatmul.mubr.bf16.gmra.mrb[0].mxu0 %v546
        %v682 = vpop.f32.mrb[0].mxu0
        %v683 = vadd.f32 0.0, %v682
        %v684 = vpop.f32.mrb[0].mxu0
        %v685 = vpop.f32.mrb[0].mxu0
        %v686 = vadd.f32 0.0, %v685
        %v687 = vpop.f32.mrb[0].mxu0
        %688 = vmatprep.mubr.bf16.mxu0 0
        %689 = vmatmul.mubr.bf16.gmra.mrb[0].mxu0 %v549
        %v690 = vpop.f32.mrb[0].mxu0
        %v691 = vadd.f32 0.0, %v690
        %v692 = vpop.f32.mrb[0].mxu0
        %v693 = vpop.f32.mrb[0].mxu0
        %v694 = vadd.f32 0.0, %v693
        %v695 = vpop.f32.mrb[0].mxu0
        %696 = vmatprep.mubr.bf16.mxu0 0
        %697 = vmatmul.mubr.bf16.gmra.mrb[0].mxu0 %v552
        %v698 = vpop.f32.mrb[0].mxu0
        %v699 = vadd.f32 0.0, %v698
        %v700 = vpop.f32.mrb[0].mxu0
        %v701 = vpop.f32.mrb[0].mxu0
        %v702 = vadd.f32 0.0, %v701
        %v703 = vpop.f32.mrb[0].mxu0
        %704 = vmatprep.mubr.bf16.mxu0 0
        %705 = vmatmul.mubr.bf16.gmra.mrb[0].mxu0 %v555
        %v706 = vpop.f32.mrb[0].mxu0
        %v707 = vadd.f32 0.0, %v706
        %v708 = vpop.f32.mrb[0].mxu0
        %v709 = vpop.f32.mrb[0].mxu0
        %v710 = vadd.f32 0.0, %v709
        %v711 = vpop.f32.mrb[0].mxu0
        %712 = vmatprep.mubr.bf16.mxu0 0
        %713 = vmatmul.mubr.bf16.gmra.mrb[0].mxu0 %v558
        %v714 = vpop.f32.mrb[0].mxu0
        %v715 = vadd.f32 0.0, %v714
        %v716 = vpop.f32.mrb[0].mxu0
        %v717 = vpop.f32.mrb[0].mxu0
        %v718 = vadd.f32 0.0, %v717
        %v719 = vpop.f32.mrb[0].mxu0
        %720 = vdwg.mxu0
        %v721 = vmax.f32 %v595, 0.0
        %v722 = vmax.f32 %v598, 0.0
        %v723 = vmax.f32 %v603, 0.0
        %v724 = vmax.f32 %v606, 0.0
        %v725 = vmax.f32 %v611, 0.0
        %v726 = vmax.f32 %v614, 0.0
        %v727 = vmax.f32 %v619, 0.0
        %v728 = vmax.f32 %v622, 0.0
        %v729 = vmax.f32 %v627, 0.0
        %v730 = vmax.f32 %v630, 0.0
        %v731 = vmax.f32 %v635, 0.0
        %v732 = vmax.f32 %v638, 0.0
        %v733 = vmax.f32 %v643, 0.0
        %v734 = vmax.f32 %v646, 0.0
        %v735 = vmax.f32 %v651, 0.0
        %v736 = vmax.f32 %v654, 0.0
        %v737 = vmax.f32 %v659, 0.0
        %v738 = vmax.f32 %v662, 0.0
        %v739 = vmax.f32 %v667, 0.0
        %v740 = vmax.f32 %v670, 0.0
        %v741 = vmax.f32 %v675, 0.0
        %v742 = vmax.f32 %v678, 0.0
        %v743 = vmax.f32 %v683, 0.0
        %v744 = vmax.f32 %v686, 0.0
        %v745 = vmax.f32 %v691, 0.0
        %v746 = vmax.f32 %v694, 0.0
        %v747 = vmax.f32 %v699, 0.0
        %v748 = vmax.f32 %v702, 0.0
        %v749 = vmax.f32 %v707, 0.0
        %v750 = vmax.f32 %v710, 0.0
        %v751 = vmax.f32 %v715, 0.0
        %v752 = vmax.f32 %v718, 0.0
        %v753 = vpack.c.bf16 %v722, %v721
        %v754 = vpack.c.bf16 %v724, %v723
        %v755 = vpack.c.bf16 %v726, %v725
        %v756 = vpack.c.bf16 %v728, %v727
        %v757 = vpack.c.bf16 %v730, %v729
        %v758 = vpack.c.bf16 %v732, %v731
        %v759 = vpack.c.bf16 %v734, %v733
        %v760 = vpack.c.bf16 %v736, %v735
        %v761 = vpack.c.bf16 %v738, %v737
        %v762 = vpack.c.bf16 %v740, %v739
        %v763 = vpack.c.bf16 %v742, %v741
        %v764 = vpack.c.bf16 %v744, %v743
        %v765 = vpack.c.bf16 %v746, %v745
        %v766 = vpack.c.bf16 %v748, %v747
        %v767 = vpack.c.bf16 %v750, %v749
        %v768 = vpack.c.bf16 %v752, %v751
        %v769 = vld [vmem:[#allocation2] sm:$0xff]
        %v770 = vld [vmem:[#allocation2 + $0x8] sm:$0xff]
        %v771 = vld [vmem:[#allocation2 + $0x10] sm:$0xff]
        %v772 = vld [vmem:[#allocation2 + $0x18] sm:$0xff]
        %v773 = vld [vmem:[#allocation2 + $0x20] sm:$0xff]
        %v774 = vld [vmem:[#allocation2 + $0x28] sm:$0xff]
        %v775 = vld [vmem:[#allocation2 + $0x30] sm:$0xff]
        %v776 = vld [vmem:[#allocation2 + $0x38] sm:$0xff]
        %v785 = vunpack.c.l.b16 %v769
        %v786 = vunpack.c.h.b16 %v769
        %v787 = vunpack.c.l.b16 %v770
        %v788 = vunpack.c.h.b16 %v770
        %v789 = vunpack.c.l.b16 %v771
        %v790 = vunpack.c.h.b16 %v771
        %v791 = vunpack.c.l.b16 %v772
        %v792 = vunpack.c.h.b16 %v772
        %v793 = vunpack.c.l.b16 %v773
        %v794 = vunpack.c.h.b16 %v773
        %v795 = vunpack.c.l.b16 %v774
        %v796 = vunpack.c.h.b16 %v774
        %v797 = vunpack.c.l.b16 %v775
        %v798 = vunpack.c.h.b16 %v775
        %v799 = vunpack.c.l.b16 %v776
        %v800 = vunpack.c.h.b16 %v776
        %v801 = vpack.c.b16 %v787, %v785
        %v802 = vpack.c.b16 %v788, %v786
        %v803 = vpack.c.b16 %v791, %v789
        %v804 = vpack.c.b16 %v792, %v790
        %v805 = vpack.c.b16 %v795, %v793
        %v806 = vpack.c.b16 %v796, %v794
        %v807 = vpack.c.b16 %v799, %v797
        %v808 = vpack.c.b16 %v800, %v798
        %817 = vmatprep.subr.bf16.mxu0 0
        %818 = vmatpush1.bf16.msra.mxu0 %v753
        %819 = vmatprep.subr.bf16.mxu0 0
        %820 = vmatpush1.bf16.msra.mxu0 %v754
        %821 = vmatprep.subr.bf16.mxu0 0
        %822 = vmatpush1.bf16.msra.mxu0 %v755
        %823 = vmatprep.subr.bf16.mxu0 0
        %824 = vmatpush1.bf16.msra.mxu0 %v756
        %825 = vmatprep.subr.bf16.mxu0 0
        %826 = vmatpush1.bf16.msra.mxu0 %v757
        %827 = vmatprep.subr.bf16.mxu0 0
        %828 = vmatpush1.bf16.msra.mxu0 %v758
        %829 = vmatprep.subr.bf16.mxu0 0
        %830 = vmatpush1.bf16.msra.mxu0 %v759
        %831 = vmatprep.subr.bf16.mxu0 0
        %832 = vmatpush1.bf16.msra.mxu0 %v760
        %833 = vmatprep.subr.bf16.mxu0 0
        %834 = vmatpush1.bf16.msra.mxu0 %v761
        %835 = vmatprep.subr.bf16.mxu0 0
        %836 = vmatpush1.bf16.msra.mxu0 %v762
        %837 = vmatprep.subr.bf16.mxu0 0
        %838 = vmatpush1.bf16.msra.mxu0 %v763
        %839 = vmatprep.subr.bf16.mxu0 0
        %840 = vmatpush1.bf16.msra.mxu0 %v764
        %841 = vmatprep.subr.bf16.mxu0 0
        %842 = vmatpush1.bf16.msra.mxu0 %v765
        %843 = vmatprep.subr.bf16.mxu0 0
        %844 = vmatpush1.bf16.msra.mxu0 %v766
        %845 = vmatprep.subr.bf16.mxu0 0
        %846 = vmatpush1.bf16.msra.mxu0 %v767
        %847 = vmatprep.subr.bf16.mxu0 0
        %848 = vmatpush1.bf16.msra.mxu0 %v768
        %849 = vmatprep.mubr.bf16.mxu0 %v802
        %850 = vmatmul.mubr.bf16.gmra.mrb[0].mxu0 %v801
        %v851 = vpop.f32.mrb[0].mxu0
        %v852 = vadd.f32 0.0, %v851
        %v853 = vpop.f32.mrb[0].mxu0
        %v854 = vpop.f32.mrb[0].mxu0
        %v855 = vadd.f32 0.0, %v854
        %v856 = vpop.f32.mrb[0].mxu0
        %857 = vmatprep.mubr.bf16.mxu0 %v804
        %858 = vmatmul.mubr.bf16.gmra.mrb[0].mxu0 %v803
        %v859 = vpop.f32.mrb[0].mxu0
        %v860 = vadd.f32 0.0, %v859
        %v861 = vpop.f32.mrb[0].mxu0
        %v862 = vpop.f32.mrb[0].mxu0
        %v863 = vadd.f32 0.0, %v862
        %v864 = vpop.f32.mrb[0].mxu0
        %865 = vmatprep.mubr.bf16.mxu0 %v806
        %866 = vmatmul.mubr.bf16.gmra.mrb[0].mxu0 %v805
        %v867 = vpop.f32.mrb[0].mxu0
        %v868 = vadd.f32 0.0, %v867
        %v869 = vpop.f32.mrb[0].mxu0
        %v870 = vpop.f32.mrb[0].mxu0
        %v871 = vadd.f32 0.0, %v870
        %v872 = vpop.f32.mrb[0].mxu0
        %873 = vmatprep.mubr.bf16.mxu0 %v808
        %874 = vmatmul.mubr.bf16.gmra.mrb[0].mxu0 %v807
        %v875 = vpop.f32.mrb[0].mxu0
        %v876 = vadd.f32 0.0, %v875
        %v877 = vpop.f32.mrb[0].mxu0
        %v878 = vpop.f32.mrb[0].mxu0
        %v879 = vadd.f32 0.0, %v878
        %v880 = vpop.f32.mrb[0].mxu0
        %881 = vdwg.mxu0
        %v882 = vpack.c.bf16 %v855, %v852
        %v883 = vpack.c.bf16 %v863, %v860
        %v884 = vpack.c.bf16 %v871, %v868
        %v885 = vpack.c.bf16 %v879, %v876
        %v886 = vld [vmem:[%s3] sm:$0xf]
        %v887 = vld [vmem:[%s3 + $0x4] sm:$0xf]
        %v888 = vld [vmem:[%s3 + $0x8] sm:$0xf]
        %v889 = vld [vmem:[%s3 + $0xc] sm:$0xf]
        %s890 = scalar_lea.vmem [#allocation2], 64
        %v891 = vld [vmem:[%s890] sm:$0xff]
        %v892 = vld [vmem:[%s890 + $0x8] sm:$0xff]
        %v893 = vld [vmem:[%s890 + $0x10] sm:$0xff]
        %v894 = vld [vmem:[%s890 + $0x18] sm:$0xff]
        %v895 = vld [vmem:[%s890 + $0x20] sm:$0xff]
        %v896 = vld [vmem:[%s890 + $0x28] sm:$0xff]
        %v897 = vld [vmem:[%s890 + $0x30] sm:$0xff]
        %v898 = vld [vmem:[%s890 + $0x38] sm:$0xff]
        %v907 = vunpack.c.l.b16 %v891
        %v908 = vunpack.c.h.b16 %v891
        %v909 = vunpack.c.l.b16 %v892
        %v910 = vunpack.c.h.b16 %v892
        %v911 = vunpack.c.l.b16 %v893
        %v912 = vunpack.c.h.b16 %v893
        %v913 = vunpack.c.l.b16 %v894
        %v914 = vunpack.c.h.b16 %v894
        %v915 = vunpack.c.l.b16 %v895
        %v916 = vunpack.c.h.b16 %v895
        %v917 = vunpack.c.l.b16 %v896
        %v918 = vunpack.c.h.b16 %v896
        %v919 = vunpack.c.l.b16 %v897
        %v920 = vunpack.c.h.b16 %v897
        %v921 = vunpack.c.l.b16 %v898
        %v922 = vunpack.c.h.b16 %v898
        %v923 = vpack.c.b16 %v909, %v907
        %v924 = vpack.c.b16 %v910, %v908
        %v925 = vpack.c.b16 %v913, %v911
        %v926 = vpack.c.b16 %v914, %v912
        %v927 = vpack.c.b16 %v917, %v915
        %v928 = vpack.c.b16 %v918, %v916
        %v929 = vpack.c.b16 %v921, %v919
        %v930 = vpack.c.b16 %v922, %v920
        %939 = vmatprep.subr.bf16.mxu0 0
        %940 = vmatpush1.bf16.msra.mxu0 %v753
        %941 = vmatprep.subr.bf16.mxu0 0
        %942 = vmatpush1.bf16.msra.mxu0 %v754
        %943 = vmatprep.subr.bf16.mxu0 0
        %944 = vmatpush1.bf16.msra.mxu0 %v755
        %945 = vmatprep.subr.bf16.mxu0 0
        %946 = vmatpush1.bf16.msra.mxu0 %v756
        %947 = vmatprep.subr.bf16.mxu0 0
        %948 = vmatpush1.bf16.msra.mxu0 %v757
        %949 = vmatprep.subr.bf16.mxu0 0
        %950 = vmatpush1.bf16.msra.mxu0 %v758
        %951 = vmatprep.subr.bf16.mxu0 0
        %952 = vmatpush1.bf16.msra.mxu0 %v759
        %953 = vmatprep.subr.bf16.mxu0 0
        %954 = vmatpush1.bf16.msra.mxu0 %v760
        %955 = vmatprep.subr.bf16.mxu0 0
        %956 = vmatpush1.bf16.msra.mxu0 %v761
        %957 = vmatprep.subr.bf16.mxu0 0
        %958 = vmatpush1.bf16.msra.mxu0 %v762
        %959 = vmatprep.subr.bf16.mxu0 0
        %960 = vmatpush1.bf16.msra.mxu0 %v763
        %961 = vmatprep.subr.bf16.mxu0 0
        %962 = vmatpush1.bf16.msra.mxu0 %v764
        %963 = vmatprep.subr.bf16.mxu0 0
        %964 = vmatpush1.bf16.msra.mxu0 %v765
        %965 = vmatprep.subr.bf16.mxu0 0
        %966 = vmatpush1.bf16.msra.mxu0 %v766
        %967 = vmatprep.subr.bf16.mxu0 0
        %968 = vmatpush1.bf16.msra.mxu0 %v767
        %969 = vmatprep.subr.bf16.mxu0 0
        %970 = vmatpush1.bf16.msra.mxu0 %v768
        %971 = vmatprep.mubr.bf16.mxu0 %v924
        %972 = vmatmul.mubr.bf16.gmra.mrb[0].mxu0 %v923
        %v973 = vpop.f32.mrb[0].mxu0
        %v974 = vadd.f32 0.0, %v973
        %v975 = vpop.f32.mrb[0].mxu0
        %v976 = vpop.f32.mrb[0].mxu0
        %v977 = vadd.f32 0.0, %v976
        %v978 = vpop.f32.mrb[0].mxu0
        %979 = vmatprep.mubr.bf16.mxu0 %v926
        %980 = vmatmul.mubr.bf16.gmra.mrb[0].mxu0 %v925
        %v981 = vpop.f32.mrb[0].mxu0
        %v982 = vadd.f32 0.0, %v981
        %v983 = vpop.f32.mrb[0].mxu0
        %v984 = vpop.f32.mrb[0].mxu0
        %v985 = vadd.f32 0.0, %v984
        %v986 = vpop.f32.mrb[0].mxu0
        %987 = vmatprep.mubr.bf16.mxu0 %v928
        %988 = vmatmul.mubr.bf16.gmra.mrb[0].mxu0 %v927
        %v989 = vpop.f32.mrb[0].mxu0
        %v990 = vadd.f32 0.0, %v989
        %v991 = vpop.f32.mrb[0].mxu0
        %v992 = vpop.f32.mrb[0].mxu0
        %v993 = vadd.f32 0.0, %v992
        %v994 = vpop.f32.mrb[0].mxu0
        %995 = vmatprep.mubr.bf16.mxu0 %v930
        %996 = vmatmul.mubr.bf16.gmra.mrb[0].mxu0 %v929
        %v997 = vpop.f32.mrb[0].mxu0
        %v998 = vadd.f32 0.0, %v997
        %v999 = vpop.f32.mrb[0].mxu0
        %v1000 = vpop.f32.mrb[0].mxu0
        %v1001 = vadd.f32 0.0, %v1000
        %v1002 = vpop.f32.mrb[0].mxu0
        %1003 = vdwg.mxu0
        %v1004 = vpack.c.bf16 %v977, %v974
        %v1005 = vpack.c.bf16 %v985, %v982
        %v1006 = vpack.c.bf16 %v993, %v990
        %v1007 = vpack.c.bf16 %v1001, %v998
        %s1008 = scalar_lea.vmem %s3, 16
        %v1009 = vld [vmem:[%s1008] sm:$0xf]
        %v1010 = vld [vmem:[%s1008 + $0x4] sm:$0xf]
        %v1011 = vld [vmem:[%s1008 + $0x8] sm:$0xf]
        %v1012 = vld [vmem:[%s1008 + $0xc] sm:$0xf]
        %v1017 = vunpack.c.l.b16 %v1009
        %v1018 = vunpack.c.l.b16 %v1010
        %v1019 = vunpack.c.l.b16 %v1011
        %v1020 = vunpack.c.l.b16 %v1012
        %v1021 = vpack.c.b16 %v1018, %v1017
        %v1022 = vpack.c.b16 %v1020, %v1019
        %vm1025 = vcmask 261120
        %v1027 = vsel %vm1025, %v1004, 0
        %v1030 = vsel %vm1025, %v1005, 0
        %v1033 = vsel %vm1025, %v1006, 0
        %v1036 = vsel %vm1025, %v1007, 0
        %1038 = vmatprep.subr.bf16.mxu0 0
        %1039 = vmatpush1.bf16.msra.mxu0 %v1021
        %1040 = vmatprep.subr.bf16.mxu0 0
        %1041 = vmatpush1.bf16.msra.mxu0 %v1022
        %1042 = vmatprep.subr.bf16.mxu0 0
        %1043 = vmatpush1.bf16.msra.mxu0 0
        %1044 = vmatprep.subr.bf16.mxu0 0
        %1045 = vmatpush1.bf16.msra.mxu0 0
        %1046 = vmatprep.subr.bf16.mxu0 0
        %1047 = vmatpush1.bf16.msra.mxu0 0
        %1048 = vmatprep.subr.bf16.mxu0 0
        %1049 = vmatpush1.bf16.msra.mxu0 0
        %1050 = vmatprep.subr.bf16.mxu0 0
        %1051 = vmatpush1.bf16.msra.mxu0 0
        %1052 = vmatprep.subr.bf16.mxu0 0
        %1053 = vmatpush1.bf16.msra.mxu0 0
        %1054 = vmatprep.subr.bf16.mxu0 0
        %1055 = vmatpush1.bf16.msra.mxu0 0
        %1056 = vmatprep.subr.bf16.mxu0 0
        %1057 = vmatpush1.bf16.msra.mxu0 0
        %1058 = vmatprep.subr.bf16.mxu0 0
        %1059 = vmatpush1.bf16.msra.mxu0 0
        %1060 = vmatprep.subr.bf16.mxu0 0
        %1061 = vmatpush1.bf16.msra.mxu0 0
        %1062 = vmatprep.subr.bf16.mxu0 0
        %1063 = vmatpush1.bf16.msra.mxu0 0
        %1064 = vmatprep.subr.bf16.mxu0 0
        %1065 = vmatpush1.bf16.msra.mxu0 0
        %1066 = vmatprep.subr.bf16.mxu0 0
        %1067 = vmatpush1.bf16.msra.mxu0 0
        %1068 = vmatprep.subr.bf16.mxu0 0
        %1069 = vmatpush1.bf16.msra.mxu0 0
        %1070 = vmatprep.mubr.bf16.mxu0 0
        %1071 = vmatmul.mubr.bf16.gmra.mrb[0].mxu0 %v1027
        %v1072 = vpop.f32.mrb[0].mxu0
        %v1073 = vadd.f32 0.0, %v1072
        %v1074 = vpop.f32.mrb[0].mxu0
        %v1075 = vpop.f32.mrb[0].mxu0
        %v1076 = vadd.f32 0.0, %v1075
        %v1077 = vpop.f32.mrb[0].mxu0
        %1078 = vmatprep.mubr.bf16.mxu0 0
        %1079 = vmatmul.mubr.bf16.gmra.mrb[0].mxu0 %v1030
        %v1080 = vpop.f32.mrb[0].mxu0
        %v1081 = vadd.f32 0.0, %v1080
        %v1082 = vpop.f32.mrb[0].mxu0
        %v1083 = vpop.f32.mrb[0].mxu0
        %v1084 = vadd.f32 0.0, %v1083
        %v1085 = vpop.f32.mrb[0].mxu0
        %1086 = vmatprep.mubr.bf16.mxu0 0
        %1087 = vmatmul.mubr.bf16.gmra.mrb[0].mxu0 %v1033
        %v1088 = vpop.f32.mrb[0].mxu0
        %v1089 = vadd.f32 0.0, %v1088
        %v1090 = vpop.f32.mrb[0].mxu0
        %v1091 = vpop.f32.mrb[0].mxu0
        %v1092 = vadd.f32 0.0, %v1091
        %v1093 = vpop.f32.mrb[0].mxu0
        %1094 = vmatprep.mubr.bf16.mxu0 0
        %1095 = vmatmul.mubr.bf16.gmra.mrb[0].mxu0 %v1036
        %v1096 = vpop.f32.mrb[0].mxu0
        %v1097 = vadd.f32 0.0, %v1096
        %v1098 = vpop.f32.mrb[0].mxu0
        %v1099 = vpop.f32.mrb[0].mxu0
        %v1100 = vadd.f32 0.0, %v1099
        %v1101 = vpop.f32.mrb[0].mxu0
        %1102 = vdwg.mxu0
        %v1107 = vunpack.c.l.b16 %v886
        %v1108 = vunpack.c.l.b16 %v887
        %v1109 = vunpack.c.l.b16 %v888
        %v1110 = vunpack.c.l.b16 %v889
        %v1111 = vpack.c.b16 %v1108, %v1107
        %v1112 = vpack.c.b16 %v1110, %v1109
        %v1116 = vsel %vm1025, %v882, 0
        %v1119 = vsel %vm1025, %v883, 0
        %v1122 = vsel %vm1025, %v884, 0
        %v1125 = vsel %vm1025, %v885, 0
        %1127 = vmatprep.subr.bf16.mxu0 0
        %1128 = vmatpush1.bf16.msra.mxu0 %v1111
        %1129 = vmatprep.subr.bf16.mxu0 0
        %1130 = vmatpush1.bf16.msra.mxu0 %v1112
        %1131 = vmatprep.subr.bf16.mxu0 0
        %1132 = vmatpush1.bf16.msra.mxu0 0
        %1133 = vmatprep.subr.bf16.mxu0 0
        %1134 = vmatpush1.bf16.msra.mxu0 0
        %1135 = vmatprep.subr.bf16.mxu0 0
        %1136 = vmatpush1.bf16.msra.mxu0 0
        %1137 = vmatprep.subr.bf16.mxu0 0
        %1138 = vmatpush1.bf16.msra.mxu0 0
        %1139 = vmatprep.subr.bf16.mxu0 0
        %1140 = vmatpush1.bf16.msra.mxu0 0
        %1141 = vmatprep.subr.bf16.mxu0 0
        %1142 = vmatpush1.bf16.msra.mxu0 0
        %1143 = vmatprep.subr.bf16.mxu0 0
        %1144 = vmatpush1.bf16.msra.mxu0 0
        %1145 = vmatprep.subr.bf16.mxu0 0
        %1146 = vmatpush1.bf16.msra.mxu0 0
        %1147 = vmatprep.subr.bf16.mxu0 0
        %1148 = vmatpush1.bf16.msra.mxu0 0
        %1149 = vmatprep.subr.bf16.mxu0 0
        %1150 = vmatpush1.bf16.msra.mxu0 0
        %1151 = vmatprep.subr.bf16.mxu0 0
        %1152 = vmatpush1.bf16.msra.mxu0 0
        %1153 = vmatprep.subr.bf16.mxu0 0
        %1154 = vmatpush1.bf16.msra.mxu0 0
        %1155 = vmatprep.subr.bf16.mxu0 0
        %1156 = vmatpush1.bf16.msra.mxu0 0
        %1157 = vmatprep.subr.bf16.mxu0 0
        %1158 = vmatpush1.bf16.msra.mxu0 0
        %1159 = vmatprep.mubr.bf16.mxu0 0
        %1160 = vmatmul.mubr.bf16.gmra.mrb[0].mxu0 %v1116
        %v1161 = vpop.f32.mrb[0].mxu0
        %v1162 = vadd.f32 %v1073, %v1161
        %v1163 = vpop.f32.mrb[0].mxu0
        %v1164 = vpop.f32.mrb[0].mxu0
        %v1165 = vadd.f32 %v1076, %v1164
        %v1166 = vpop.f32.mrb[0].mxu0
        %1167 = vmatprep.mubr.bf16.mxu0 0
        %1168 = vmatmul.mubr.bf16.gmra.mrb[0].mxu0 %v1119
        %v1169 = vpop.f32.mrb[0].mxu0
        %v1170 = vadd.f32 %v1081, %v1169
        %v1171 = vpop.f32.mrb[0].mxu0
        %v1172 = vpop.f32.mrb[0].mxu0
        %v1173 = vadd.f32 %v1084, %v1172
        %v1174 = vpop.f32.mrb[0].mxu0
        %1175 = vmatprep.mubr.bf16.mxu0 0
        %1176 = vmatmul.mubr.bf16.gmra.mrb[0].mxu0 %v1122
        %v1177 = vpop.f32.mrb[0].mxu0
        %v1178 = vadd.f32 %v1089, %v1177
        %v1179 = vpop.f32.mrb[0].mxu0
        %v1180 = vpop.f32.mrb[0].mxu0
        %v1181 = vadd.f32 %v1092, %v1180
        %v1182 = vpop.f32.mrb[0].mxu0
        %1183 = vmatprep.mubr.bf16.mxu0 0
        %1184 = vmatmul.mubr.bf16.gmra.mrb[0].mxu0 %v1125
        %v1185 = vpop.f32.mrb[0].mxu0
        %v1186 = vadd.f32 %v1097, %v1185
        %v1187 = vpop.f32.mrb[0].mxu0
        %v1188 = vpop.f32.mrb[0].mxu0
        %v1189 = vadd.f32 %v1100, %v1188
        %v1190 = vpop.f32.mrb[0].mxu0
        %1191 = vdwg.mxu0
        %s1192 = scalar_lea.vmem [#allocation2], 128
        %v1193 = vld [vmem:[%s1192] sm:$0xff]
        %v1194 = vld [vmem:[%s1192 + $0x8] sm:$0xff]
        %v1195 = vld [vmem:[%s1192 + $0x10] sm:$0xff]
        %v1196 = vld [vmem:[%s1192 + $0x18] sm:$0xff]
        %v1197 = vld [vmem:[%s1192 + $0x20] sm:$0xff]
        %v1198 = vld [vmem:[%s1192 + $0x28] sm:$0xff]
        %v1199 = vld [vmem:[%s1192 + $0x30] sm:$0xff]
        %v1200 = vld [vmem:[%s1192 + $0x38] sm:$0xff]
        %v1209 = vunpack.c.l.b16 %v1193
        %v1210 = vunpack.c.h.b16 %v1193
        %v1211 = vunpack.c.l.b16 %v1194
        %v1212 = vunpack.c.h.b16 %v1194
        %v1213 = vunpack.c.l.b16 %v1195
        %v1214 = vunpack.c.h.b16 %v1195
        %v1215 = vunpack.c.l.b16 %v1196
        %v1216 = vunpack.c.h.b16 %v1196
        %v1217 = vunpack.c.l.b16 %v1197
        %v1218 = vunpack.c.h.b16 %v1197
        %v1219 = vunpack.c.l.b16 %v1198
        %v1220 = vunpack.c.h.b16 %v1198
        %v1221 = vunpack.c.l.b16 %v1199
        %v1222 = vunpack.c.h.b16 %v1199
        %v1223 = vunpack.c.l.b16 %v1200
        %v1224 = vunpack.c.h.b16 %v1200
        %v1225 = vpack.c.b16 %v1211, %v1209
        %v1226 = vpack.c.b16 %v1212, %v1210
        %v1227 = vpack.c.b16 %v1215, %v1213
        %v1228 = vpack.c.b16 %v1216, %v1214
        %v1229 = vpack.c.b16 %v1219, %v1217
        %v1230 = vpack.c.b16 %v1220, %v1218
        %v1231 = vpack.c.b16 %v1223, %v1221
        %v1232 = vpack.c.b16 %v1224, %v1222
        %1241 = vmatprep.subr.bf16.mxu0 0
        %1242 = vmatpush1.bf16.msra.mxu0 %v753
        %1243 = vmatprep.subr.bf16.mxu0 0
        %1244 = vmatpush1.bf16.msra.mxu0 %v754
        %1245 = vmatprep.subr.bf16.mxu0 0
        %1246 = vmatpush1.bf16.msra.mxu0 %v755
        %1247 = vmatprep.subr.bf16.mxu0 0
        %1248 = vmatpush1.bf16.msra.mxu0 %v756
        %1249 = vmatprep.subr.bf16.mxu0 0
        %1250 = vmatpush1.bf16.msra.mxu0 %v757
        %1251 = vmatprep.subr.bf16.mxu0 0
        %1252 = vmatpush1.bf16.msra.mxu0 %v758
        %1253 = vmatprep.subr.bf16.mxu0 0
        %1254 = vmatpush1.bf16.msra.mxu0 %v759
        %1255 = vmatprep.subr.bf16.mxu0 0
        %1256 = vmatpush1.bf16.msra.mxu0 %v760
        %1257 = vmatprep.subr.bf16.mxu0 0
        %1258 = vmatpush1.bf16.msra.mxu0 %v761
        %1259 = vmatprep.subr.bf16.mxu0 0
        %1260 = vmatpush1.bf16.msra.mxu0 %v762
        %1261 = vmatprep.subr.bf16.mxu0 0
        %1262 = vmatpush1.bf16.msra.mxu0 %v763
        %1263 = vmatprep.subr.bf16.mxu0 0
        %1264 = vmatpush1.bf16.msra.mxu0 %v764
        %1265 = vmatprep.subr.bf16.mxu0 0
        %1266 = vmatpush1.bf16.msra.mxu0 %v765
        %1267 = vmatprep.subr.bf16.mxu0 0
        %1268 = vmatpush1.bf16.msra.mxu0 %v766
        %1269 = vmatprep.subr.bf16.mxu0 0
        %1270 = vmatpush1.bf16.msra.mxu0 %v767
        %1271 = vmatprep.subr.bf16.mxu0 0
        %1272 = vmatpush1.bf16.msra.mxu0 %v768
        %1273 = vmatprep.mubr.bf16.mxu0 %v1226
        %1274 = vmatmul.mubr.bf16.gmra.mrb[0].mxu0 %v1225
        %v1275 = vpop.f32.mrb[0].mxu0
        %v1276 = vadd.f32 0.0, %v1275
        %v1277 = vpop.f32.mrb[0].mxu0
        %v1278 = vpop.f32.mrb[0].mxu0
        %v1279 = vadd.f32 0.0, %v1278
        %v1280 = vpop.f32.mrb[0].mxu0
        %1281 = vmatprep.mubr.bf16.mxu0 %v1228
        %1282 = vmatmul.mubr.bf16.gmra.mrb[0].mxu0 %v1227
        %v1283 = vpop.f32.mrb[0].mxu0
        %v1284 = vadd.f32 0.0, %v1283
        %v1285 = vpop.f32.mrb[0].mxu0
        %v1286 = vpop.f32.mrb[0].mxu0
        %v1287 = vadd.f32 0.0, %v1286
        %v1288 = vpop.f32.mrb[0].mxu0
        %1289 = vmatprep.mubr.bf16.mxu0 %v1230
        %1290 = vmatmul.mubr.bf16.gmra.mrb[0].mxu0 %v1229
        %v1291 = vpop.f32.mrb[0].mxu0
        %v1292 = vadd.f32 0.0, %v1291
        %v1293 = vpop.f32.mrb[0].mxu0
        %v1294 = vpop.f32.mrb[0].mxu0
        %v1295 = vadd.f32 0.0, %v1294
        %v1296 = vpop.f32.mrb[0].mxu0
        %1297 = vmatprep.mubr.bf16.mxu0 %v1232
        %1298 = vmatmul.mubr.bf16.gmra.mrb[0].mxu0 %v1231
        %v1299 = vpop.f32.mrb[0].mxu0
        %v1300 = vadd.f32 0.0, %v1299
        %v1301 = vpop.f32.mrb[0].mxu0
        %v1302 = vpop.f32.mrb[0].mxu0
        %v1303 = vadd.f32 0.0, %v1302
        %v1304 = vpop.f32.mrb[0].mxu0
        %1305 = vdwg.mxu0
        %v1306 = vpack.c.bf16 %v1279, %v1276
        %v1307 = vpack.c.bf16 %v1287, %v1284
        %v1308 = vpack.c.bf16 %v1295, %v1292
        %v1309 = vpack.c.bf16 %v1303, %v1300
        %s1310 = scalar_lea.vmem %s3, 32
        %v1311 = vld [vmem:[%s1310] sm:$0xf]
        %v1312 = vld [vmem:[%s1310 + $0x4] sm:$0xf]
        %v1313 = vld [vmem:[%s1310 + $0x8] sm:$0xf]
        %v1314 = vld [vmem:[%s1310 + $0xc] sm:$0xf]
        %v1319 = vunpack.c.l.b16 %v1311
        %v1320 = vunpack.c.l.b16 %v1312
        %v1321 = vunpack.c.l.b16 %v1313
        %v1322 = vunpack.c.l.b16 %v1314
        %v1323 = vpack.c.b16 %v1320, %v1319
        %v1324 = vpack.c.b16 %v1322, %v1321
        %v1328 = vsel %vm1025, %v1306, 0
        %v1331 = vsel %vm1025, %v1307, 0
        %v1334 = vsel %vm1025, %v1308, 0
        %v1337 = vsel %vm1025, %v1309, 0
        %1339 = vmatprep.subr.bf16.mxu0 0
        %1340 = vmatpush1.bf16.msra.mxu0 %v1323
        %1341 = vmatprep.subr.bf16.mxu0 0
        %1342 = vmatpush1.bf16.msra.mxu0 %v1324
        %1343 = vmatprep.subr.bf16.mxu0 0
        %1344 = vmatpush1.bf16.msra.mxu0 0
        %1345 = vmatprep.subr.bf16.mxu0 0
        %1346 = vmatpush1.bf16.msra.mxu0 0
        %1347 = vmatprep.subr.bf16.mxu0 0
        %1348 = vmatpush1.bf16.msra.mxu0 0
        %1349 = vmatprep.subr.bf16.mxu0 0
        %1350 = vmatpush1.bf16.msra.mxu0 0
        %1351 = vmatprep.subr.bf16.mxu0 0
        %1352 = vmatpush1.bf16.msra.mxu0 0
        %1353 = vmatprep.subr.bf16.mxu0 0
        %1354 = vmatpush1.bf16.msra.mxu0 0
        %1355 = vmatprep.subr.bf16.mxu0 0
        %1356 = vmatpush1.bf16.msra.mxu0 0
        %1357 = vmatprep.subr.bf16.mxu0 0
        %1358 = vmatpush1.bf16.msra.mxu0 0
        %1359 = vmatprep.subr.bf16.mxu0 0
        %1360 = vmatpush1.bf16.msra.mxu0 0
        %1361 = vmatprep.subr.bf16.mxu0 0
        %1362 = vmatpush1.bf16.msra.mxu0 0
        %1363 = vmatprep.subr.bf16.mxu0 0
        %1364 = vmatpush1.bf16.msra.mxu0 0
        %1365 = vmatprep.subr.bf16.mxu0 0
        %1366 = vmatpush1.bf16.msra.mxu0 0
        %1367 = vmatprep.subr.bf16.mxu0 0
        %1368 = vmatpush1.bf16.msra.mxu0 0
        %1369 = vmatprep.subr.bf16.mxu0 0
        %1370 = vmatpush1.bf16.msra.mxu0 0
        %1371 = vmatprep.mubr.bf16.mxu0 0
        %1372 = vmatmul.mubr.bf16.gmra.mrb[0].mxu0 %v1328
        %v1373 = vpop.f32.mrb[0].mxu0
        %v1374 = vadd.f32 0.0, %v1373
        %v1375 = vpop.f32.mrb[0].mxu0
        %v1376 = vpop.f32.mrb[0].mxu0
        %v1377 = vadd.f32 0.0, %v1376
        %v1378 = vpop.f32.mrb[0].mxu0
        %1379 = vmatprep.mubr.bf16.mxu0 0
        %1380 = vmatmul.mubr.bf16.gmra.mrb[0].mxu0 %v1331
        %v1381 = vpop.f32.mrb[0].mxu0
        %v1382 = vadd.f32 0.0, %v1381
        %v1383 = vpop.f32.mrb[0].mxu0
        %v1384 = vpop.f32.mrb[0].mxu0
        %v1385 = vadd.f32 0.0, %v1384
        %v1386 = vpop.f32.mrb[0].mxu0
        %1387 = vmatprep.mubr.bf16.mxu0 0
        %1388 = vmatmul.mubr.bf16.gmra.mrb[0].mxu0 %v1334
        %v1389 = vpop.f32.mrb[0].mxu0
        %v1390 = vadd.f32 0.0, %v1389
        %v1391 = vpop.f32.mrb[0].mxu0
        %v1392 = vpop.f32.mrb[0].mxu0
        %v1393 = vadd.f32 0.0, %v1392
        %v1394 = vpop.f32.mrb[0].mxu0
        %1395 = vmatprep.mubr.bf16.mxu0 0
        %1396 = vmatmul.mubr.bf16.gmra.mrb[0].mxu0 %v1337
        %v1397 = vpop.f32.mrb[0].mxu0
        %v1398 = vadd.f32 0.0, %v1397
        %v1399 = vpop.f32.mrb[0].mxu0
        %v1400 = vpop.f32.mrb[0].mxu0
        %v1401 = vadd.f32 0.0, %v1400
        %v1402 = vpop.f32.mrb[0].mxu0
        %1403 = vdwg.mxu0
        %v1404 = vadd.f32 %v1162, %v1374
        %v1405 = vadd.f32 %v1165, %v1377
        %v1406 = vadd.f32 %v1170, %v1382
        %v1407 = vadd.f32 %v1173, %v1385
        %v1408 = vadd.f32 %v1178, %v1390
        %v1409 = vadd.f32 %v1181, %v1393
        %v1410 = vadd.f32 %v1186, %v1398
        %v1411 = vadd.f32 %v1189, %v1401
        %s1412 = scalar_lea.vmem [#allocation2], 192
        %v1413 = vld [vmem:[%s1412] sm:$0xff]
        %v1414 = vld [vmem:[%s1412 + $0x8] sm:$0xff]
        %v1415 = vld [vmem:[%s1412 + $0x10] sm:$0xff]
        %v1416 = vld [vmem:[%s1412 + $0x18] sm:$0xff]
        %v1417 = vld [vmem:[%s1412 + $0x20] sm:$0xff]
        %v1418 = vld [vmem:[%s1412 + $0x28] sm:$0xff]
        %v1419 = vld [vmem:[%s1412 + $0x30] sm:$0xff]
        %v1420 = vld [vmem:[%s1412 + $0x38] sm:$0xff]
        %v1429 = vunpack.c.l.b16 %v1413
        %v1430 = vunpack.c.h.b16 %v1413
        %v1431 = vunpack.c.l.b16 %v1414
        %v1432 = vunpack.c.h.b16 %v1414
        %v1433 = vunpack.c.l.b16 %v1415
        %v1434 = vunpack.c.h.b16 %v1415
        %v1435 = vunpack.c.l.b16 %v1416
        %v1436 = vunpack.c.h.b16 %v1416
        %v1437 = vunpack.c.l.b16 %v1417
        %v1438 = vunpack.c.h.b16 %v1417
        %v1439 = vunpack.c.l.b16 %v1418
        %v1440 = vunpack.c.h.b16 %v1418
        %v1441 = vunpack.c.l.b16 %v1419
        %v1442 = vunpack.c.h.b16 %v1419
        %v1443 = vunpack.c.l.b16 %v1420
        %v1444 = vunpack.c.h.b16 %v1420
        %v1445 = vpack.c.b16 %v1431, %v1429
        %v1446 = vpack.c.b16 %v1432, %v1430
        %v1447 = vpack.c.b16 %v1435, %v1433
        %v1448 = vpack.c.b16 %v1436, %v1434
        %v1449 = vpack.c.b16 %v1439, %v1437
        %v1450 = vpack.c.b16 %v1440, %v1438
        %v1451 = vpack.c.b16 %v1443, %v1441
        %v1452 = vpack.c.b16 %v1444, %v1442
        %1461 = vmatprep.subr.bf16.mxu0 0
        %1462 = vmatpush1.bf16.msra.mxu0 %v753
        %1463 = vmatprep.subr.bf16.mxu0 0
        %1464 = vmatpush1.bf16.msra.mxu0 %v754
        %1465 = vmatprep.subr.bf16.mxu0 0
        %1466 = vmatpush1.bf16.msra.mxu0 %v755
        %1467 = vmatprep.subr.bf16.mxu0 0
        %1468 = vmatpush1.bf16.msra.mxu0 %v756
        %1469 = vmatprep.subr.bf16.mxu0 0
        %1470 = vmatpush1.bf16.msra.mxu0 %v757
        %1471 = vmatprep.subr.bf16.mxu0 0
        %1472 = vmatpush1.bf16.msra.mxu0 %v758
        %1473 = vmatprep.subr.bf16.mxu0 0
        %1474 = vmatpush1.bf16.msra.mxu0 %v759
        %1475 = vmatprep.subr.bf16.mxu0 0
        %1476 = vmatpush1.bf16.msra.mxu0 %v760
        %1477 = vmatprep.subr.bf16.mxu0 0
        %1478 = vmatpush1.bf16.msra.mxu0 %v761
        %1479 = vmatprep.subr.bf16.mxu0 0
        %1480 = vmatpush1.bf16.msra.mxu0 %v762
        %1481 = vmatprep.subr.bf16.mxu0 0
        %1482 = vmatpush1.bf16.msra.mxu0 %v763
        %1483 = vmatprep.subr.bf16.mxu0 0
        %1484 = vmatpush1.bf16.msra.mxu0 %v764
        %1485 = vmatprep.subr.bf16.mxu0 0
        %1486 = vmatpush1.bf16.msra.mxu0 %v765
        %1487 = vmatprep.subr.bf16.mxu0 0
        %1488 = vmatpush1.bf16.msra.mxu0 %v766
        %1489 = vmatprep.subr.bf16.mxu0 0
        %1490 = vmatpush1.bf16.msra.mxu0 %v767
        %1491 = vmatprep.subr.bf16.mxu0 0
        %1492 = vmatpush1.bf16.msra.mxu0 %v768
        %1493 = vmatprep.mubr.bf16.mxu0 %v1446
        %1494 = vmatmul.mubr.bf16.gmra.mrb[0].mxu0 %v1445
        %v1495 = vpop.f32.mrb[0].mxu0
        %v1496 = vadd.f32 0.0, %v1495
        %v1497 = vpop.f32.mrb[0].mxu0
        %v1498 = vpop.f32.mrb[0].mxu0
        %v1499 = vadd.f32 0.0, %v1498
        %v1500 = vpop.f32.mrb[0].mxu0
        %1501 = vmatprep.mubr.bf16.mxu0 %v1448
        %1502 = vmatmul.mubr.bf16.gmra.mrb[0].mxu0 %v1447
        %v1503 = vpop.f32.mrb[0].mxu0
        %v1504 = vadd.f32 0.0, %v1503
        %v1505 = vpop.f32.mrb[0].mxu0
        %v1506 = vpop.f32.mrb[0].mxu0
        %v1507 = vadd.f32 0.0, %v1506
        %v1508 = vpop.f32.mrb[0].mxu0
        %1509 = vmatprep.mubr.bf16.mxu0 %v1450
        %1510 = vmatmul.mubr.bf16.gmra.mrb[0].mxu0 %v1449
        %v1511 = vpop.f32.mrb[0].mxu0
        %v1512 = vadd.f32 0.0, %v1511
        %v1513 = vpop.f32.mrb[0].mxu0
        %v1514 = vpop.f32.mrb[0].mxu0
        %v1515 = vadd.f32 0.0, %v1514
        %v1516 = vpop.f32.mrb[0].mxu0
        %1517 = vmatprep.mubr.bf16.mxu0 %v1452
        %1518 = vmatmul.mubr.bf16.gmra.mrb[0].mxu0 %v1451
        %v1519 = vpop.f32.mrb[0].mxu0
        %v1520 = vadd.f32 0.0, %v1519
        %v1521 = vpop.f32.mrb[0].mxu0
        %v1522 = vpop.f32.mrb[0].mxu0
        %v1523 = vadd.f32 0.0, %v1522
        %v1524 = vpop.f32.mrb[0].mxu0
        %1525 = vdwg.mxu0
        %v1526 = vpack.c.bf16 %v1499, %v1496
        %v1527 = vpack.c.bf16 %v1507, %v1504
        %v1528 = vpack.c.bf16 %v1515, %v1512
        %v1529 = vpack.c.bf16 %v1523, %v1520
        %s1530 = scalar_lea.vmem %s3, 48
        %v1531 = vld [vmem:[%s1530] sm:$0xf]
        %v1532 = vld [vmem:[%s1530 + $0x4] sm:$0xf]
        %v1533 = vld [vmem:[%s1530 + $0x8] sm:$0xf]
        %v1534 = vld [vmem:[%s1530 + $0xc] sm:$0xf]
        %v1539 = vunpack.c.l.b16 %v1531
        %v1540 = vunpack.c.l.b16 %v1532
        %v1541 = vunpack.c.l.b16 %v1533
        %v1542 = vunpack.c.l.b16 %v1534
        %v1543 = vpack.c.b16 %v1540, %v1539
        %v1544 = vpack.c.b16 %v1542, %v1541
        %v1548 = vsel %vm1025, %v1526, 0
        %v1551 = vsel %vm1025, %v1527, 0
        %v1554 = vsel %vm1025, %v1528, 0
        %v1557 = vsel %vm1025, %v1529, 0
        %1559 = vmatprep.subr.bf16.mxu0 0
        %1560 = vmatpush1.bf16.msra.mxu0 %v1543
        %1561 = vmatprep.subr.bf16.mxu0 0
        %1562 = vmatpush1.bf16.msra.mxu0 %v1544
        %1563 = vmatprep.subr.bf16.mxu0 0
        %1564 = vmatpush1.bf16.msra.mxu0 0
        %1565 = vmatprep.subr.bf16.mxu0 0
        %1566 = vmatpush1.bf16.msra.mxu0 0
        %1567 = vmatprep.subr.bf16.mxu0 0
        %1568 = vmatpush1.bf16.msra.mxu0 0
        %1569 = vmatprep.subr.bf16.mxu0 0
        %1570 = vmatpush1.bf16.msra.mxu0 0
        %1571 = vmatprep.subr.bf16.mxu0 0
        %1572 = vmatpush1.bf16.msra.mxu0 0
        %1573 = vmatprep.subr.bf16.mxu0 0
        %1574 = vmatpush1.bf16.msra.mxu0 0
        %1575 = vmatprep.subr.bf16.mxu0 0
        %1576 = vmatpush1.bf16.msra.mxu0 0
        %1577 = vmatprep.subr.bf16.mxu0 0
        %1578 = vmatpush1.bf16.msra.mxu0 0
        %1579 = vmatprep.subr.bf16.mxu0 0
        %1580 = vmatpush1.bf16.msra.mxu0 0
        %1581 = vmatprep.subr.bf16.mxu0 0
        %1582 = vmatpush1.bf16.msra.mxu0 0
        %1583 = vmatprep.subr.bf16.mxu0 0
        %1584 = vmatpush1.bf16.msra.mxu0 0
        %1585 = vmatprep.subr.bf16.mxu0 0
        %1586 = vmatpush1.bf16.msra.mxu0 0
        %1587 = vmatprep.subr.bf16.mxu0 0
        %1588 = vmatpush1.bf16.msra.mxu0 0
        %1589 = vmatprep.subr.bf16.mxu0 0
        %1590 = vmatpush1.bf16.msra.mxu0 0
        %1591 = vmatprep.mubr.bf16.mxu0 0
        %1592 = vmatmul.mubr.bf16.gmra.mrb[0].mxu0 %v1548
        %v1593 = vpop.f32.mrb[0].mxu0
        %v1594 = vadd.f32 0.0, %v1593
        %v1595 = vpop.f32.mrb[0].mxu0
        %v1596 = vpop.f32.mrb[0].mxu0
        %v1597 = vadd.f32 0.0, %v1596
        %v1598 = vpop.f32.mrb[0].mxu0
        %1599 = vmatprep.mubr.bf16.mxu0 0
        %1600 = vmatmul.mubr.bf16.gmra.mrb[0].mxu0 %v1551
        %v1601 = vpop.f32.mrb[0].mxu0
        %v1602 = vadd.f32 0.0, %v1601
        %v1603 = vpop.f32.mrb[0].mxu0
        %v1604 = vpop.f32.mrb[0].mxu0
        %v1605 = vadd.f32 0.0, %v1604
        %v1606 = vpop.f32.mrb[0].mxu0
        %1607 = vmatprep.mubr.bf16.mxu0 0
        %1608 = vmatmul.mubr.bf16.gmra.mrb[0].mxu0 %v1554
        %v1609 = vpop.f32.mrb[0].mxu0
        %v1610 = vadd.f32 0.0, %v1609
        %v1611 = vpop.f32.mrb[0].mxu0
        %v1612 = vpop.f32.mrb[0].mxu0
        %v1613 = vadd.f32 0.0, %v1612
        %v1614 = vpop.f32.mrb[0].mxu0
        %1615 = vmatprep.mubr.bf16.mxu0 0
        %1616 = vmatmul.mubr.bf16.gmra.mrb[0].mxu0 %v1557
        %v1617 = vpop.f32.mrb[0].mxu0
        %v1618 = vadd.f32 0.0, %v1617
        %v1619 = vpop.f32.mrb[0].mxu0
        %v1620 = vpop.f32.mrb[0].mxu0
        %v1621 = vadd.f32 0.0, %v1620
        %v1622 = vpop.f32.mrb[0].mxu0
        %1623 = vdwg.mxu0
        %v1624 = vadd.f32 %v1404, %v1594
        %v1625 = vadd.f32 %v1405, %v1597
        %v1626 = vadd.f32 %v1406, %v1602
        %v1627 = vadd.f32 %v1407, %v1605
        %v1628 = vadd.f32 %v1408, %v1610
        %v1629 = vadd.f32 %v1409, %v1613
        %v1630 = vadd.f32 %v1410, %v1618
        %v1631 = vadd.f32 %v1411, %v1621
        %s1632 = scalar_lea.vmem [#allocation2], 256
        %v1633 = vld [vmem:[%s1632] sm:$0xff]
        %v1634 = vld [vmem:[%s1632 + $0x8] sm:$0xff]
        %v1635 = vld [vmem:[%s1632 + $0x10] sm:$0xff]
        %v1636 = vld [vmem:[%s1632 + $0x18] sm:$0xff]
        %v1637 = vld [vmem:[%s1632 + $0x20] sm:$0xff]
        %v1638 = vld [vmem:[%s1632 + $0x28] sm:$0xff]
        %v1639 = vld [vmem:[%s1632 + $0x30] sm:$0xff]
        %v1640 = vld [vmem:[%s1632 + $0x38] sm:$0xff]
        %v1649 = vunpack.c.l.b16 %v1633
        %v1650 = vunpack.c.h.b16 %v1633
        %v1651 = vunpack.c.l.b16 %v1634
        %v1652 = vunpack.c.h.b16 %v1634
        %v1653 = vunpack.c.l.b16 %v1635
        %v1654 = vunpack.c.h.b16 %v1635
        %v1655 = vunpack.c.l.b16 %v1636
        %v1656 = vunpack.c.h.b16 %v1636
        %v1657 = vunpack.c.l.b16 %v1637
        %v1658 = vunpack.c.h.b16 %v1637
        %v1659 = vunpack.c.l.b16 %v1638
        %v1660 = vunpack.c.h.b16 %v1638
        %v1661 = vunpack.c.l.b16 %v1639
        %v1662 = vunpack.c.h.b16 %v1639
        %v1663 = vunpack.c.l.b16 %v1640
        %v1664 = vunpack.c.h.b16 %v1640
        %v1665 = vpack.c.b16 %v1651, %v1649
        %v1666 = vpack.c.b16 %v1652, %v1650
        %v1667 = vpack.c.b16 %v1655, %v1653
        %v1668 = vpack.c.b16 %v1656, %v1654
        %v1669 = vpack.c.b16 %v1659, %v1657
        %v1670 = vpack.c.b16 %v1660, %v1658
        %v1671 = vpack.c.b16 %v1663, %v1661
        %v1672 = vpack.c.b16 %v1664, %v1662
        %1681 = vmatprep.subr.bf16.mxu0 0
        %1682 = vmatpush1.bf16.msra.mxu0 %v753
        %1683 = vmatprep.subr.bf16.mxu0 0
        %1684 = vmatpush1.bf16.msra.mxu0 %v754
        %1685 = vmatprep.subr.bf16.mxu0 0
        %1686 = vmatpush1.bf16.msra.mxu0 %v755
        %1687 = vmatprep.subr.bf16.mxu0 0
        %1688 = vmatpush1.bf16.msra.mxu0 %v756
        %1689 = vmatprep.subr.bf16.mxu0 0
        %1690 = vmatpush1.bf16.msra.mxu0 %v757
        %1691 = vmatprep.subr.bf16.mxu0 0
        %1692 = vmatpush1.bf16.msra.mxu0 %v758
        %1693 = vmatprep.subr.bf16.mxu0 0
        %1694 = vmatpush1.bf16.msra.mxu0 %v759
        %1695 = vmatprep.subr.bf16.mxu0 0
        %1696 = vmatpush1.bf16.msra.mxu0 %v760
        %1697 = vmatprep.subr.bf16.mxu0 0
        %1698 = vmatpush1.bf16.msra.mxu0 %v761
        %1699 = vmatprep.subr.bf16.mxu0 0
        %1700 = vmatpush1.bf16.msra.mxu0 %v762
        %1701 = vmatprep.subr.bf16.mxu0 0
        %1702 = vmatpush1.bf16.msra.mxu0 %v763
        %1703 = vmatprep.subr.bf16.mxu0 0
        %1704 = vmatpush1.bf16.msra.mxu0 %v764
        %1705 = vmatprep.subr.bf16.mxu0 0
        %1706 = vmatpush1.bf16.msra.mxu0 %v765
        %1707 = vmatprep.subr.bf16.mxu0 0
        %1708 = vmatpush1.bf16.msra.mxu0 %v766
        %1709 = vmatprep.subr.bf16.mxu0 0
        %1710 = vmatpush1.bf16.msra.mxu0 %v767
        %1711 = vmatprep.subr.bf16.mxu0 0
        %1712 = vmatpush1.bf16.msra.mxu0 %v768
        %1713 = vmatprep.mubr.bf16.mxu0 %v1666
        %1714 = vmatmul.mubr.bf16.gmra.mrb[0].mxu0 %v1665
        %v1715 = vpop.f32.mrb[0].mxu0
        %v1716 = vadd.f32 0.0, %v1715
        %v1717 = vpop.f32.mrb[0].mxu0
        %v1718 = vpop.f32.mrb[0].mxu0
        %v1719 = vadd.f32 0.0, %v1718
        %v1720 = vpop.f32.mrb[0].mxu0
        %1721 = vmatprep.mubr.bf16.mxu0 %v1668
        %1722 = vmatmul.mubr.bf16.gmra.mrb[0].mxu0 %v1667
        %v1723 = vpop.f32.mrb[0].mxu0
        %v1724 = vadd.f32 0.0, %v1723
        %v1725 = vpop.f32.mrb[0].mxu0
        %v1726 = vpop.f32.mrb[0].mxu0
        %v1727 = vadd.f32 0.0, %v1726
        %v1728 = vpop.f32.mrb[0].mxu0
        %1729 = vmatprep.mubr.bf16.mxu0 %v1670
        %1730 = vmatmul.mubr.bf16.gmra.mrb[0].mxu0 %v1669
        %v1731 = vpop.f32.mrb[0].mxu0
        %v1732 = vadd.f32 0.0, %v1731
        %v1733 = vpop.f32.mrb[0].mxu0
        %v1734 = vpop.f32.mrb[0].mxu0
        %v1735 = vadd.f32 0.0, %v1734
        %v1736 = vpop.f32.mrb[0].mxu0
        %1737 = vmatprep.mubr.bf16.mxu0 %v1672
        %1738 = vmatmul.mubr.bf16.gmra.mrb[0].mxu0 %v1671
        %v1739 = vpop.f32.mrb[0].mxu0
        %v1740 = vadd.f32 0.0, %v1739
        %v1741 = vpop.f32.mrb[0].mxu0
        %v1742 = vpop.f32.mrb[0].mxu0
        %v1743 = vadd.f32 0.0, %v1742
        %v1744 = vpop.f32.mrb[0].mxu0
        %1745 = vdwg.mxu0
        %v1746 = vpack.c.bf16 %v1719, %v1716
        %v1747 = vpack.c.bf16 %v1727, %v1724
        %v1748 = vpack.c.bf16 %v1735, %v1732
        %v1749 = vpack.c.bf16 %v1743, %v1740
        %s1750 = scalar_lea.vmem %s3, 64
        %v1751 = vld [vmem:[%s1750] sm:$0xf]
        %v1752 = vld [vmem:[%s1750 + $0x4] sm:$0xf]
        %v1753 = vld [vmem:[%s1750 + $0x8] sm:$0xf]
        %v1754 = vld [vmem:[%s1750 + $0xc] sm:$0xf]
        %v1759 = vunpack.c.l.b16 %v1751
        %v1760 = vunpack.c.l.b16 %v1752
        %v1761 = vunpack.c.l.b16 %v1753
        %v1762 = vunpack.c.l.b16 %v1754
        %v1763 = vpack.c.b16 %v1760, %v1759
        %v1764 = vpack.c.b16 %v1762, %v1761
        %v1768 = vsel %vm1025, %v1746, 0
        %v1771 = vsel %vm1025, %v1747, 0
        %v1774 = vsel %vm1025, %v1748, 0
        %v1777 = vsel %vm1025, %v1749, 0
        %1779 = vmatprep.subr.bf16.mxu0 0
        %1780 = vmatpush1.bf16.msra.mxu0 %v1763
        %1781 = vmatprep.subr.bf16.mxu0 0
        %1782 = vmatpush1.bf16.msra.mxu0 %v1764
        %1783 = vmatprep.subr.bf16.mxu0 0
        %1784 = vmatpush1.bf16.msra.mxu0 0
        %1785 = vmatprep.subr.bf16.mxu0 0
        %1786 = vmatpush1.bf16.msra.mxu0 0
        %1787 = vmatprep.subr.bf16.mxu0 0
        %1788 = vmatpush1.bf16.msra.mxu0 0
        %1789 = vmatprep.subr.bf16.mxu0 0
        %1790 = vmatpush1.bf16.msra.mxu0 0
        %1791 = vmatprep.subr.bf16.mxu0 0
        %1792 = vmatpush1.bf16.msra.mxu0 0
        %1793 = vmatprep.subr.bf16.mxu0 0
        %1794 = vmatpush1.bf16.msra.mxu0 0
        %1795 = vmatprep.subr.bf16.mxu0 0
        %1796 = vmatpush1.bf16.msra.mxu0 0
        %1797 = vmatprep.subr.bf16.mxu0 0
        %1798 = vmatpush1.bf16.msra.mxu0 0
        %1799 = vmatprep.subr.bf16.mxu0 0
        %1800 = vmatpush1.bf16.msra.mxu0 0
        %1801 = vmatprep.subr.bf16.mxu0 0
        %1802 = vmatpush1.bf16.msra.mxu0 0
        %1803 = vmatprep.subr.bf16.mxu0 0
        %1804 = vmatpush1.bf16.msra.mxu0 0
        %1805 = vmatprep.subr.bf16.mxu0 0
        %1806 = vmatpush1.bf16.msra.mxu0 0
        %1807 = vmatprep.subr.bf16.mxu0 0
        %1808 = vmatpush1.bf16.msra.mxu0 0
        %1809 = vmatprep.subr.bf16.mxu0 0
        %1810 = vmatpush1.bf16.msra.mxu0 0
        %1811 = vmatprep.mubr.bf16.mxu0 0
        %1812 = vmatmul.mubr.bf16.gmra.mrb[0].mxu0 %v1768
        %v1813 = vpop.f32.mrb[0].mxu0
        %v1814 = vadd.f32 0.0, %v1813
        %v1815 = vpop.f32.mrb[0].mxu0
        %v1816 = vpop.f32.mrb[0].mxu0
        %v1817 = vadd.f32 0.0, %v1816
        %v1818 = vpop.f32.mrb[0].mxu0
        %1819 = vmatprep.mubr.bf16.mxu0 0
        %1820 = vmatmul.mubr.bf16.gmra.mrb[0].mxu0 %v1771
        %v1821 = vpop.f32.mrb[0].mxu0
        %v1822 = vadd.f32 0.0, %v1821
        %v1823 = vpop.f32.mrb[0].mxu0
        %v1824 = vpop.f32.mrb[0].mxu0
        %v1825 = vadd.f32 0.0, %v1824
        %v1826 = vpop.f32.mrb[0].mxu0
        %1827 = vmatprep.mubr.bf16.mxu0 0
        %1828 = vmatmul.mubr.bf16.gmra.mrb[0].mxu0 %v1774
        %v1829 = vpop.f32.mrb[0].mxu0
        %v1830 = vadd.f32 0.0, %v1829
        %v1831 = vpop.f32.mrb[0].mxu0
        %v1832 = vpop.f32.mrb[0].mxu0
        %v1833 = vadd.f32 0.0, %v1832
        %v1834 = vpop.f32.mrb[0].mxu0
        %1835 = vmatprep.mubr.bf16.mxu0 0
        %1836 = vmatmul.mubr.bf16.gmra.mrb[0].mxu0 %v1777
        %v1837 = vpop.f32.mrb[0].mxu0
        %v1838 = vadd.f32 0.0, %v1837
        %v1839 = vpop.f32.mrb[0].mxu0
        %v1840 = vpop.f32.mrb[0].mxu0
        %v1841 = vadd.f32 0.0, %v1840
        %v1842 = vpop.f32.mrb[0].mxu0
        %1843 = vdwg.mxu0
        %v1844 = vadd.f32 %v1624, %v1814
        %v1845 = vadd.f32 %v1625, %v1817
        %v1846 = vadd.f32 %v1626, %v1822
        %v1847 = vadd.f32 %v1627, %v1825
        %v1848 = vadd.f32 %v1628, %v1830
        %v1849 = vadd.f32 %v1629, %v1833
        %v1850 = vadd.f32 %v1630, %v1838
        %v1851 = vadd.f32 %v1631, %v1841
        %s1852 = scalar_lea.vmem [#allocation2], 320
        %v1853 = vld [vmem:[%s1852] sm:$0xff]
        %v1854 = vld [vmem:[%s1852 + $0x8] sm:$0xff]
        %v1855 = vld [vmem:[%s1852 + $0x10] sm:$0xff]
        %v1856 = vld [vmem:[%s1852 + $0x18] sm:$0xff]
        %v1857 = vld [vmem:[%s1852 + $0x20] sm:$0xff]
        %v1858 = vld [vmem:[%s1852 + $0x28] sm:$0xff]
        %v1859 = vld [vmem:[%s1852 + $0x30] sm:$0xff]
        %v1860 = vld [vmem:[%s1852 + $0x38] sm:$0xff]
        %v1869 = vunpack.c.l.b16 %v1853
        %v1870 = vunpack.c.h.b16 %v1853
        %v1871 = vunpack.c.l.b16 %v1854
        %v1872 = vunpack.c.h.b16 %v1854
        %v1873 = vunpack.c.l.b16 %v1855
        %v1874 = vunpack.c.h.b16 %v1855
        %v1875 = vunpack.c.l.b16 %v1856
        %v1876 = vunpack.c.h.b16 %v1856
        %v1877 = vunpack.c.l.b16 %v1857
        %v1878 = vunpack.c.h.b16 %v1857
        %v1879 = vunpack.c.l.b16 %v1858
        %v1880 = vunpack.c.h.b16 %v1858
        %v1881 = vunpack.c.l.b16 %v1859
        %v1882 = vunpack.c.h.b16 %v1859
        %v1883 = vunpack.c.l.b16 %v1860
        %v1884 = vunpack.c.h.b16 %v1860
        %v1885 = vpack.c.b16 %v1871, %v1869
        %v1886 = vpack.c.b16 %v1872, %v1870
        %v1887 = vpack.c.b16 %v1875, %v1873
        %v1888 = vpack.c.b16 %v1876, %v1874
        %v1889 = vpack.c.b16 %v1879, %v1877
        %v1890 = vpack.c.b16 %v1880, %v1878
        %v1891 = vpack.c.b16 %v1883, %v1881
        %v1892 = vpack.c.b16 %v1884, %v1882
        %1901 = vmatprep.subr.bf16.mxu0 0
        %1902 = vmatpush1.bf16.msra.mxu0 %v753
        %1903 = vmatprep.subr.bf16.mxu0 0
        %1904 = vmatpush1.bf16.msra.mxu0 %v754
        %1905 = vmatprep.subr.bf16.mxu0 0
        %1906 = vmatpush1.bf16.msra.mxu0 %v755
        %1907 = vmatprep.subr.bf16.mxu0 0
        %1908 = vmatpush1.bf16.msra.mxu0 %v756
        %1909 = vmatprep.subr.bf16.mxu0 0
        %1910 = vmatpush1.bf16.msra.mxu0 %v757
        %1911 = vmatprep.subr.bf16.mxu0 0
        %1912 = vmatpush1.bf16.msra.mxu0 %v758
        %1913 = vmatprep.subr.bf16.mxu0 0
        %1914 = vmatpush1.bf16.msra.mxu0 %v759
        %1915 = vmatprep.subr.bf16.mxu0 0
        %1916 = vmatpush1.bf16.msra.mxu0 %v760
        %1917 = vmatprep.subr.bf16.mxu0 0
        %1918 = vmatpush1.bf16.msra.mxu0 %v761
        %1919 = vmatprep.subr.bf16.mxu0 0
        %1920 = vmatpush1.bf16.msra.mxu0 %v762
        %1921 = vmatprep.subr.bf16.mxu0 0
        %1922 = vmatpush1.bf16.msra.mxu0 %v763
        %1923 = vmatprep.subr.bf16.mxu0 0
        %1924 = vmatpush1.bf16.msra.mxu0 %v764
        %1925 = vmatprep.subr.bf16.mxu0 0
        %1926 = vmatpush1.bf16.msra.mxu0 %v765
        %1927 = vmatprep.subr.bf16.mxu0 0
        %1928 = vmatpush1.bf16.msra.mxu0 %v766
        %1929 = vmatprep.subr.bf16.mxu0 0
        %1930 = vmatpush1.bf16.msra.mxu0 %v767
        %1931 = vmatprep.subr.bf16.mxu0 0
        %1932 = vmatpush1.bf16.msra.mxu0 %v768
        %1933 = vmatprep.mubr.bf16.mxu0 %v1886
        %1934 = vmatmul.mubr.bf16.gmra.mrb[0].mxu0 %v1885
        %v1935 = vpop.f32.mrb[0].mxu0
        %v1936 = vadd.f32 0.0, %v1935
        %v1937 = vpop.f32.mrb[0].mxu0
        %v1938 = vpop.f32.mrb[0].mxu0
        %v1939 = vadd.f32 0.0, %v1938
        %v1940 = vpop.f32.mrb[0].mxu0
        %1941 = vmatprep.mubr.bf16.mxu0 %v1888
        %1942 = vmatmul.mubr.bf16.gmra.mrb[0].mxu0 %v1887
        %v1943 = vpop.f32.mrb[0].mxu0
        %v1944 = vadd.f32 0.0, %v1943
        %v1945 = vpop.f32.mrb[0].mxu0
        %v1946 = vpop.f32.mrb[0].mxu0
        %v1947 = vadd.f32 0.0, %v1946
        %v1948 = vpop.f32.mrb[0].mxu0
        %1949 = vmatprep.mubr.bf16.mxu0 %v1890
        %1950 = vmatmul.mubr.bf16.gmra.mrb[0].mxu0 %v1889
        %v1951 = vpop.f32.mrb[0].mxu0
        %v1952 = vadd.f32 0.0, %v1951
        %v1953 = vpop.f32.mrb[0].mxu0
        %v1954 = vpop.f32.mrb[0].mxu0
        %v1955 = vadd.f32 0.0, %v1954
        %v1956 = vpop.f32.mrb[0].mxu0
        %1957 = vmatprep.mubr.bf16.mxu0 %v1892
        %1958 = vmatmul.mubr.bf16.gmra.mrb[0].mxu0 %v1891
        %v1959 = vpop.f32.mrb[0].mxu0
        %v1960 = vadd.f32 0.0, %v1959
        %v1961 = vpop.f32.mrb[0].mxu0
        %v1962 = vpop.f32.mrb[0].mxu0
        %v1963 = vadd.f32 0.0, %v1962
        %v1964 = vpop.f32.mrb[0].mxu0
        %1965 = vdwg.mxu0
        %v1966 = vpack.c.bf16 %v1939, %v1936
        %v1967 = vpack.c.bf16 %v1947, %v1944
        %v1968 = vpack.c.bf16 %v1955, %v1952
        %v1969 = vpack.c.bf16 %v1963, %v1960
        %s1970 = scalar_lea.vmem %s3, 80
        %v1971 = vld [vmem:[%s1970] sm:$0xf]
        %v1972 = vld [vmem:[%s1970 + $0x4] sm:$0xf]
        %v1973 = vld [vmem:[%s1970 + $0x8] sm:$0xf]
        %v1974 = vld [vmem:[%s1970 + $0xc] sm:$0xf]
        %v1979 = vunpack.c.l.b16 %v1971
        %v1980 = vunpack.c.l.b16 %v1972
        %v1981 = vunpack.c.l.b16 %v1973
        %v1982 = vunpack.c.l.b16 %v1974
        %v1983 = vpack.c.b16 %v1980, %v1979
        %v1984 = vpack.c.b16 %v1982, %v1981
        %v1988 = vsel %vm1025, %v1966, 0
        %v1991 = vsel %vm1025, %v1967, 0
        %v1994 = vsel %vm1025, %v1968, 0
        %v1997 = vsel %vm1025, %v1969, 0
        %1999 = vmatprep.subr.bf16.mxu0 0
        %2000 = vmatpush1.bf16.msra.mxu0 %v1983
        %2001 = vmatprep.subr.bf16.mxu0 0
        %2002 = vmatpush1.bf16.msra.mxu0 %v1984
        %2003 = vmatprep.subr.bf16.mxu0 0
        %2004 = vmatpush1.bf16.msra.mxu0 0
        %2005 = vmatprep.subr.bf16.mxu0 0
        %2006 = vmatpush1.bf16.msra.mxu0 0
        %2007 = vmatprep.subr.bf16.mxu0 0
        %2008 = vmatpush1.bf16.msra.mxu0 0
        %2009 = vmatprep.subr.bf16.mxu0 0
        %2010 = vmatpush1.bf16.msra.mxu0 0
        %2011 = vmatprep.subr.bf16.mxu0 0
        %2012 = vmatpush1.bf16.msra.mxu0 0
        %2013 = vmatprep.subr.bf16.mxu0 0
        %2014 = vmatpush1.bf16.msra.mxu0 0
        %2015 = vmatprep.subr.bf16.mxu0 0
        %2016 = vmatpush1.bf16.msra.mxu0 0
        %2017 = vmatprep.subr.bf16.mxu0 0
        %2018 = vmatpush1.bf16.msra.mxu0 0
        %2019 = vmatprep.subr.bf16.mxu0 0
        %2020 = vmatpush1.bf16.msra.mxu0 0
        %2021 = vmatprep.subr.bf16.mxu0 0
        %2022 = vmatpush1.bf16.msra.mxu0 0
        %2023 = vmatprep.subr.bf16.mxu0 0
        %2024 = vmatpush1.bf16.msra.mxu0 0
        %2025 = vmatprep.subr.bf16.mxu0 0
        %2026 = vmatpush1.bf16.msra.mxu0 0
        %2027 = vmatprep.subr.bf16.mxu0 0
        %2028 = vmatpush1.bf16.msra.mxu0 0
        %2029 = vmatprep.subr.bf16.mxu0 0
        %2030 = vmatpush1.bf16.msra.mxu0 0
        %2031 = vmatprep.mubr.bf16.mxu0 0
        %2032 = vmatmul.mubr.bf16.gmra.mrb[0].mxu0 %v1988
        %v2033 = vpop.f32.mrb[0].mxu0
        %v2034 = vadd.f32 0.0, %v2033
        %v2035 = vpop.f32.mrb[0].mxu0
        %v2036 = vpop.f32.mrb[0].mxu0
        %v2037 = vadd.f32 0.0, %v2036
        %v2038 = vpop.f32.mrb[0].mxu0
        %2039 = vmatprep.mubr.bf16.mxu0 0
        %2040 = vmatmul.mubr.bf16.gmra.mrb[0].mxu0 %v1991
        %v2041 = vpop.f32.mrb[0].mxu0
        %v2042 = vadd.f32 0.0, %v2041
        %v2043 = vpop.f32.mrb[0].mxu0
        %v2044 = vpop.f32.mrb[0].mxu0
        %v2045 = vadd.f32 0.0, %v2044
        %v2046 = vpop.f32.mrb[0].mxu0
        %2047 = vmatprep.mubr.bf16.mxu0 0
        %2048 = vmatmul.mubr.bf16.gmra.mrb[0].mxu0 %v1994
        %v2049 = vpop.f32.mrb[0].mxu0
        %v2050 = vadd.f32 0.0, %v2049
        %v2051 = vpop.f32.mrb[0].mxu0
        %v2052 = vpop.f32.mrb[0].mxu0
        %v2053 = vadd.f32 0.0, %v2052
        %v2054 = vpop.f32.mrb[0].mxu0
        %2055 = vmatprep.mubr.bf16.mxu0 0
        %2056 = vmatmul.mubr.bf16.gmra.mrb[0].mxu0 %v1997
        %v2057 = vpop.f32.mrb[0].mxu0
        %v2058 = vadd.f32 0.0, %v2057
        %v2059 = vpop.f32.mrb[0].mxu0
        %v2060 = vpop.f32.mrb[0].mxu0
        %v2061 = vadd.f32 0.0, %v2060
        %v2062 = vpop.f32.mrb[0].mxu0
        %2063 = vdwg.mxu0
        %v2064 = vadd.f32 %v1844, %v2034
        %v2065 = vadd.f32 %v1845, %v2037
        %v2066 = vadd.f32 %v1846, %v2042
        %v2067 = vadd.f32 %v1847, %v2045
        %v2068 = vadd.f32 %v1848, %v2050
        %v2069 = vadd.f32 %v1849, %v2053
        %v2070 = vadd.f32 %v1850, %v2058
        %v2071 = vadd.f32 %v1851, %v2061
        %s2072 = scalar_lea.vmem [#allocation2], 384
        %v2073 = vld [vmem:[%s2072] sm:$0xff]
        %v2074 = vld [vmem:[%s2072 + $0x8] sm:$0xff]
        %v2075 = vld [vmem:[%s2072 + $0x10] sm:$0xff]
        %v2076 = vld [vmem:[%s2072 + $0x18] sm:$0xff]
        %v2077 = vld [vmem:[%s2072 + $0x20] sm:$0xff]
        %v2078 = vld [vmem:[%s2072 + $0x28] sm:$0xff]
        %v2079 = vld [vmem:[%s2072 + $0x30] sm:$0xff]
        %v2080 = vld [vmem:[%s2072 + $0x38] sm:$0xff]
        %v2089 = vunpack.c.l.b16 %v2073
        %v2090 = vunpack.c.h.b16 %v2073
        %v2091 = vunpack.c.l.b16 %v2074
        %v2092 = vunpack.c.h.b16 %v2074
        %v2093 = vunpack.c.l.b16 %v2075
        %v2094 = vunpack.c.h.b16 %v2075
        %v2095 = vunpack.c.l.b16 %v2076
        %v2096 = vunpack.c.h.b16 %v2076
        %v2097 = vunpack.c.l.b16 %v2077
        %v2098 = vunpack.c.h.b16 %v2077
        %v2099 = vunpack.c.l.b16 %v2078
        %v2100 = vunpack.c.h.b16 %v2078
        %v2101 = vunpack.c.l.b16 %v2079
        %v2102 = vunpack.c.h.b16 %v2079
        %v2103 = vunpack.c.l.b16 %v2080
        %v2104 = vunpack.c.h.b16 %v2080
        %v2105 = vpack.c.b16 %v2091, %v2089
        %v2106 = vpack.c.b16 %v2092, %v2090
        %v2107 = vpack.c.b16 %v2095, %v2093
        %v2108 = vpack.c.b16 %v2096, %v2094
        %v2109 = vpack.c.b16 %v2099, %v2097
        %v2110 = vpack.c.b16 %v2100, %v2098
        %v2111 = vpack.c.b16 %v2103, %v2101
        %v2112 = vpack.c.b16 %v2104, %v2102
        %2121 = vmatprep.subr.bf16.mxu0 0
        %2122 = vmatpush1.bf16.msra.mxu0 %v753
        %2123 = vmatprep.subr.bf16.mxu0 0
        %2124 = vmatpush1.bf16.msra.mxu0 %v754
        %2125 = vmatprep.subr.bf16.mxu0 0
        %2126 = vmatpush1.bf16.msra.mxu0 %v755
        %2127 = vmatprep.subr.bf16.mxu0 0
        %2128 = vmatpush1.bf16.msra.mxu0 %v756
        %2129 = vmatprep.subr.bf16.mxu0 0
        %2130 = vmatpush1.bf16.msra.mxu0 %v757
        %2131 = vmatprep.subr.bf16.mxu0 0
        %2132 = vmatpush1.bf16.msra.mxu0 %v758
        %2133 = vmatprep.subr.bf16.mxu0 0
        %2134 = vmatpush1.bf16.msra.mxu0 %v759
        %2135 = vmatprep.subr.bf16.mxu0 0
        %2136 = vmatpush1.bf16.msra.mxu0 %v760
        %2137 = vmatprep.subr.bf16.mxu0 0
        %2138 = vmatpush1.bf16.msra.mxu0 %v761
        %2139 = vmatprep.subr.bf16.mxu0 0
        %2140 = vmatpush1.bf16.msra.mxu0 %v762
        %2141 = vmatprep.subr.bf16.mxu0 0
        %2142 = vmatpush1.bf16.msra.mxu0 %v763
        %2143 = vmatprep.subr.bf16.mxu0 0
        %2144 = vmatpush1.bf16.msra.mxu0 %v764
        %2145 = vmatprep.subr.bf16.mxu0 0
        %2146 = vmatpush1.bf16.msra.mxu0 %v765
        %2147 = vmatprep.subr.bf16.mxu0 0
        %2148 = vmatpush1.bf16.msra.mxu0 %v766
        %2149 = vmatprep.subr.bf16.mxu0 0
        %2150 = vmatpush1.bf16.msra.mxu0 %v767
        %2151 = vmatprep.subr.bf16.mxu0 0
        %2152 = vmatpush1.bf16.msra.mxu0 %v768
        %2153 = vmatprep.mubr.bf16.mxu0 %v2106
        %2154 = vmatmul.mubr.bf16.gmra.mrb[0].mxu0 %v2105
        %v2155 = vpop.f32.mrb[0].mxu0
        %v2156 = vadd.f32 0.0, %v2155
        %v2157 = vpop.f32.mrb[0].mxu0
        %v2158 = vpop.f32.mrb[0].mxu0
        %v2159 = vadd.f32 0.0, %v2158
        %v2160 = vpop.f32.mrb[0].mxu0
        %2161 = vmatprep.mubr.bf16.mxu0 %v2108
        %2162 = vmatmul.mubr.bf16.gmra.mrb[0].mxu0 %v2107
        %v2163 = vpop.f32.mrb[0].mxu0
        %v2164 = vadd.f32 0.0, %v2163
        %v2165 = vpop.f32.mrb[0].mxu0
        %v2166 = vpop.f32.mrb[0].mxu0
        %v2167 = vadd.f32 0.0, %v2166
        %v2168 = vpop.f32.mrb[0].mxu0
        %2169 = vmatprep.mubr.bf16.mxu0 %v2110
        %2170 = vmatmul.mubr.bf16.gmra.mrb[0].mxu0 %v2109
        %v2171 = vpop.f32.mrb[0].mxu0
        %v2172 = vadd.f32 0.0, %v2171
        %v2173 = vpop.f32.mrb[0].mxu0
        %v2174 = vpop.f32.mrb[0].mxu0
        %v2175 = vadd.f32 0.0, %v2174
        %v2176 = vpop.f32.mrb[0].mxu0
        %2177 = vmatprep.mubr.bf16.mxu0 %v2112
        %2178 = vmatmul.mubr.bf16.gmra.mrb[0].mxu0 %v2111
        %v2179 = vpop.f32.mrb[0].mxu0
        %v2180 = vadd.f32 0.0, %v2179
        %v2181 = vpop.f32.mrb[0].mxu0
        %v2182 = vpop.f32.mrb[0].mxu0
        %v2183 = vadd.f32 0.0, %v2182
        %v2184 = vpop.f32.mrb[0].mxu0
        %2185 = vdwg.mxu0
        %v2186 = vpack.c.bf16 %v2159, %v2156
        %v2187 = vpack.c.bf16 %v2167, %v2164
        %v2188 = vpack.c.bf16 %v2175, %v2172
        %v2189 = vpack.c.bf16 %v2183, %v2180
        %s2190 = scalar_lea.vmem %s3, 96
        %v2191 = vld [vmem:[%s2190] sm:$0xf]
        %v2192 = vld [vmem:[%s2190 + $0x4] sm:$0xf]
        %v2193 = vld [vmem:[%s2190 + $0x8] sm:$0xf]
        %v2194 = vld [vmem:[%s2190 + $0xc] sm:$0xf]
        %v2199 = vunpack.c.l.b16 %v2191
        %v2200 = vunpack.c.l.b16 %v2192
        %v2201 = vunpack.c.l.b16 %v2193
        %v2202 = vunpack.c.l.b16 %v2194
        %v2203 = vpack.c.b16 %v2200, %v2199
        %v2204 = vpack.c.b16 %v2202, %v2201
        %v2208 = vsel %vm1025, %v2186, 0
        %v2211 = vsel %vm1025, %v2187, 0
        %v2214 = vsel %vm1025, %v2188, 0
        %v2217 = vsel %vm1025, %v2189, 0
        %2219 = vmatprep.subr.bf16.mxu0 0
        %2220 = vmatpush1.bf16.msra.mxu0 %v2203
        %2221 = vmatprep.subr.bf16.mxu0 0
        %2222 = vmatpush1.bf16.msra.mxu0 %v2204
        %2223 = vmatprep.subr.bf16.mxu0 0
        %2224 = vmatpush1.bf16.msra.mxu0 0
        %2225 = vmatprep.subr.bf16.mxu0 0
        %2226 = vmatpush1.bf16.msra.mxu0 0
        %2227 = vmatprep.subr.bf16.mxu0 0
        %2228 = vmatpush1.bf16.msra.mxu0 0
        %2229 = vmatprep.subr.bf16.mxu0 0
        %2230 = vmatpush1.bf16.msra.mxu0 0
        %2231 = vmatprep.subr.bf16.mxu0 0
        %2232 = vmatpush1.bf16.msra.mxu0 0
        %2233 = vmatprep.subr.bf16.mxu0 0
        %2234 = vmatpush1.bf16.msra.mxu0 0
        %2235 = vmatprep.subr.bf16.mxu0 0
        %2236 = vmatpush1.bf16.msra.mxu0 0
        %2237 = vmatprep.subr.bf16.mxu0 0
        %2238 = vmatpush1.bf16.msra.mxu0 0
        %2239 = vmatprep.subr.bf16.mxu0 0
        %2240 = vmatpush1.bf16.msra.mxu0 0
        %2241 = vmatprep.subr.bf16.mxu0 0
        %2242 = vmatpush1.bf16.msra.mxu0 0
        %2243 = vmatprep.subr.bf16.mxu0 0
        %2244 = vmatpush1.bf16.msra.mxu0 0
        %2245 = vmatprep.subr.bf16.mxu0 0
        %2246 = vmatpush1.bf16.msra.mxu0 0
        %2247 = vmatprep.subr.bf16.mxu0 0
        %2248 = vmatpush1.bf16.msra.mxu0 0
        %2249 = vmatprep.subr.bf16.mxu0 0
        %2250 = vmatpush1.bf16.msra.mxu0 0
        %2251 = vmatprep.mubr.bf16.mxu0 0
        %2252 = vmatmul.mubr.bf16.gmra.mrb[0].mxu0 %v2208
        %v2253 = vpop.f32.mrb[0].mxu0
        %v2254 = vadd.f32 0.0, %v2253
        %v2255 = vpop.f32.mrb[0].mxu0
        %v2256 = vpop.f32.mrb[0].mxu0
        %v2257 = vadd.f32 0.0, %v2256
        %v2258 = vpop.f32.mrb[0].mxu0
        %2259 = vmatprep.mubr.bf16.mxu0 0
        %2260 = vmatmul.mubr.bf16.gmra.mrb[0].mxu0 %v2211
        %v2261 = vpop.f32.mrb[0].mxu0
        %v2262 = vadd.f32 0.0, %v2261
        %v2263 = vpop.f32.mrb[0].mxu0
        %v2264 = vpop.f32.mrb[0].mxu0
        %v2265 = vadd.f32 0.0, %v2264
        %v2266 = vpop.f32.mrb[0].mxu0
        %2267 = vmatprep.mubr.bf16.mxu0 0
        %2268 = vmatmul.mubr.bf16.gmra.mrb[0].mxu0 %v2214
        %v2269 = vpop.f32.mrb[0].mxu0
        %v2270 = vadd.f32 0.0, %v2269
        %v2271 = vpop.f32.mrb[0].mxu0
        %v2272 = vpop.f32.mrb[0].mxu0
        %v2273 = vadd.f32 0.0, %v2272
        %v2274 = vpop.f32.mrb[0].mxu0
        %2275 = vmatprep.mubr.bf16.mxu0 0
        %2276 = vmatmul.mubr.bf16.gmra.mrb[0].mxu0 %v2217
        %v2277 = vpop.f32.mrb[0].mxu0
        %v2278 = vadd.f32 0.0, %v2277
        %v2279 = vpop.f32.mrb[0].mxu0
        %v2280 = vpop.f32.mrb[0].mxu0
        %v2281 = vadd.f32 0.0, %v2280
        %v2282 = vpop.f32.mrb[0].mxu0
        %2283 = vdwg.mxu0
        %v2284 = vadd.f32 %v2064, %v2254
        %v2285 = vadd.f32 %v2065, %v2257
        %v2286 = vadd.f32 %v2066, %v2262
        %v2287 = vadd.f32 %v2067, %v2265
        %v2288 = vadd.f32 %v2068, %v2270
        %v2289 = vadd.f32 %v2069, %v2273
        %v2290 = vadd.f32 %v2070, %v2278
        %v2291 = vadd.f32 %v2071, %v2281
        %s2292 = scalar_lea.vmem [#allocation2], 448
        %v2293 = vld [vmem:[%s2292] sm:$0xff]
        %v2294 = vld [vmem:[%s2292 + $0x8] sm:$0xff]
        %v2295 = vld [vmem:[%s2292 + $0x10] sm:$0xff]
        %v2296 = vld [vmem:[%s2292 + $0x18] sm:$0xff]
        %v2297 = vld [vmem:[%s2292 + $0x20] sm:$0xff]
        %v2298 = vld [vmem:[%s2292 + $0x28] sm:$0xff]
        %v2299 = vld [vmem:[%s2292 + $0x30] sm:$0xff]
        %v2300 = vld [vmem:[%s2292 + $0x38] sm:$0xff]
        %v2309 = vunpack.c.l.b16 %v2293
        %v2310 = vunpack.c.h.b16 %v2293
        %v2311 = vunpack.c.l.b16 %v2294
        %v2312 = vunpack.c.h.b16 %v2294
        %v2313 = vunpack.c.l.b16 %v2295
        %v2314 = vunpack.c.h.b16 %v2295
        %v2315 = vunpack.c.l.b16 %v2296
        %v2316 = vunpack.c.h.b16 %v2296
        %v2317 = vunpack.c.l.b16 %v2297
        %v2318 = vunpack.c.h.b16 %v2297
        %v2319 = vunpack.c.l.b16 %v2298
        %v2320 = vunpack.c.h.b16 %v2298
        %v2321 = vunpack.c.l.b16 %v2299
        %v2322 = vunpack.c.h.b16 %v2299
        %v2323 = vunpack.c.l.b16 %v2300
        %v2324 = vunpack.c.h.b16 %v2300
        %v2325 = vpack.c.b16 %v2311, %v2309
        %v2326 = vpack.c.b16 %v2312, %v2310
        %v2327 = vpack.c.b16 %v2315, %v2313
        %v2328 = vpack.c.b16 %v2316, %v2314
        %v2329 = vpack.c.b16 %v2319, %v2317
        %v2330 = vpack.c.b16 %v2320, %v2318
        %v2331 = vpack.c.b16 %v2323, %v2321
        %v2332 = vpack.c.b16 %v2324, %v2322
        %2341 = vmatprep.subr.bf16.mxu0 0
        %2342 = vmatpush1.bf16.msra.mxu0 %v753
        %2343 = vmatprep.subr.bf16.mxu0 0
        %2344 = vmatpush1.bf16.msra.mxu0 %v754
        %2345 = vmatprep.subr.bf16.mxu0 0
        %2346 = vmatpush1.bf16.msra.mxu0 %v755
        %2347 = vmatprep.subr.bf16.mxu0 0
        %2348 = vmatpush1.bf16.msra.mxu0 %v756
        %2349 = vmatprep.subr.bf16.mxu0 0
        %2350 = vmatpush1.bf16.msra.mxu0 %v757
        %2351 = vmatprep.subr.bf16.mxu0 0
        %2352 = vmatpush1.bf16.msra.mxu0 %v758
        %2353 = vmatprep.subr.bf16.mxu0 0
        %2354 = vmatpush1.bf16.msra.mxu0 %v759
        %2355 = vmatprep.subr.bf16.mxu0 0
        %2356 = vmatpush1.bf16.msra.mxu0 %v760
        %2357 = vmatprep.subr.bf16.mxu0 0
        %2358 = vmatpush1.bf16.msra.mxu0 %v761
        %2359 = vmatprep.subr.bf16.mxu0 0
        %2360 = vmatpush1.bf16.msra.mxu0 %v762
        %2361 = vmatprep.subr.bf16.mxu0 0
        %2362 = vmatpush1.bf16.msra.mxu0 %v763
        %2363 = vmatprep.subr.bf16.mxu0 0
        %2364 = vmatpush1.bf16.msra.mxu0 %v764
        %2365 = vmatprep.subr.bf16.mxu0 0
        %2366 = vmatpush1.bf16.msra.mxu0 %v765
        %2367 = vmatprep.subr.bf16.mxu0 0
        %2368 = vmatpush1.bf16.msra.mxu0 %v766
        %2369 = vmatprep.subr.bf16.mxu0 0
        %2370 = vmatpush1.bf16.msra.mxu0 %v767
        %2371 = vmatprep.subr.bf16.mxu0 0
        %2372 = vmatpush1.bf16.msra.mxu0 %v768
        %2373 = vmatprep.mubr.bf16.mxu0 %v2326
        %2374 = vmatmul.mubr.bf16.gmra.mrb[0].mxu0 %v2325
        %v2375 = vpop.f32.mrb[0].mxu0
        %v2376 = vadd.f32 0.0, %v2375
        %v2377 = vpop.f32.mrb[0].mxu0
        %v2378 = vpop.f32.mrb[0].mxu0
        %v2379 = vadd.f32 0.0, %v2378
        %v2380 = vpop.f32.mrb[0].mxu0
        %2381 = vmatprep.mubr.bf16.mxu0 %v2328
        %2382 = vmatmul.mubr.bf16.gmra.mrb[0].mxu0 %v2327
        %v2383 = vpop.f32.mrb[0].mxu0
        %v2384 = vadd.f32 0.0, %v2383
        %v2385 = vpop.f32.mrb[0].mxu0
        %v2386 = vpop.f32.mrb[0].mxu0
        %v2387 = vadd.f32 0.0, %v2386
        %v2388 = vpop.f32.mrb[0].mxu0
        %2389 = vmatprep.mubr.bf16.mxu0 %v2330
        %2390 = vmatmul.mubr.bf16.gmra.mrb[0].mxu0 %v2329
        %v2391 = vpop.f32.mrb[0].mxu0
        %v2392 = vadd.f32 0.0, %v2391
        %v2393 = vpop.f32.mrb[0].mxu0
        %v2394 = vpop.f32.mrb[0].mxu0
        %v2395 = vadd.f32 0.0, %v2394
        %v2396 = vpop.f32.mrb[0].mxu0
        %2397 = vmatprep.mubr.bf16.mxu0 %v2332
        %2398 = vmatmul.mubr.bf16.gmra.mrb[0].mxu0 %v2331
        %v2399 = vpop.f32.mrb[0].mxu0
        %v2400 = vadd.f32 0.0, %v2399
        %v2401 = vpop.f32.mrb[0].mxu0
        %v2402 = vpop.f32.mrb[0].mxu0
        %v2403 = vadd.f32 0.0, %v2402
        %v2404 = vpop.f32.mrb[0].mxu0
        %2405 = vdwg.mxu0
        %v2406 = vpack.c.bf16 %v2379, %v2376
        %v2407 = vpack.c.bf16 %v2387, %v2384
        %v2408 = vpack.c.bf16 %v2395, %v2392
        %v2409 = vpack.c.bf16 %v2403, %v2400
        %s2410 = scalar_lea.vmem %s3, 112
        %v2411 = vld [vmem:[%s2410] sm:$0xf]
        %v2412 = vld [vmem:[%s2410 + $0x4] sm:$0xf]
        %v2413 = vld [vmem:[%s2410 + $0x8] sm:$0xf]
        %v2414 = vld [vmem:[%s2410 + $0xc] sm:$0xf]
        %v2419 = vunpack.c.l.b16 %v2411
        %v2420 = vunpack.c.l.b16 %v2412
        %v2421 = vunpack.c.l.b16 %v2413
        %v2422 = vunpack.c.l.b16 %v2414
        %v2423 = vpack.c.b16 %v2420, %v2419
        %v2424 = vpack.c.b16 %v2422, %v2421
        %v2428 = vsel %vm1025, %v2406, 0
        %v2431 = vsel %vm1025, %v2407, 0
        %v2434 = vsel %vm1025, %v2408, 0
        %v2437 = vsel %vm1025, %v2409, 0
        %2439 = vmatprep.subr.bf16.mxu0 0
        %2440 = vmatpush1.bf16.msra.mxu0 %v2423
        %2441 = vmatprep.subr.bf16.mxu0 0
        %2442 = vmatpush1.bf16.msra.mxu0 %v2424
        %2443 = vmatprep.subr.bf16.mxu0 0
        %2444 = vmatpush1.bf16.msra.mxu0 0
        %2445 = vmatprep.subr.bf16.mxu0 0
        %2446 = vmatpush1.bf16.msra.mxu0 0
        %2447 = vmatprep.subr.bf16.mxu0 0
        %2448 = vmatpush1.bf16.msra.mxu0 0
        %2449 = vmatprep.subr.bf16.mxu0 0
        %2450 = vmatpush1.bf16.msra.mxu0 0
        %2451 = vmatprep.subr.bf16.mxu0 0
        %2452 = vmatpush1.bf16.msra.mxu0 0
        %2453 = vmatprep.subr.bf16.mxu0 0
        %2454 = vmatpush1.bf16.msra.mxu0 0
        %2455 = vmatprep.subr.bf16.mxu0 0
        %2456 = vmatpush1.bf16.msra.mxu0 0
        %2457 = vmatprep.subr.bf16.mxu0 0
        %2458 = vmatpush1.bf16.msra.mxu0 0
        %2459 = vmatprep.subr.bf16.mxu0 0
        %2460 = vmatpush1.bf16.msra.mxu0 0
        %2461 = vmatprep.subr.bf16.mxu0 0
        %2462 = vmatpush1.bf16.msra.mxu0 0
        %2463 = vmatprep.subr.bf16.mxu0 0
        %2464 = vmatpush1.bf16.msra.mxu0 0
        %2465 = vmatprep.subr.bf16.mxu0 0
        %2466 = vmatpush1.bf16.msra.mxu0 0
        %2467 = vmatprep.subr.bf16.mxu0 0
        %2468 = vmatpush1.bf16.msra.mxu0 0
        %2469 = vmatprep.subr.bf16.mxu0 0
        %2470 = vmatpush1.bf16.msra.mxu0 0
        %2471 = vmatprep.mubr.bf16.mxu0 0
        %2472 = vmatmul.mubr.bf16.gmra.mrb[0].mxu0 %v2428
        %v2473 = vpop.f32.mrb[0].mxu0
        %v2474 = vadd.f32 0.0, %v2473
        %v2475 = vpop.f32.mrb[0].mxu0
        %v2476 = vpop.f32.mrb[0].mxu0
        %v2477 = vadd.f32 0.0, %v2476
        %v2478 = vpop.f32.mrb[0].mxu0
        %2479 = vmatprep.mubr.bf16.mxu0 0
        %2480 = vmatmul.mubr.bf16.gmra.mrb[0].mxu0 %v2431
        %v2481 = vpop.f32.mrb[0].mxu0
        %v2482 = vadd.f32 0.0, %v2481
        %v2483 = vpop.f32.mrb[0].mxu0
        %v2484 = vpop.f32.mrb[0].mxu0
        %v2485 = vadd.f32 0.0, %v2484
        %v2486 = vpop.f32.mrb[0].mxu0
        %2487 = vmatprep.mubr.bf16.mxu0 0
        %2488 = vmatmul.mubr.bf16.gmra.mrb[0].mxu0 %v2434
        %v2489 = vpop.f32.mrb[0].mxu0
        %v2490 = vadd.f32 0.0, %v2489
        %v2491 = vpop.f32.mrb[0].mxu0
        %v2492 = vpop.f32.mrb[0].mxu0
        %v2493 = vadd.f32 0.0, %v2492
        %v2494 = vpop.f32.mrb[0].mxu0
        %2495 = vmatprep.mubr.bf16.mxu0 0
        %2496 = vmatmul.mubr.bf16.gmra.mrb[0].mxu0 %v2437
        %v2497 = vpop.f32.mrb[0].mxu0
        %v2498 = vadd.f32 0.0, %v2497
        %v2499 = vpop.f32.mrb[0].mxu0
        %v2500 = vpop.f32.mrb[0].mxu0
        %v2501 = vadd.f32 0.0, %v2500
        %v2502 = vpop.f32.mrb[0].mxu0
        %2503 = vdwg.mxu0
        %v2504 = vadd.f32 %v2284, %v2474
        %v2505 = vadd.f32 %v2285, %v2477
        %v2506 = vadd.f32 %v2286, %v2482
        %v2507 = vadd.f32 %v2287, %v2485
        %v2508 = vadd.f32 %v2288, %v2490
        %v2509 = vadd.f32 %v2289, %v2493
        %v2510 = vadd.f32 %v2290, %v2498
        %v2511 = vadd.f32 %v2291, %v2501
        %s2512 = scalar_lea.vmem [#allocation2], 512
        %v2513 = vld [vmem:[%s2512] sm:$0xff]
        %v2514 = vld [vmem:[%s2512 + $0x8] sm:$0xff]
        %v2515 = vld [vmem:[%s2512 + $0x10] sm:$0xff]
        %v2516 = vld [vmem:[%s2512 + $0x18] sm:$0xff]
        %v2517 = vld [vmem:[%s2512 + $0x20] sm:$0xff]
        %v2518 = vld [vmem:[%s2512 + $0x28] sm:$0xff]
        %v2519 = vld [vmem:[%s2512 + $0x30] sm:$0xff]
        %v2520 = vld [vmem:[%s2512 + $0x38] sm:$0xff]
        %v2529 = vunpack.c.l.b16 %v2513
        %v2530 = vunpack.c.h.b16 %v2513
        %v2531 = vunpack.c.l.b16 %v2514
        %v2532 = vunpack.c.h.b16 %v2514
        %v2533 = vunpack.c.l.b16 %v2515
        %v2534 = vunpack.c.h.b16 %v2515
        %v2535 = vunpack.c.l.b16 %v2516
        %v2536 = vunpack.c.h.b16 %v2516
        %v2537 = vunpack.c.l.b16 %v2517
        %v2538 = vunpack.c.h.b16 %v2517
        %v2539 = vunpack.c.l.b16 %v2518
        %v2540 = vunpack.c.h.b16 %v2518
        %v2541 = vunpack.c.l.b16 %v2519
        %v2542 = vunpack.c.h.b16 %v2519
        %v2543 = vunpack.c.l.b16 %v2520
        %v2544 = vunpack.c.h.b16 %v2520
        %v2545 = vpack.c.b16 %v2531, %v2529
        %v2546 = vpack.c.b16 %v2532, %v2530
        %v2547 = vpack.c.b16 %v2535, %v2533
        %v2548 = vpack.c.b16 %v2536, %v2534
        %v2549 = vpack.c.b16 %v2539, %v2537
        %v2550 = vpack.c.b16 %v2540, %v2538
        %v2551 = vpack.c.b16 %v2543, %v2541
        %v2552 = vpack.c.b16 %v2544, %v2542
        %2561 = vmatprep.subr.bf16.mxu0 0
        %2562 = vmatpush1.bf16.msra.mxu0 %v753
        %2563 = vmatprep.subr.bf16.mxu0 0
        %2564 = vmatpush1.bf16.msra.mxu0 %v754
        %2565 = vmatprep.subr.bf16.mxu0 0
        %2566 = vmatpush1.bf16.msra.mxu0 %v755
        %2567 = vmatprep.subr.bf16.mxu0 0
        %2568 = vmatpush1.bf16.msra.mxu0 %v756
        %2569 = vmatprep.subr.bf16.mxu0 0
        %2570 = vmatpush1.bf16.msra.mxu0 %v757
        %2571 = vmatprep.subr.bf16.mxu0 0
        %2572 = vmatpush1.bf16.msra.mxu0 %v758
        %2573 = vmatprep.subr.bf16.mxu0 0
        %2574 = vmatpush1.bf16.msra.mxu0 %v759
        %2575 = vmatprep.subr.bf16.mxu0 0
        %2576 = vmatpush1.bf16.msra.mxu0 %v760
        %2577 = vmatprep.subr.bf16.mxu0 0
        %2578 = vmatpush1.bf16.msra.mxu0 %v761
        %2579 = vmatprep.subr.bf16.mxu0 0
        %2580 = vmatpush1.bf16.msra.mxu0 %v762
        %2581 = vmatprep.subr.bf16.mxu0 0
        %2582 = vmatpush1.bf16.msra.mxu0 %v763
        %2583 = vmatprep.subr.bf16.mxu0 0
        %2584 = vmatpush1.bf16.msra.mxu0 %v764
        %2585 = vmatprep.subr.bf16.mxu0 0
        %2586 = vmatpush1.bf16.msra.mxu0 %v765
        %2587 = vmatprep.subr.bf16.mxu0 0
        %2588 = vmatpush1.bf16.msra.mxu0 %v766
        %2589 = vmatprep.subr.bf16.mxu0 0
        %2590 = vmatpush1.bf16.msra.mxu0 %v767
        %2591 = vmatprep.subr.bf16.mxu0 0
        %2592 = vmatpush1.bf16.msra.mxu0 %v768
        %2593 = vmatprep.mubr.bf16.mxu0 %v2546
        %2594 = vmatmul.mubr.bf16.gmra.mrb[0].mxu0 %v2545
        %v2595 = vpop.f32.mrb[0].mxu0
        %v2596 = vadd.f32 0.0, %v2595
        %v2597 = vpop.f32.mrb[0].mxu0
        %v2598 = vpop.f32.mrb[0].mxu0
        %v2599 = vadd.f32 0.0, %v2598
        %v2600 = vpop.f32.mrb[0].mxu0
        %2601 = vmatprep.mubr.bf16.mxu0 %v2548
        %2602 = vmatmul.mubr.bf16.gmra.mrb[0].mxu0 %v2547
        %v2603 = vpop.f32.mrb[0].mxu0
        %v2604 = vadd.f32 0.0, %v2603
        %v2605 = vpop.f32.mrb[0].mxu0
        %v2606 = vpop.f32.mrb[0].mxu0
        %v2607 = vadd.f32 0.0, %v2606
        %v2608 = vpop.f32.mrb[0].mxu0
        %2609 = vmatprep.mubr.bf16.mxu0 %v2550
        %2610 = vmatmul.mubr.bf16.gmra.mrb[0].mxu0 %v2549
        %v2611 = vpop.f32.mrb[0].mxu0
        %v2612 = vadd.f32 0.0, %v2611
        %v2613 = vpop.f32.mrb[0].mxu0
        %v2614 = vpop.f32.mrb[0].mxu0
        %v2615 = vadd.f32 0.0, %v2614
        %v2616 = vpop.f32.mrb[0].mxu0
        %2617 = vmatprep.mubr.bf16.mxu0 %v2552
        %2618 = vmatmul.mubr.bf16.gmra.mrb[0].mxu0 %v2551
        %v2619 = vpop.f32.mrb[0].mxu0
        %v2620 = vadd.f32 0.0, %v2619
        %v2621 = vpop.f32.mrb[0].mxu0
        %v2622 = vpop.f32.mrb[0].mxu0
        %v2623 = vadd.f32 0.0, %v2622
        %v2624 = vpop.f32.mrb[0].mxu0
        %2625 = vdwg.mxu0
        %v2626 = vpack.c.bf16 %v2599, %v2596
        %v2627 = vpack.c.bf16 %v2607, %v2604
        %v2628 = vpack.c.bf16 %v2615, %v2612
        %v2629 = vpack.c.bf16 %v2623, %v2620
        %s2630 = scalar_lea.vmem %s3, 128
        %v2631 = vld [vmem:[%s2630] sm:$0xf]
        %v2632 = vld [vmem:[%s2630 + $0x4] sm:$0xf]
        %v2633 = vld [vmem:[%s2630 + $0x8] sm:$0xf]
        %v2634 = vld [vmem:[%s2630 + $0xc] sm:$0xf]
        %v2639 = vunpack.c.l.b16 %v2631
        %v2640 = vunpack.c.l.b16 %v2632
        %v2641 = vunpack.c.l.b16 %v2633
        %v2642 = vunpack.c.l.b16 %v2634
        %v2643 = vpack.c.b16 %v2640, %v2639
        %v2644 = vpack.c.b16 %v2642, %v2641
        %v2648 = vsel %vm1025, %v2626, 0
        %v2651 = vsel %vm1025, %v2627, 0
        %v2654 = vsel %vm1025, %v2628, 0
        %v2657 = vsel %vm1025, %v2629, 0
        %2659 = vmatprep.subr.bf16.mxu0 0
        %2660 = vmatpush1.bf16.msra.mxu0 %v2643
        %2661 = vmatprep.subr.bf16.mxu0 0
        %2662 = vmatpush1.bf16.msra.mxu0 %v2644
        %2663 = vmatprep.subr.bf16.mxu0 0
        %2664 = vmatpush1.bf16.msra.mxu0 0
        %2665 = vmatprep.subr.bf16.mxu0 0
        %2666 = vmatpush1.bf16.msra.mxu0 0
        %2667 = vmatprep.subr.bf16.mxu0 0
        %2668 = vmatpush1.bf16.msra.mxu0 0
        %2669 = vmatprep.subr.bf16.mxu0 0
        %2670 = vmatpush1.bf16.msra.mxu0 0
        %2671 = vmatprep.subr.bf16.mxu0 0
        %2672 = vmatpush1.bf16.msra.mxu0 0
        %2673 = vmatprep.subr.bf16.mxu0 0
        %2674 = vmatpush1.bf16.msra.mxu0 0
        %2675 = vmatprep.subr.bf16.mxu0 0
        %2676 = vmatpush1.bf16.msra.mxu0 0
        %2677 = vmatprep.subr.bf16.mxu0 0
        %2678 = vmatpush1.bf16.msra.mxu0 0
        %2679 = vmatprep.subr.bf16.mxu0 0
        %2680 = vmatpush1.bf16.msra.mxu0 0
        %2681 = vmatprep.subr.bf16.mxu0 0
        %2682 = vmatpush1.bf16.msra.mxu0 0
        %2683 = vmatprep.subr.bf16.mxu0 0
        %2684 = vmatpush1.bf16.msra.mxu0 0
        %2685 = vmatprep.subr.bf16.mxu0 0
        %2686 = vmatpush1.bf16.msra.mxu0 0
        %2687 = vmatprep.subr.bf16.mxu0 0
        %2688 = vmatpush1.bf16.msra.mxu0 0
        %2689 = vmatprep.subr.bf16.mxu0 0
        %2690 = vmatpush1.bf16.msra.mxu0 0
        %2691 = vmatprep.mubr.bf16.mxu0 0
        %2692 = vmatmul.mubr.bf16.gmra.mrb[0].mxu0 %v2648
        %v2693 = vpop.f32.mrb[0].mxu0
        %v2694 = vadd.f32 0.0, %v2693
        %v2695 = vpop.f32.mrb[0].mxu0
        %v2696 = vpop.f32.mrb[0].mxu0
        %v2697 = vadd.f32 0.0, %v2696
        %v2698 = vpop.f32.mrb[0].mxu0
        %2699 = vmatprep.mubr.bf16.mxu0 0
        %2700 = vmatmul.mubr.bf16.gmra.mrb[0].mxu0 %v2651
        %v2701 = vpop.f32.mrb[0].mxu0
        %v2702 = vadd.f32 0.0, %v2701
        %v2703 = vpop.f32.mrb[0].mxu0
        %v2704 = vpop.f32.mrb[0].mxu0
        %v2705 = vadd.f32 0.0, %v2704
        %v2706 = vpop.f32.mrb[0].mxu0
        %2707 = vmatprep.mubr.bf16.mxu0 0
        %2708 = vmatmul.mubr.bf16.gmra.mrb[0].mxu0 %v2654
        %v2709 = vpop.f32.mrb[0].mxu0
        %v2710 = vadd.f32 0.0, %v2709
        %v2711 = vpop.f32.mrb[0].mxu0
        %v2712 = vpop.f32.mrb[0].mxu0
        %v2713 = vadd.f32 0.0, %v2712
        %v2714 = vpop.f32.mrb[0].mxu0
        %2715 = vmatprep.mubr.bf16.mxu0 0
        %2716 = vmatmul.mubr.bf16.gmra.mrb[0].mxu0 %v2657
        %v2717 = vpop.f32.mrb[0].mxu0
        %v2718 = vadd.f32 0.0, %v2717
        %v2719 = vpop.f32.mrb[0].mxu0
        %v2720 = vpop.f32.mrb[0].mxu0
        %v2721 = vadd.f32 0.0, %v2720
        %v2722 = vpop.f32.mrb[0].mxu0
        %2723 = vdwg.mxu0
        %v2724 = vadd.f32 %v2504, %v2694
        %v2725 = vadd.f32 %v2505, %v2697
        %v2726 = vadd.f32 %v2506, %v2702
        %v2727 = vadd.f32 %v2507, %v2705
        %v2728 = vadd.f32 %v2508, %v2710
        %v2729 = vadd.f32 %v2509, %v2713
        %v2730 = vadd.f32 %v2510, %v2718
        %v2731 = vadd.f32 %v2511, %v2721
        %vm2732 = vcmp.ge.f32.partialorder %v2724, 0.0
        %vm2733 = vcmp.ge.f32.partialorder %v2725, 0.0
        %vm2734 = vcmp.ge.f32.partialorder %v2726, 0.0
        %vm2735 = vcmp.ge.f32.partialorder %v2727, 0.0
        %vm2736 = vcmp.ge.f32.partialorder %v2728, 0.0
        %vm2737 = vcmp.ge.f32.partialorder %v2729, 0.0
        %vm2738 = vcmp.ge.f32.partialorder %v2730, 0.0
        %vm2739 = vcmp.ge.f32.partialorder %v2731, 0.0
        %v2740 = vmul.f32 %v2724, 0.15
        %v2741 = vmul.f32 %v2725, 0.15
        %v2742 = vmul.f32 %v2726, 0.15
        %v2743 = vmul.f32 %v2727, 0.15
        %v2744 = vmul.f32 %v2728, 0.15
        %v2745 = vmul.f32 %v2729, 0.15
        %v2746 = vmul.f32 %v2730, 0.15
        %v2747 = vmul.f32 %v2731, 0.15
        %v2748 = vsel %vm2732, %v2724, %v2740
        %v2749 = vsel %vm2733, %v2725, %v2741
        %v2750 = vsel %vm2734, %v2726, %v2742
        %v2751 = vsel %vm2735, %v2727, %v2743
        %v2752 = vsel %vm2736, %v2728, %v2744
        %v2753 = vsel %vm2737, %v2729, %v2745
        %v2754 = vsel %vm2738, %v2730, %v2746
        %v2755 = vsel %vm2739, %v2731, %v2747
        %v2756 = vpack.c.bf16 %v2749, %v2748
        %v2757 = vpack.c.bf16 %v2751, %v2750
        %v2758 = vpack.c.bf16 %v2753, %v2752
        %v2759 = vpack.c.bf16 %v2755, %v2754
        %v2760 = vld [vmem:[#allocation4] sm:$0xf]
        %v2761 = vld [vmem:[#allocation4 + $0x4] sm:$0xf]
        %v2762 = vld [vmem:[#allocation4 + $0x8] sm:$0xf]
        %v2763 = vld [vmem:[#allocation4 + $0xc] sm:$0xf]
        %v2764 = vld [vmem:[#allocation4 + $0x10] sm:$0xf]
        %v2765 = vld [vmem:[#allocation4 + $0x14] sm:$0xf]
        %v2766 = vld [vmem:[#allocation4 + $0x18] sm:$0xf]
        %v2767 = vld [vmem:[#allocation4 + $0x1c] sm:$0xf]
        %v2776 = vunpack.c.l.b16 %v2760
        %v2777 = vunpack.c.l.b16 %v2761
        %v2778 = vunpack.c.l.b16 %v2762
        %v2779 = vunpack.c.l.b16 %v2763
        %v2780 = vunpack.c.l.b16 %v2764
        %v2781 = vunpack.c.l.b16 %v2765
        %v2782 = vunpack.c.l.b16 %v2766
        %v2783 = vunpack.c.l.b16 %v2767
        %v2784 = vpack.c.b16 %v2777, %v2776
        %v2785 = vpack.c.b16 %v2779, %v2778
        %v2786 = vpack.c.b16 %v2781, %v2780
        %v2787 = vpack.c.b16 %v2783, %v2782
        %vm2788 = vcmask 523264
        %v2790 = vsel %vm2788, %v2784, 0
        %v2793 = vsel %vm2788, %v2785, 0
        %v2796 = vsel %vm2788, %v2786, 0
        %v2799 = vsel %vm2788, %v2787, 0
        %2801 = vmatprep.subr.bf16.mxu0 0
        %2802 = vmatpush1.bf16.msra.mxu0 %v2756
        %2803 = vmatprep.subr.bf16.mxu0 0
        %2804 = vmatpush1.bf16.msra.mxu0 %v2757
        %2805 = vmatprep.subr.bf16.mxu0 0
        %2806 = vmatpush1.bf16.msra.mxu0 %v2758
        %2807 = vmatprep.subr.bf16.mxu0 0
        %2808 = vmatpush1.bf16.msra.mxu0 %v2759
        %2809 = vmatprep.subr.bf16.mxu0 0
        %2810 = vmatpush1.bf16.msra.mxu0 0
        %2811 = vmatprep.subr.bf16.mxu0 0
        %2812 = vmatpush1.bf16.msra.mxu0 0
        %2813 = vmatprep.subr.bf16.mxu0 0
        %2814 = vmatpush1.bf16.msra.mxu0 0
        %2815 = vmatprep.subr.bf16.mxu0 0
        %2816 = vmatpush1.bf16.msra.mxu0 0
        %2817 = vmatprep.subr.bf16.mxu0 0
        %2818 = vmatpush1.bf16.msra.mxu0 0
        %2819 = vmatprep.subr.bf16.mxu0 0
        %2820 = vmatpush1.bf16.msra.mxu0 0
        %2821 = vmatprep.subr.bf16.mxu0 0
        %2822 = vmatpush1.bf16.msra.mxu0 0
        %2823 = vmatprep.subr.bf16.mxu0 0
        %2824 = vmatpush1.bf16.msra.mxu0 0
        %2825 = vmatprep.subr.bf16.mxu0 0
        %2826 = vmatpush1.bf16.msra.mxu0 0
        %2827 = vmatprep.subr.bf16.mxu0 0
        %2828 = vmatpush1.bf16.msra.mxu0 0
        %2829 = vmatprep.subr.bf16.mxu0 0
        %2830 = vmatpush1.bf16.msra.mxu0 0
        %2831 = vmatprep.subr.bf16.mxu0 0
        %2832 = vmatpush1.bf16.msra.mxu0 0
        %2833 = vmatprep.mubr.bf16.mxu0 0
        %2834 = vmatmul.mubr.bf16.gmra.mrb[0].mxu0 %v2790
        %v2835 = vpop.f32.mrb[0].mxu0
        %v2836 = vadd.f32 0.0, %v2835
        %v2837 = vpop.f32.mrb[0].mxu0
        %v2838 = vpop.f32.mrb[0].mxu0
        %v2839 = vadd.f32 0.0, %v2838
        %v2840 = vpop.f32.mrb[0].mxu0
        %2841 = vmatprep.mubr.bf16.mxu0 0
        %2842 = vmatmul.mubr.bf16.gmra.mrb[0].mxu0 %v2793
        %v2843 = vpop.f32.mrb[0].mxu0
        %v2844 = vadd.f32 0.0, %v2843
        %v2845 = vpop.f32.mrb[0].mxu0
        %v2846 = vpop.f32.mrb[0].mxu0
        %v2847 = vadd.f32 0.0, %v2846
        %v2848 = vpop.f32.mrb[0].mxu0
        %2849 = vmatprep.mubr.bf16.mxu0 0
        %2850 = vmatmul.mubr.bf16.gmra.mrb[0].mxu0 %v2796
        %v2851 = vpop.f32.mrb[0].mxu0
        %v2852 = vadd.f32 0.0, %v2851
        %v2853 = vpop.f32.mrb[0].mxu0
        %v2854 = vpop.f32.mrb[0].mxu0
        %v2855 = vadd.f32 0.0, %v2854
        %v2856 = vpop.f32.mrb[0].mxu0
        %2857 = vmatprep.mubr.bf16.mxu0 0
        %2858 = vmatmul.mubr.bf16.gmra.mrb[0].mxu0 %v2799
        %v2859 = vpop.f32.mrb[0].mxu0
        %v2860 = vadd.f32 0.0, %v2859
        %v2861 = vpop.f32.mrb[0].mxu0
        %v2862 = vpop.f32.mrb[0].mxu0
        %v2863 = vadd.f32 0.0, %v2862
        %v2864 = vpop.f32.mrb[0].mxu0
        %2865 = vdwg.mxu0
        %v2866 = vpack.c.bf16 %v2839, %v2836
        %v2867 = vpack.c.bf16 %v2847, %v2844
        %v2868 = vpack.c.bf16 %v2855, %v2852
        %v2869 = vpack.c.bf16 %v2863, %v2860
        %v2870 = vld [vmem:[#allocation6] sm:$0xf]
        %v2871 = vld [vmem:[#allocation6 + $0x4] sm:$0xf]
        %v2872 = vld [vmem:[#allocation6 + $0x8] sm:$0xf]
        %v2873 = vld [vmem:[#allocation6 + $0xc] sm:$0xf]
        %v2874 = vld [vmem:[#allocation6 + $0x10] sm:$0xf]
        %v2875 = vld [vmem:[#allocation6 + $0x14] sm:$0xf]
        %v2876 = vld [vmem:[#allocation6 + $0x18] sm:$0xf]
        %v2877 = vld [vmem:[#allocation6 + $0x1c] sm:$0xf]
        %s2878 = scalar_lea.vmem [#allocation4], 32
        %v2879 = vld [vmem:[%s2878] sm:$0xf]
        %v2880 = vld [vmem:[%s2878 + $0x4] sm:$0xf]
        %v2881 = vld [vmem:[%s2878 + $0x8] sm:$0xf]
        %v2882 = vld [vmem:[%s2878 + $0xc] sm:$0xf]
        %v2883 = vld [vmem:[%s2878 + $0x10] sm:$0xf]
        %v2884 = vld [vmem:[%s2878 + $0x14] sm:$0xf]
        %v2885 = vld [vmem:[%s2878 + $0x18] sm:$0xf]
        %v2886 = vld [vmem:[%s2878 + $0x1c] sm:$0xf]
        %v2895 = vunpack.c.l.b16 %v2879
        %v2896 = vunpack.c.l.b16 %v2880
        %v2897 = vunpack.c.l.b16 %v2881
        %v2898 = vunpack.c.l.b16 %v2882
        %v2899 = vunpack.c.l.b16 %v2883
        %v2900 = vunpack.c.l.b16 %v2884
        %v2901 = vunpack.c.l.b16 %v2885
        %v2902 = vunpack.c.l.b16 %v2886
        %v2903 = vpack.c.b16 %v2896, %v2895
        %v2904 = vpack.c.b16 %v2898, %v2897
        %v2905 = vpack.c.b16 %v2900, %v2899
        %v2906 = vpack.c.b16 %v2902, %v2901
        %v2908 = vsel %vm2788, %v2903, 0
        %v2911 = vsel %vm2788, %v2904, 0
        %v2914 = vsel %vm2788, %v2905, 0
        %v2917 = vsel %vm2788, %v2906, 0
        %2919 = vmatprep.subr.bf16.mxu0 0
        %2920 = vmatpush1.bf16.msra.mxu0 %v2756
        %2921 = vmatprep.subr.bf16.mxu0 0
        %2922 = vmatpush1.bf16.msra.mxu0 %v2757
        %2923 = vmatprep.subr.bf16.mxu0 0
        %2924 = vmatpush1.bf16.msra.mxu0 %v2758
        %2925 = vmatprep.subr.bf16.mxu0 0
        %2926 = vmatpush1.bf16.msra.mxu0 %v2759
        %2927 = vmatprep.subr.bf16.mxu0 0
        %2928 = vmatpush1.bf16.msra.mxu0 0
        %2929 = vmatprep.subr.bf16.mxu0 0
        %2930 = vmatpush1.bf16.msra.mxu0 0
        %2931 = vmatprep.subr.bf16.mxu0 0
        %2932 = vmatpush1.bf16.msra.mxu0 0
        %2933 = vmatprep.subr.bf16.mxu0 0
        %2934 = vmatpush1.bf16.msra.mxu0 0
        %2935 = vmatprep.subr.bf16.mxu0 0
        %2936 = vmatpush1.bf16.msra.mxu0 0
        %2937 = vmatprep.subr.bf16.mxu0 0
        %2938 = vmatpush1.bf16.msra.mxu0 0
        %2939 = vmatprep.subr.bf16.mxu0 0
        %2940 = vmatpush1.bf16.msra.mxu0 0
        %2941 = vmatprep.subr.bf16.mxu0 0
        %2942 = vmatpush1.bf16.msra.mxu0 0
        %2943 = vmatprep.subr.bf16.mxu0 0
        %2944 = vmatpush1.bf16.msra.mxu0 0
        %2945 = vmatprep.subr.bf16.mxu0 0
        %2946 = vmatpush1.bf16.msra.mxu0 0
        %2947 = vmatprep.subr.bf16.mxu0 0
        %2948 = vmatpush1.bf16.msra.mxu0 0
        %2949 = vmatprep.subr.bf16.mxu0 0
        %2950 = vmatpush1.bf16.msra.mxu0 0
        %2951 = vmatprep.mubr.bf16.mxu0 0
        %2952 = vmatmul.mubr.bf16.gmra.mrb[0].mxu0 %v2908
        %v2953 = vpop.f32.mrb[0].mxu0
        %v2954 = vadd.f32 0.0, %v2953
        %v2955 = vpop.f32.mrb[0].mxu0
        %v2956 = vpop.f32.mrb[0].mxu0
        %v2957 = vadd.f32 0.0, %v2956
        %v2958 = vpop.f32.mrb[0].mxu0
        %2959 = vmatprep.mubr.bf16.mxu0 0
        %2960 = vmatmul.mubr.bf16.gmra.mrb[0].mxu0 %v2911
        %v2961 = vpop.f32.mrb[0].mxu0
        %v2962 = vadd.f32 0.0, %v2961
        %v2963 = vpop.f32.mrb[0].mxu0
        %v2964 = vpop.f32.mrb[0].mxu0
        %v2965 = vadd.f32 0.0, %v2964
        %v2966 = vpop.f32.mrb[0].mxu0
        %2967 = vmatprep.mubr.bf16.mxu0 0
        %2968 = vmatmul.mubr.bf16.gmra.mrb[0].mxu0 %v2914
        %v2969 = vpop.f32.mrb[0].mxu0
        %v2970 = vadd.f32 0.0, %v2969
        %v2971 = vpop.f32.mrb[0].mxu0
        %v2972 = vpop.f32.mrb[0].mxu0
        %v2973 = vadd.f32 0.0, %v2972
        %v2974 = vpop.f32.mrb[0].mxu0
        %2975 = vmatprep.mubr.bf16.mxu0 0
        %2976 = vmatmul.mubr.bf16.gmra.mrb[0].mxu0 %v2917
        %v2977 = vpop.f32.mrb[0].mxu0
        %v2978 = vadd.f32 0.0, %v2977
        %v2979 = vpop.f32.mrb[0].mxu0
        %v2980 = vpop.f32.mrb[0].mxu0
        %v2981 = vadd.f32 0.0, %v2980
        %v2982 = vpop.f32.mrb[0].mxu0
        %2983 = vdwg.mxu0
        %v2984 = vpack.c.bf16 %v2957, %v2954
        %v2985 = vpack.c.bf16 %v2965, %v2962
        %v2986 = vpack.c.bf16 %v2973, %v2970
        %v2987 = vpack.c.bf16 %v2981, %v2978
        %s2988 = scalar_lea.vmem [#allocation6], 32
        %v2989 = vld [vmem:[%s2988] sm:$0xf]
        %v2990 = vld [vmem:[%s2988 + $0x4] sm:$0xf]
        %v2991 = vld [vmem:[%s2988 + $0x8] sm:$0xf]
        %v2992 = vld [vmem:[%s2988 + $0xc] sm:$0xf]
        %v2993 = vld [vmem:[%s2988 + $0x10] sm:$0xf]
        %v2994 = vld [vmem:[%s2988 + $0x14] sm:$0xf]
        %v2995 = vld [vmem:[%s2988 + $0x18] sm:$0xf]
        %v2996 = vld [vmem:[%s2988 + $0x1c] sm:$0xf]
        %v3005 = vunpack.c.l.b16 %v2989
        %v3006 = vunpack.c.l.b16 %v2990
        %v3007 = vunpack.c.l.b16 %v2991
        %v3008 = vunpack.c.l.b16 %v2992
        %v3009 = vunpack.c.l.b16 %v2993
        %v3010 = vunpack.c.l.b16 %v2994
        %v3011 = vunpack.c.l.b16 %v2995
        %v3012 = vunpack.c.l.b16 %v2996
        %v3013 = vpack.c.b16 %v3006, %v3005
        %v3014 = vpack.c.b16 %v3008, %v3007
        %v3015 = vpack.c.b16 %v3010, %v3009
        %v3016 = vpack.c.b16 %v3012, %v3011
        %v3022 = vsel %vm2788, %v2984, 0
        %v3025 = vsel %vm2788, %v2985, 0
        %v3028 = vsel %vm2788, %v2986, 0
        %v3031 = vsel %vm2788, %v2987, 0
        %3033 = vmatprep.subr.bf16.mxu0 0
        %3034 = vmatpush1.bf16.msra.mxu0 %v3013
        %3035 = vmatprep.subr.bf16.mxu0 0
        %3036 = vmatpush1.bf16.msra.mxu0 %v3014
        %3037 = vmatprep.subr.bf16.mxu0 0
        %3038 = vmatpush1.bf16.msra.mxu0 %v3015
        %3039 = vmatprep.subr.bf16.mxu0 0
        %3040 = vmatpush1.bf16.msra.mxu0 %v3016
        %3041 = vmatprep.subr.bf16.mxu0 0
        %3042 = vmatpush1.bf16.msra.mxu0 0
        %3043 = vmatprep.subr.bf16.mxu0 0
        %3044 = vmatpush1.bf16.msra.mxu0 0
        %3045 = vmatprep.subr.bf16.mxu0 0
        %3046 = vmatpush1.bf16.msra.mxu0 0
        %3047 = vmatprep.subr.bf16.mxu0 0
        %3048 = vmatpush1.bf16.msra.mxu0 0
        %3049 = vmatprep.subr.bf16.mxu0 0
        %3050 = vmatpush1.bf16.msra.mxu0 0
        %3051 = vmatprep.subr.bf16.mxu0 0
        %3052 = vmatpush1.bf16.msra.mxu0 0
        %3053 = vmatprep.subr.bf16.mxu0 0
        %3054 = vmatpush1.bf16.msra.mxu0 0
        %3055 = vmatprep.subr.bf16.mxu0 0
        %3056 = vmatpush1.bf16.msra.mxu0 0
        %3057 = vmatprep.subr.bf16.mxu0 0
        %3058 = vmatpush1.bf16.msra.mxu0 0
        %3059 = vmatprep.subr.bf16.mxu0 0
        %3060 = vmatpush1.bf16.msra.mxu0 0
        %3061 = vmatprep.subr.bf16.mxu0 0
        %3062 = vmatpush1.bf16.msra.mxu0 0
        %3063 = vmatprep.subr.bf16.mxu0 0
        %3064 = vmatpush1.bf16.msra.mxu0 0
        %3065 = vmatprep.mubr.bf16.mxu0 0
        %3066 = vmatmul.mubr.bf16.gmra.mrb[0].mxu0 %v3022
        %v3067 = vpop.f32.mrb[0].mxu0
        %v3068 = vadd.f32 0.0, %v3067
        %v3069 = vpop.f32.mrb[0].mxu0
        %v3070 = vpop.f32.mrb[0].mxu0
        %v3071 = vadd.f32 0.0, %v3070
        %v3072 = vpop.f32.mrb[0].mxu0
        %3073 = vmatprep.mubr.bf16.mxu0 0
        %3074 = vmatmul.mubr.bf16.gmra.mrb[0].mxu0 %v3025
        %v3075 = vpop.f32.mrb[0].mxu0
        %v3076 = vadd.f32 0.0, %v3075
        %v3077 = vpop.f32.mrb[0].mxu0
        %v3078 = vpop.f32.mrb[0].mxu0
        %v3079 = vadd.f32 0.0, %v3078
        %v3080 = vpop.f32.mrb[0].mxu0
        %3081 = vmatprep.mubr.bf16.mxu0 0
        %3082 = vmatmul.mubr.bf16.gmra.mrb[0].mxu0 %v3028
        %v3083 = vpop.f32.mrb[0].mxu0
        %v3084 = vadd.f32 0.0, %v3083
        %v3085 = vpop.f32.mrb[0].mxu0
        %v3086 = vpop.f32.mrb[0].mxu0
        %v3087 = vadd.f32 0.0, %v3086
        %v3088 = vpop.f32.mrb[0].mxu0
        %3089 = vmatprep.mubr.bf16.mxu0 0
        %3090 = vmatmul.mubr.bf16.gmra.mrb[0].mxu0 %v3031
        %v3091 = vpop.f32.mrb[0].mxu0
        %v3092 = vadd.f32 0.0, %v3091
        %v3093 = vpop.f32.mrb[0].mxu0
        %v3094 = vpop.f32.mrb[0].mxu0
        %v3095 = vadd.f32 0.0, %v3094
        %v3096 = vpop.f32.mrb[0].mxu0
        %3097 = vdwg.mxu0
        %v3106 = vunpack.c.l.b16 %v2870
        %v3107 = vunpack.c.l.b16 %v2871
        %v3108 = vunpack.c.l.b16 %v2872
        %v3109 = vunpack.c.l.b16 %v2873
        %v3110 = vunpack.c.l.b16 %v2874
        %v3111 = vunpack.c.l.b16 %v2875
        %v3112 = vunpack.c.l.b16 %v2876
        %v3113 = vunpack.c.l.b16 %v2877
        %v3114 = vpack.c.b16 %v3107, %v3106
        %v3115 = vpack.c.b16 %v3109, %v3108
        %v3116 = vpack.c.b16 %v3111, %v3110
        %v3117 = vpack.c.b16 %v3113, %v3112
        %v3123 = vsel %vm2788, %v2866, 0
        %v3126 = vsel %vm2788, %v2867, 0
        %v3129 = vsel %vm2788, %v2868, 0
        %v3132 = vsel %vm2788, %v2869, 0
        %3134 = vmatprep.subr.bf16.mxu0 0
        %3135 = vmatpush1.bf16.msra.mxu0 %v3114
        %3136 = vmatprep.subr.bf16.mxu0 0
        %3137 = vmatpush1.bf16.msra.mxu0 %v3115
        %3138 = vmatprep.subr.bf16.mxu0 0
        %3139 = vmatpush1.bf16.msra.mxu0 %v3116
        %3140 = vmatprep.subr.bf16.mxu0 0
        %3141 = vmatpush1.bf16.msra.mxu0 %v3117
        %3142 = vmatprep.subr.bf16.mxu0 0
        %3143 = vmatpush1.bf16.msra.mxu0 0
        %3144 = vmatprep.subr.bf16.mxu0 0
        %3145 = vmatpush1.bf16.msra.mxu0 0
        %3146 = vmatprep.subr.bf16.mxu0 0
        %3147 = vmatpush1.bf16.msra.mxu0 0
        %3148 = vmatprep.subr.bf16.mxu0 0
        %3149 = vmatpush1.bf16.msra.mxu0 0
        %3150 = vmatprep.subr.bf16.mxu0 0
        %3151 = vmatpush1.bf16.msra.mxu0 0
        %3152 = vmatprep.subr.bf16.mxu0 0
        %3153 = vmatpush1.bf16.msra.mxu0 0
        %3154 = vmatprep.subr.bf16.mxu0 0
        %3155 = vmatpush1.bf16.msra.mxu0 0
        %3156 = vmatprep.subr.bf16.mxu0 0
        %3157 = vmatpush1.bf16.msra.mxu0 0
        %3158 = vmatprep.subr.bf16.mxu0 0
        %3159 = vmatpush1.bf16.msra.mxu0 0
        %3160 = vmatprep.subr.bf16.mxu0 0
        %3161 = vmatpush1.bf16.msra.mxu0 0
        %3162 = vmatprep.subr.bf16.mxu0 0
        %3163 = vmatpush1.bf16.msra.mxu0 0
        %3164 = vmatprep.subr.bf16.mxu0 0
        %3165 = vmatpush1.bf16.msra.mxu0 0
        %3166 = vmatprep.mubr.bf16.mxu0 0
        %3167 = vmatmul.mubr.bf16.gmra.mrb[0].mxu0 %v3123
        %v3168 = vpop.f32.mrb[0].mxu0
        %v3169 = vadd.f32 %v3068, %v3168
        %v3170 = vpop.f32.mrb[0].mxu0
        %v3171 = vpop.f32.mrb[0].mxu0
        %v3172 = vadd.f32 %v3071, %v3171
        %v3173 = vpop.f32.mrb[0].mxu0
        %3174 = vmatprep.mubr.bf16.mxu0 0
        %3175 = vmatmul.mubr.bf16.gmra.mrb[0].mxu0 %v3126
        %v3176 = vpop.f32.mrb[0].mxu0
        %v3177 = vadd.f32 %v3076, %v3176
        %v3178 = vpop.f32.mrb[0].mxu0
        %v3179 = vpop.f32.mrb[0].mxu0
        %v3180 = vadd.f32 %v3079, %v3179
        %v3181 = vpop.f32.mrb[0].mxu0
        %3182 = vmatprep.mubr.bf16.mxu0 0
        %3183 = vmatmul.mubr.bf16.gmra.mrb[0].mxu0 %v3129
        %v3184 = vpop.f32.mrb[0].mxu0
        %v3185 = vadd.f32 %v3084, %v3184
        %v3186 = vpop.f32.mrb[0].mxu0
        %v3187 = vpop.f32.mrb[0].mxu0
        %v3188 = vadd.f32 %v3087, %v3187
        %v3189 = vpop.f32.mrb[0].mxu0
        %3190 = vmatprep.mubr.bf16.mxu0 0
        %3191 = vmatmul.mubr.bf16.gmra.mrb[0].mxu0 %v3132
        %v3192 = vpop.f32.mrb[0].mxu0
        %v3193 = vadd.f32 %v3092, %v3192
        %v3194 = vpop.f32.mrb[0].mxu0
        %v3195 = vpop.f32.mrb[0].mxu0
        %v3196 = vadd.f32 %v3095, %v3195
        %v3197 = vpop.f32.mrb[0].mxu0
        %3198 = vdwg.mxu0
        %s3199 = scalar_lea.vmem [#allocation4], 64
        %v3200 = vld [vmem:[%s3199] sm:$0xf]
        %v3201 = vld [vmem:[%s3199 + $0x4] sm:$0xf]
        %v3202 = vld [vmem:[%s3199 + $0x8] sm:$0xf]
        %v3203 = vld [vmem:[%s3199 + $0xc] sm:$0xf]
        %v3204 = vld [vmem:[%s3199 + $0x10] sm:$0xf]
        %v3205 = vld [vmem:[%s3199 + $0x14] sm:$0xf]
        %v3206 = vld [vmem:[%s3199 + $0x18] sm:$0xf]
        %v3207 = vld [vmem:[%s3199 + $0x1c] sm:$0xf]
        %v3216 = vunpack.c.l.b16 %v3200
        %v3217 = vunpack.c.l.b16 %v3201
        %v3218 = vunpack.c.l.b16 %v3202
        %v3219 = vunpack.c.l.b16 %v3203
        %v3220 = vunpack.c.l.b16 %v3204
        %v3221 = vunpack.c.l.b16 %v3205
        %v3222 = vunpack.c.l.b16 %v3206
        %v3223 = vunpack.c.l.b16 %v3207
        %v3224 = vpack.c.b16 %v3217, %v3216
        %v3225 = vpack.c.b16 %v3219, %v3218
        %v3226 = vpack.c.b16 %v3221, %v3220
        %v3227 = vpack.c.b16 %v3223, %v3222
        %v3229 = vsel %vm2788, %v3224, 0
        %v3232 = vsel %vm2788, %v3225, 0
        %v3235 = vsel %vm2788, %v3226, 0
        %v3238 = vsel %vm2788, %v3227, 0
        %3240 = vmatprep.subr.bf16.mxu0 0
        %3241 = vmatpush1.bf16.msra.mxu0 %v2756
        %3242 = vmatprep.subr.bf16.mxu0 0
        %3243 = vmatpush1.bf16.msra.mxu0 %v2757
        %3244 = vmatprep.subr.bf16.mxu0 0
        %3245 = vmatpush1.bf16.msra.mxu0 %v2758
        %3246 = vmatprep.subr.bf16.mxu0 0
        %3247 = vmatpush1.bf16.msra.mxu0 %v2759
        %3248 = vmatprep.subr.bf16.mxu0 0
        %3249 = vmatpush1.bf16.msra.mxu0 0
        %3250 = vmatprep.subr.bf16.mxu0 0
        %3251 = vmatpush1.bf16.msra.mxu0 0
        %3252 = vmatprep.subr.bf16.mxu0 0
        %3253 = vmatpush1.bf16.msra.mxu0 0
        %3254 = vmatprep.subr.bf16.mxu0 0
        %3255 = vmatpush1.bf16.msra.mxu0 0
        %3256 = vmatprep.subr.bf16.mxu0 0
        %3257 = vmatpush1.bf16.msra.mxu0 0
        %3258 = vmatprep.subr.bf16.mxu0 0
        %3259 = vmatpush1.bf16.msra.mxu0 0
        %3260 = vmatprep.subr.bf16.mxu0 0
        %3261 = vmatpush1.bf16.msra.mxu0 0
        %3262 = vmatprep.subr.bf16.mxu0 0
        %3263 = vmatpush1.bf16.msra.mxu0 0
        %3264 = vmatprep.subr.bf16.mxu0 0
        %3265 = vmatpush1.bf16.msra.mxu0 0
        %3266 = vmatprep.subr.bf16.mxu0 0
        %3267 = vmatpush1.bf16.msra.mxu0 0
        %3268 = vmatprep.subr.bf16.mxu0 0
        %3269 = vmatpush1.bf16.msra.mxu0 0
        %3270 = vmatprep.subr.bf16.mxu0 0
        %3271 = vmatpush1.bf16.msra.mxu0 0
        %3272 = vmatprep.mubr.bf16.mxu0 0
        %3273 = vmatmul.mubr.bf16.gmra.mrb[0].mxu0 %v3229
        %v3274 = vpop.f32.mrb[0].mxu0
        %v3275 = vadd.f32 0.0, %v3274
        %v3276 = vpop.f32.mrb[0].mxu0
        %v3277 = vpop.f32.mrb[0].mxu0
        %v3278 = vadd.f32 0.0, %v3277
        %v3279 = vpop.f32.mrb[0].mxu0
        %3280 = vmatprep.mubr.bf16.mxu0 0
        %3281 = vmatmul.mubr.bf16.gmra.mrb[0].mxu0 %v3232
        %v3282 = vpop.f32.mrb[0].mxu0
        %v3283 = vadd.f32 0.0, %v3282
        %v3284 = vpop.f32.mrb[0].mxu0
        %v3285 = vpop.f32.mrb[0].mxu0
        %v3286 = vadd.f32 0.0, %v3285
        %v3287 = vpop.f32.mrb[0].mxu0
        %3288 = vmatprep.mubr.bf16.mxu0 0
        %3289 = vmatmul.mubr.bf16.gmra.mrb[0].mxu0 %v3235
        %v3290 = vpop.f32.mrb[0].mxu0
        %v3291 = vadd.f32 0.0, %v3290
        %v3292 = vpop.f32.mrb[0].mxu0
        %v3293 = vpop.f32.mrb[0].mxu0
        %v3294 = vadd.f32 0.0, %v3293
        %v3295 = vpop.f32.mrb[0].mxu0
        %3296 = vmatprep.mubr.bf16.mxu0 0
        %3297 = vmatmul.mubr.bf16.gmra.mrb[0].mxu0 %v3238
        %v3298 = vpop.f32.mrb[0].mxu0
        %v3299 = vadd.f32 0.0, %v3298
        %v3300 = vpop.f32.mrb[0].mxu0
        %v3301 = vpop.f32.mrb[0].mxu0
        %v3302 = vadd.f32 0.0, %v3301
        %v3303 = vpop.f32.mrb[0].mxu0
        %3304 = vdwg.mxu0
        %v3305 = vpack.c.bf16 %v3278, %v3275
        %v3306 = vpack.c.bf16 %v3286, %v3283
        %v3307 = vpack.c.bf16 %v3294, %v3291
        %v3308 = vpack.c.bf16 %v3302, %v3299
        %s3309 = scalar_lea.vmem [#allocation6], 64
        %v3310 = vld [vmem:[%s3309] sm:$0xf]
        %v3311 = vld [vmem:[%s3309 + $0x4] sm:$0xf]
        %v3312 = vld [vmem:[%s3309 + $0x8] sm:$0xf]
        %v3313 = vld [vmem:[%s3309 + $0xc] sm:$0xf]
        %v3314 = vld [vmem:[%s3309 + $0x10] sm:$0xf]
        %v3315 = vld [vmem:[%s3309 + $0x14] sm:$0xf]
        %v3316 = vld [vmem:[%s3309 + $0x18] sm:$0xf]
        %v3317 = vld [vmem:[%s3309 + $0x1c] sm:$0xf]
        %v3326 = vunpack.c.l.b16 %v3310
        %v3327 = vunpack.c.l.b16 %v3311
        %v3328 = vunpack.c.l.b16 %v3312
        %v3329 = vunpack.c.l.b16 %v3313
        %v3330 = vunpack.c.l.b16 %v3314
        %v3331 = vunpack.c.l.b16 %v3315
        %v3332 = vunpack.c.l.b16 %v3316
        %v3333 = vunpack.c.l.b16 %v3317
        %v3334 = vpack.c.b16 %v3327, %v3326
        %v3335 = vpack.c.b16 %v3329, %v3328
        %v3336 = vpack.c.b16 %v3331, %v3330
        %v3337 = vpack.c.b16 %v3333, %v3332
        %v3343 = vsel %vm2788, %v3305, 0
        %v3346 = vsel %vm2788, %v3306, 0
        %v3349 = vsel %vm2788, %v3307, 0
        %v3352 = vsel %vm2788, %v3308, 0
        %3354 = vmatprep.subr.bf16.mxu0 0
        %3355 = vmatpush1.bf16.msra.mxu0 %v3334
        %3356 = vmatprep.subr.bf16.mxu0 0
        %3357 = vmatpush1.bf16.msra.mxu0 %v3335
        %3358 = vmatprep.subr.bf16.mxu0 0
        %3359 = vmatpush1.bf16.msra.mxu0 %v3336
        %3360 = vmatprep.subr.bf16.mxu0 0
        %3361 = vmatpush1.bf16.msra.mxu0 %v3337
        %3362 = vmatprep.subr.bf16.mxu0 0
        %3363 = vmatpush1.bf16.msra.mxu0 0
        %3364 = vmatprep.subr.bf16.mxu0 0
        %3365 = vmatpush1.bf16.msra.mxu0 0
        %3366 = vmatprep.subr.bf16.mxu0 0
        %3367 = vmatpush1.bf16.msra.mxu0 0
        %3368 = vmatprep.subr.bf16.mxu0 0
        %3369 = vmatpush1.bf16.msra.mxu0 0
        %3370 = vmatprep.subr.bf16.mxu0 0
        %3371 = vmatpush1.bf16.msra.mxu0 0
        %3372 = vmatprep.subr.bf16.mxu0 0
        %3373 = vmatpush1.bf16.msra.mxu0 0
        %3374 = vmatprep.subr.bf16.mxu0 0
        %3375 = vmatpush1.bf16.msra.mxu0 0
        %3376 = vmatprep.subr.bf16.mxu0 0
        %3377 = vmatpush1.bf16.msra.mxu0 0
        %3378 = vmatprep.subr.bf16.mxu0 0
        %3379 = vmatpush1.bf16.msra.mxu0 0
        %3380 = vmatprep.subr.bf16.mxu0 0
        %3381 = vmatpush1.bf16.msra.mxu0 0
        %3382 = vmatprep.subr.bf16.mxu0 0
        %3383 = vmatpush1.bf16.msra.mxu0 0
        %3384 = vmatprep.subr.bf16.mxu0 0
        %3385 = vmatpush1.bf16.msra.mxu0 0
        %3386 = vmatprep.mubr.bf16.mxu0 0
        %3387 = vmatmul.mubr.bf16.gmra.mrb[0].mxu0 %v3343
        %v3388 = vpop.f32.mrb[0].mxu0
        %v3389 = vadd.f32 0.0, %v3388
        %v3390 = vpop.f32.mrb[0].mxu0
        %v3391 = vpop.f32.mrb[0].mxu0
        %v3392 = vadd.f32 0.0, %v3391
        %v3393 = vpop.f32.mrb[0].mxu0
        %3394 = vmatprep.mubr.bf16.mxu0 0
        %3395 = vmatmul.mubr.bf16.gmra.mrb[0].mxu0 %v3346
        %v3396 = vpop.f32.mrb[0].mxu0
        %v3397 = vadd.f32 0.0, %v3396
        %v3398 = vpop.f32.mrb[0].mxu0
        %v3399 = vpop.f32.mrb[0].mxu0
        %v3400 = vadd.f32 0.0, %v3399
        %v3401 = vpop.f32.mrb[0].mxu0
        %3402 = vmatprep.mubr.bf16.mxu0 0
        %3403 = vmatmul.mubr.bf16.gmra.mrb[0].mxu0 %v3349
        %v3404 = vpop.f32.mrb[0].mxu0
        %v3405 = vadd.f32 0.0, %v3404
        %v3406 = vpop.f32.mrb[0].mxu0
        %v3407 = vpop.f32.mrb[0].mxu0
        %v3408 = vadd.f32 0.0, %v3407
        %v3409 = vpop.f32.mrb[0].mxu0
        %3410 = vmatprep.mubr.bf16.mxu0 0
        %3411 = vmatmul.mubr.bf16.gmra.mrb[0].mxu0 %v3352
        %v3412 = vpop.f32.mrb[0].mxu0
        %v3413 = vadd.f32 0.0, %v3412
        %v3414 = vpop.f32.mrb[0].mxu0
        %v3415 = vpop.f32.mrb[0].mxu0
        %v3416 = vadd.f32 0.0, %v3415
        %v3417 = vpop.f32.mrb[0].mxu0
        %3418 = vdwg.mxu0
        %v3419 = vadd.f32 %v3169, %v3389
        %v3420 = vadd.f32 %v3172, %v3392
        %v3421 = vadd.f32 %v3177, %v3397
        %v3422 = vadd.f32 %v3180, %v3400
        %v3423 = vadd.f32 %v3185, %v3405
        %v3424 = vadd.f32 %v3188, %v3408
        %v3425 = vadd.f32 %v3193, %v3413
        %v3426 = vadd.f32 %v3196, %v3416
        %s3427 = scalar_lea.vmem [#allocation4], 96
        %v3428 = vld [vmem:[%s3427] sm:$0xf]
        %v3429 = vld [vmem:[%s3427 + $0x4] sm:$0xf]
        %v3430 = vld [vmem:[%s3427 + $0x8] sm:$0xf]
        %v3431 = vld [vmem:[%s3427 + $0xc] sm:$0xf]
        %v3432 = vld [vmem:[%s3427 + $0x10] sm:$0xf]
        %v3433 = vld [vmem:[%s3427 + $0x14] sm:$0xf]
        %v3434 = vld [vmem:[%s3427 + $0x18] sm:$0xf]
        %v3435 = vld [vmem:[%s3427 + $0x1c] sm:$0xf]
        %v3444 = vunpack.c.l.b16 %v3428
        %v3445 = vunpack.c.l.b16 %v3429
        %v3446 = vunpack.c.l.b16 %v3430
        %v3447 = vunpack.c.l.b16 %v3431
        %v3448 = vunpack.c.l.b16 %v3432
        %v3449 = vunpack.c.l.b16 %v3433
        %v3450 = vunpack.c.l.b16 %v3434
        %v3451 = vunpack.c.l.b16 %v3435
        %v3452 = vpack.c.b16 %v3445, %v3444
        %v3453 = vpack.c.b16 %v3447, %v3446
        %v3454 = vpack.c.b16 %v3449, %v3448
        %v3455 = vpack.c.b16 %v3451, %v3450
        %v3457 = vsel %vm2788, %v3452, 0
        %v3460 = vsel %vm2788, %v3453, 0
        %v3463 = vsel %vm2788, %v3454, 0
        %v3466 = vsel %vm2788, %v3455, 0
        %3468 = vmatprep.subr.bf16.mxu0 0
        %3469 = vmatpush1.bf16.msra.mxu0 %v2756
        %3470 = vmatprep.subr.bf16.mxu0 0
        %3471 = vmatpush1.bf16.msra.mxu0 %v2757
        %3472 = vmatprep.subr.bf16.mxu0 0
        %3473 = vmatpush1.bf16.msra.mxu0 %v2758
        %3474 = vmatprep.subr.bf16.mxu0 0
        %3475 = vmatpush1.bf16.msra.mxu0 %v2759
        %3476 = vmatprep.subr.bf16.mxu0 0
        %3477 = vmatpush1.bf16.msra.mxu0 0
        %3478 = vmatprep.subr.bf16.mxu0 0
        %3479 = vmatpush1.bf16.msra.mxu0 0
        %3480 = vmatprep.subr.bf16.mxu0 0
        %3481 = vmatpush1.bf16.msra.mxu0 0
        %3482 = vmatprep.subr.bf16.mxu0 0
        %3483 = vmatpush1.bf16.msra.mxu0 0
        %3484 = vmatprep.subr.bf16.mxu0 0
        %3485 = vmatpush1.bf16.msra.mxu0 0
        %3486 = vmatprep.subr.bf16.mxu0 0
        %3487 = vmatpush1.bf16.msra.mxu0 0
        %3488 = vmatprep.subr.bf16.mxu0 0
        %3489 = vmatpush1.bf16.msra.mxu0 0
        %3490 = vmatprep.subr.bf16.mxu0 0
        %3491 = vmatpush1.bf16.msra.mxu0 0
        %3492 = vmatprep.subr.bf16.mxu0 0
        %3493 = vmatpush1.bf16.msra.mxu0 0
        %3494 = vmatprep.subr.bf16.mxu0 0
        %3495 = vmatpush1.bf16.msra.mxu0 0
        %3496 = vmatprep.subr.bf16.mxu0 0
        %3497 = vmatpush1.bf16.msra.mxu0 0
        %3498 = vmatprep.subr.bf16.mxu0 0
        %3499 = vmatpush1.bf16.msra.mxu0 0
        %3500 = vmatprep.mubr.bf16.mxu0 0
        %3501 = vmatmul.mubr.bf16.gmra.mrb[0].mxu0 %v3457
        %v3502 = vpop.f32.mrb[0].mxu0
        %v3503 = vadd.f32 0.0, %v3502
        %v3504 = vpop.f32.mrb[0].mxu0
        %v3505 = vpop.f32.mrb[0].mxu0
        %v3506 = vadd.f32 0.0, %v3505
        %v3507 = vpop.f32.mrb[0].mxu0
        %3508 = vmatprep.mubr.bf16.mxu0 0
        %3509 = vmatmul.mubr.bf16.gmra.mrb[0].mxu0 %v3460
        %v3510 = vpop.f32.mrb[0].mxu0
        %v3511 = vadd.f32 0.0, %v3510
        %v3512 = vpop.f32.mrb[0].mxu0
        %v3513 = vpop.f32.mrb[0].mxu0
        %v3514 = vadd.f32 0.0, %v3513
        %v3515 = vpop.f32.mrb[0].mxu0
        %3516 = vmatprep.mubr.bf16.mxu0 0
        %3517 = vmatmul.mubr.bf16.gmra.mrb[0].mxu0 %v3463
        %v3518 = vpop.f32.mrb[0].mxu0
        %v3519 = vadd.f32 0.0, %v3518
        %v3520 = vpop.f32.mrb[0].mxu0
        %v3521 = vpop.f32.mrb[0].mxu0
        %v3522 = vadd.f32 0.0, %v3521
        %v3523 = vpop.f32.mrb[0].mxu0
        %3524 = vmatprep.mubr.bf16.mxu0 0
        %3525 = vmatmul.mubr.bf16.gmra.mrb[0].mxu0 %v3466
        %v3526 = vpop.f32.mrb[0].mxu0
        %v3527 = vadd.f32 0.0, %v3526
        %v3528 = vpop.f32.mrb[0].mxu0
        %v3529 = vpop.f32.mrb[0].mxu0
        %v3530 = vadd.f32 0.0, %v3529
        %v3531 = vpop.f32.mrb[0].mxu0
        %3532 = vdwg.mxu0
        %v3533 = vpack.c.bf16 %v3506, %v3503
        %v3534 = vpack.c.bf16 %v3514, %v3511
        %v3535 = vpack.c.bf16 %v3522, %v3519
        %v3536 = vpack.c.bf16 %v3530, %v3527
        %s3537 = scalar_lea.vmem [#allocation6], 96
        %v3538 = vld [vmem:[%s3537] sm:$0xf]
        %v3539 = vld [vmem:[%s3537 + $0x4] sm:$0xf]
        %v3540 = vld [vmem:[%s3537 + $0x8] sm:$0xf]
        %v3541 = vld [vmem:[%s3537 + $0xc] sm:$0xf]
        %v3542 = vld [vmem:[%s3537 + $0x10] sm:$0xf]
        %v3543 = vld [vmem:[%s3537 + $0x14] sm:$0xf]
        %v3544 = vld [vmem:[%s3537 + $0x18] sm:$0xf]
        %v3545 = vld [vmem:[%s3537 + $0x1c] sm:$0xf]
        %v3554 = vunpack.c.l.b16 %v3538
        %v3555 = vunpack.c.l.b16 %v3539
        %v3556 = vunpack.c.l.b16 %v3540
        %v3557 = vunpack.c.l.b16 %v3541
        %v3558 = vunpack.c.l.b16 %v3542
        %v3559 = vunpack.c.l.b16 %v3543
        %v3560 = vunpack.c.l.b16 %v3544
        %v3561 = vunpack.c.l.b16 %v3545
        %v3562 = vpack.c.b16 %v3555, %v3554
        %v3563 = vpack.c.b16 %v3557, %v3556
        %v3564 = vpack.c.b16 %v3559, %v3558
        %v3565 = vpack.c.b16 %v3561, %v3560
        %v3571 = vsel %vm2788, %v3533, 0
        %v3574 = vsel %vm2788, %v3534, 0
        %v3577 = vsel %vm2788, %v3535, 0
        %v3580 = vsel %vm2788, %v3536, 0
        %3582 = vmatprep.subr.bf16.mxu0 0
        %3583 = vmatpush1.bf16.msra.mxu0 %v3562
        %3584 = vmatprep.subr.bf16.mxu0 0
        %3585 = vmatpush1.bf16.msra.mxu0 %v3563
        %3586 = vmatprep.subr.bf16.mxu0 0
        %3587 = vmatpush1.bf16.msra.mxu0 %v3564
        %3588 = vmatprep.subr.bf16.mxu0 0
        %3589 = vmatpush1.bf16.msra.mxu0 %v3565
        %3590 = vmatprep.subr.bf16.mxu0 0
        %3591 = vmatpush1.bf16.msra.mxu0 0
        %3592 = vmatprep.subr.bf16.mxu0 0
        %3593 = vmatpush1.bf16.msra.mxu0 0
        %3594 = vmatprep.subr.bf16.mxu0 0
        %3595 = vmatpush1.bf16.msra.mxu0 0
        %3596 = vmatprep.subr.bf16.mxu0 0
        %3597 = vmatpush1.bf16.msra.mxu0 0
        %3598 = vmatprep.subr.bf16.mxu0 0
        %3599 = vmatpush1.bf16.msra.mxu0 0
        %3600 = vmatprep.subr.bf16.mxu0 0
        %3601 = vmatpush1.bf16.msra.mxu0 0
        %3602 = vmatprep.subr.bf16.mxu0 0
        %3603 = vmatpush1.bf16.msra.mxu0 0
        %3604 = vmatprep.subr.bf16.mxu0 0
        %3605 = vmatpush1.bf16.msra.mxu0 0
        %3606 = vmatprep.subr.bf16.mxu0 0
        %3607 = vmatpush1.bf16.msra.mxu0 0
        %3608 = vmatprep.subr.bf16.mxu0 0
        %3609 = vmatpush1.bf16.msra.mxu0 0
        %3610 = vmatprep.subr.bf16.mxu0 0
        %3611 = vmatpush1.bf16.msra.mxu0 0
        %3612 = vmatprep.subr.bf16.mxu0 0
        %3613 = vmatpush1.bf16.msra.mxu0 0
        %3614 = vmatprep.mubr.bf16.mxu0 0
        %3615 = vmatmul.mubr.bf16.gmra.mrb[0].mxu0 %v3571
        %v3616 = vpop.f32.mrb[0].mxu0
        %v3617 = vadd.f32 0.0, %v3616
        %v3618 = vpop.f32.mrb[0].mxu0
        %v3619 = vpop.f32.mrb[0].mxu0
        %v3620 = vadd.f32 0.0, %v3619
        %v3621 = vpop.f32.mrb[0].mxu0
        %3622 = vmatprep.mubr.bf16.mxu0 0
        %3623 = vmatmul.mubr.bf16.gmra.mrb[0].mxu0 %v3574
        %v3624 = vpop.f32.mrb[0].mxu0
        %v3625 = vadd.f32 0.0, %v3624
        %v3626 = vpop.f32.mrb[0].mxu0
        %v3627 = vpop.f32.mrb[0].mxu0
        %v3628 = vadd.f32 0.0, %v3627
        %v3629 = vpop.f32.mrb[0].mxu0
        %3630 = vmatprep.mubr.bf16.mxu0 0
        %3631 = vmatmul.mubr.bf16.gmra.mrb[0].mxu0 %v3577
        %v3632 = vpop.f32.mrb[0].mxu0
        %v3633 = vadd.f32 0.0, %v3632
        %v3634 = vpop.f32.mrb[0].mxu0
        %v3635 = vpop.f32.mrb[0].mxu0
        %v3636 = vadd.f32 0.0, %v3635
        %v3637 = vpop.f32.mrb[0].mxu0
        %3638 = vmatprep.mubr.bf16.mxu0 0
        %3639 = vmatmul.mubr.bf16.gmra.mrb[0].mxu0 %v3580
        %v3640 = vpop.f32.mrb[0].mxu0
        %v3641 = vadd.f32 0.0, %v3640
        %v3642 = vpop.f32.mrb[0].mxu0
        %v3643 = vpop.f32.mrb[0].mxu0
        %v3644 = vadd.f32 0.0, %v3643
        %v3645 = vpop.f32.mrb[0].mxu0
        %3646 = vdwg.mxu0
        %v3647 = vadd.f32 %v3419, %v3617
        %v3648 = vadd.f32 %v3420, %v3620
        %v3649 = vadd.f32 %v3421, %v3625
        %v3650 = vadd.f32 %v3422, %v3628
        %v3651 = vadd.f32 %v3423, %v3633
        %v3652 = vadd.f32 %v3424, %v3636
        %v3653 = vadd.f32 %v3425, %v3641
        %v3654 = vadd.f32 %v3426, %v3644
        %s3655 = scalar_lea.vmem [#allocation4], 128
        %v3656 = vld [vmem:[%s3655] sm:$0xf]
        %v3657 = vld [vmem:[%s3655 + $0x4] sm:$0xf]
        %v3658 = vld [vmem:[%s3655 + $0x8] sm:$0xf]
        %v3659 = vld [vmem:[%s3655 + $0xc] sm:$0xf]
        %v3660 = vld [vmem:[%s3655 + $0x10] sm:$0xf]
        %v3661 = vld [vmem:[%s3655 + $0x14] sm:$0xf]
        %v3662 = vld [vmem:[%s3655 + $0x18] sm:$0xf]
        %v3663 = vld [vmem:[%s3655 + $0x1c] sm:$0xf]
        %v3672 = vunpack.c.l.b16 %v3656
        %v3673 = vunpack.c.l.b16 %v3657
        %v3674 = vunpack.c.l.b16 %v3658
        %v3675 = vunpack.c.l.b16 %v3659
        %v3676 = vunpack.c.l.b16 %v3660
        %v3677 = vunpack.c.l.b16 %v3661
        %v3678 = vunpack.c.l.b16 %v3662
        %v3679 = vunpack.c.l.b16 %v3663
        %v3680 = vpack.c.b16 %v3673, %v3672
        %v3681 = vpack.c.b16 %v3675, %v3674
        %v3682 = vpack.c.b16 %v3677, %v3676
        %v3683 = vpack.c.b16 %v3679, %v3678
        %v3685 = vsel %vm2788, %v3680, 0
        %v3688 = vsel %vm2788, %v3681, 0
        %v3691 = vsel %vm2788, %v3682, 0
        %v3694 = vsel %vm2788, %v3683, 0
        %3696 = vmatprep.subr.bf16.mxu0 0
        %3697 = vmatpush1.bf16.msra.mxu0 %v2756
        %3698 = vmatprep.subr.bf16.mxu0 0
        %3699 = vmatpush1.bf16.msra.mxu0 %v2757
        %3700 = vmatprep.subr.bf16.mxu0 0
        %3701 = vmatpush1.bf16.msra.mxu0 %v2758
        %3702 = vmatprep.subr.bf16.mxu0 0
        %3703 = vmatpush1.bf16.msra.mxu0 %v2759
        %3704 = vmatprep.subr.bf16.mxu0 0
        %3705 = vmatpush1.bf16.msra.mxu0 0
        %3706 = vmatprep.subr.bf16.mxu0 0
        %3707 = vmatpush1.bf16.msra.mxu0 0
        %3708 = vmatprep.subr.bf16.mxu0 0
        %3709 = vmatpush1.bf16.msra.mxu0 0
        %3710 = vmatprep.subr.bf16.mxu0 0
        %3711 = vmatpush1.bf16.msra.mxu0 0
        %3712 = vmatprep.subr.bf16.mxu0 0
        %3713 = vmatpush1.bf16.msra.mxu0 0
        %3714 = vmatprep.subr.bf16.mxu0 0
        %3715 = vmatpush1.bf16.msra.mxu0 0
        %3716 = vmatprep.subr.bf16.mxu0 0
        %3717 = vmatpush1.bf16.msra.mxu0 0
        %3718 = vmatprep.subr.bf16.mxu0 0
        %3719 = vmatpush1.bf16.msra.mxu0 0
        %3720 = vmatprep.subr.bf16.mxu0 0
        %3721 = vmatpush1.bf16.msra.mxu0 0
        %3722 = vmatprep.subr.bf16.mxu0 0
        %3723 = vmatpush1.bf16.msra.mxu0 0
        %3724 = vmatprep.subr.bf16.mxu0 0
        %3725 = vmatpush1.bf16.msra.mxu0 0
        %3726 = vmatprep.subr.bf16.mxu0 0
        %3727 = vmatpush1.bf16.msra.mxu0 0
        %3728 = vmatprep.mubr.bf16.mxu0 0
        %3729 = vmatmul.mubr.bf16.gmra.mrb[0].mxu0 %v3685
        %v3730 = vpop.f32.mrb[0].mxu0
        %v3731 = vadd.f32 0.0, %v3730
        %v3732 = vpop.f32.mrb[0].mxu0
        %v3733 = vpop.f32.mrb[0].mxu0
        %v3734 = vadd.f32 0.0, %v3733
        %v3735 = vpop.f32.mrb[0].mxu0
        %3736 = vmatprep.mubr.bf16.mxu0 0
        %3737 = vmatmul.mubr.bf16.gmra.mrb[0].mxu0 %v3688
        %v3738 = vpop.f32.mrb[0].mxu0
        %v3739 = vadd.f32 0.0, %v3738
        %v3740 = vpop.f32.mrb[0].mxu0
        %v3741 = vpop.f32.mrb[0].mxu0
        %v3742 = vadd.f32 0.0, %v3741
        %v3743 = vpop.f32.mrb[0].mxu0
        %3744 = vmatprep.mubr.bf16.mxu0 0
        %3745 = vmatmul.mubr.bf16.gmra.mrb[0].mxu0 %v3691
        %v3746 = vpop.f32.mrb[0].mxu0
        %v3747 = vadd.f32 0.0, %v3746
        %v3748 = vpop.f32.mrb[0].mxu0
        %v3749 = vpop.f32.mrb[0].mxu0
        %v3750 = vadd.f32 0.0, %v3749
        %v3751 = vpop.f32.mrb[0].mxu0
        %3752 = vmatprep.mubr.bf16.mxu0 0
        %3753 = vmatmul.mubr.bf16.gmra.mrb[0].mxu0 %v3694
        %v3754 = vpop.f32.mrb[0].mxu0
        %v3755 = vadd.f32 0.0, %v3754
        %v3756 = vpop.f32.mrb[0].mxu0
        %v3757 = vpop.f32.mrb[0].mxu0
        %v3758 = vadd.f32 0.0, %v3757
        %v3759 = vpop.f32.mrb[0].mxu0
        %3760 = vdwg.mxu0
        %v3761 = vpack.c.bf16 %v3734, %v3731
        %v3762 = vpack.c.bf16 %v3742, %v3739
        %v3763 = vpack.c.bf16 %v3750, %v3747
        %v3764 = vpack.c.bf16 %v3758, %v3755
        %s3765 = scalar_lea.vmem [#allocation6], 128
        %v3766 = vld [vmem:[%s3765] sm:$0xf]
        %v3767 = vld [vmem:[%s3765 + $0x4] sm:$0xf]
        %v3768 = vld [vmem:[%s3765 + $0x8] sm:$0xf]
        %v3769 = vld [vmem:[%s3765 + $0xc] sm:$0xf]
        %v3770 = vld [vmem:[%s3765 + $0x10] sm:$0xf]
        %v3771 = vld [vmem:[%s3765 + $0x14] sm:$0xf]
        %v3772 = vld [vmem:[%s3765 + $0x18] sm:$0xf]
        %v3773 = vld [vmem:[%s3765 + $0x1c] sm:$0xf]
        %v3782 = vunpack.c.l.b16 %v3766
        %v3783 = vunpack.c.l.b16 %v3767
        %v3784 = vunpack.c.l.b16 %v3768
        %v3785 = vunpack.c.l.b16 %v3769
        %v3786 = vunpack.c.l.b16 %v3770
        %v3787 = vunpack.c.l.b16 %v3771
        %v3788 = vunpack.c.l.b16 %v3772
        %v3789 = vunpack.c.l.b16 %v3773
        %v3790 = vpack.c.b16 %v3783, %v3782
        %v3791 = vpack.c.b16 %v3785, %v3784
        %v3792 = vpack.c.b16 %v3787, %v3786
        %v3793 = vpack.c.b16 %v3789, %v3788
        %v3799 = vsel %vm2788, %v3761, 0
        %v3802 = vsel %vm2788, %v3762, 0
        %v3805 = vsel %vm2788, %v3763, 0
        %v3808 = vsel %vm2788, %v3764, 0
        %3810 = vmatprep.subr.bf16.mxu0 0
        %3811 = vmatpush1.bf16.msra.mxu0 %v3790
        %3812 = vmatprep.subr.bf16.mxu0 0
        %3813 = vmatpush1.bf16.msra.mxu0 %v3791
        %3814 = vmatprep.subr.bf16.mxu0 0
        %3815 = vmatpush1.bf16.msra.mxu0 %v3792
        %3816 = vmatprep.subr.bf16.mxu0 0
        %3817 = vmatpush1.bf16.msra.mxu0 %v3793
        %3818 = vmatprep.subr.bf16.mxu0 0
        %3819 = vmatpush1.bf16.msra.mxu0 0
        %3820 = vmatprep.subr.bf16.mxu0 0
        %3821 = vmatpush1.bf16.msra.mxu0 0
        %3822 = vmatprep.subr.bf16.mxu0 0
        %3823 = vmatpush1.bf16.msra.mxu0 0
        %3824 = vmatprep.subr.bf16.mxu0 0
        %3825 = vmatpush1.bf16.msra.mxu0 0
        %3826 = vmatprep.subr.bf16.mxu0 0
        %3827 = vmatpush1.bf16.msra.mxu0 0
        %3828 = vmatprep.subr.bf16.mxu0 0
        %3829 = vmatpush1.bf16.msra.mxu0 0
        %3830 = vmatprep.subr.bf16.mxu0 0
        %3831 = vmatpush1.bf16.msra.mxu0 0
        %3832 = vmatprep.subr.bf16.mxu0 0
        %3833 = vmatpush1.bf16.msra.mxu0 0
        %3834 = vmatprep.subr.bf16.mxu0 0
        %3835 = vmatpush1.bf16.msra.mxu0 0
        %3836 = vmatprep.subr.bf16.mxu0 0
        %3837 = vmatpush1.bf16.msra.mxu0 0
        %3838 = vmatprep.subr.bf16.mxu0 0
        %3839 = vmatpush1.bf16.msra.mxu0 0
        %3840 = vmatprep.subr.bf16.mxu0 0
        %3841 = vmatpush1.bf16.msra.mxu0 0
        %3842 = vmatprep.mubr.bf16.mxu0 0
        %3843 = vmatmul.mubr.bf16.gmra.mrb[0].mxu0 %v3799
        %v3844 = vpop.f32.mrb[0].mxu0
        %v3845 = vadd.f32 0.0, %v3844
        %v3846 = vpop.f32.mrb[0].mxu0
        %v3847 = vpop.f32.mrb[0].mxu0
        %v3848 = vadd.f32 0.0, %v3847
        %v3849 = vpop.f32.mrb[0].mxu0
        %3850 = vmatprep.mubr.bf16.mxu0 0
        %3851 = vmatmul.mubr.bf16.gmra.mrb[0].mxu0 %v3802
        %v3852 = vpop.f32.mrb[0].mxu0
        %v3853 = vadd.f32 0.0, %v3852
        %v3854 = vpop.f32.mrb[0].mxu0
        %v3855 = vpop.f32.mrb[0].mxu0
        %v3856 = vadd.f32 0.0, %v3855
        %v3857 = vpop.f32.mrb[0].mxu0
        %3858 = vmatprep.mubr.bf16.mxu0 0
        %3859 = vmatmul.mubr.bf16.gmra.mrb[0].mxu0 %v3805
        %v3860 = vpop.f32.mrb[0].mxu0
        %v3861 = vadd.f32 0.0, %v3860
        %v3862 = vpop.f32.mrb[0].mxu0
        %v3863 = vpop.f32.mrb[0].mxu0
        %v3864 = vadd.f32 0.0, %v3863
        %v3865 = vpop.f32.mrb[0].mxu0
        %3866 = vmatprep.mubr.bf16.mxu0 0
        %3867 = vmatmul.mubr.bf16.gmra.mrb[0].mxu0 %v3808
        %v3868 = vpop.f32.mrb[0].mxu0
        %v3869 = vadd.f32 0.0, %v3868
        %v3870 = vpop.f32.mrb[0].mxu0
        %v3871 = vpop.f32.mrb[0].mxu0
        %v3872 = vadd.f32 0.0, %v3871
        %v3873 = vpop.f32.mrb[0].mxu0
        %3874 = vdwg.mxu0
        %v3875 = vadd.f32 %v3647, %v3845
        %v3876 = vadd.f32 %v3648, %v3848
        %v3877 = vadd.f32 %v3649, %v3853
        %v3878 = vadd.f32 %v3650, %v3856
        %v3879 = vadd.f32 %v3651, %v3861
        %v3880 = vadd.f32 %v3652, %v3864
        %v3881 = vadd.f32 %v3653, %v3869
        %v3882 = vadd.f32 %v3654, %v3872
        %s3883 = scalar_lea.vmem [#allocation4], 160
        %v3884 = vld [vmem:[%s3883] sm:$0xf]
        %v3885 = vld [vmem:[%s3883 + $0x4] sm:$0xf]
        %v3886 = vld [vmem:[%s3883 + $0x8] sm:$0xf]
        %v3887 = vld [vmem:[%s3883 + $0xc] sm:$0xf]
        %v3888 = vld [vmem:[%s3883 + $0x10] sm:$0xf]
        %v3889 = vld [vmem:[%s3883 + $0x14] sm:$0xf]
        %v3890 = vld [vmem:[%s3883 + $0x18] sm:$0xf]
        %v3891 = vld [vmem:[%s3883 + $0x1c] sm:$0xf]
        %v3900 = vunpack.c.l.b16 %v3884
        %v3901 = vunpack.c.l.b16 %v3885
        %v3902 = vunpack.c.l.b16 %v3886
        %v3903 = vunpack.c.l.b16 %v3887
        %v3904 = vunpack.c.l.b16 %v3888
        %v3905 = vunpack.c.l.b16 %v3889
        %v3906 = vunpack.c.l.b16 %v3890
        %v3907 = vunpack.c.l.b16 %v3891
        %v3908 = vpack.c.b16 %v3901, %v3900
        %v3909 = vpack.c.b16 %v3903, %v3902
        %v3910 = vpack.c.b16 %v3905, %v3904
        %v3911 = vpack.c.b16 %v3907, %v3906
        %v3913 = vsel %vm2788, %v3908, 0
        %v3916 = vsel %vm2788, %v3909, 0
        %v3919 = vsel %vm2788, %v3910, 0
        %v3922 = vsel %vm2788, %v3911, 0
        %3924 = vmatprep.subr.bf16.mxu0 0
        %3925 = vmatpush1.bf16.msra.mxu0 %v2756
        %3926 = vmatprep.subr.bf16.mxu0 0
        %3927 = vmatpush1.bf16.msra.mxu0 %v2757
        %3928 = vmatprep.subr.bf16.mxu0 0
        %3929 = vmatpush1.bf16.msra.mxu0 %v2758
        %3930 = vmatprep.subr.bf16.mxu0 0
        %3931 = vmatpush1.bf16.msra.mxu0 %v2759
        %3932 = vmatprep.subr.bf16.mxu0 0
        %3933 = vmatpush1.bf16.msra.mxu0 0
        %3934 = vmatprep.subr.bf16.mxu0 0
        %3935 = vmatpush1.bf16.msra.mxu0 0
        %3936 = vmatprep.subr.bf16.mxu0 0
        %3937 = vmatpush1.bf16.msra.mxu0 0
        %3938 = vmatprep.subr.bf16.mxu0 0
        %3939 = vmatpush1.bf16.msra.mxu0 0
        %3940 = vmatprep.subr.bf16.mxu0 0
        %3941 = vmatpush1.bf16.msra.mxu0 0
        %3942 = vmatprep.subr.bf16.mxu0 0
        %3943 = vmatpush1.bf16.msra.mxu0 0
        %3944 = vmatprep.subr.bf16.mxu0 0
        %3945 = vmatpush1.bf16.msra.mxu0 0
        %3946 = vmatprep.subr.bf16.mxu0 0
        %3947 = vmatpush1.bf16.msra.mxu0 0
        %3948 = vmatprep.subr.bf16.mxu0 0
        %3949 = vmatpush1.bf16.msra.mxu0 0
        %3950 = vmatprep.subr.bf16.mxu0 0
        %3951 = vmatpush1.bf16.msra.mxu0 0
        %3952 = vmatprep.subr.bf16.mxu0 0
        %3953 = vmatpush1.bf16.msra.mxu0 0
        %3954 = vmatprep.subr.bf16.mxu0 0
        %3955 = vmatpush1.bf16.msra.mxu0 0
        %3956 = vmatprep.mubr.bf16.mxu0 0
        %3957 = vmatmul.mubr.bf16.gmra.mrb[0].mxu0 %v3913
        %v3958 = vpop.f32.mrb[0].mxu0
        %v3959 = vadd.f32 0.0, %v3958
        %v3960 = vpop.f32.mrb[0].mxu0
        %v3961 = vpop.f32.mrb[0].mxu0
        %v3962 = vadd.f32 0.0, %v3961
        %v3963 = vpop.f32.mrb[0].mxu0
        %3964 = vmatprep.mubr.bf16.mxu0 0
        %3965 = vmatmul.mubr.bf16.gmra.mrb[0].mxu0 %v3916
        %v3966 = vpop.f32.mrb[0].mxu0
        %v3967 = vadd.f32 0.0, %v3966
        %v3968 = vpop.f32.mrb[0].mxu0
        %v3969 = vpop.f32.mrb[0].mxu0
        %v3970 = vadd.f32 0.0, %v3969
        %v3971 = vpop.f32.mrb[0].mxu0
        %3972 = vmatprep.mubr.bf16.mxu0 0
        %3973 = vmatmul.mubr.bf16.gmra.mrb[0].mxu0 %v3919
        %v3974 = vpop.f32.mrb[0].mxu0
        %v3975 = vadd.f32 0.0, %v3974
        %v3976 = vpop.f32.mrb[0].mxu0
        %v3977 = vpop.f32.mrb[0].mxu0
        %v3978 = vadd.f32 0.0, %v3977
        %v3979 = vpop.f32.mrb[0].mxu0
        %3980 = vmatprep.mubr.bf16.mxu0 0
        %3981 = vmatmul.mubr.bf16.gmra.mrb[0].mxu0 %v3922
        %v3982 = vpop.f32.mrb[0].mxu0
        %v3983 = vadd.f32 0.0, %v3982
        %v3984 = vpop.f32.mrb[0].mxu0
        %v3985 = vpop.f32.mrb[0].mxu0
        %v3986 = vadd.f32 0.0, %v3985
        %v3987 = vpop.f32.mrb[0].mxu0
        %3988 = vdwg.mxu0
        %v3989 = vpack.c.bf16 %v3962, %v3959
        %v3990 = vpack.c.bf16 %v3970, %v3967
        %v3991 = vpack.c.bf16 %v3978, %v3975
        %v3992 = vpack.c.bf16 %v3986, %v3983
        %s3993 = scalar_lea.vmem [#allocation6], 160
        %v3994 = vld [vmem:[%s3993] sm:$0xf]
        %v3995 = vld [vmem:[%s3993 + $0x4] sm:$0xf]
        %v3996 = vld [vmem:[%s3993 + $0x8] sm:$0xf]
        %v3997 = vld [vmem:[%s3993 + $0xc] sm:$0xf]
        %v3998 = vld [vmem:[%s3993 + $0x10] sm:$0xf]
        %v3999 = vld [vmem:[%s3993 + $0x14] sm:$0xf]
        %v4000 = vld [vmem:[%s3993 + $0x18] sm:$0xf]
        %v4001 = vld [vmem:[%s3993 + $0x1c] sm:$0xf]
        %v4010 = vunpack.c.l.b16 %v3994
        %v4011 = vunpack.c.l.b16 %v3995
        %v4012 = vunpack.c.l.b16 %v3996
        %v4013 = vunpack.c.l.b16 %v3997
        %v4014 = vunpack.c.l.b16 %v3998
        %v4015 = vunpack.c.l.b16 %v3999
        %v4016 = vunpack.c.l.b16 %v4000
        %v4017 = vunpack.c.l.b16 %v4001
        %v4018 = vpack.c.b16 %v4011, %v4010
        %v4019 = vpack.c.b16 %v4013, %v4012
        %v4020 = vpack.c.b16 %v4015, %v4014
        %v4021 = vpack.c.b16 %v4017, %v4016
        %v4027 = vsel %vm2788, %v3989, 0
        %v4030 = vsel %vm2788, %v3990, 0
        %v4033 = vsel %vm2788, %v3991, 0
        %v4036 = vsel %vm2788, %v3992, 0
        %4038 = vmatprep.subr.bf16.mxu0 0
        %4039 = vmatpush1.bf16.msra.mxu0 %v4018
        %4040 = vmatprep.subr.bf16.mxu0 0
        %4041 = vmatpush1.bf16.msra.mxu0 %v4019
        %4042 = vmatprep.subr.bf16.mxu0 0
        %4043 = vmatpush1.bf16.msra.mxu0 %v4020
        %4044 = vmatprep.subr.bf16.mxu0 0
        %4045 = vmatpush1.bf16.msra.mxu0 %v4021
        %4046 = vmatprep.subr.bf16.mxu0 0
        %4047 = vmatpush1.bf16.msra.mxu0 0
        %4048 = vmatprep.subr.bf16.mxu0 0
        %4049 = vmatpush1.bf16.msra.mxu0 0
        %4050 = vmatprep.subr.bf16.mxu0 0
        %4051 = vmatpush1.bf16.msra.mxu0 0
        %4052 = vmatprep.subr.bf16.mxu0 0
        %4053 = vmatpush1.bf16.msra.mxu0 0
        %4054 = vmatprep.subr.bf16.mxu0 0
        %4055 = vmatpush1.bf16.msra.mxu0 0
        %4056 = vmatprep.subr.bf16.mxu0 0
        %4057 = vmatpush1.bf16.msra.mxu0 0
        %4058 = vmatprep.subr.bf16.mxu0 0
        %4059 = vmatpush1.bf16.msra.mxu0 0
        %4060 = vmatprep.subr.bf16.mxu0 0
        %4061 = vmatpush1.bf16.msra.mxu0 0
        %4062 = vmatprep.subr.bf16.mxu0 0
        %4063 = vmatpush1.bf16.msra.mxu0 0
        %4064 = vmatprep.subr.bf16.mxu0 0
        %4065 = vmatpush1.bf16.msra.mxu0 0
        %4066 = vmatprep.subr.bf16.mxu0 0
        %4067 = vmatpush1.bf16.msra.mxu0 0
        %4068 = vmatprep.subr.bf16.mxu0 0
        %4069 = vmatpush1.bf16.msra.mxu0 0
        %4070 = vmatprep.mubr.bf16.mxu0 0
        %4071 = vmatmul.mubr.bf16.gmra.mrb[0].mxu0 %v4027
        %v4072 = vpop.f32.mrb[0].mxu0
        %v4073 = vadd.f32 0.0, %v4072
        %v4074 = vpop.f32.mrb[0].mxu0
        %v4075 = vpop.f32.mrb[0].mxu0
        %v4076 = vadd.f32 0.0, %v4075
        %v4077 = vpop.f32.mrb[0].mxu0
        %4078 = vmatprep.mubr.bf16.mxu0 0
        %4079 = vmatmul.mubr.bf16.gmra.mrb[0].mxu0 %v4030
        %v4080 = vpop.f32.mrb[0].mxu0
        %v4081 = vadd.f32 0.0, %v4080
        %v4082 = vpop.f32.mrb[0].mxu0
        %v4083 = vpop.f32.mrb[0].mxu0
        %v4084 = vadd.f32 0.0, %v4083
        %v4085 = vpop.f32.mrb[0].mxu0
        %4086 = vmatprep.mubr.bf16.mxu0 0
        %4087 = vmatmul.mubr.bf16.gmra.mrb[0].mxu0 %v4033
        %v4088 = vpop.f32.mrb[0].mxu0
        %v4089 = vadd.f32 0.0, %v4088
        %v4090 = vpop.f32.mrb[0].mxu0
        %v4091 = vpop.f32.mrb[0].mxu0
        %v4092 = vadd.f32 0.0, %v4091
        %v4093 = vpop.f32.mrb[0].mxu0
        %4094 = vmatprep.mubr.bf16.mxu0 0
        %4095 = vmatmul.mubr.bf16.gmra.mrb[0].mxu0 %v4036
        %v4096 = vpop.f32.mrb[0].mxu0
        %v4097 = vadd.f32 0.0, %v4096
        %v4098 = vpop.f32.mrb[0].mxu0
        %v4099 = vpop.f32.mrb[0].mxu0
        %v4100 = vadd.f32 0.0, %v4099
        %v4101 = vpop.f32.mrb[0].mxu0
        %4102 = vdwg.mxu0
        %v4103 = vadd.f32 %v3875, %v4073
        %v4104 = vadd.f32 %v3876, %v4076
        %v4105 = vadd.f32 %v3877, %v4081
        %v4106 = vadd.f32 %v3878, %v4084
        %v4107 = vadd.f32 %v3879, %v4089
        %v4108 = vadd.f32 %v3880, %v4092
        %v4109 = vadd.f32 %v3881, %v4097
        %v4110 = vadd.f32 %v3882, %v4100
        %s4111 = scalar_lea.vmem [#allocation4], 192
        %v4112 = vld [vmem:[%s4111] sm:$0xf]
        %v4113 = vld [vmem:[%s4111 + $0x4] sm:$0xf]
        %v4114 = vld [vmem:[%s4111 + $0x8] sm:$0xf]
        %v4115 = vld [vmem:[%s4111 + $0xc] sm:$0xf]
        %v4116 = vld [vmem:[%s4111 + $0x10] sm:$0xf]
        %v4117 = vld [vmem:[%s4111 + $0x14] sm:$0xf]
        %v4118 = vld [vmem:[%s4111 + $0x18] sm:$0xf]
        %v4119 = vld [vmem:[%s4111 + $0x1c] sm:$0xf]
        %v4128 = vunpack.c.l.b16 %v4112
        %v4129 = vunpack.c.l.b16 %v4113
        %v4130 = vunpack.c.l.b16 %v4114
        %v4131 = vunpack.c.l.b16 %v4115
        %v4132 = vunpack.c.l.b16 %v4116
        %v4133 = vunpack.c.l.b16 %v4117
        %v4134 = vunpack.c.l.b16 %v4118
        %v4135 = vunpack.c.l.b16 %v4119
        %v4136 = vpack.c.b16 %v4129, %v4128
        %v4137 = vpack.c.b16 %v4131, %v4130
        %v4138 = vpack.c.b16 %v4133, %v4132
        %v4139 = vpack.c.b16 %v4135, %v4134
        %v4141 = vsel %vm2788, %v4136, 0
        %v4144 = vsel %vm2788, %v4137, 0
        %v4147 = vsel %vm2788, %v4138, 0
        %v4150 = vsel %vm2788, %v4139, 0
        %4152 = vmatprep.subr.bf16.mxu0 0
        %4153 = vmatpush1.bf16.msra.mxu0 %v2756
        %4154 = vmatprep.subr.bf16.mxu0 0
        %4155 = vmatpush1.bf16.msra.mxu0 %v2757
        %4156 = vmatprep.subr.bf16.mxu0 0
        %4157 = vmatpush1.bf16.msra.mxu0 %v2758
        %4158 = vmatprep.subr.bf16.mxu0 0
        %4159 = vmatpush1.bf16.msra.mxu0 %v2759
        %4160 = vmatprep.subr.bf16.mxu0 0
        %4161 = vmatpush1.bf16.msra.mxu0 0
        %4162 = vmatprep.subr.bf16.mxu0 0
        %4163 = vmatpush1.bf16.msra.mxu0 0
        %4164 = vmatprep.subr.bf16.mxu0 0
        %4165 = vmatpush1.bf16.msra.mxu0 0
        %4166 = vmatprep.subr.bf16.mxu0 0
        %4167 = vmatpush1.bf16.msra.mxu0 0
        %4168 = vmatprep.subr.bf16.mxu0 0
        %4169 = vmatpush1.bf16.msra.mxu0 0
        %4170 = vmatprep.subr.bf16.mxu0 0
        %4171 = vmatpush1.bf16.msra.mxu0 0
        %4172 = vmatprep.subr.bf16.mxu0 0
        %4173 = vmatpush1.bf16.msra.mxu0 0
        %4174 = vmatprep.subr.bf16.mxu0 0
        %4175 = vmatpush1.bf16.msra.mxu0 0
        %4176 = vmatprep.subr.bf16.mxu0 0
        %4177 = vmatpush1.bf16.msra.mxu0 0
        %4178 = vmatprep.subr.bf16.mxu0 0
        %4179 = vmatpush1.bf16.msra.mxu0 0
        %4180 = vmatprep.subr.bf16.mxu0 0
        %4181 = vmatpush1.bf16.msra.mxu0 0
        %4182 = vmatprep.subr.bf16.mxu0 0
        %4183 = vmatpush1.bf16.msra.mxu0 0
        %4184 = vmatprep.mubr.bf16.mxu0 0
        %4185 = vmatmul.mubr.bf16.gmra.mrb[0].mxu0 %v4141
        %v4186 = vpop.f32.mrb[0].mxu0
        %v4187 = vadd.f32 0.0, %v4186
        %v4188 = vpop.f32.mrb[0].mxu0
        %v4189 = vpop.f32.mrb[0].mxu0
        %v4190 = vadd.f32 0.0, %v4189
        %v4191 = vpop.f32.mrb[0].mxu0
        %4192 = vmatprep.mubr.bf16.mxu0 0
        %4193 = vmatmul.mubr.bf16.gmra.mrb[0].mxu0 %v4144
        %v4194 = vpop.f32.mrb[0].mxu0
        %v4195 = vadd.f32 0.0, %v4194
        %v4196 = vpop.f32.mrb[0].mxu0
        %v4197 = vpop.f32.mrb[0].mxu0
        %v4198 = vadd.f32 0.0, %v4197
        %v4199 = vpop.f32.mrb[0].mxu0
        %4200 = vmatprep.mubr.bf16.mxu0 0
        %4201 = vmatmul.mubr.bf16.gmra.mrb[0].mxu0 %v4147
        %v4202 = vpop.f32.mrb[0].mxu0
        %v4203 = vadd.f32 0.0, %v4202
        %v4204 = vpop.f32.mrb[0].mxu0
        %v4205 = vpop.f32.mrb[0].mxu0
        %v4206 = vadd.f32 0.0, %v4205
        %v4207 = vpop.f32.mrb[0].mxu0
        %4208 = vmatprep.mubr.bf16.mxu0 0
        %4209 = vmatmul.mubr.bf16.gmra.mrb[0].mxu0 %v4150
        %v4210 = vpop.f32.mrb[0].mxu0
        %v4211 = vadd.f32 0.0, %v4210
        %v4212 = vpop.f32.mrb[0].mxu0
        %v4213 = vpop.f32.mrb[0].mxu0
        %v4214 = vadd.f32 0.0, %v4213
        %v4215 = vpop.f32.mrb[0].mxu0
        %4216 = vdwg.mxu0
        %v4217 = vpack.c.bf16 %v4190, %v4187
        %v4218 = vpack.c.bf16 %v4198, %v4195
        %v4219 = vpack.c.bf16 %v4206, %v4203
        %v4220 = vpack.c.bf16 %v4214, %v4211
        %s4221 = scalar_lea.vmem [#allocation6], 192
        %v4222 = vld [vmem:[%s4221] sm:$0xf]
        %v4223 = vld [vmem:[%s4221 + $0x4] sm:$0xf]
        %v4224 = vld [vmem:[%s4221 + $0x8] sm:$0xf]
        %v4225 = vld [vmem:[%s4221 + $0xc] sm:$0xf]
        %v4226 = vld [vmem:[%s4221 + $0x10] sm:$0xf]
        %v4227 = vld [vmem:[%s4221 + $0x14] sm:$0xf]
        %v4228 = vld [vmem:[%s4221 + $0x18] sm:$0xf]
        %v4229 = vld [vmem:[%s4221 + $0x1c] sm:$0xf]
        %v4238 = vunpack.c.l.b16 %v4222
        %v4239 = vunpack.c.l.b16 %v4223
        %v4240 = vunpack.c.l.b16 %v4224
        %v4241 = vunpack.c.l.b16 %v4225
        %v4242 = vunpack.c.l.b16 %v4226
        %v4243 = vunpack.c.l.b16 %v4227
        %v4244 = vunpack.c.l.b16 %v4228
        %v4245 = vunpack.c.l.b16 %v4229
        %v4246 = vpack.c.b16 %v4239, %v4238
        %v4247 = vpack.c.b16 %v4241, %v4240
        %v4248 = vpack.c.b16 %v4243, %v4242
        %v4249 = vpack.c.b16 %v4245, %v4244
        %v4255 = vsel %vm2788, %v4217, 0
        %v4258 = vsel %vm2788, %v4218, 0
        %v4261 = vsel %vm2788, %v4219, 0
        %v4264 = vsel %vm2788, %v4220, 0
        %4266 = vmatprep.subr.bf16.mxu0 0
        %4267 = vmatpush1.bf16.msra.mxu0 %v4246
        %4268 = vmatprep.subr.bf16.mxu0 0
        %4269 = vmatpush1.bf16.msra.mxu0 %v4247
        %4270 = vmatprep.subr.bf16.mxu0 0
        %4271 = vmatpush1.bf16.msra.mxu0 %v4248
        %4272 = vmatprep.subr.bf16.mxu0 0
        %4273 = vmatpush1.bf16.msra.mxu0 %v4249
        %4274 = vmatprep.subr.bf16.mxu0 0
        %4275 = vmatpush1.bf16.msra.mxu0 0
        %4276 = vmatprep.subr.bf16.mxu0 0
        %4277 = vmatpush1.bf16.msra.mxu0 0
        %4278 = vmatprep.subr.bf16.mxu0 0
        %4279 = vmatpush1.bf16.msra.mxu0 0
        %4280 = vmatprep.subr.bf16.mxu0 0
        %4281 = vmatpush1.bf16.msra.mxu0 0
        %4282 = vmatprep.subr.bf16.mxu0 0
        %4283 = vmatpush1.bf16.msra.mxu0 0
        %4284 = vmatprep.subr.bf16.mxu0 0
        %4285 = vmatpush1.bf16.msra.mxu0 0
        %4286 = vmatprep.subr.bf16.mxu0 0
        %4287 = vmatpush1.bf16.msra.mxu0 0
        %4288 = vmatprep.subr.bf16.mxu0 0
        %4289 = vmatpush1.bf16.msra.mxu0 0
        %4290 = vmatprep.subr.bf16.mxu0 0
        %4291 = vmatpush1.bf16.msra.mxu0 0
        %4292 = vmatprep.subr.bf16.mxu0 0
        %4293 = vmatpush1.bf16.msra.mxu0 0
        %4294 = vmatprep.subr.bf16.mxu0 0
        %4295 = vmatpush1.bf16.msra.mxu0 0
        %4296 = vmatprep.subr.bf16.mxu0 0
        %4297 = vmatpush1.bf16.msra.mxu0 0
        %4298 = vmatprep.mubr.bf16.mxu0 0
        %4299 = vmatmul.mubr.bf16.gmra.mrb[0].mxu0 %v4255
        %v4300 = vpop.f32.mrb[0].mxu0
        %v4301 = vadd.f32 0.0, %v4300
        %v4302 = vpop.f32.mrb[0].mxu0
        %v4303 = vpop.f32.mrb[0].mxu0
        %v4304 = vadd.f32 0.0, %v4303
        %v4305 = vpop.f32.mrb[0].mxu0
        %4306 = vmatprep.mubr.bf16.mxu0 0
        %4307 = vmatmul.mubr.bf16.gmra.mrb[0].mxu0 %v4258
        %v4308 = vpop.f32.mrb[0].mxu0
        %v4309 = vadd.f32 0.0, %v4308
        %v4310 = vpop.f32.mrb[0].mxu0
        %v4311 = vpop.f32.mrb[0].mxu0
        %v4312 = vadd.f32 0.0, %v4311
        %v4313 = vpop.f32.mrb[0].mxu0
        %4314 = vmatprep.mubr.bf16.mxu0 0
        %4315 = vmatmul.mubr.bf16.gmra.mrb[0].mxu0 %v4261
        %v4316 = vpop.f32.mrb[0].mxu0
        %v4317 = vadd.f32 0.0, %v4316
        %v4318 = vpop.f32.mrb[0].mxu0
        %v4319 = vpop.f32.mrb[0].mxu0
        %v4320 = vadd.f32 0.0, %v4319
        %v4321 = vpop.f32.mrb[0].mxu0
        %4322 = vmatprep.mubr.bf16.mxu0 0
        %4323 = vmatmul.mubr.bf16.gmra.mrb[0].mxu0 %v4264
        %v4324 = vpop.f32.mrb[0].mxu0
        %v4325 = vadd.f32 0.0, %v4324
        %v4326 = vpop.f32.mrb[0].mxu0
        %v4327 = vpop.f32.mrb[0].mxu0
        %v4328 = vadd.f32 0.0, %v4327
        %v4329 = vpop.f32.mrb[0].mxu0
        %4330 = vdwg.mxu0
        %v4331 = vadd.f32 %v4103, %v4301
        %v4332 = vadd.f32 %v4104, %v4304
        %v4333 = vadd.f32 %v4105, %v4309
        %v4334 = vadd.f32 %v4106, %v4312
        %v4335 = vadd.f32 %v4107, %v4317
        %v4336 = vadd.f32 %v4108, %v4320
        %v4337 = vadd.f32 %v4109, %v4325
        %v4338 = vadd.f32 %v4110, %v4328
        %s4339 = scalar_lea.vmem [#allocation4], 224
        %v4340 = vld [vmem:[%s4339] sm:$0xf]
        %v4341 = vld [vmem:[%s4339 + $0x4] sm:$0xf]
        %v4342 = vld [vmem:[%s4339 + $0x8] sm:$0xf]
        %v4343 = vld [vmem:[%s4339 + $0xc] sm:$0xf]
        %v4344 = vld [vmem:[%s4339 + $0x10] sm:$0xf]
        %v4345 = vld [vmem:[%s4339 + $0x14] sm:$0xf]
        %v4346 = vld [vmem:[%s4339 + $0x18] sm:$0xf]
        %v4347 = vld [vmem:[%s4339 + $0x1c] sm:$0xf]
        %v4356 = vunpack.c.l.b16 %v4340
        %v4357 = vunpack.c.l.b16 %v4341
        %v4358 = vunpack.c.l.b16 %v4342
        %v4359 = vunpack.c.l.b16 %v4343
        %v4360 = vunpack.c.l.b16 %v4344
        %v4361 = vunpack.c.l.b16 %v4345
        %v4362 = vunpack.c.l.b16 %v4346
        %v4363 = vunpack.c.l.b16 %v4347
        %v4364 = vpack.c.b16 %v4357, %v4356
        %v4365 = vpack.c.b16 %v4359, %v4358
        %v4366 = vpack.c.b16 %v4361, %v4360
        %v4367 = vpack.c.b16 %v4363, %v4362
        %v4369 = vsel %vm2788, %v4364, 0
        %v4372 = vsel %vm2788, %v4365, 0
        %v4375 = vsel %vm2788, %v4366, 0
        %v4378 = vsel %vm2788, %v4367, 0
        %4380 = vmatprep.subr.bf16.mxu0 0
        %4381 = vmatpush1.bf16.msra.mxu0 %v2756
        %4382 = vmatprep.subr.bf16.mxu0 0
        %4383 = vmatpush1.bf16.msra.mxu0 %v2757
        %4384 = vmatprep.subr.bf16.mxu0 0
        %4385 = vmatpush1.bf16.msra.mxu0 %v2758
        %4386 = vmatprep.subr.bf16.mxu0 0
        %4387 = vmatpush1.bf16.msra.mxu0 %v2759
        %4388 = vmatprep.subr.bf16.mxu0 0
        %4389 = vmatpush1.bf16.msra.mxu0 0
        %4390 = vmatprep.subr.bf16.mxu0 0
        %4391 = vmatpush1.bf16.msra.mxu0 0
        %4392 = vmatprep.subr.bf16.mxu0 0
        %4393 = vmatpush1.bf16.msra.mxu0 0
        %4394 = vmatprep.subr.bf16.mxu0 0
        %4395 = vmatpush1.bf16.msra.mxu0 0
        %4396 = vmatprep.subr.bf16.mxu0 0
        %4397 = vmatpush1.bf16.msra.mxu0 0
        %4398 = vmatprep.subr.bf16.mxu0 0
        %4399 = vmatpush1.bf16.msra.mxu0 0
        %4400 = vmatprep.subr.bf16.mxu0 0
        %4401 = vmatpush1.bf16.msra.mxu0 0
        %4402 = vmatprep.subr.bf16.mxu0 0
        %4403 = vmatpush1.bf16.msra.mxu0 0
        %4404 = vmatprep.subr.bf16.mxu0 0
        %4405 = vmatpush1.bf16.msra.mxu0 0
        %4406 = vmatprep.subr.bf16.mxu0 0
        %4407 = vmatpush1.bf16.msra.mxu0 0
        %4408 = vmatprep.subr.bf16.mxu0 0
        %4409 = vmatpush1.bf16.msra.mxu0 0
        %4410 = vmatprep.subr.bf16.mxu0 0
        %4411 = vmatpush1.bf16.msra.mxu0 0
        %4412 = vmatprep.mubr.bf16.mxu0 0
        %4413 = vmatmul.mubr.bf16.gmra.mrb[0].mxu0 %v4369
        %v4414 = vpop.f32.mrb[0].mxu0
        %v4415 = vadd.f32 0.0, %v4414
        %v4416 = vpop.f32.mrb[0].mxu0
        %v4417 = vpop.f32.mrb[0].mxu0
        %v4418 = vadd.f32 0.0, %v4417
        %v4419 = vpop.f32.mrb[0].mxu0
        %4420 = vmatprep.mubr.bf16.mxu0 0
        %4421 = vmatmul.mubr.bf16.gmra.mrb[0].mxu0 %v4372
        %v4422 = vpop.f32.mrb[0].mxu0
        %v4423 = vadd.f32 0.0, %v4422
        %v4424 = vpop.f32.mrb[0].mxu0
        %v4425 = vpop.f32.mrb[0].mxu0
        %v4426 = vadd.f32 0.0, %v4425
        %v4427 = vpop.f32.mrb[0].mxu0
        %4428 = vmatprep.mubr.bf16.mxu0 0
        %4429 = vmatmul.mubr.bf16.gmra.mrb[0].mxu0 %v4375
        %v4430 = vpop.f32.mrb[0].mxu0
        %v4431 = vadd.f32 0.0, %v4430
        %v4432 = vpop.f32.mrb[0].mxu0
        %v4433 = vpop.f32.mrb[0].mxu0
        %v4434 = vadd.f32 0.0, %v4433
        %v4435 = vpop.f32.mrb[0].mxu0
        %4436 = vmatprep.mubr.bf16.mxu0 0
        %4437 = vmatmul.mubr.bf16.gmra.mrb[0].mxu0 %v4378
        %v4438 = vpop.f32.mrb[0].mxu0
        %v4439 = vadd.f32 0.0, %v4438
        %v4440 = vpop.f32.mrb[0].mxu0
        %v4441 = vpop.f32.mrb[0].mxu0
        %v4442 = vadd.f32 0.0, %v4441
        %v4443 = vpop.f32.mrb[0].mxu0
        %4444 = vdwg.mxu0
        %v4445 = vpack.c.bf16 %v4418, %v4415
        %v4446 = vpack.c.bf16 %v4426, %v4423
        %v4447 = vpack.c.bf16 %v4434, %v4431
        %v4448 = vpack.c.bf16 %v4442, %v4439
        %s4449 = scalar_lea.vmem [#allocation6], 224
        %v4450 = vld [vmem:[%s4449] sm:$0xf]
        %v4451 = vld [vmem:[%s4449 + $0x4] sm:$0xf]
        %v4452 = vld [vmem:[%s4449 + $0x8] sm:$0xf]
        %v4453 = vld [vmem:[%s4449 + $0xc] sm:$0xf]
        %v4454 = vld [vmem:[%s4449 + $0x10] sm:$0xf]
        %v4455 = vld [vmem:[%s4449 + $0x14] sm:$0xf]
        %v4456 = vld [vmem:[%s4449 + $0x18] sm:$0xf]
        %v4457 = vld [vmem:[%s4449 + $0x1c] sm:$0xf]
        %v4466 = vunpack.c.l.b16 %v4450
        %v4467 = vunpack.c.l.b16 %v4451
        %v4468 = vunpack.c.l.b16 %v4452
        %v4469 = vunpack.c.l.b16 %v4453
        %v4470 = vunpack.c.l.b16 %v4454
        %v4471 = vunpack.c.l.b16 %v4455
        %v4472 = vunpack.c.l.b16 %v4456
        %v4473 = vunpack.c.l.b16 %v4457
        %v4474 = vpack.c.b16 %v4467, %v4466
        %v4475 = vpack.c.b16 %v4469, %v4468
        %v4476 = vpack.c.b16 %v4471, %v4470
        %v4477 = vpack.c.b16 %v4473, %v4472
        %v4483 = vsel %vm2788, %v4445, 0
        %v4486 = vsel %vm2788, %v4446, 0
        %v4489 = vsel %vm2788, %v4447, 0
        %v4492 = vsel %vm2788, %v4448, 0
        %4494 = vmatprep.subr.bf16.mxu0 0
        %4495 = vmatpush1.bf16.msra.mxu0 %v4474
        %4496 = vmatprep.subr.bf16.mxu0 0
        %4497 = vmatpush1.bf16.msra.mxu0 %v4475
        %4498 = vmatprep.subr.bf16.mxu0 0
        %4499 = vmatpush1.bf16.msra.mxu0 %v4476
        %4500 = vmatprep.subr.bf16.mxu0 0
        %4501 = vmatpush1.bf16.msra.mxu0 %v4477
        %4502 = vmatprep.subr.bf16.mxu0 0
        %4503 = vmatpush1.bf16.msra.mxu0 0
        %4504 = vmatprep.subr.bf16.mxu0 0
        %4505 = vmatpush1.bf16.msra.mxu0 0
        %4506 = vmatprep.subr.bf16.mxu0 0
        %4507 = vmatpush1.bf16.msra.mxu0 0
        %4508 = vmatprep.subr.bf16.mxu0 0
        %4509 = vmatpush1.bf16.msra.mxu0 0
        %4510 = vmatprep.subr.bf16.mxu0 0
        %4511 = vmatpush1.bf16.msra.mxu0 0
        %4512 = vmatprep.subr.bf16.mxu0 0
        %4513 = vmatpush1.bf16.msra.mxu0 0
        %4514 = vmatprep.subr.bf16.mxu0 0
        %4515 = vmatpush1.bf16.msra.mxu0 0
        %4516 = vmatprep.subr.bf16.mxu0 0
        %4517 = vmatpush1.bf16.msra.mxu0 0
        %4518 = vmatprep.subr.bf16.mxu0 0
        %4519 = vmatpush1.bf16.msra.mxu0 0
        %4520 = vmatprep.subr.bf16.mxu0 0
        %4521 = vmatpush1.bf16.msra.mxu0 0
        %4522 = vmatprep.subr.bf16.mxu0 0
        %4523 = vmatpush1.bf16.msra.mxu0 0
        %4524 = vmatprep.subr.bf16.mxu0 0
        %4525 = vmatpush1.bf16.msra.mxu0 0
        %4526 = vmatprep.mubr.bf16.mxu0 0
        %4527 = vmatmul.mubr.bf16.gmra.mrb[0].mxu0 %v4483
        %v4528 = vpop.f32.mrb[0].mxu0
        %v4529 = vadd.f32 0.0, %v4528
        %v4530 = vpop.f32.mrb[0].mxu0
        %v4531 = vpop.f32.mrb[0].mxu0
        %v4532 = vadd.f32 0.0, %v4531
        %v4533 = vpop.f32.mrb[0].mxu0
        %4534 = vmatprep.mubr.bf16.mxu0 0
        %4535 = vmatmul.mubr.bf16.gmra.mrb[0].mxu0 %v4486
        %v4536 = vpop.f32.mrb[0].mxu0
        %v4537 = vadd.f32 0.0, %v4536
        %v4538 = vpop.f32.mrb[0].mxu0
        %v4539 = vpop.f32.mrb[0].mxu0
        %v4540 = vadd.f32 0.0, %v4539
        %v4541 = vpop.f32.mrb[0].mxu0
        %4542 = vmatprep.mubr.bf16.mxu0 0
        %4543 = vmatmul.mubr.bf16.gmra.mrb[0].mxu0 %v4489
        %v4544 = vpop.f32.mrb[0].mxu0
        %v4545 = vadd.f32 0.0, %v4544
        %v4546 = vpop.f32.mrb[0].mxu0
        %v4547 = vpop.f32.mrb[0].mxu0
        %v4548 = vadd.f32 0.0, %v4547
        %v4549 = vpop.f32.mrb[0].mxu0
        %4550 = vmatprep.mubr.bf16.mxu0 0
        %4551 = vmatmul.mubr.bf16.gmra.mrb[0].mxu0 %v4492
        %v4552 = vpop.f32.mrb[0].mxu0
        %v4553 = vadd.f32 0.0, %v4552
        %v4554 = vpop.f32.mrb[0].mxu0
        %v4555 = vpop.f32.mrb[0].mxu0
        %v4556 = vadd.f32 0.0, %v4555
        %v4557 = vpop.f32.mrb[0].mxu0
        %4558 = vdwg.mxu0
        %v4559 = vadd.f32 %v4331, %v4529
        %v4560 = vadd.f32 %v4332, %v4532
        %v4561 = vadd.f32 %v4333, %v4537
        %v4562 = vadd.f32 %v4334, %v4540
        %v4563 = vadd.f32 %v4335, %v4545
        %v4564 = vadd.f32 %v4336, %v4548
        %v4565 = vadd.f32 %v4337, %v4553
        %v4566 = vadd.f32 %v4338, %v4556
        %s4567 = scalar_lea.vmem [#allocation4], 256
        %v4568 = vld [vmem:[%s4567] sm:$0xf]
        %v4569 = vld [vmem:[%s4567 + $0x4] sm:$0xf]
        %v4570 = vld [vmem:[%s4567 + $0x8] sm:$0xf]
        %v4571 = vld [vmem:[%s4567 + $0xc] sm:$0xf]
        %v4572 = vld [vmem:[%s4567 + $0x10] sm:$0xf]
        %v4573 = vld [vmem:[%s4567 + $0x14] sm:$0xf]
        %v4574 = vld [vmem:[%s4567 + $0x18] sm:$0xf]
        %v4575 = vld [vmem:[%s4567 + $0x1c] sm:$0xf]
        %v4584 = vunpack.c.l.b16 %v4568
        %v4585 = vunpack.c.l.b16 %v4569
        %v4586 = vunpack.c.l.b16 %v4570
        %v4587 = vunpack.c.l.b16 %v4571
        %v4588 = vunpack.c.l.b16 %v4572
        %v4589 = vunpack.c.l.b16 %v4573
        %v4590 = vunpack.c.l.b16 %v4574
        %v4591 = vunpack.c.l.b16 %v4575
        %v4592 = vpack.c.b16 %v4585, %v4584
        %v4593 = vpack.c.b16 %v4587, %v4586
        %v4594 = vpack.c.b16 %v4589, %v4588
        %v4595 = vpack.c.b16 %v4591, %v4590
        %v4597 = vsel %vm2788, %v4592, 0
        %v4600 = vsel %vm2788, %v4593, 0
        %v4603 = vsel %vm2788, %v4594, 0
        %v4606 = vsel %vm2788, %v4595, 0
        %4608 = vmatprep.subr.bf16.mxu0 0
        %4609 = vmatpush1.bf16.msra.mxu0 %v2756
        %4610 = vmatprep.subr.bf16.mxu0 0
        %4611 = vmatpush1.bf16.msra.mxu0 %v2757
        %4612 = vmatprep.subr.bf16.mxu0 0
        %4613 = vmatpush1.bf16.msra.mxu0 %v2758
        %4614 = vmatprep.subr.bf16.mxu0 0
        %4615 = vmatpush1.bf16.msra.mxu0 %v2759
        %4616 = vmatprep.subr.bf16.mxu0 0
        %4617 = vmatpush1.bf16.msra.mxu0 0
        %4618 = vmatprep.subr.bf16.mxu0 0
        %4619 = vmatpush1.bf16.msra.mxu0 0
        %4620 = vmatprep.subr.bf16.mxu0 0
        %4621 = vmatpush1.bf16.msra.mxu0 0
        %4622 = vmatprep.subr.bf16.mxu0 0
        %4623 = vmatpush1.bf16.msra.mxu0 0
        %4624 = vmatprep.subr.bf16.mxu0 0
        %4625 = vmatpush1.bf16.msra.mxu0 0
        %4626 = vmatprep.subr.bf16.mxu0 0
        %4627 = vmatpush1.bf16.msra.mxu0 0
        %4628 = vmatprep.subr.bf16.mxu0 0
        %4629 = vmatpush1.bf16.msra.mxu0 0
        %4630 = vmatprep.subr.bf16.mxu0 0
        %4631 = vmatpush1.bf16.msra.mxu0 0
        %4632 = vmatprep.subr.bf16.mxu0 0
        %4633 = vmatpush1.bf16.msra.mxu0 0
        %4634 = vmatprep.subr.bf16.mxu0 0
        %4635 = vmatpush1.bf16.msra.mxu0 0
        %4636 = vmatprep.subr.bf16.mxu0 0
        %4637 = vmatpush1.bf16.msra.mxu0 0
        %4638 = vmatprep.subr.bf16.mxu0 0
        %4639 = vmatpush1.bf16.msra.mxu0 0
        %4640 = vmatprep.mubr.bf16.mxu0 0
        %4641 = vmatmul.mubr.bf16.gmra.mrb[0].mxu0 %v4597
        %v4642 = vpop.f32.mrb[0].mxu0
        %v4643 = vadd.f32 0.0, %v4642
        %v4644 = vpop.f32.mrb[0].mxu0
        %v4645 = vpop.f32.mrb[0].mxu0
        %v4646 = vadd.f32 0.0, %v4645
        %v4647 = vpop.f32.mrb[0].mxu0
        %4648 = vmatprep.mubr.bf16.mxu0 0
        %4649 = vmatmul.mubr.bf16.gmra.mrb[0].mxu0 %v4600
        %v4650 = vpop.f32.mrb[0].mxu0
        %v4651 = vadd.f32 0.0, %v4650
        %v4652 = vpop.f32.mrb[0].mxu0
        %v4653 = vpop.f32.mrb[0].mxu0
        %v4654 = vadd.f32 0.0, %v4653
        %v4655 = vpop.f32.mrb[0].mxu0
        %4656 = vmatprep.mubr.bf16.mxu0 0
        %4657 = vmatmul.mubr.bf16.gmra.mrb[0].mxu0 %v4603
        %v4658 = vpop.f32.mrb[0].mxu0
        %v4659 = vadd.f32 0.0, %v4658
        %v4660 = vpop.f32.mrb[0].mxu0
        %v4661 = vpop.f32.mrb[0].mxu0
        %v4662 = vadd.f32 0.0, %v4661
        %v4663 = vpop.f32.mrb[0].mxu0
        %4664 = vmatprep.mubr.bf16.mxu0 0
        %4665 = vmatmul.mubr.bf16.gmra.mrb[0].mxu0 %v4606
        %v4666 = vpop.f32.mrb[0].mxu0
        %v4667 = vadd.f32 0.0, %v4666
        %v4668 = vpop.f32.mrb[0].mxu0
        %v4669 = vpop.f32.mrb[0].mxu0
        %v4670 = vadd.f32 0.0, %v4669
        %v4671 = vpop.f32.mrb[0].mxu0
        %4672 = vdwg.mxu0
        %v4673 = vpack.c.bf16 %v4646, %v4643
        %v4674 = vpack.c.bf16 %v4654, %v4651
        %v4675 = vpack.c.bf16 %v4662, %v4659
        %v4676 = vpack.c.bf16 %v4670, %v4667
        %s4677 = scalar_lea.vmem [#allocation6], 256
        %v4678 = vld [vmem:[%s4677] sm:$0xf]
        %v4679 = vld [vmem:[%s4677 + $0x4] sm:$0xf]
        %v4680 = vld [vmem:[%s4677 + $0x8] sm:$0xf]
        %v4681 = vld [vmem:[%s4677 + $0xc] sm:$0xf]
        %v4682 = vld [vmem:[%s4677 + $0x10] sm:$0xf]
        %v4683 = vld [vmem:[%s4677 + $0x14] sm:$0xf]
        %v4684 = vld [vmem:[%s4677 + $0x18] sm:$0xf]
        %v4685 = vld [vmem:[%s4677 + $0x1c] sm:$0xf]
        %v4694 = vunpack.c.l.b16 %v4678
        %v4695 = vunpack.c.l.b16 %v4679
        %v4696 = vunpack.c.l.b16 %v4680
        %v4697 = vunpack.c.l.b16 %v4681
        %v4698 = vunpack.c.l.b16 %v4682
        %v4699 = vunpack.c.l.b16 %v4683
        %v4700 = vunpack.c.l.b16 %v4684
        %v4701 = vunpack.c.l.b16 %v4685
        %v4702 = vpack.c.b16 %v4695, %v4694
        %v4703 = vpack.c.b16 %v4697, %v4696
        %v4704 = vpack.c.b16 %v4699, %v4698
        %v4705 = vpack.c.b16 %v4701, %v4700
        %v4711 = vsel %vm2788, %v4673, 0
        %v4714 = vsel %vm2788, %v4674, 0
        %v4717 = vsel %vm2788, %v4675, 0
        %v4720 = vsel %vm2788, %v4676, 0
        %4722 = vmatprep.subr.bf16.mxu0 0
        %4723 = vmatpush1.bf16.msra.mxu0 %v4702
        %4724 = vmatprep.subr.bf16.mxu0 0
        %4725 = vmatpush1.bf16.msra.mxu0 %v4703
        %4726 = vmatprep.subr.bf16.mxu0 0
        %4727 = vmatpush1.bf16.msra.mxu0 %v4704
        %4728 = vmatprep.subr.bf16.mxu0 0
        %4729 = vmatpush1.bf16.msra.mxu0 %v4705
        %4730 = vmatprep.subr.bf16.mxu0 0
        %4731 = vmatpush1.bf16.msra.mxu0 0
        %4732 = vmatprep.subr.bf16.mxu0 0
        %4733 = vmatpush1.bf16.msra.mxu0 0
        %4734 = vmatprep.subr.bf16.mxu0 0
        %4735 = vmatpush1.bf16.msra.mxu0 0
        %4736 = vmatprep.subr.bf16.mxu0 0
        %4737 = vmatpush1.bf16.msra.mxu0 0
        %4738 = vmatprep.subr.bf16.mxu0 0
        %4739 = vmatpush1.bf16.msra.mxu0 0
        %4740 = vmatprep.subr.bf16.mxu0 0
        %4741 = vmatpush1.bf16.msra.mxu0 0
        %4742 = vmatprep.subr.bf16.mxu0 0
        %4743 = vmatpush1.bf16.msra.mxu0 0
        %4744 = vmatprep.subr.bf16.mxu0 0
        %4745 = vmatpush1.bf16.msra.mxu0 0
        %4746 = vmatprep.subr.bf16.mxu0 0
        %4747 = vmatpush1.bf16.msra.mxu0 0
        %4748 = vmatprep.subr.bf16.mxu0 0
        %4749 = vmatpush1.bf16.msra.mxu0 0
        %4750 = vmatprep.subr.bf16.mxu0 0
        %4751 = vmatpush1.bf16.msra.mxu0 0
        %4752 = vmatprep.subr.bf16.mxu0 0
        %4753 = vmatpush1.bf16.msra.mxu0 0
        %4754 = vmatprep.mubr.bf16.mxu0 0
        %4755 = vmatmul.mubr.bf16.gmra.mrb[0].mxu0 %v4711
        %v4756 = vpop.f32.mrb[0].mxu0
        %v4757 = vadd.f32 0.0, %v4756
        %v4758 = vpop.f32.mrb[0].mxu0
        %v4759 = vpop.f32.mrb[0].mxu0
        %v4760 = vadd.f32 0.0, %v4759
        %v4761 = vpop.f32.mrb[0].mxu0
        %4762 = vmatprep.mubr.bf16.mxu0 0
        %4763 = vmatmul.mubr.bf16.gmra.mrb[0].mxu0 %v4714
        %v4764 = vpop.f32.mrb[0].mxu0
        %v4765 = vadd.f32 0.0, %v4764
        %v4766 = vpop.f32.mrb[0].mxu0
        %v4767 = vpop.f32.mrb[0].mxu0
        %v4768 = vadd.f32 0.0, %v4767
        %v4769 = vpop.f32.mrb[0].mxu0
        %4770 = vmatprep.mubr.bf16.mxu0 0
        %4771 = vmatmul.mubr.bf16.gmra.mrb[0].mxu0 %v4717
        %v4772 = vpop.f32.mrb[0].mxu0
        %v4773 = vadd.f32 0.0, %v4772
        %v4774 = vpop.f32.mrb[0].mxu0
        %v4775 = vpop.f32.mrb[0].mxu0
        %v4776 = vadd.f32 0.0, %v4775
        %v4777 = vpop.f32.mrb[0].mxu0
        %4778 = vmatprep.mubr.bf16.mxu0 0
        %4779 = vmatmul.mubr.bf16.gmra.mrb[0].mxu0 %v4720
        %v4780 = vpop.f32.mrb[0].mxu0
        %v4781 = vadd.f32 0.0, %v4780
        %v4782 = vpop.f32.mrb[0].mxu0
        %v4783 = vpop.f32.mrb[0].mxu0
        %v4784 = vadd.f32 0.0, %v4783
        %v4785 = vpop.f32.mrb[0].mxu0
        %4786 = vdwg.mxu0
        %v4787 = vadd.f32 %v4559, %v4757
        %v4788 = vadd.f32 %v4560, %v4760
        %v4789 = vadd.f32 %v4561, %v4765
        %v4790 = vadd.f32 %v4562, %v4768
        %v4791 = vadd.f32 %v4563, %v4773
        %v4792 = vadd.f32 %v4564, %v4776
        %v4793 = vadd.f32 %v4565, %v4781
        %v4794 = vadd.f32 %v4566, %v4784
        %vm4795 = vcmp.ge.f32.partialorder %v4787, 0.0
        %vm4796 = vcmp.ge.f32.partialorder %v4788, 0.0
        %vm4797 = vcmp.ge.f32.partialorder %v4789, 0.0
        %vm4798 = vcmp.ge.f32.partialorder %v4790, 0.0
        %vm4799 = vcmp.ge.f32.partialorder %v4791, 0.0
        %vm4800 = vcmp.ge.f32.partialorder %v4792, 0.0
        %vm4801 = vcmp.ge.f32.partialorder %v4793, 0.0
        %vm4802 = vcmp.ge.f32.partialorder %v4794, 0.0
        %v4803 = vmul.f32 %v4787, 0.15
        %v4804 = vmul.f32 %v4788, 0.15
        %v4805 = vmul.f32 %v4789, 0.15
        %v4806 = vmul.f32 %v4790, 0.15
        %v4807 = vmul.f32 %v4791, 0.15
        %v4808 = vmul.f32 %v4792, 0.15
        %v4809 = vmul.f32 %v4793, 0.15
        %v4810 = vmul.f32 %v4794, 0.15
        %v4811 = vsel %vm4795, %v4787, %v4803
        %v4812 = vsel %vm4796, %v4788, %v4804
        %v4813 = vsel %vm4797, %v4789, %v4805
        %v4814 = vsel %vm4798, %v4790, %v4806
        %v4815 = vsel %vm4799, %v4791, %v4807
        %v4816 = vsel %vm4800, %v4792, %v4808
        %v4817 = vsel %vm4801, %v4793, %v4809
        %v4818 = vsel %vm4802, %v4794, %v4810
        %v4819 = vpack.c.bf16 %v4812, %v4811
        %v4820 = vpack.c.bf16 %v4814, %v4813
        %v4821 = vpack.c.bf16 %v4816, %v4815
        %v4822 = vpack.c.bf16 %v4818, %v4817
        %v4823 = vld [vmem:[%s6] sm:$0xf]
        %v4824 = vld [vmem:[%s6 + $0x4] sm:$0xf]
        %v4827 = vunpack.c.l.b16 %v4823
        %v4828 = vunpack.c.l.b16 %v4824
        %v4829 = vpack.c.b16 %v4828, %v4827
        %v4831 = vsel %vm2788, %v4829, 0
        %4833 = vmatprep.subr.bf16.mxu0 0
        %4834 = vmatpush1.bf16.msra.mxu0 %v4819
        %4835 = vmatprep.subr.bf16.mxu0 0
        %4836 = vmatpush1.bf16.msra.mxu0 %v4820
        %4837 = vmatprep.subr.bf16.mxu0 0
        %4838 = vmatpush1.bf16.msra.mxu0 %v4821
        %4839 = vmatprep.subr.bf16.mxu0 0
        %4840 = vmatpush1.bf16.msra.mxu0 %v4822
        %4841 = vmatprep.subr.bf16.mxu0 0
        %4842 = vmatpush1.bf16.msra.mxu0 0
        %4843 = vmatprep.subr.bf16.mxu0 0
        %4844 = vmatpush1.bf16.msra.mxu0 0
        %4845 = vmatprep.subr.bf16.mxu0 0
        %4846 = vmatpush1.bf16.msra.mxu0 0
        %4847 = vmatprep.subr.bf16.mxu0 0
        %4848 = vmatpush1.bf16.msra.mxu0 0
        %4849 = vmatprep.subr.bf16.mxu0 0
        %4850 = vmatpush1.bf16.msra.mxu0 0
        %4851 = vmatprep.subr.bf16.mxu0 0
        %4852 = vmatpush1.bf16.msra.mxu0 0
        %4853 = vmatprep.subr.bf16.mxu0 0
        %4854 = vmatpush1.bf16.msra.mxu0 0
        %4855 = vmatprep.subr.bf16.mxu0 0
        %4856 = vmatpush1.bf16.msra.mxu0 0
        %4857 = vmatprep.subr.bf16.mxu0 0
        %4858 = vmatpush1.bf16.msra.mxu0 0
        %4859 = vmatprep.subr.bf16.mxu0 0
        %4860 = vmatpush1.bf16.msra.mxu0 0
        %4861 = vmatprep.subr.bf16.mxu0 0
        %4862 = vmatpush1.bf16.msra.mxu0 0
        %4863 = vmatprep.subr.bf16.mxu0 0
        %4864 = vmatpush1.bf16.msra.mxu0 0
        %4865 = vmatprep.mubr.bf16.mxu0 0
        %4866 = vmatmul.mubr.bf16.gmra.mrb[0].mxu0 %v4831
        %v4867 = vpop.f32.mrb[0].mxu0
        %v4868 = vadd.f32 0.0, %v4867
        %v4869 = vpop.f32.mrb[0].mxu0
        %v4870 = vpop.f32.mrb[0].mxu0
        %v4871 = vadd.f32 0.0, %v4870
        %v4872 = vpop.f32.mrb[0].mxu0
        %4873 = vdwg.mxu0
        %v4874 = vpack.c.bf16 %v4871, %v4868
        %v4875 = vld [vmem:[%s7] sm:$0xff]
        %v4876 = vld [vmem:[%s7 + $0x8] sm:$0xff]
        %v4877 = vld [vmem:[%s7 + $0x10] sm:$0xff]
        %v4878 = vld [vmem:[%s7 + $0x18] sm:$0xff]
        %v4879 = vld [vmem:[%s7 + $0x20] sm:$0xff]
        %v4880 = vld [vmem:[%s7 + $0x28] sm:$0xff]
        %v4881 = vld [vmem:[%s7 + $0x30] sm:$0xff]
        %v4882 = vld [vmem:[%s7 + $0x38] sm:$0xff]
        %v4883 = vld [vmem:[%s7 + $0x40] sm:$0xff]
        %v4884 = vld [vmem:[%s7 + $0x48] sm:$0xff]
        %v4885 = vld [vmem:[%s7 + $0x50] sm:$0xff]
        %v4886 = vld [vmem:[%s7 + $0x58] sm:$0xff]
        %v4887 = vld [vmem:[%s7 + $0x60] sm:$0xff]
        %v4888 = vld [vmem:[%s7 + $0x68] sm:$0xff]
        %v4889 = vld [vmem:[%s7 + $0x70] sm:$0xff]
        %v4890 = vld [vmem:[%s7 + $0x78] sm:$0xff]
        %s4891 = scalar_lea.vmem %s6, 8
        %v4892 = vld [vmem:[%s4891] sm:$0xf]
        %v4893 = vld [vmem:[%s4891 + $0x4] sm:$0xf]
        %v4896 = vunpack.c.l.b16 %v4892
        %v4897 = vunpack.c.l.b16 %v4893
        %v4898 = vpack.c.b16 %v4897, %v4896
        %v4900 = vsel %vm2788, %v4898, 0
        %4902 = vmatprep.subr.bf16.mxu0 0
        %4903 = vmatpush1.bf16.msra.mxu0 %v4819
        %4904 = vmatprep.subr.bf16.mxu0 0
        %4905 = vmatpush1.bf16.msra.mxu0 %v4820
        %4906 = vmatprep.subr.bf16.mxu0 0
        %4907 = vmatpush1.bf16.msra.mxu0 %v4821
        %4908 = vmatprep.subr.bf16.mxu0 0
        %4909 = vmatpush1.bf16.msra.mxu0 %v4822
        %4910 = vmatprep.subr.bf16.mxu0 0
        %4911 = vmatpush1.bf16.msra.mxu0 0
        %4912 = vmatprep.subr.bf16.mxu0 0
        %4913 = vmatpush1.bf16.msra.mxu0 0
        %4914 = vmatprep.subr.bf16.mxu0 0
        %4915 = vmatpush1.bf16.msra.mxu0 0
        %4916 = vmatprep.subr.bf16.mxu0 0
        %4917 = vmatpush1.bf16.msra.mxu0 0
        %4918 = vmatprep.subr.bf16.mxu0 0
        %4919 = vmatpush1.bf16.msra.mxu0 0
        %4920 = vmatprep.subr.bf16.mxu0 0
        %4921 = vmatpush1.bf16.msra.mxu0 0
        %4922 = vmatprep.subr.bf16.mxu0 0
        %4923 = vmatpush1.bf16.msra.mxu0 0
        %4924 = vmatprep.subr.bf16.mxu0 0
        %4925 = vmatpush1.bf16.msra.mxu0 0
        %4926 = vmatprep.subr.bf16.mxu0 0
        %4927 = vmatpush1.bf16.msra.mxu0 0
        %4928 = vmatprep.subr.bf16.mxu0 0
        %4929 = vmatpush1.bf16.msra.mxu0 0
        %4930 = vmatprep.subr.bf16.mxu0 0
        %4931 = vmatpush1.bf16.msra.mxu0 0
        %4932 = vmatprep.subr.bf16.mxu0 0
        %4933 = vmatpush1.bf16.msra.mxu0 0
        %4934 = vmatprep.mubr.bf16.mxu0 0
        %4935 = vmatmul.mubr.bf16.gmra.mrb[0].mxu0 %v4900
        %v4936 = vpop.f32.mrb[0].mxu0
        %v4937 = vadd.f32 0.0, %v4936
        %v4938 = vpop.f32.mrb[0].mxu0
        %v4939 = vpop.f32.mrb[0].mxu0
        %v4940 = vadd.f32 0.0, %v4939
        %v4941 = vpop.f32.mrb[0].mxu0
        %4942 = vdwg.mxu0
        %v4943 = vpack.c.bf16 %v4940, %v4937
        %s4944 = scalar_lea.vmem %s7, 128
        %v4945 = vld [vmem:[%s4944] sm:$0xff]
        %v4946 = vld [vmem:[%s4944 + $0x8] sm:$0xff]
        %v4947 = vld [vmem:[%s4944 + $0x10] sm:$0xff]
        %v4948 = vld [vmem:[%s4944 + $0x18] sm:$0xff]
        %v4949 = vld [vmem:[%s4944 + $0x20] sm:$0xff]
        %v4950 = vld [vmem:[%s4944 + $0x28] sm:$0xff]
        %v4951 = vld [vmem:[%s4944 + $0x30] sm:$0xff]
        %v4952 = vld [vmem:[%s4944 + $0x38] sm:$0xff]
        %v4953 = vld [vmem:[%s4944 + $0x40] sm:$0xff]
        %v4954 = vld [vmem:[%s4944 + $0x48] sm:$0xff]
        %v4955 = vld [vmem:[%s4944 + $0x50] sm:$0xff]
        %v4956 = vld [vmem:[%s4944 + $0x58] sm:$0xff]
        %v4957 = vld [vmem:[%s4944 + $0x60] sm:$0xff]
        %v4958 = vld [vmem:[%s4944 + $0x68] sm:$0xff]
        %v4959 = vld [vmem:[%s4944 + $0x70] sm:$0xff]
        %v4960 = vld [vmem:[%s4944 + $0x78] sm:$0xff]
        %v4977 = vunpack.c.l.b16 %v4945
        %v4978 = vunpack.c.h.b16 %v4945
        %v4979 = vunpack.c.l.b16 %v4946
        %v4980 = vunpack.c.h.b16 %v4946
        %v4981 = vunpack.c.l.b16 %v4947
        %v4982 = vunpack.c.h.b16 %v4947
        %v4983 = vunpack.c.l.b16 %v4948
        %v4984 = vunpack.c.h.b16 %v4948
        %v4985 = vunpack.c.l.b16 %v4949
        %v4986 = vunpack.c.h.b16 %v4949
        %v4987 = vunpack.c.l.b16 %v4950
        %v4988 = vunpack.c.h.b16 %v4950
        %v4989 = vunpack.c.l.b16 %v4951
        %v4990 = vunpack.c.h.b16 %v4951
        %v4991 = vunpack.c.l.b16 %v4952
        %v4992 = vunpack.c.h.b16 %v4952
        %v4993 = vunpack.c.l.b16 %v4953
        %v4994 = vunpack.c.h.b16 %v4953
        %v4995 = vunpack.c.l.b16 %v4954
        %v4996 = vunpack.c.h.b16 %v4954
        %v4997 = vunpack.c.l.b16 %v4955
        %v4998 = vunpack.c.h.b16 %v4955
        %v4999 = vunpack.c.l.b16 %v4956
        %v5000 = vunpack.c.h.b16 %v4956
        %v5001 = vunpack.c.l.b16 %v4957
        %v5002 = vunpack.c.h.b16 %v4957
        %v5003 = vunpack.c.l.b16 %v4958
        %v5004 = vunpack.c.h.b16 %v4958
        %v5005 = vunpack.c.l.b16 %v4959
        %v5006 = vunpack.c.h.b16 %v4959
        %v5007 = vunpack.c.l.b16 %v4960
        %v5008 = vunpack.c.h.b16 %v4960
        %v5009 = vpack.c.b16 %v4979, %v4977
        %v5010 = vpack.c.b16 %v4980, %v4978
        %v5011 = vpack.c.b16 %v4983, %v4981
        %v5012 = vpack.c.b16 %v4984, %v4982
        %v5013 = vpack.c.b16 %v4987, %v4985
        %v5014 = vpack.c.b16 %v4988, %v4986
        %v5015 = vpack.c.b16 %v4991, %v4989
        %v5016 = vpack.c.b16 %v4992, %v4990
        %v5017 = vpack.c.b16 %v4995, %v4993
        %v5018 = vpack.c.b16 %v4996, %v4994
        %v5019 = vpack.c.b16 %v4999, %v4997
        %v5020 = vpack.c.b16 %v5000, %v4998
        %v5021 = vpack.c.b16 %v5003, %v5001
        %v5022 = vpack.c.b16 %v5004, %v5002
        %v5023 = vpack.c.b16 %v5007, %v5005
        %v5024 = vpack.c.b16 %v5008, %v5006
        %5041 = vmatprep.subr.bf16.mxu0 %v5010
        %5042 = vmatpush1.bf16.msra.mxu0 %v5009
        %5043 = vmatprep.subr.bf16.mxu0 %v5012
        %5044 = vmatpush1.bf16.msra.mxu0 %v5011
        %5045 = vmatprep.subr.bf16.mxu0 %v5014
        %5046 = vmatpush1.bf16.msra.mxu0 %v5013
        %5047 = vmatprep.subr.bf16.mxu0 %v5016
        %5048 = vmatpush1.bf16.msra.mxu0 %v5015
        %5049 = vmatprep.subr.bf16.mxu0 %v5018
        %5050 = vmatpush1.bf16.msra.mxu0 %v5017
        %5051 = vmatprep.subr.bf16.mxu0 %v5020
        %5052 = vmatpush1.bf16.msra.mxu0 %v5019
        %5053 = vmatprep.subr.bf16.mxu0 %v5022
        %5054 = vmatpush1.bf16.msra.mxu0 %v5021
        %5055 = vmatprep.subr.bf16.mxu0 %v5024
        %5056 = vmatpush1.bf16.msra.mxu0 %v5023
        %5057 = vmatprep.subr.bf16.mxu0 0
        %5058 = vmatpush1.bf16.msra.mxu0 0
        %5059 = vmatprep.subr.bf16.mxu0 0
        %5060 = vmatpush1.bf16.msra.mxu0 0
        %5061 = vmatprep.subr.bf16.mxu0 0
        %5062 = vmatpush1.bf16.msra.mxu0 0
        %5063 = vmatprep.subr.bf16.mxu0 0
        %5064 = vmatpush1.bf16.msra.mxu0 0
        %5065 = vmatprep.subr.bf16.mxu0 0
        %5066 = vmatpush1.bf16.msra.mxu0 0
        %5067 = vmatprep.subr.bf16.mxu0 0
        %5068 = vmatpush1.bf16.msra.mxu0 0
        %5069 = vmatprep.subr.bf16.mxu0 0
        %5070 = vmatpush1.bf16.msra.mxu0 0
        %5071 = vmatprep.subr.bf16.mxu0 0
        %5072 = vmatpush1.bf16.msra.mxu0 0
        %5073 = vmatprep.mubr.bf16.mxu0 0
        %5074 = vmatmul.mubr.bf16.gmra.mrb[0].mxu0 %v4943
        %v5075 = vpop.f32.mrb[0].mxu0
        %v5076 = vadd.f32 0.0, %v5075
        %v5077 = vpop.f32.mrb[0].mxu0
        %v5078 = vadd.f32 0.0, %v5077
        %v5079 = vpop.f32.mrb[0].mxu0
        %v5080 = vadd.f32 0.0, %v5079
        %v5081 = vpop.f32.mrb[0].mxu0
        %v5082 = vadd.f32 0.0, %v5081
        %5083 = vdwg.mxu0
        %v5100 = vunpack.c.l.b16 %v4875
        %v5101 = vunpack.c.h.b16 %v4875
        %v5102 = vunpack.c.l.b16 %v4876
        %v5103 = vunpack.c.h.b16 %v4876
        %v5104 = vunpack.c.l.b16 %v4877
        %v5105 = vunpack.c.h.b16 %v4877
        %v5106 = vunpack.c.l.b16 %v4878
        %v5107 = vunpack.c.h.b16 %v4878
        %v5108 = vunpack.c.l.b16 %v4879
        %v5109 = vunpack.c.h.b16 %v4879
        %v5110 = vunpack.c.l.b16 %v4880
        %v5111 = vunpack.c.h.b16 %v4880
        %v5112 = vunpack.c.l.b16 %v4881
        %v5113 = vunpack.c.h.b16 %v4881
        %v5114 = vunpack.c.l.b16 %v4882
        %v5115 = vunpack.c.h.b16 %v4882
        %v5116 = vunpack.c.l.b16 %v4883
        %v5117 = vunpack.c.h.b16 %v4883
        %v5118 = vunpack.c.l.b16 %v4884
        %v5119 = vunpack.c.h.b16 %v4884
        %v5120 = vunpack.c.l.b16 %v4885
        %v5121 = vunpack.c.h.b16 %v4885
        %v5122 = vunpack.c.l.b16 %v4886
        %v5123 = vunpack.c.h.b16 %v4886
        %v5124 = vunpack.c.l.b16 %v4887
        %v5125 = vunpack.c.h.b16 %v4887
        %v5126 = vunpack.c.l.b16 %v4888
        %v5127 = vunpack.c.h.b16 %v4888
        %v5128 = vunpack.c.l.b16 %v4889
        %v5129 = vunpack.c.h.b16 %v4889
        %v5130 = vunpack.c.l.b16 %v4890
        %v5131 = vunpack.c.h.b16 %v4890
        %v5132 = vpack.c.b16 %v5102, %v5100
        %v5133 = vpack.c.b16 %v5103, %v5101
        %v5134 = vpack.c.b16 %v5106, %v5104
        %v5135 = vpack.c.b16 %v5107, %v5105
        %v5136 = vpack.c.b16 %v5110, %v5108
        %v5137 = vpack.c.b16 %v5111, %v5109
        %v5138 = vpack.c.b16 %v5114, %v5112
        %v5139 = vpack.c.b16 %v5115, %v5113
        %v5140 = vpack.c.b16 %v5118, %v5116
        %v5141 = vpack.c.b16 %v5119, %v5117
        %v5142 = vpack.c.b16 %v5122, %v5120
        %v5143 = vpack.c.b16 %v5123, %v5121
        %v5144 = vpack.c.b16 %v5126, %v5124
        %v5145 = vpack.c.b16 %v5127, %v5125
        %v5146 = vpack.c.b16 %v5130, %v5128
        %v5147 = vpack.c.b16 %v5131, %v5129
        %5164 = vmatprep.subr.bf16.mxu0 %v5133
        %5165 = vmatpush1.bf16.msra.mxu0 %v5132
        %5166 = vmatprep.subr.bf16.mxu0 %v5135
        %5167 = vmatpush1.bf16.msra.mxu0 %v5134
        %5168 = vmatprep.subr.bf16.mxu0 %v5137
        %5169 = vmatpush1.bf16.msra.mxu0 %v5136
        %5170 = vmatprep.subr.bf16.mxu0 %v5139
        %5171 = vmatpush1.bf16.msra.mxu0 %v5138
        %5172 = vmatprep.subr.bf16.mxu0 %v5141
        %5173 = vmatpush1.bf16.msra.mxu0 %v5140
        %5174 = vmatprep.subr.bf16.mxu0 %v5143
        %5175 = vmatpush1.bf16.msra.mxu0 %v5142
        %5176 = vmatprep.subr.bf16.mxu0 %v5145
        %5177 = vmatpush1.bf16.msra.mxu0 %v5144
        %5178 = vmatprep.subr.bf16.mxu0 %v5147
        %5179 = vmatpush1.bf16.msra.mxu0 %v5146
        %5180 = vmatprep.subr.bf16.mxu0 0
        %5181 = vmatpush1.bf16.msra.mxu0 0
        %5182 = vmatprep.subr.bf16.mxu0 0
        %5183 = vmatpush1.bf16.msra.mxu0 0
        %5184 = vmatprep.subr.bf16.mxu0 0
        %5185 = vmatpush1.bf16.msra.mxu0 0
        %5186 = vmatprep.subr.bf16.mxu0 0
        %5187 = vmatpush1.bf16.msra.mxu0 0
        %5188 = vmatprep.subr.bf16.mxu0 0
        %5189 = vmatpush1.bf16.msra.mxu0 0
        %5190 = vmatprep.subr.bf16.mxu0 0
        %5191 = vmatpush1.bf16.msra.mxu0 0
        %5192 = vmatprep.subr.bf16.mxu0 0
        %5193 = vmatpush1.bf16.msra.mxu0 0
        %5194 = vmatprep.subr.bf16.mxu0 0
        %5195 = vmatpush1.bf16.msra.mxu0 0
        %5196 = vmatprep.mubr.bf16.mxu0 0
        %5197 = vmatmul.mubr.bf16.gmra.mrb[0].mxu0 %v4874
        %v5198 = vpop.f32.mrb[0].mxu0
        %v5199 = vadd.f32 %v5076, %v5198
        %v5200 = vpop.f32.mrb[0].mxu0
        %v5201 = vadd.f32 %v5078, %v5200
        %v5202 = vpop.f32.mrb[0].mxu0
        %v5203 = vadd.f32 %v5080, %v5202
        %v5204 = vpop.f32.mrb[0].mxu0
        %v5205 = vadd.f32 %v5082, %v5204
        %5206 = vdwg.mxu0
        %s5207 = scalar_lea.vmem %s6, 16
        %v5208 = vld [vmem:[%s5207] sm:$0xf]
        %v5209 = vld [vmem:[%s5207 + $0x4] sm:$0xf]
        %v5212 = vunpack.c.l.b16 %v5208
        %v5213 = vunpack.c.l.b16 %v5209
        %v5214 = vpack.c.b16 %v5213, %v5212
        %v5216 = vsel %vm2788, %v5214, 0
        %5218 = vmatprep.subr.bf16.mxu0 0
        %5219 = vmatpush1.bf16.msra.mxu0 %v4819
        %5220 = vmatprep.subr.bf16.mxu0 0
        %5221 = vmatpush1.bf16.msra.mxu0 %v4820
        %5222 = vmatprep.subr.bf16.mxu0 0
        %5223 = vmatpush1.bf16.msra.mxu0 %v4821
        %5224 = vmatprep.subr.bf16.mxu0 0
        %5225 = vmatpush1.bf16.msra.mxu0 %v4822
        %5226 = vmatprep.subr.bf16.mxu0 0
        %5227 = vmatpush1.bf16.msra.mxu0 0
        %5228 = vmatprep.subr.bf16.mxu0 0
        %5229 = vmatpush1.bf16.msra.mxu0 0
        %5230 = vmatprep.subr.bf16.mxu0 0
        %5231 = vmatpush1.bf16.msra.mxu0 0
        %5232 = vmatprep.subr.bf16.mxu0 0
        %5233 = vmatpush1.bf16.msra.mxu0 0
        %5234 = vmatprep.subr.bf16.mxu0 0
        %5235 = vmatpush1.bf16.msra.mxu0 0
        %5236 = vmatprep.subr.bf16.mxu0 0
        %5237 = vmatpush1.bf16.msra.mxu0 0
        %5238 = vmatprep.subr.bf16.mxu0 0
        %5239 = vmatpush1.bf16.msra.mxu0 0
        %5240 = vmatprep.subr.bf16.mxu0 0
        %5241 = vmatpush1.bf16.msra.mxu0 0
        %5242 = vmatprep.subr.bf16.mxu0 0
        %5243 = vmatpush1.bf16.msra.mxu0 0
        %5244 = vmatprep.subr.bf16.mxu0 0
        %5245 = vmatpush1.bf16.msra.mxu0 0
        %5246 = vmatprep.subr.bf16.mxu0 0
        %5247 = vmatpush1.bf16.msra.mxu0 0
        %5248 = vmatprep.subr.bf16.mxu0 0
        %5249 = vmatpush1.bf16.msra.mxu0 0
        %5250 = vmatprep.mubr.bf16.mxu0 0
        %5251 = vmatmul.mubr.bf16.gmra.mrb[0].mxu0 %v5216
        %v5252 = vpop.f32.mrb[0].mxu0
        %v5253 = vadd.f32 0.0, %v5252
        %v5254 = vpop.f32.mrb[0].mxu0
        %v5255 = vpop.f32.mrb[0].mxu0
        %v5256 = vadd.f32 0.0, %v5255
        %v5257 = vpop.f32.mrb[0].mxu0
        %5258 = vdwg.mxu0
        %v5259 = vpack.c.bf16 %v5256, %v5253
        %s5260 = scalar_lea.vmem %s7, 256
        %v5261 = vld [vmem:[%s5260] sm:$0xff]
        %v5262 = vld [vmem:[%s5260 + $0x8] sm:$0xff]
        %v5263 = vld [vmem:[%s5260 + $0x10] sm:$0xff]
        %v5264 = vld [vmem:[%s5260 + $0x18] sm:$0xff]
        %v5265 = vld [vmem:[%s5260 + $0x20] sm:$0xff]
        %v5266 = vld [vmem:[%s5260 + $0x28] sm:$0xff]
        %v5267 = vld [vmem:[%s5260 + $0x30] sm:$0xff]
        %v5268 = vld [vmem:[%s5260 + $0x38] sm:$0xff]
        %v5269 = vld [vmem:[%s5260 + $0x40] sm:$0xff]
        %v5270 = vld [vmem:[%s5260 + $0x48] sm:$0xff]
        %v5271 = vld [vmem:[%s5260 + $0x50] sm:$0xff]
        %v5272 = vld [vmem:[%s5260 + $0x58] sm:$0xff]
        %v5273 = vld [vmem:[%s5260 + $0x60] sm:$0xff]
        %v5274 = vld [vmem:[%s5260 + $0x68] sm:$0xff]
        %v5275 = vld [vmem:[%s5260 + $0x70] sm:$0xff]
        %v5276 = vld [vmem:[%s5260 + $0x78] sm:$0xff]
        %v5293 = vunpack.c.l.b16 %v5261
        %v5294 = vunpack.c.h.b16 %v5261
        %v5295 = vunpack.c.l.b16 %v5262
        %v5296 = vunpack.c.h.b16 %v5262
        %v5297 = vunpack.c.l.b16 %v5263
        %v5298 = vunpack.c.h.b16 %v5263
        %v5299 = vunpack.c.l.b16 %v5264
        %v5300 = vunpack.c.h.b16 %v5264
        %v5301 = vunpack.c.l.b16 %v5265
        %v5302 = vunpack.c.h.b16 %v5265
        %v5303 = vunpack.c.l.b16 %v5266
        %v5304 = vunpack.c.h.b16 %v5266
        %v5305 = vunpack.c.l.b16 %v5267
        %v5306 = vunpack.c.h.b16 %v5267
        %v5307 = vunpack.c.l.b16 %v5268
        %v5308 = vunpack.c.h.b16 %v5268
        %v5309 = vunpack.c.l.b16 %v5269
        %v5310 = vunpack.c.h.b16 %v5269
        %v5311 = vunpack.c.l.b16 %v5270
        %v5312 = vunpack.c.h.b16 %v5270
        %v5313 = vunpack.c.l.b16 %v5271
        %v5314 = vunpack.c.h.b16 %v5271
        %v5315 = vunpack.c.l.b16 %v5272
        %v5316 = vunpack.c.h.b16 %v5272
        %v5317 = vunpack.c.l.b16 %v5273
        %v5318 = vunpack.c.h.b16 %v5273
        %v5319 = vunpack.c.l.b16 %v5274
        %v5320 = vunpack.c.h.b16 %v5274
        %v5321 = vunpack.c.l.b16 %v5275
        %v5322 = vunpack.c.h.b16 %v5275
        %v5323 = vunpack.c.l.b16 %v5276
        %v5324 = vunpack.c.h.b16 %v5276
        %v5325 = vpack.c.b16 %v5295, %v5293
        %v5326 = vpack.c.b16 %v5296, %v5294
        %v5327 = vpack.c.b16 %v5299, %v5297
        %v5328 = vpack.c.b16 %v5300, %v5298
        %v5329 = vpack.c.b16 %v5303, %v5301
        %v5330 = vpack.c.b16 %v5304, %v5302
        %v5331 = vpack.c.b16 %v5307, %v5305
        %v5332 = vpack.c.b16 %v5308, %v5306
        %v5333 = vpack.c.b16 %v5311, %v5309
        %v5334 = vpack.c.b16 %v5312, %v5310
        %v5335 = vpack.c.b16 %v5315, %v5313
        %v5336 = vpack.c.b16 %v5316, %v5314
        %v5337 = vpack.c.b16 %v5319, %v5317
        %v5338 = vpack.c.b16 %v5320, %v5318
        %v5339 = vpack.c.b16 %v5323, %v5321
        %v5340 = vpack.c.b16 %v5324, %v5322
        %5357 = vmatprep.subr.bf16.mxu0 %v5326
        %5358 = vmatpush1.bf16.msra.mxu0 %v5325
        %5359 = vmatprep.subr.bf16.mxu0 %v5328
        %5360 = vmatpush1.bf16.msra.mxu0 %v5327
        %5361 = vmatprep.subr.bf16.mxu0 %v5330
        %5362 = vmatpush1.bf16.msra.mxu0 %v5329
        %5363 = vmatprep.subr.bf16.mxu0 %v5332
        %5364 = vmatpush1.bf16.msra.mxu0 %v5331
        %5365 = vmatprep.subr.bf16.mxu0 %v5334
        %5366 = vmatpush1.bf16.msra.mxu0 %v5333
        %5367 = vmatprep.subr.bf16.mxu0 %v5336
        %5368 = vmatpush1.bf16.msra.mxu0 %v5335
        %5369 = vmatprep.subr.bf16.mxu0 %v5338
        %5370 = vmatpush1.bf16.msra.mxu0 %v5337
        %5371 = vmatprep.subr.bf16.mxu0 %v5340
        %5372 = vmatpush1.bf16.msra.mxu0 %v5339
        %5373 = vmatprep.subr.bf16.mxu0 0
        %5374 = vmatpush1.bf16.msra.mxu0 0
        %5375 = vmatprep.subr.bf16.mxu0 0
        %5376 = vmatpush1.bf16.msra.mxu0 0
        %5377 = vmatprep.subr.bf16.mxu0 0
        %5378 = vmatpush1.bf16.msra.mxu0 0
        %5379 = vmatprep.subr.bf16.mxu0 0
        %5380 = vmatpush1.bf16.msra.mxu0 0
        %5381 = vmatprep.subr.bf16.mxu0 0
        %5382 = vmatpush1.bf16.msra.mxu0 0
        %5383 = vmatprep.subr.bf16.mxu0 0
        %5384 = vmatpush1.bf16.msra.mxu0 0
        %5385 = vmatprep.subr.bf16.mxu0 0
        %5386 = vmatpush1.bf16.msra.mxu0 0
        %5387 = vmatprep.subr.bf16.mxu0 0
        %5388 = vmatpush1.bf16.msra.mxu0 0
        %5389 = vmatprep.mubr.bf16.mxu0 0
        %5390 = vmatmul.mubr.bf16.gmra.mrb[0].mxu0 %v5259
        %v5391 = vpop.f32.mrb[0].mxu0
        %v5392 = vadd.f32 0.0, %v5391
        %v5393 = vpop.f32.mrb[0].mxu0
        %v5394 = vadd.f32 0.0, %v5393
        %v5395 = vpop.f32.mrb[0].mxu0
        %v5396 = vadd.f32 0.0, %v5395
        %v5397 = vpop.f32.mrb[0].mxu0
        %v5398 = vadd.f32 0.0, %v5397
        %5399 = vdwg.mxu0
        %v5400 = vadd.f32 %v5199, %v5392
        %v5401 = vadd.f32 %v5201, %v5394
        %v5402 = vadd.f32 %v5203, %v5396
        %v5403 = vadd.f32 %v5205, %v5398
        %s5404 = scalar_lea.vmem %s6, 24
        %v5405 = vld [vmem:[%s5404] sm:$0xf]
        %v5406 = vld [vmem:[%s5404 + $0x4] sm:$0xf]
        %v5409 = vunpack.c.l.b16 %v5405
        %v5410 = vunpack.c.l.b16 %v5406
        %v5411 = vpack.c.b16 %v5410, %v5409
        %v5413 = vsel %vm2788, %v5411, 0
        %5415 = vmatprep.subr.bf16.mxu0 0
        %5416 = vmatpush1.bf16.msra.mxu0 %v4819
        %5417 = vmatprep.subr.bf16.mxu0 0
        %5418 = vmatpush1.bf16.msra.mxu0 %v4820
        %5419 = vmatprep.subr.bf16.mxu0 0
        %5420 = vmatpush1.bf16.msra.mxu0 %v4821
        %5421 = vmatprep.subr.bf16.mxu0 0
        %5422 = vmatpush1.bf16.msra.mxu0 %v4822
        %5423 = vmatprep.subr.bf16.mxu0 0
        %5424 = vmatpush1.bf16.msra.mxu0 0
        %5425 = vmatprep.subr.bf16.mxu0 0
        %5426 = vmatpush1.bf16.msra.mxu0 0
        %5427 = vmatprep.subr.bf16.mxu0 0
        %5428 = vmatpush1.bf16.msra.mxu0 0
        %5429 = vmatprep.subr.bf16.mxu0 0
        %5430 = vmatpush1.bf16.msra.mxu0 0
        %5431 = vmatprep.subr.bf16.mxu0 0
        %5432 = vmatpush1.bf16.msra.mxu0 0
        %5433 = vmatprep.subr.bf16.mxu0 0
        %5434 = vmatpush1.bf16.msra.mxu0 0
        %5435 = vmatprep.subr.bf16.mxu0 0
        %5436 = vmatpush1.bf16.msra.mxu0 0
        %5437 = vmatprep.subr.bf16.mxu0 0
        %5438 = vmatpush1.bf16.msra.mxu0 0
        %5439 = vmatprep.subr.bf16.mxu0 0
        %5440 = vmatpush1.bf16.msra.mxu0 0
        %5441 = vmatprep.subr.bf16.mxu0 0
        %5442 = vmatpush1.bf16.msra.mxu0 0
        %5443 = vmatprep.subr.bf16.mxu0 0
        %5444 = vmatpush1.bf16.msra.mxu0 0
        %5445 = vmatprep.subr.bf16.mxu0 0
        %5446 = vmatpush1.bf16.msra.mxu0 0
        %5447 = vmatprep.mubr.bf16.mxu0 0
        %5448 = vmatmul.mubr.bf16.gmra.mrb[0].mxu0 %v5413
        %v5449 = vpop.f32.mrb[0].mxu0
        %v5450 = vadd.f32 0.0, %v5449
        %v5451 = vpop.f32.mrb[0].mxu0
        %v5452 = vpop.f32.mrb[0].mxu0
        %v5453 = vadd.f32 0.0, %v5452
        %v5454 = vpop.f32.mrb[0].mxu0
        %5455 = vdwg.mxu0
        %v5456 = vpack.c.bf16 %v5453, %v5450
        %s5457 = scalar_lea.vmem %s7, 384
        %v5458 = vld [vmem:[%s5457] sm:$0xff]
        %v5459 = vld [vmem:[%s5457 + $0x8] sm:$0xff]
        %v5460 = vld [vmem:[%s5457 + $0x10] sm:$0xff]
        %v5461 = vld [vmem:[%s5457 + $0x18] sm:$0xff]
        %v5462 = vld [vmem:[%s5457 + $0x20] sm:$0xff]
        %v5463 = vld [vmem:[%s5457 + $0x28] sm:$0xff]
        %v5464 = vld [vmem:[%s5457 + $0x30] sm:$0xff]
        %v5465 = vld [vmem:[%s5457 + $0x38] sm:$0xff]
        %v5466 = vld [vmem:[%s5457 + $0x40] sm:$0xff]
        %v5467 = vld [vmem:[%s5457 + $0x48] sm:$0xff]
        %v5468 = vld [vmem:[%s5457 + $0x50] sm:$0xff]
        %v5469 = vld [vmem:[%s5457 + $0x58] sm:$0xff]
        %v5470 = vld [vmem:[%s5457 + $0x60] sm:$0xff]
        %v5471 = vld [vmem:[%s5457 + $0x68] sm:$0xff]
        %v5472 = vld [vmem:[%s5457 + $0x70] sm:$0xff]
        %v5473 = vld [vmem:[%s5457 + $0x78] sm:$0xff]
        %v5490 = vunpack.c.l.b16 %v5458
        %v5491 = vunpack.c.h.b16 %v5458
        %v5492 = vunpack.c.l.b16 %v5459
        %v5493 = vunpack.c.h.b16 %v5459
        %v5494 = vunpack.c.l.b16 %v5460
        %v5495 = vunpack.c.h.b16 %v5460
        %v5496 = vunpack.c.l.b16 %v5461
        %v5497 = vunpack.c.h.b16 %v5461
        %v5498 = vunpack.c.l.b16 %v5462
        %v5499 = vunpack.c.h.b16 %v5462
        %v5500 = vunpack.c.l.b16 %v5463
        %v5501 = vunpack.c.h.b16 %v5463
        %v5502 = vunpack.c.l.b16 %v5464
        %v5503 = vunpack.c.h.b16 %v5464
        %v5504 = vunpack.c.l.b16 %v5465
        %v5505 = vunpack.c.h.b16 %v5465
        %v5506 = vunpack.c.l.b16 %v5466
        %v5507 = vunpack.c.h.b16 %v5466
        %v5508 = vunpack.c.l.b16 %v5467
        %v5509 = vunpack.c.h.b16 %v5467
        %v5510 = vunpack.c.l.b16 %v5468
        %v5511 = vunpack.c.h.b16 %v5468
        %v5512 = vunpack.c.l.b16 %v5469
        %v5513 = vunpack.c.h.b16 %v5469
        %v5514 = vunpack.c.l.b16 %v5470
        %v5515 = vunpack.c.h.b16 %v5470
        %v5516 = vunpack.c.l.b16 %v5471
        %v5517 = vunpack.c.h.b16 %v5471
        %v5518 = vunpack.c.l.b16 %v5472
        %v5519 = vunpack.c.h.b16 %v5472
        %v5520 = vunpack.c.l.b16 %v5473
        %v5521 = vunpack.c.h.b16 %v5473
        %v5522 = vpack.c.b16 %v5492, %v5490
        %v5523 = vpack.c.b16 %v5493, %v5491
        %v5524 = vpack.c.b16 %v5496, %v5494
        %v5525 = vpack.c.b16 %v5497, %v5495
        %v5526 = vpack.c.b16 %v5500, %v5498
        %v5527 = vpack.c.b16 %v5501, %v5499
        %v5528 = vpack.c.b16 %v5504, %v5502
        %v5529 = vpack.c.b16 %v5505, %v5503
        %v5530 = vpack.c.b16 %v5508, %v5506
        %v5531 = vpack.c.b16 %v5509, %v5507
        %v5532 = vpack.c.b16 %v5512, %v5510
        %v5533 = vpack.c.b16 %v5513, %v5511
        %v5534 = vpack.c.b16 %v5516, %v5514
        %v5535 = vpack.c.b16 %v5517, %v5515
        %v5536 = vpack.c.b16 %v5520, %v5518
        %v5537 = vpack.c.b16 %v5521, %v5519
        %5554 = vmatprep.subr.bf16.mxu0 %v5523
        %5555 = vmatpush1.bf16.msra.mxu0 %v5522
        %5556 = vmatprep.subr.bf16.mxu0 %v5525
        %5557 = vmatpush1.bf16.msra.mxu0 %v5524
        %5558 = vmatprep.subr.bf16.mxu0 %v5527
        %5559 = vmatpush1.bf16.msra.mxu0 %v5526
        %5560 = vmatprep.subr.bf16.mxu0 %v5529
        %5561 = vmatpush1.bf16.msra.mxu0 %v5528
        %5562 = vmatprep.subr.bf16.mxu0 %v5531
        %5563 = vmatpush1.bf16.msra.mxu0 %v5530
        %5564 = vmatprep.subr.bf16.mxu0 %v5533
        %5565 = vmatpush1.bf16.msra.mxu0 %v5532
        %5566 = vmatprep.subr.bf16.mxu0 %v5535
        %5567 = vmatpush1.bf16.msra.mxu0 %v5534
        %5568 = vmatprep.subr.bf16.mxu0 %v5537
        %5569 = vmatpush1.bf16.msra.mxu0 %v5536
        %5570 = vmatprep.subr.bf16.mxu0 0
        %5571 = vmatpush1.bf16.msra.mxu0 0
        %5572 = vmatprep.subr.bf16.mxu0 0
        %5573 = vmatpush1.bf16.msra.mxu0 0
        %5574 = vmatprep.subr.bf16.mxu0 0
        %5575 = vmatpush1.bf16.msra.mxu0 0
        %5576 = vmatprep.subr.bf16.mxu0 0
        %5577 = vmatpush1.bf16.msra.mxu0 0
        %5578 = vmatprep.subr.bf16.mxu0 0
        %5579 = vmatpush1.bf16.msra.mxu0 0
        %5580 = vmatprep.subr.bf16.mxu0 0
        %5581 = vmatpush1.bf16.msra.mxu0 0
        %5582 = vmatprep.subr.bf16.mxu0 0
        %5583 = vmatpush1.bf16.msra.mxu0 0
        %5584 = vmatprep.subr.bf16.mxu0 0
        %5585 = vmatpush1.bf16.msra.mxu0 0
        %5586 = vmatprep.mubr.bf16.mxu0 0
        %5587 = vmatmul.mubr.bf16.gmra.mrb[0].mxu0 %v5456
        %v5588 = vpop.f32.mrb[0].mxu0
        %v5589 = vadd.f32 0.0, %v5588
        %v5590 = vpop.f32.mrb[0].mxu0
        %v5591 = vadd.f32 0.0, %v5590
        %v5592 = vpop.f32.mrb[0].mxu0
        %v5593 = vadd.f32 0.0, %v5592
        %v5594 = vpop.f32.mrb[0].mxu0
        %v5595 = vadd.f32 0.0, %v5594
        %5596 = vdwg.mxu0
        %v5597 = vadd.f32 %v5400, %v5589
        %v5598 = vadd.f32 %v5401, %v5591
        %v5599 = vadd.f32 %v5402, %v5593
        %v5600 = vadd.f32 %v5403, %v5595
        %s5601 = scalar_lea.vmem %s6, 32
        %v5602 = vld [vmem:[%s5601] sm:$0xf]
        %v5603 = vld [vmem:[%s5601 + $0x4] sm:$0xf]
        %v5606 = vunpack.c.l.b16 %v5602
        %v5607 = vunpack.c.l.b16 %v5603
        %v5608 = vpack.c.b16 %v5607, %v5606
        %v5610 = vsel %vm2788, %v5608, 0
        %5612 = vmatprep.subr.bf16.mxu0 0
        %5613 = vmatpush1.bf16.msra.mxu0 %v4819
        %5614 = vmatprep.subr.bf16.mxu0 0
        %5615 = vmatpush1.bf16.msra.mxu0 %v4820
        %5616 = vmatprep.subr.bf16.mxu0 0
        %5617 = vmatpush1.bf16.msra.mxu0 %v4821
        %5618 = vmatprep.subr.bf16.mxu0 0
        %5619 = vmatpush1.bf16.msra.mxu0 %v4822
        %5620 = vmatprep.subr.bf16.mxu0 0
        %5621 = vmatpush1.bf16.msra.mxu0 0
        %5622 = vmatprep.subr.bf16.mxu0 0
        %5623 = vmatpush1.bf16.msra.mxu0 0
        %5624 = vmatprep.subr.bf16.mxu0 0
        %5625 = vmatpush1.bf16.msra.mxu0 0
        %5626 = vmatprep.subr.bf16.mxu0 0
        %5627 = vmatpush1.bf16.msra.mxu0 0
        %5628 = vmatprep.subr.bf16.mxu0 0
        %5629 = vmatpush1.bf16.msra.mxu0 0
        %5630 = vmatprep.subr.bf16.mxu0 0
        %5631 = vmatpush1.bf16.msra.mxu0 0
        %5632 = vmatprep.subr.bf16.mxu0 0
        %5633 = vmatpush1.bf16.msra.mxu0 0
        %5634 = vmatprep.subr.bf16.mxu0 0
        %5635 = vmatpush1.bf16.msra.mxu0 0
        %5636 = vmatprep.subr.bf16.mxu0 0
        %5637 = vmatpush1.bf16.msra.mxu0 0
        %5638 = vmatprep.subr.bf16.mxu0 0
        %5639 = vmatpush1.bf16.msra.mxu0 0
        %5640 = vmatprep.subr.bf16.mxu0 0
        %5641 = vmatpush1.bf16.msra.mxu0 0
        %5642 = vmatprep.subr.bf16.mxu0 0
        %5643 = vmatpush1.bf16.msra.mxu0 0
        %5644 = vmatprep.mubr.bf16.mxu0 0
        %5645 = vmatmul.mubr.bf16.gmra.mrb[0].mxu0 %v5610
        %v5646 = vpop.f32.mrb[0].mxu0
        %v5647 = vadd.f32 0.0, %v5646
        %v5648 = vpop.f32.mrb[0].mxu0
        %v5649 = vpop.f32.mrb[0].mxu0
        %v5650 = vadd.f32 0.0, %v5649
        %v5651 = vpop.f32.mrb[0].mxu0
        %5652 = vdwg.mxu0
        %v5653 = vpack.c.bf16 %v5650, %v5647
        %s5654 = scalar_lea.vmem %s7, 512
        %v5655 = vld [vmem:[%s5654] sm:$0xff]
        %v5656 = vld [vmem:[%s5654 + $0x8] sm:$0xff]
        %v5657 = vld [vmem:[%s5654 + $0x10] sm:$0xff]
        %v5658 = vld [vmem:[%s5654 + $0x18] sm:$0xff]
        %v5659 = vld [vmem:[%s5654 + $0x20] sm:$0xff]
        %v5660 = vld [vmem:[%s5654 + $0x28] sm:$0xff]
        %v5661 = vld [vmem:[%s5654 + $0x30] sm:$0xff]
        %v5662 = vld [vmem:[%s5654 + $0x38] sm:$0xff]
        %v5663 = vld [vmem:[%s5654 + $0x40] sm:$0xff]
        %v5664 = vld [vmem:[%s5654 + $0x48] sm:$0xff]
        %v5665 = vld [vmem:[%s5654 + $0x50] sm:$0xff]
        %v5666 = vld [vmem:[%s5654 + $0x58] sm:$0xff]
        %v5667 = vld [vmem:[%s5654 + $0x60] sm:$0xff]
        %v5668 = vld [vmem:[%s5654 + $0x68] sm:$0xff]
        %v5669 = vld [vmem:[%s5654 + $0x70] sm:$0xff]
        %v5670 = vld [vmem:[%s5654 + $0x78] sm:$0xff]
        %v5687 = vunpack.c.l.b16 %v5655
        %v5688 = vunpack.c.h.b16 %v5655
        %v5689 = vunpack.c.l.b16 %v5656
        %v5690 = vunpack.c.h.b16 %v5656
        %v5691 = vunpack.c.l.b16 %v5657
        %v5692 = vunpack.c.h.b16 %v5657
        %v5693 = vunpack.c.l.b16 %v5658
        %v5694 = vunpack.c.h.b16 %v5658
        %v5695 = vunpack.c.l.b16 %v5659
        %v5696 = vunpack.c.h.b16 %v5659
        %v5697 = vunpack.c.l.b16 %v5660
        %v5698 = vunpack.c.h.b16 %v5660
        %v5699 = vunpack.c.l.b16 %v5661
        %v5700 = vunpack.c.h.b16 %v5661
        %v5701 = vunpack.c.l.b16 %v5662
        %v5702 = vunpack.c.h.b16 %v5662
        %v5703 = vunpack.c.l.b16 %v5663
        %v5704 = vunpack.c.h.b16 %v5663
        %v5705 = vunpack.c.l.b16 %v5664
        %v5706 = vunpack.c.h.b16 %v5664
        %v5707 = vunpack.c.l.b16 %v5665
        %v5708 = vunpack.c.h.b16 %v5665
        %v5709 = vunpack.c.l.b16 %v5666
        %v5710 = vunpack.c.h.b16 %v5666
        %v5711 = vunpack.c.l.b16 %v5667
        %v5712 = vunpack.c.h.b16 %v5667
        %v5713 = vunpack.c.l.b16 %v5668
        %v5714 = vunpack.c.h.b16 %v5668
        %v5715 = vunpack.c.l.b16 %v5669
        %v5716 = vunpack.c.h.b16 %v5669
        %v5717 = vunpack.c.l.b16 %v5670
        %v5718 = vunpack.c.h.b16 %v5670
        %v5719 = vpack.c.b16 %v5689, %v5687
        %v5720 = vpack.c.b16 %v5690, %v5688
        %v5721 = vpack.c.b16 %v5693, %v5691
        %v5722 = vpack.c.b16 %v5694, %v5692
        %v5723 = vpack.c.b16 %v5697, %v5695
        %v5724 = vpack.c.b16 %v5698, %v5696
        %v5725 = vpack.c.b16 %v5701, %v5699
        %v5726 = vpack.c.b16 %v5702, %v5700
        %v5727 = vpack.c.b16 %v5705, %v5703
        %v5728 = vpack.c.b16 %v5706, %v5704
        %v5729 = vpack.c.b16 %v5709, %v5707
        %v5730 = vpack.c.b16 %v5710, %v5708
        %v5731 = vpack.c.b16 %v5713, %v5711
        %v5732 = vpack.c.b16 %v5714, %v5712
        %v5733 = vpack.c.b16 %v5717, %v5715
        %v5734 = vpack.c.b16 %v5718, %v5716
        %5751 = vmatprep.subr.bf16.mxu0 %v5720
        %5752 = vmatpush1.bf16.msra.mxu0 %v5719
        %5753 = vmatprep.subr.bf16.mxu0 %v5722
        %5754 = vmatpush1.bf16.msra.mxu0 %v5721
        %5755 = vmatprep.subr.bf16.mxu0 %v5724
        %5756 = vmatpush1.bf16.msra.mxu0 %v5723
        %5757 = vmatprep.subr.bf16.mxu0 %v5726
        %5758 = vmatpush1.bf16.msra.mxu0 %v5725
        %5759 = vmatprep.subr.bf16.mxu0 %v5728
        %5760 = vmatpush1.bf16.msra.mxu0 %v5727
        %5761 = vmatprep.subr.bf16.mxu0 %v5730
        %5762 = vmatpush1.bf16.msra.mxu0 %v5729
        %5763 = vmatprep.subr.bf16.mxu0 %v5732
        %5764 = vmatpush1.bf16.msra.mxu0 %v5731
        %5765 = vmatprep.subr.bf16.mxu0 %v5734
        %5766 = vmatpush1.bf16.msra.mxu0 %v5733
        %5767 = vmatprep.subr.bf16.mxu0 0
        %5768 = vmatpush1.bf16.msra.mxu0 0
        %5769 = vmatprep.subr.bf16.mxu0 0
        %5770 = vmatpush1.bf16.msra.mxu0 0
        %5771 = vmatprep.subr.bf16.mxu0 0
        %5772 = vmatpush1.bf16.msra.mxu0 0
        %5773 = vmatprep.subr.bf16.mxu0 0
        %5774 = vmatpush1.bf16.msra.mxu0 0
        %5775 = vmatprep.subr.bf16.mxu0 0
        %5776 = vmatpush1.bf16.msra.mxu0 0
        %5777 = vmatprep.subr.bf16.mxu0 0
        %5778 = vmatpush1.bf16.msra.mxu0 0
        %5779 = vmatprep.subr.bf16.mxu0 0
        %5780 = vmatpush1.bf16.msra.mxu0 0
        %5781 = vmatprep.subr.bf16.mxu0 0
        %5782 = vmatpush1.bf16.msra.mxu0 0
        %5783 = vmatprep.mubr.bf16.mxu0 0
        %5784 = vmatmul.mubr.bf16.gmra.mrb[0].mxu0 %v5653
        %v5785 = vpop.f32.mrb[0].mxu0
        %v5786 = vadd.f32 0.0, %v5785
        %v5787 = vpop.f32.mrb[0].mxu0
        %v5788 = vadd.f32 0.0, %v5787
        %v5789 = vpop.f32.mrb[0].mxu0
        %v5790 = vadd.f32 0.0, %v5789
        %v5791 = vpop.f32.mrb[0].mxu0
        %v5792 = vadd.f32 0.0, %v5791
        %5793 = vdwg.mxu0
        %v5794 = vadd.f32 %v5597, %v5786
        %v5795 = vadd.f32 %v5598, %v5788
        %v5796 = vadd.f32 %v5599, %v5790
        %v5797 = vadd.f32 %v5600, %v5792
        %s5798 = scalar_lea.vmem %s6, 40
        %v5799 = vld [vmem:[%s5798] sm:$0xf]
        %v5800 = vld [vmem:[%s5798 + $0x4] sm:$0xf]
        %v5803 = vunpack.c.l.b16 %v5799
        %v5804 = vunpack.c.l.b16 %v5800
        %v5805 = vpack.c.b16 %v5804, %v5803
        %v5807 = vsel %vm2788, %v5805, 0
        %5809 = vmatprep.subr.bf16.mxu0 0
        %5810 = vmatpush1.bf16.msra.mxu0 %v4819
        %5811 = vmatprep.subr.bf16.mxu0 0
        %5812 = vmatpush1.bf16.msra.mxu0 %v4820
        %5813 = vmatprep.subr.bf16.mxu0 0
        %5814 = vmatpush1.bf16.msra.mxu0 %v4821
        %5815 = vmatprep.subr.bf16.mxu0 0
        %5816 = vmatpush1.bf16.msra.mxu0 %v4822
        %5817 = vmatprep.subr.bf16.mxu0 0
        %5818 = vmatpush1.bf16.msra.mxu0 0
        %5819 = vmatprep.subr.bf16.mxu0 0
        %5820 = vmatpush1.bf16.msra.mxu0 0
        %5821 = vmatprep.subr.bf16.mxu0 0
        %5822 = vmatpush1.bf16.msra.mxu0 0
        %5823 = vmatprep.subr.bf16.mxu0 0
        %5824 = vmatpush1.bf16.msra.mxu0 0
        %5825 = vmatprep.subr.bf16.mxu0 0
        %5826 = vmatpush1.bf16.msra.mxu0 0
        %5827 = vmatprep.subr.bf16.mxu0 0
        %5828 = vmatpush1.bf16.msra.mxu0 0
        %5829 = vmatprep.subr.bf16.mxu0 0
        %5830 = vmatpush1.bf16.msra.mxu0 0
        %5831 = vmatprep.subr.bf16.mxu0 0
        %5832 = vmatpush1.bf16.msra.mxu0 0
        %5833 = vmatprep.subr.bf16.mxu0 0
        %5834 = vmatpush1.bf16.msra.mxu0 0
        %5835 = vmatprep.subr.bf16.mxu0 0
        %5836 = vmatpush1.bf16.msra.mxu0 0
        %5837 = vmatprep.subr.bf16.mxu0 0
        %5838 = vmatpush1.bf16.msra.mxu0 0
        %5839 = vmatprep.subr.bf16.mxu0 0
        %5840 = vmatpush1.bf16.msra.mxu0 0
        %5841 = vmatprep.mubr.bf16.mxu0 0
        %5842 = vmatmul.mubr.bf16.gmra.mrb[0].mxu0 %v5807
        %v5843 = vpop.f32.mrb[0].mxu0
        %v5844 = vadd.f32 0.0, %v5843
        %v5845 = vpop.f32.mrb[0].mxu0
        %v5846 = vpop.f32.mrb[0].mxu0
        %v5847 = vadd.f32 0.0, %v5846
        %v5848 = vpop.f32.mrb[0].mxu0
        %5849 = vdwg.mxu0
        %v5850 = vpack.c.bf16 %v5847, %v5844
        %s5851 = scalar_lea.vmem %s7, 640
        %v5852 = vld [vmem:[%s5851] sm:$0xff]
        %v5853 = vld [vmem:[%s5851 + $0x8] sm:$0xff]
        %v5854 = vld [vmem:[%s5851 + $0x10] sm:$0xff]
        %v5855 = vld [vmem:[%s5851 + $0x18] sm:$0xff]
        %v5856 = vld [vmem:[%s5851 + $0x20] sm:$0xff]
        %v5857 = vld [vmem:[%s5851 + $0x28] sm:$0xff]
        %v5858 = vld [vmem:[%s5851 + $0x30] sm:$0xff]
        %v5859 = vld [vmem:[%s5851 + $0x38] sm:$0xff]
        %v5860 = vld [vmem:[%s5851 + $0x40] sm:$0xff]
        %v5861 = vld [vmem:[%s5851 + $0x48] sm:$0xff]
        %v5862 = vld [vmem:[%s5851 + $0x50] sm:$0xff]
        %v5863 = vld [vmem:[%s5851 + $0x58] sm:$0xff]
        %v5864 = vld [vmem:[%s5851 + $0x60] sm:$0xff]
        %v5865 = vld [vmem:[%s5851 + $0x68] sm:$0xff]
        %v5866 = vld [vmem:[%s5851 + $0x70] sm:$0xff]
        %v5867 = vld [vmem:[%s5851 + $0x78] sm:$0xff]
        %v5884 = vunpack.c.l.b16 %v5852
        %v5885 = vunpack.c.h.b16 %v5852
        %v5886 = vunpack.c.l.b16 %v5853
        %v5887 = vunpack.c.h.b16 %v5853
        %v5888 = vunpack.c.l.b16 %v5854
        %v5889 = vunpack.c.h.b16 %v5854
        %v5890 = vunpack.c.l.b16 %v5855
        %v5891 = vunpack.c.h.b16 %v5855
        %v5892 = vunpack.c.l.b16 %v5856
        %v5893 = vunpack.c.h.b16 %v5856
        %v5894 = vunpack.c.l.b16 %v5857
        %v5895 = vunpack.c.h.b16 %v5857
        %v5896 = vunpack.c.l.b16 %v5858
        %v5897 = vunpack.c.h.b16 %v5858
        %v5898 = vunpack.c.l.b16 %v5859
        %v5899 = vunpack.c.h.b16 %v5859
        %v5900 = vunpack.c.l.b16 %v5860
        %v5901 = vunpack.c.h.b16 %v5860
        %v5902 = vunpack.c.l.b16 %v5861
        %v5903 = vunpack.c.h.b16 %v5861
        %v5904 = vunpack.c.l.b16 %v5862
        %v5905 = vunpack.c.h.b16 %v5862
        %v5906 = vunpack.c.l.b16 %v5863
        %v5907 = vunpack.c.h.b16 %v5863
        %v5908 = vunpack.c.l.b16 %v5864
        %v5909 = vunpack.c.h.b16 %v5864
        %v5910 = vunpack.c.l.b16 %v5865
        %v5911 = vunpack.c.h.b16 %v5865
        %v5912 = vunpack.c.l.b16 %v5866
        %v5913 = vunpack.c.h.b16 %v5866
        %v5914 = vunpack.c.l.b16 %v5867
        %v5915 = vunpack.c.h.b16 %v5867
        %v5916 = vpack.c.b16 %v5886, %v5884
        %v5917 = vpack.c.b16 %v5887, %v5885
        %v5918 = vpack.c.b16 %v5890, %v5888
        %v5919 = vpack.c.b16 %v5891, %v5889
        %v5920 = vpack.c.b16 %v5894, %v5892
        %v5921 = vpack.c.b16 %v5895, %v5893
        %v5922 = vpack.c.b16 %v5898, %v5896
        %v5923 = vpack.c.b16 %v5899, %v5897
        %v5924 = vpack.c.b16 %v5902, %v5900
        %v5925 = vpack.c.b16 %v5903, %v5901
        %v5926 = vpack.c.b16 %v5906, %v5904
        %v5927 = vpack.c.b16 %v5907, %v5905
        %v5928 = vpack.c.b16 %v5910, %v5908
        %v5929 = vpack.c.b16 %v5911, %v5909
        %v5930 = vpack.c.b16 %v5914, %v5912
        %v5931 = vpack.c.b16 %v5915, %v5913
        %5948 = vmatprep.subr.bf16.mxu0 %v5917
        %5949 = vmatpush1.bf16.msra.mxu0 %v5916
        %5950 = vmatprep.subr.bf16.mxu0 %v5919
        %5951 = vmatpush1.bf16.msra.mxu0 %v5918
        %5952 = vmatprep.subr.bf16.mxu0 %v5921
        %5953 = vmatpush1.bf16.msra.mxu0 %v5920
        %5954 = vmatprep.subr.bf16.mxu0 %v5923
        %5955 = vmatpush1.bf16.msra.mxu0 %v5922
        %5956 = vmatprep.subr.bf16.mxu0 %v5925
        %5957 = vmatpush1.bf16.msra.mxu0 %v5924
        %5958 = vmatprep.subr.bf16.mxu0 %v5927
        %5959 = vmatpush1.bf16.msra.mxu0 %v5926
        %5960 = vmatprep.subr.bf16.mxu0 %v5929
        %5961 = vmatpush1.bf16.msra.mxu0 %v5928
        %5962 = vmatprep.subr.bf16.mxu0 %v5931
        %5963 = vmatpush1.bf16.msra.mxu0 %v5930
        %5964 = vmatprep.subr.bf16.mxu0 0
        %5965 = vmatpush1.bf16.msra.mxu0 0
        %5966 = vmatprep.subr.bf16.mxu0 0
        %5967 = vmatpush1.bf16.msra.mxu0 0
        %5968 = vmatprep.subr.bf16.mxu0 0
        %5969 = vmatpush1.bf16.msra.mxu0 0
        %5970 = vmatprep.subr.bf16.mxu0 0
        %5971 = vmatpush1.bf16.msra.mxu0 0
        %5972 = vmatprep.subr.bf16.mxu0 0
        %5973 = vmatpush1.bf16.msra.mxu0 0
        %5974 = vmatprep.subr.bf16.mxu0 0
        %5975 = vmatpush1.bf16.msra.mxu0 0
        %5976 = vmatprep.subr.bf16.mxu0 0
        %5977 = vmatpush1.bf16.msra.mxu0 0
        %5978 = vmatprep.subr.bf16.mxu0 0
        %5979 = vmatpush1.bf16.msra.mxu0 0
        %5980 = vmatprep.mubr.bf16.mxu0 0
        %5981 = vmatmul.mubr.bf16.gmra.mrb[0].mxu0 %v5850
        %v5982 = vpop.f32.mrb[0].mxu0
        %v5983 = vadd.f32 0.0, %v5982
        %v5984 = vpop.f32.mrb[0].mxu0
        %v5985 = vadd.f32 0.0, %v5984
        %v5986 = vpop.f32.mrb[0].mxu0
        %v5987 = vadd.f32 0.0, %v5986
        %v5988 = vpop.f32.mrb[0].mxu0
        %v5989 = vadd.f32 0.0, %v5988
        %5990 = vdwg.mxu0
        %v5991 = vadd.f32 %v5794, %v5983
        %v5992 = vadd.f32 %v5795, %v5985
        %v5993 = vadd.f32 %v5796, %v5987
        %v5994 = vadd.f32 %v5797, %v5989
        %s5995 = scalar_lea.vmem %s6, 48
        %v5996 = vld [vmem:[%s5995] sm:$0xf]
        %v5997 = vld [vmem:[%s5995 + $0x4] sm:$0xf]
        %v6000 = vunpack.c.l.b16 %v5996
        %v6001 = vunpack.c.l.b16 %v5997
        %v6002 = vpack.c.b16 %v6001, %v6000
        %v6004 = vsel %vm2788, %v6002, 0
        %6006 = vmatprep.subr.bf16.mxu0 0
        %6007 = vmatpush1.bf16.msra.mxu0 %v4819
        %6008 = vmatprep.subr.bf16.mxu0 0
        %6009 = vmatpush1.bf16.msra.mxu0 %v4820
        %6010 = vmatprep.subr.bf16.mxu0 0
        %6011 = vmatpush1.bf16.msra.mxu0 %v4821
        %6012 = vmatprep.subr.bf16.mxu0 0
        %6013 = vmatpush1.bf16.msra.mxu0 %v4822
        %6014 = vmatprep.subr.bf16.mxu0 0
        %6015 = vmatpush1.bf16.msra.mxu0 0
        %6016 = vmatprep.subr.bf16.mxu0 0
        %6017 = vmatpush1.bf16.msra.mxu0 0
        %6018 = vmatprep.subr.bf16.mxu0 0
        %6019 = vmatpush1.bf16.msra.mxu0 0
        %6020 = vmatprep.subr.bf16.mxu0 0
        %6021 = vmatpush1.bf16.msra.mxu0 0
        %6022 = vmatprep.subr.bf16.mxu0 0
        %6023 = vmatpush1.bf16.msra.mxu0 0
        %6024 = vmatprep.subr.bf16.mxu0 0
        %6025 = vmatpush1.bf16.msra.mxu0 0
        %6026 = vmatprep.subr.bf16.mxu0 0
        %6027 = vmatpush1.bf16.msra.mxu0 0
        %6028 = vmatprep.subr.bf16.mxu0 0
        %6029 = vmatpush1.bf16.msra.mxu0 0
        %6030 = vmatprep.subr.bf16.mxu0 0
        %6031 = vmatpush1.bf16.msra.mxu0 0
        %6032 = vmatprep.subr.bf16.mxu0 0
        %6033 = vmatpush1.bf16.msra.mxu0 0
        %6034 = vmatprep.subr.bf16.mxu0 0
        %6035 = vmatpush1.bf16.msra.mxu0 0
        %6036 = vmatprep.subr.bf16.mxu0 0
        %6037 = vmatpush1.bf16.msra.mxu0 0
        %6038 = vmatprep.mubr.bf16.mxu0 0
        %6039 = vmatmul.mubr.bf16.gmra.mrb[0].mxu0 %v6004
        %v6040 = vpop.f32.mrb[0].mxu0
        %v6041 = vadd.f32 0.0, %v6040
        %v6042 = vpop.f32.mrb[0].mxu0
        %v6043 = vpop.f32.mrb[0].mxu0
        %v6044 = vadd.f32 0.0, %v6043
        %v6045 = vpop.f32.mrb[0].mxu0
        %6046 = vdwg.mxu0
        %v6047 = vpack.c.bf16 %v6044, %v6041
        %s6048 = scalar_lea.vmem %s7, 768
        %v6049 = vld [vmem:[%s6048] sm:$0xff]
        %v6050 = vld [vmem:[%s6048 + $0x8] sm:$0xff]
        %v6051 = vld [vmem:[%s6048 + $0x10] sm:$0xff]
        %v6052 = vld [vmem:[%s6048 + $0x18] sm:$0xff]
        %v6053 = vld [vmem:[%s6048 + $0x20] sm:$0xff]
        %v6054 = vld [vmem:[%s6048 + $0x28] sm:$0xff]
        %v6055 = vld [vmem:[%s6048 + $0x30] sm:$0xff]
        %v6056 = vld [vmem:[%s6048 + $0x38] sm:$0xff]
        %v6057 = vld [vmem:[%s6048 + $0x40] sm:$0xff]
        %v6058 = vld [vmem:[%s6048 + $0x48] sm:$0xff]
        %v6059 = vld [vmem:[%s6048 + $0x50] sm:$0xff]
        %v6060 = vld [vmem:[%s6048 + $0x58] sm:$0xff]
        %v6061 = vld [vmem:[%s6048 + $0x60] sm:$0xff]
        %v6062 = vld [vmem:[%s6048 + $0x68] sm:$0xff]
        %v6063 = vld [vmem:[%s6048 + $0x70] sm:$0xff]
        %v6064 = vld [vmem:[%s6048 + $0x78] sm:$0xff]
        %v6081 = vunpack.c.l.b16 %v6049
        %v6082 = vunpack.c.h.b16 %v6049
        %v6083 = vunpack.c.l.b16 %v6050
        %v6084 = vunpack.c.h.b16 %v6050
        %v6085 = vunpack.c.l.b16 %v6051
        %v6086 = vunpack.c.h.b16 %v6051
        %v6087 = vunpack.c.l.b16 %v6052
        %v6088 = vunpack.c.h.b16 %v6052
        %v6089 = vunpack.c.l.b16 %v6053
        %v6090 = vunpack.c.h.b16 %v6053
        %v6091 = vunpack.c.l.b16 %v6054
        %v6092 = vunpack.c.h.b16 %v6054
        %v6093 = vunpack.c.l.b16 %v6055
        %v6094 = vunpack.c.h.b16 %v6055
        %v6095 = vunpack.c.l.b16 %v6056
        %v6096 = vunpack.c.h.b16 %v6056
        %v6097 = vunpack.c.l.b16 %v6057
        %v6098 = vunpack.c.h.b16 %v6057
        %v6099 = vunpack.c.l.b16 %v6058
        %v6100 = vunpack.c.h.b16 %v6058
        %v6101 = vunpack.c.l.b16 %v6059
        %v6102 = vunpack.c.h.b16 %v6059
        %v6103 = vunpack.c.l.b16 %v6060
        %v6104 = vunpack.c.h.b16 %v6060
        %v6105 = vunpack.c.l.b16 %v6061
        %v6106 = vunpack.c.h.b16 %v6061
        %v6107 = vunpack.c.l.b16 %v6062
        %v6108 = vunpack.c.h.b16 %v6062
        %v6109 = vunpack.c.l.b16 %v6063
        %v6110 = vunpack.c.h.b16 %v6063
        %v6111 = vunpack.c.l.b16 %v6064
        %v6112 = vunpack.c.h.b16 %v6064
        %v6113 = vpack.c.b16 %v6083, %v6081
        %v6114 = vpack.c.b16 %v6084, %v6082
        %v6115 = vpack.c.b16 %v6087, %v6085
        %v6116 = vpack.c.b16 %v6088, %v6086
        %v6117 = vpack.c.b16 %v6091, %v6089
        %v6118 = vpack.c.b16 %v6092, %v6090
        %v6119 = vpack.c.b16 %v6095, %v6093
        %v6120 = vpack.c.b16 %v6096, %v6094
        %v6121 = vpack.c.b16 %v6099, %v6097
        %v6122 = vpack.c.b16 %v6100, %v6098
        %v6123 = vpack.c.b16 %v6103, %v6101
        %v6124 = vpack.c.b16 %v6104, %v6102
        %v6125 = vpack.c.b16 %v6107, %v6105
        %v6126 = vpack.c.b16 %v6108, %v6106
        %v6127 = vpack.c.b16 %v6111, %v6109
        %v6128 = vpack.c.b16 %v6112, %v6110
        %6145 = vmatprep.subr.bf16.mxu0 %v6114
        %6146 = vmatpush1.bf16.msra.mxu0 %v6113
        %6147 = vmatprep.subr.bf16.mxu0 %v6116
        %6148 = vmatpush1.bf16.msra.mxu0 %v6115
        %6149 = vmatprep.subr.bf16.mxu0 %v6118
        %6150 = vmatpush1.bf16.msra.mxu0 %v6117
        %6151 = vmatprep.subr.bf16.mxu0 %v6120
        %6152 = vmatpush1.bf16.msra.mxu0 %v6119
        %6153 = vmatprep.subr.bf16.mxu0 %v6122
        %6154 = vmatpush1.bf16.msra.mxu0 %v6121
        %6155 = vmatprep.subr.bf16.mxu0 %v6124
        %6156 = vmatpush1.bf16.msra.mxu0 %v6123
        %6157 = vmatprep.subr.bf16.mxu0 %v6126
        %6158 = vmatpush1.bf16.msra.mxu0 %v6125
        %6159 = vmatprep.subr.bf16.mxu0 %v6128
        %6160 = vmatpush1.bf16.msra.mxu0 %v6127
        %6161 = vmatprep.subr.bf16.mxu0 0
        %6162 = vmatpush1.bf16.msra.mxu0 0
        %6163 = vmatprep.subr.bf16.mxu0 0
        %6164 = vmatpush1.bf16.msra.mxu0 0
        %6165 = vmatprep.subr.bf16.mxu0 0
        %6166 = vmatpush1.bf16.msra.mxu0 0
        %6167 = vmatprep.subr.bf16.mxu0 0
        %6168 = vmatpush1.bf16.msra.mxu0 0
        %6169 = vmatprep.subr.bf16.mxu0 0
        %6170 = vmatpush1.bf16.msra.mxu0 0
        %6171 = vmatprep.subr.bf16.mxu0 0
        %6172 = vmatpush1.bf16.msra.mxu0 0
        %6173 = vmatprep.subr.bf16.mxu0 0
        %6174 = vmatpush1.bf16.msra.mxu0 0
        %6175 = vmatprep.subr.bf16.mxu0 0
        %6176 = vmatpush1.bf16.msra.mxu0 0
        %6177 = vmatprep.mubr.bf16.mxu0 0
        %6178 = vmatmul.mubr.bf16.gmra.mrb[0].mxu0 %v6047
        %v6179 = vpop.f32.mrb[0].mxu0
        %v6180 = vadd.f32 0.0, %v6179
        %v6181 = vpop.f32.mrb[0].mxu0
        %v6182 = vadd.f32 0.0, %v6181
        %v6183 = vpop.f32.mrb[0].mxu0
        %v6184 = vadd.f32 0.0, %v6183
        %v6185 = vpop.f32.mrb[0].mxu0
        %v6186 = vadd.f32 0.0, %v6185
        %6187 = vdwg.mxu0
        %v6188 = vadd.f32 %v5991, %v6180
        %v6189 = vadd.f32 %v5992, %v6182
        %v6190 = vadd.f32 %v5993, %v6184
        %v6191 = vadd.f32 %v5994, %v6186
        %s6192 = scalar_lea.vmem %s6, 56
        %v6193 = vld [vmem:[%s6192] sm:$0xf]
        %v6194 = vld [vmem:[%s6192 + $0x4] sm:$0xf]
        %v6197 = vunpack.c.l.b16 %v6193
        %v6198 = vunpack.c.l.b16 %v6194
        %v6199 = vpack.c.b16 %v6198, %v6197
        %v6201 = vsel %vm2788, %v6199, 0
        %6203 = vmatprep.subr.bf16.mxu0 0
        %6204 = vmatpush1.bf16.msra.mxu0 %v4819
        %6205 = vmatprep.subr.bf16.mxu0 0
        %6206 = vmatpush1.bf16.msra.mxu0 %v4820
        %6207 = vmatprep.subr.bf16.mxu0 0
        %6208 = vmatpush1.bf16.msra.mxu0 %v4821
        %6209 = vmatprep.subr.bf16.mxu0 0
        %6210 = vmatpush1.bf16.msra.mxu0 %v4822
        %6211 = vmatprep.subr.bf16.mxu0 0
        %6212 = vmatpush1.bf16.msra.mxu0 0
        %6213 = vmatprep.subr.bf16.mxu0 0
        %6214 = vmatpush1.bf16.msra.mxu0 0
        %6215 = vmatprep.subr.bf16.mxu0 0
        %6216 = vmatpush1.bf16.msra.mxu0 0
        %6217 = vmatprep.subr.bf16.mxu0 0
        %6218 = vmatpush1.bf16.msra.mxu0 0
        %6219 = vmatprep.subr.bf16.mxu0 0
        %6220 = vmatpush1.bf16.msra.mxu0 0
        %6221 = vmatprep.subr.bf16.mxu0 0
        %6222 = vmatpush1.bf16.msra.mxu0 0
        %6223 = vmatprep.subr.bf16.mxu0 0
        %6224 = vmatpush1.bf16.msra.mxu0 0
        %6225 = vmatprep.subr.bf16.mxu0 0
        %6226 = vmatpush1.bf16.msra.mxu0 0
        %6227 = vmatprep.subr.bf16.mxu0 0
        %6228 = vmatpush1.bf16.msra.mxu0 0
        %6229 = vmatprep.subr.bf16.mxu0 0
        %6230 = vmatpush1.bf16.msra.mxu0 0
        %6231 = vmatprep.subr.bf16.mxu0 0
        %6232 = vmatpush1.bf16.msra.mxu0 0
        %6233 = vmatprep.subr.bf16.mxu0 0
        %6234 = vmatpush1.bf16.msra.mxu0 0
        %6235 = vmatprep.mubr.bf16.mxu0 0
        %6236 = vmatmul.mubr.bf16.gmra.mrb[0].mxu0 %v6201
        %v6237 = vpop.f32.mrb[0].mxu0
        %v6238 = vadd.f32 0.0, %v6237
        %v6239 = vpop.f32.mrb[0].mxu0
        %v6240 = vpop.f32.mrb[0].mxu0
        %v6241 = vadd.f32 0.0, %v6240
        %v6242 = vpop.f32.mrb[0].mxu0
        %6243 = vdwg.mxu0
        %v6244 = vpack.c.bf16 %v6241, %v6238
        %s6245 = scalar_lea.vmem %s7, 896
        %v6246 = vld [vmem:[%s6245] sm:$0xff]
        %v6247 = vld [vmem:[%s6245 + $0x8] sm:$0xff]
        %v6248 = vld [vmem:[%s6245 + $0x10] sm:$0xff]
        %v6249 = vld [vmem:[%s6245 + $0x18] sm:$0xff]
        %v6250 = vld [vmem:[%s6245 + $0x20] sm:$0xff]
        %v6251 = vld [vmem:[%s6245 + $0x28] sm:$0xff]
        %v6252 = vld [vmem:[%s6245 + $0x30] sm:$0xff]
        %v6253 = vld [vmem:[%s6245 + $0x38] sm:$0xff]
        %v6254 = vld [vmem:[%s6245 + $0x40] sm:$0xff]
        %v6255 = vld [vmem:[%s6245 + $0x48] sm:$0xff]
        %v6256 = vld [vmem:[%s6245 + $0x50] sm:$0xff]
        %v6257 = vld [vmem:[%s6245 + $0x58] sm:$0xff]
        %v6258 = vld [vmem:[%s6245 + $0x60] sm:$0xff]
        %v6259 = vld [vmem:[%s6245 + $0x68] sm:$0xff]
        %v6260 = vld [vmem:[%s6245 + $0x70] sm:$0xff]
        %v6261 = vld [vmem:[%s6245 + $0x78] sm:$0xff]
        %v6278 = vunpack.c.l.b16 %v6246
        %v6279 = vunpack.c.h.b16 %v6246
        %v6280 = vunpack.c.l.b16 %v6247
        %v6281 = vunpack.c.h.b16 %v6247
        %v6282 = vunpack.c.l.b16 %v6248
        %v6283 = vunpack.c.h.b16 %v6248
        %v6284 = vunpack.c.l.b16 %v6249
        %v6285 = vunpack.c.h.b16 %v6249
        %v6286 = vunpack.c.l.b16 %v6250
        %v6287 = vunpack.c.h.b16 %v6250
        %v6288 = vunpack.c.l.b16 %v6251
        %v6289 = vunpack.c.h.b16 %v6251
        %v6290 = vunpack.c.l.b16 %v6252
        %v6291 = vunpack.c.h.b16 %v6252
        %v6292 = vunpack.c.l.b16 %v6253
        %v6293 = vunpack.c.h.b16 %v6253
        %v6294 = vunpack.c.l.b16 %v6254
        %v6295 = vunpack.c.h.b16 %v6254
        %v6296 = vunpack.c.l.b16 %v6255
        %v6297 = vunpack.c.h.b16 %v6255
        %v6298 = vunpack.c.l.b16 %v6256
        %v6299 = vunpack.c.h.b16 %v6256
        %v6300 = vunpack.c.l.b16 %v6257
        %v6301 = vunpack.c.h.b16 %v6257
        %v6302 = vunpack.c.l.b16 %v6258
        %v6303 = vunpack.c.h.b16 %v6258
        %v6304 = vunpack.c.l.b16 %v6259
        %v6305 = vunpack.c.h.b16 %v6259
        %v6306 = vunpack.c.l.b16 %v6260
        %v6307 = vunpack.c.h.b16 %v6260
        %v6308 = vunpack.c.l.b16 %v6261
        %v6309 = vunpack.c.h.b16 %v6261
        %v6310 = vpack.c.b16 %v6280, %v6278
        %v6311 = vpack.c.b16 %v6281, %v6279
        %v6312 = vpack.c.b16 %v6284, %v6282
        %v6313 = vpack.c.b16 %v6285, %v6283
        %v6314 = vpack.c.b16 %v6288, %v6286
        %v6315 = vpack.c.b16 %v6289, %v6287
        %v6316 = vpack.c.b16 %v6292, %v6290
        %v6317 = vpack.c.b16 %v6293, %v6291
        %v6318 = vpack.c.b16 %v6296, %v6294
        %v6319 = vpack.c.b16 %v6297, %v6295
        %v6320 = vpack.c.b16 %v6300, %v6298
        %v6321 = vpack.c.b16 %v6301, %v6299
        %v6322 = vpack.c.b16 %v6304, %v6302
        %v6323 = vpack.c.b16 %v6305, %v6303
        %v6324 = vpack.c.b16 %v6308, %v6306
        %v6325 = vpack.c.b16 %v6309, %v6307
        %6342 = vmatprep.subr.bf16.mxu0 %v6311
        %6343 = vmatpush1.bf16.msra.mxu0 %v6310
        %6344 = vmatprep.subr.bf16.mxu0 %v6313
        %6345 = vmatpush1.bf16.msra.mxu0 %v6312
        %6346 = vmatprep.subr.bf16.mxu0 %v6315
        %6347 = vmatpush1.bf16.msra.mxu0 %v6314
        %6348 = vmatprep.subr.bf16.mxu0 %v6317
        %6349 = vmatpush1.bf16.msra.mxu0 %v6316
        %6350 = vmatprep.subr.bf16.mxu0 %v6319
        %6351 = vmatpush1.bf16.msra.mxu0 %v6318
        %6352 = vmatprep.subr.bf16.mxu0 %v6321
        %6353 = vmatpush1.bf16.msra.mxu0 %v6320
        %6354 = vmatprep.subr.bf16.mxu0 %v6323
        %6355 = vmatpush1.bf16.msra.mxu0 %v6322
        %6356 = vmatprep.subr.bf16.mxu0 %v6325
        %6357 = vmatpush1.bf16.msra.mxu0 %v6324
        %6358 = vmatprep.subr.bf16.mxu0 0
        %6359 = vmatpush1.bf16.msra.mxu0 0
        %6360 = vmatprep.subr.bf16.mxu0 0
        %6361 = vmatpush1.bf16.msra.mxu0 0
        %6362 = vmatprep.subr.bf16.mxu0 0
        %6363 = vmatpush1.bf16.msra.mxu0 0
        %6364 = vmatprep.subr.bf16.mxu0 0
        %6365 = vmatpush1.bf16.msra.mxu0 0
        %6366 = vmatprep.subr.bf16.mxu0 0
        %6367 = vmatpush1.bf16.msra.mxu0 0
        %6368 = vmatprep.subr.bf16.mxu0 0
        %6369 = vmatpush1.bf16.msra.mxu0 0
        %6370 = vmatprep.subr.bf16.mxu0 0
        %6371 = vmatpush1.bf16.msra.mxu0 0
        %6372 = vmatprep.subr.bf16.mxu0 0
        %6373 = vmatpush1.bf16.msra.mxu0 0
        %6374 = vmatprep.mubr.bf16.mxu0 0
        %6375 = vmatmul.mubr.bf16.gmra.mrb[0].mxu0 %v6244
        %v6376 = vpop.f32.mrb[0].mxu0
        %v6377 = vadd.f32 0.0, %v6376
        %v6378 = vpop.f32.mrb[0].mxu0
        %v6379 = vadd.f32 0.0, %v6378
        %v6380 = vpop.f32.mrb[0].mxu0
        %v6381 = vadd.f32 0.0, %v6380
        %v6382 = vpop.f32.mrb[0].mxu0
        %v6383 = vadd.f32 0.0, %v6382
        %6384 = vdwg.mxu0
        %v6385 = vadd.f32 %v6188, %v6377
        %v6386 = vadd.f32 %v6189, %v6379
        %v6387 = vadd.f32 %v6190, %v6381
        %v6388 = vadd.f32 %v6191, %v6383
        %s6389 = scalar_lea.vmem %s6, 64
        %v6390 = vld [vmem:[%s6389] sm:$0xf]
        %v6391 = vld [vmem:[%s6389 + $0x4] sm:$0xf]
        %v6394 = vunpack.c.l.b16 %v6390
        %v6395 = vunpack.c.l.b16 %v6391
        %v6396 = vpack.c.b16 %v6395, %v6394
        %v6398 = vsel %vm2788, %v6396, 0
        %6400 = vmatprep.subr.bf16.mxu0 0
        %6401 = vmatpush1.bf16.msra.mxu0 %v4819
        %6402 = vmatprep.subr.bf16.mxu0 0
        %6403 = vmatpush1.bf16.msra.mxu0 %v4820
        %6404 = vmatprep.subr.bf16.mxu0 0
        %6405 = vmatpush1.bf16.msra.mxu0 %v4821
        %6406 = vmatprep.subr.bf16.mxu0 0
        %6407 = vmatpush1.bf16.msra.mxu0 %v4822
        %6408 = vmatprep.subr.bf16.mxu0 0
        %6409 = vmatpush1.bf16.msra.mxu0 0
        %6410 = vmatprep.subr.bf16.mxu0 0
        %6411 = vmatpush1.bf16.msra.mxu0 0
        %6412 = vmatprep.subr.bf16.mxu0 0
        %6413 = vmatpush1.bf16.msra.mxu0 0
        %6414 = vmatprep.subr.bf16.mxu0 0
        %6415 = vmatpush1.bf16.msra.mxu0 0
        %6416 = vmatprep.subr.bf16.mxu0 0
        %6417 = vmatpush1.bf16.msra.mxu0 0
        %6418 = vmatprep.subr.bf16.mxu0 0
        %6419 = vmatpush1.bf16.msra.mxu0 0
        %6420 = vmatprep.subr.bf16.mxu0 0
        %6421 = vmatpush1.bf16.msra.mxu0 0
        %6422 = vmatprep.subr.bf16.mxu0 0
        %6423 = vmatpush1.bf16.msra.mxu0 0
        %6424 = vmatprep.subr.bf16.mxu0 0
        %6425 = vmatpush1.bf16.msra.mxu0 0
        %6426 = vmatprep.subr.bf16.mxu0 0
        %6427 = vmatpush1.bf16.msra.mxu0 0
        %6428 = vmatprep.subr.bf16.mxu0 0
        %6429 = vmatpush1.bf16.msra.mxu0 0
        %6430 = vmatprep.subr.bf16.mxu0 0
        %6431 = vmatpush1.bf16.msra.mxu0 0
        %6432 = vmatprep.mubr.bf16.mxu0 0
        %6433 = vmatmul.mubr.bf16.gmra.mrb[0].mxu0 %v6398
        %v6434 = vpop.f32.mrb[0].mxu0
        %v6435 = vadd.f32 0.0, %v6434
        %v6436 = vpop.f32.mrb[0].mxu0
        %v6437 = vpop.f32.mrb[0].mxu0
        %v6438 = vadd.f32 0.0, %v6437
        %v6439 = vpop.f32.mrb[0].mxu0
        %6440 = vdwg.mxu0
        %v6441 = vpack.c.bf16 %v6438, %v6435
        %s6442 = scalar_lea.vmem %s7, 1024
        %v6443 = vld [vmem:[%s6442] sm:$0xff]
        %v6444 = vld [vmem:[%s6442 + $0x8] sm:$0xff]
        %v6445 = vld [vmem:[%s6442 + $0x10] sm:$0xff]
        %v6446 = vld [vmem:[%s6442 + $0x18] sm:$0xff]
        %v6447 = vld [vmem:[%s6442 + $0x20] sm:$0xff]
        %v6448 = vld [vmem:[%s6442 + $0x28] sm:$0xff]
        %v6449 = vld [vmem:[%s6442 + $0x30] sm:$0xff]
        %v6450 = vld [vmem:[%s6442 + $0x38] sm:$0xff]
        %v6451 = vld [vmem:[%s6442 + $0x40] sm:$0xff]
        %v6452 = vld [vmem:[%s6442 + $0x48] sm:$0xff]
        %v6453 = vld [vmem:[%s6442 + $0x50] sm:$0xff]
        %v6454 = vld [vmem:[%s6442 + $0x58] sm:$0xff]
        %v6455 = vld [vmem:[%s6442 + $0x60] sm:$0xff]
        %v6456 = vld [vmem:[%s6442 + $0x68] sm:$0xff]
        %v6457 = vld [vmem:[%s6442 + $0x70] sm:$0xff]
        %v6458 = vld [vmem:[%s6442 + $0x78] sm:$0xff]
        %v6475 = vunpack.c.l.b16 %v6443
        %v6476 = vunpack.c.h.b16 %v6443
        %v6477 = vunpack.c.l.b16 %v6444
        %v6478 = vunpack.c.h.b16 %v6444
        %v6479 = vunpack.c.l.b16 %v6445
        %v6480 = vunpack.c.h.b16 %v6445
        %v6481 = vunpack.c.l.b16 %v6446
        %v6482 = vunpack.c.h.b16 %v6446
        %v6483 = vunpack.c.l.b16 %v6447
        %v6484 = vunpack.c.h.b16 %v6447
        %v6485 = vunpack.c.l.b16 %v6448
        %v6486 = vunpack.c.h.b16 %v6448
        %v6487 = vunpack.c.l.b16 %v6449
        %v6488 = vunpack.c.h.b16 %v6449
        %v6489 = vunpack.c.l.b16 %v6450
        %v6490 = vunpack.c.h.b16 %v6450
        %v6491 = vunpack.c.l.b16 %v6451
        %v6492 = vunpack.c.h.b16 %v6451
        %v6493 = vunpack.c.l.b16 %v6452
        %v6494 = vunpack.c.h.b16 %v6452
        %v6495 = vunpack.c.l.b16 %v6453
        %v6496 = vunpack.c.h.b16 %v6453
        %v6497 = vunpack.c.l.b16 %v6454
        %v6498 = vunpack.c.h.b16 %v6454
        %v6499 = vunpack.c.l.b16 %v6455
        %v6500 = vunpack.c.h.b16 %v6455
        %v6501 = vunpack.c.l.b16 %v6456
        %v6502 = vunpack.c.h.b16 %v6456
        %v6503 = vunpack.c.l.b16 %v6457
        %v6504 = vunpack.c.h.b16 %v6457
        %v6505 = vunpack.c.l.b16 %v6458
        %v6506 = vunpack.c.h.b16 %v6458
        %v6507 = vpack.c.b16 %v6477, %v6475
        %v6508 = vpack.c.b16 %v6478, %v6476
        %v6509 = vpack.c.b16 %v6481, %v6479
        %v6510 = vpack.c.b16 %v6482, %v6480
        %v6511 = vpack.c.b16 %v6485, %v6483
        %v6512 = vpack.c.b16 %v6486, %v6484
        %v6513 = vpack.c.b16 %v6489, %v6487
        %v6514 = vpack.c.b16 %v6490, %v6488
        %v6515 = vpack.c.b16 %v6493, %v6491
        %v6516 = vpack.c.b16 %v6494, %v6492
        %v6517 = vpack.c.b16 %v6497, %v6495
        %v6518 = vpack.c.b16 %v6498, %v6496
        %v6519 = vpack.c.b16 %v6501, %v6499
        %v6520 = vpack.c.b16 %v6502, %v6500
        %v6521 = vpack.c.b16 %v6505, %v6503
        %v6522 = vpack.c.b16 %v6506, %v6504
        %6539 = vmatprep.subr.bf16.mxu0 %v6508
        %6540 = vmatpush1.bf16.msra.mxu0 %v6507
        %6541 = vmatprep.subr.bf16.mxu0 %v6510
        %6542 = vmatpush1.bf16.msra.mxu0 %v6509
        %6543 = vmatprep.subr.bf16.mxu0 %v6512
        %6544 = vmatpush1.bf16.msra.mxu0 %v6511
        %6545 = vmatprep.subr.bf16.mxu0 %v6514
        %6546 = vmatpush1.bf16.msra.mxu0 %v6513
        %6547 = vmatprep.subr.bf16.mxu0 %v6516
        %6548 = vmatpush1.bf16.msra.mxu0 %v6515
        %6549 = vmatprep.subr.bf16.mxu0 %v6518
        %6550 = vmatpush1.bf16.msra.mxu0 %v6517
        %6551 = vmatprep.subr.bf16.mxu0 %v6520
        %6552 = vmatpush1.bf16.msra.mxu0 %v6519
        %6553 = vmatprep.subr.bf16.mxu0 %v6522
        %6554 = vmatpush1.bf16.msra.mxu0 %v6521
        %6555 = vmatprep.subr.bf16.mxu0 0
        %6556 = vmatpush1.bf16.msra.mxu0 0
        %6557 = vmatprep.subr.bf16.mxu0 0
        %6558 = vmatpush1.bf16.msra.mxu0 0
        %6559 = vmatprep.subr.bf16.mxu0 0
        %6560 = vmatpush1.bf16.msra.mxu0 0
        %6561 = vmatprep.subr.bf16.mxu0 0
        %6562 = vmatpush1.bf16.msra.mxu0 0
        %6563 = vmatprep.subr.bf16.mxu0 0
        %6564 = vmatpush1.bf16.msra.mxu0 0
        %6565 = vmatprep.subr.bf16.mxu0 0
        %6566 = vmatpush1.bf16.msra.mxu0 0
        %6567 = vmatprep.subr.bf16.mxu0 0
        %6568 = vmatpush1.bf16.msra.mxu0 0
        %6569 = vmatprep.subr.bf16.mxu0 0
        %6570 = vmatpush1.bf16.msra.mxu0 0
        %6571 = vmatprep.mubr.bf16.mxu0 0
        %6572 = vmatmul.mubr.bf16.gmra.mrb[0].mxu0 %v6441
        %v6573 = vpop.f32.mrb[0].mxu0
        %v6574 = vadd.f32 0.0, %v6573
        %v6575 = vpop.f32.mrb[0].mxu0
        %v6576 = vadd.f32 0.0, %v6575
        %v6577 = vpop.f32.mrb[0].mxu0
        %v6578 = vadd.f32 0.0, %v6577
        %v6579 = vpop.f32.mrb[0].mxu0
        %v6580 = vadd.f32 0.0, %v6579
        %6581 = vdwg.mxu0
        %v6582 = vadd.f32 %v6385, %v6574
        %v6583 = vadd.f32 %v6386, %v6576
        %v6584 = vadd.f32 %v6387, %v6578
        %v6585 = vadd.f32 %v6388, %v6580
        %v6586 = vmax.f32 %v6582, 0.0
        %v6587 = vmax.f32 %v6583, 0.0
        %v6588 = vmax.f32 %v6584, 0.0
        %v6589 = vmax.f32 %v6585, 0.0
        %v6590 = vld [vmem:[#allocation7] sm:$0xff]
        %v6591 = vld [vmem:[#allocation7 + $0x8] sm:$0xff]
        %v6592 = vld [vmem:[#allocation7 + $0x10] sm:$0xff]
        %v6593 = vld [vmem:[#allocation7 + $0x18] sm:$0xff]
        %v6594 = vld [vmem:[#allocation7 + $0x20] sm:$0xff]
        %v6595 = vld [vmem:[#allocation7 + $0x28] sm:$0xff]
        %v6596 = vld [vmem:[#allocation7 + $0x30] sm:$0xff]
        %v6597 = vld [vmem:[#allocation7 + $0x38] sm:$0xff]
        %v6598 = vmul.f32 %v6590, %v6586
        %v6599 = vmul.f32 %v6591, %v6587
        %v6600 = vmul.f32 %v6592, %v6588
        %v6601 = vmul.f32 %v6593, %v6589
        %v6602 = vmul.f32 %v6594, %v6586
        %v6603 = vmul.f32 %v6595, %v6587
        %v6604 = vmul.f32 %v6596, %v6588
        %v6605 = vmul.f32 %v6597, %v6589
        %v6606 = vadd.f32 %v6598, %v6599
        %6607 = vadd.xlane.f32.xlu0 %v6606
        %v6608 = vpop.xlane.xlu0 %6607
        %v6609 = vadd.f32 %v6600, %v6601
        %6610 = vadd.xlane.f32.xlu0 %v6609
        %v6611 = vpop.xlane.xlu0 %6610
        %v6612 = vadd.f32 %v6602, %v6603
        %6613 = vadd.xlane.f32.xlu0 %v6612
        %v6614 = vpop.xlane.xlu0 %6613
        %v6615 = vadd.f32 %v6604, %v6605
        %6616 = vadd.xlane.f32.xlu0 %v6615
        %v6617 = vpop.xlane.xlu0 %6616
        %v6622 = vlaneseq
        %v6623 = vand.u32 %v6622, 127
        %v6624 = vlaneseq
        %v6625 = vshrl.u32 %v6624, 7
        %v6626 = vsub.s32 %v6623, %v6625
        %v6627 = vrot.slane %v6608, %v6626
        %v6628 = vadd.s32 %v6623, 4294967288
        %v6629 = vlaneseq
        %v6630 = vshrl.u32 %v6629, 7
        %v6631 = vsub.s32 %v6628, %v6630
        %v6632 = vrot.slane %v6611, %v6631
        %vm6633 = vcmask 130112
        %v6634 = vsel %vm6633, %v6632, %v6627
        %v6635 = vlaneseq
        %v6636 = vshrl.u32 %v6635, 7
        %v6637 = vsub.s32 %v6623, %v6636
        %v6638 = vrot.slane %v6614, %v6637
        %v6639 = vlaneseq
        %v6640 = vshrl.u32 %v6639, 7
        %v6641 = vsub.s32 %v6628, %v6640
        %v6642 = vrot.slane %v6617, %v6641
        %v6643 = vsel %vm6633, %v6642, %v6638
        %vm6644 = vcmask 1041409
        %v6645 = vsel %vm6644, %v6643, %v6634
        %vm6647 = vcmask 123904
        %v6648 = vsel %vm6647, %v6645, 0.0
        %6649 = vadd.xlane.f32.xlu0 %v6648
        %v6650 = vpop.xlane.xlu0 %6649
        %vm6651 = vcmask 1024
        %6652 = vst.msk [vmem:[%s389] sm:$0x3] %vm6651, %v6650
        %p6653 = scmp.lt.s32.totalorder %s23, 1
        %s6654 = scalar_select %p6653, %s23, 1
        %s6655 = smul.addr %s6654, 2
        %s6656 = scalar_lea.vmem %s9, %s6655
        // Predicated region
        $region73: #{discriminator_forward.1} parent=55 // pred_check
          %p6657 = pneg %p235
        $region74: #{discriminator_forward.1} parent=55 // pred_check_branch
          %6659 = sbr.rel (%p6657) target = $region76
        $region75: #{discriminator_forward.1} parent=55 // pred_region
          _
        $region76: #{discriminator_forward.1} parent=55 // pred_fallthru
          _
      $region56: #{discriminator_forward.1} parent=5 // pred_fallthru
        _
      %p6660 = scmp.le.s32.totalorder 2, %s18
      // Predicated region
      $region77: #{discriminator_forward.1} parent=5 // pred_check
        %p6661 = pneg %p6660
      $region78: #{discriminator_forward.1} parent=5 // pred_check_branch
        %6663 = sbr.rel (%p6661) target = $region80
      $region79: #{discriminator_forward.1} parent=5 // pred_region
        %s6664 = ssub.s32 %s18, 2
        // Predicated region
        $region81: #{discriminator_forward.1} parent=79 // pred_check
          %p6665 = pneg %p241
        $region82: #{discriminator_forward.1} parent=79 // pred_check_branch
          %6667 = sbr.rel (%p6665) target = $region84
        $region83: #{discriminator_forward.1} parent=79 // pred_region
          %p6668 = scmp.lt.s32.totalorder %s24, 1
          %s6669 = scalar_select %p6668, %s24, 1
          %s6670 = smul.addr %s6669, 2
          %s6671 = scalar_lea.vmem %s9, %s6670
        $region84: #{discriminator_forward.1} parent=79 // pred_fallthru
          _
      $region80: #{discriminator_forward.1} parent=5 // pred_fallthru
        _
    $region6: #{discriminator_forward.1} parent=1 // loop_footer
      %s22 = sadd.s32 1, %s18
    $region7: #{discriminator_forward.1} parent=1 // loop_footer_branch
      %17 = sbr.rel target = $region3
    $region8: #{discriminator_forward.1} parent=1 // loop_exit
      _
    %6672 = vsyncpa [#allocation3], 1
    %s6673 = scalar_lea.sflag [#allocation3], 1
    %6674 = vsyncpa %s6673, 1
    %6675 = vsyncpa [#allocation5], 1
    %6676 = vsyncpa [#allocation8], 1

</llo_original>
